<compile_context>
chip_gen: v7x
topology: tpu7x:2x2x1
jax: 0.10.0
libtpu: 0.0.40
codegen_flags: <defaults>
</compile_context>

<pallas_src>
import functools

import jax
import jax.numpy as jnp
from jax import lax
from jax.experimental import pallas as pl
from jax.experimental.pallas import tpu as pltpu

EPS = 1e-5          # ScaleNorm eps
NEG_INF = -1e30     # finite mask sentinel (avoids -inf/NaN edge cases)


def _default_vmem_limit():
    # ~48 MiB on v7x (64 MiB/TC), ~96-100 MiB on v5e/v6e (128 MiB/TC).
    try:
        cap = int(pltpu.get_tpu_info().vmem_capacity_bytes)
    except Exception:
        cap = 128 * 1024 * 1024
    return min((cap * 3) // 4, 100 * 1024 * 1024)


_VMEM_LIMIT = _default_vmem_limit()
_BIG_VMEM = _VMEM_LIMIT >= 80 * 1024 * 1024
# Larger query tiles where VMEM is plentiful (v5e/v6e), 128 on v7x.
_ATTN_TQ_CANDIDATES = (256, 128, 64, 32, 16, 8) if _BIG_VMEM else (128, 256, 64, 32, 16, 8)
_FF_TN_CANDIDATES = (512, 1024, 256, 128, 64, 32, 16, 8)
_FF_TH_CANDIDATES = (512, 1024, 256, 128, 64, 32, 16, 8)


def _pick_tile(total, candidates):
    for c in candidates:
        if c <= total and total % c == 0:
            return c
    return total


def _const_spec(shape):
    nd = len(shape)
    return pl.BlockSpec(shape, lambda *_, _nd=nd: (0,) * _nd)


def _scale_norm_bf16(x, g):
    # ScaleNorm: x / max(||x||_2, eps) * g, emitted as bf16 matmul operand.
    inv = lax.rsqrt(jnp.maximum(jnp.sum(x * x, axis=-1, keepdims=True), EPS * EPS))
    return (x * inv * g).astype(jnp.bfloat16)


# ----------------------------------------------------------------------------
# Attention block kernel: PreNorm(ScaleNorm) -> causal MHA -> out proj -> +x
# grid = (B, num_q_tiles).  Each q tile projects its own K/V slice into a
# persistent per-head VMEM cache; only keys [0, q0+TQ) are ever scored.
# ----------------------------------------------------------------------------
def attn_block_kernel(x_ref, g_ref, wq_ref, wk_ref, wv_ref, wout_ref, bout_ref,
                      o_ref, k_sc, v_sc, *, heads):
    f32 = jnp.float32
    bf16 = jnp.bfloat16
    qi = pl.program_id(1)
    TQ = o_ref.shape[1]
    q0 = pl.multiple_of(qi * TQ, TQ)

    x_t = x_ref[0]                                   # (TQ, D) residual input (f32)
    xn = _scale_norm_bf16(x_t, g_ref[...])           # (TQ, D) bf16

    # Local causal mask for the diagonal key chunk (the only chunk needing one).
    row = lax.broadcasted_iota(jnp.int32, (TQ, TQ), 0)
    col = lax.broadcasted_iota(jnp.int32, (TQ, TQ), 1)
    diag_mask = col > row

    nt_dims = (((1,), (1,)), ((), ()))               # contract last dims; no explicit .T

    out = x_t.astype(f32) + bout_ref[0]              # residual + output-proj bias
    for h in range(heads):                           # static loop, leading-axis indexing
        # Per-tile, per-head Q/K/V projections; query scale is pre-folded into wq.
        q_h = jnp.dot(xn, wq_ref[h], preferred_element_type=f32).astype(bf16)
        k_h = jnp.dot(xn, wk_ref[h], preferred_element_type=f32).astype(bf16)
        v_h = jnp.dot(xn, wv_ref[h], preferred_element_type=f32).astype(bf16)
        k_sc[h, pl.ds(q0, TQ), :] = k_h              # fill persistent K/V cache
        v_sc[h, pl.ds(q0, TQ), :] = v_h

        # Diagonal key chunk straight from registers; initialises online softmax.
        s = lax.dot_general(q_h, k_h, nt_dims, preferred_element_type=f32)
        s = jnp.where(diag_mask, NEG_INF, s)
        m = jnp.max(s, axis=-1, keepdims=True)
        p = jnp.exp(s - m)
        l = jnp.sum(p, axis=-1, keepdims=True)
        acc = jnp.dot(p.astype(bf16), v_h, preferred_element_type=f32)

        # Strictly-below-diagonal key chunks: fully unmasked, read from cache.
        def below_diag(j, carry, _h=h, _q=q_h):
            m_c, l_c, acc_c = carry
            off = pl.multiple_of(j * TQ, TQ)
            k_j = k_sc[_h, pl.ds(off, TQ), :]
            v_j = v_sc[_h, pl.ds(off, TQ), :]
            s_j = lax.dot_general(_q, k_j, nt_dims, preferred_element_type=f32)
            m_new = jnp.maximum(m_c, jnp.max(s_j, axis=-1, keepdims=True))
            alpha = jnp.exp(m_c - m_new)
            p_j = jnp.exp(s_j - m_new)
            l_new = alpha * l_c + jnp.sum(p_j, axis=-1, keepdims=True)
            acc_new = alpha * acc_c + jnp.dot(p_j.astype(bf16), v_j,
                                              preferred_element_type=f32)
            return m_new, l_new, acc_new

        m, l, acc = lax.fori_loop(0, qi, below_diag, (m, l, acc))

        ctx_h = (acc * pl.reciprocal(l, approx=True)).astype(bf16)    # (TQ, dh)
        out = out + jnp.dot(ctx_h, wout_ref[h], preferred_element_type=f32)

    o_ref[0] = out.astype(o_ref.dtype)


def attn_block(x, g, wq, wk, wv, wout, bout, *, heads, dim_head):
    B, N, D = x.shape
    dh = dim_head
    TQ = _pick_tile(N, _ATTN_TQ_CANDIDATES)
    nq = N // TQ

    # Head-major weight layouts; fold the 1/sqrt(dh) query scale into wq.
    scale = dh ** -0.5
    wq_h = (wq.astype(jnp.float32).reshape(D, heads, dh) * scale
            ).transpose(1, 0, 2).astype(jnp.bfloat16)            # (H, D, dh)
    wk_h = wk.reshape(D, heads, dh).transpose(1, 0, 2)           # (H, D, dh)
    wv_h = wv.reshape(D, heads, dh).transpose(1, 0, 2)           # (H, D, dh)
    wout_h = wout.reshape(heads, dh, D)                          # (H, dh, D)

    kernel = functools.partial(attn_block_kernel, heads=heads)

    # TODO(synk): on v7x with B == 1 only one TensorCore is used here (q axis
    # is scratch-carried / 'arbitrary'); a head-parallel leading grid axis
    # would recover the second core if that case matters.
    return pl.pallas_call(
        kernel,
        out_shape=jax.ShapeDtypeStruct((B, N, D), x.dtype),
        grid=(B, nq),
        in_specs=[
            pl.BlockSpec((1, TQ, D), lambda b, q: (b, q, 0)),
            _const_spec((1, 1)),
            _const_spec((heads, D, dh)),
            _const_spec((heads, D, dh)),
            _const_spec((heads, D, dh)),
            _const_spec((heads, dh, D)),
            _const_spec((1, D)),
        ],
        out_specs=pl.BlockSpec((1, TQ, D), lambda b, q: (b, q, 0)),
        scratch_shapes=[
            pltpu.VMEM((heads, N, dh), jnp.bfloat16),   # K cache, filled tile-by-tile
            pltpu.VMEM((heads, N, dh), jnp.bfloat16),   # V cache
        ],
        compiler_params=pltpu.CompilerParams(
            dimension_semantics=("parallel", "arbitrary"),
            vmem_limit_bytes=_VMEM_LIMIT),
    )(x, g, wq_h, wk_h, wv_h, wout_h, bout)


# ----------------------------------------------------------------------------
# FeedForward block kernel: PreNorm(ScaleNorm) -> Linear -> GEGLU -> Linear -> +x
# grid = (B, num_token_tiles, num_hidden_tiles); hidden axis is a reduction
# accumulated into an f32 VMEM scratch.
# ----------------------------------------------------------------------------
def ff_block_kernel(x_ref, g_ref, w1v_ref, b1v_ref, w1g_ref, b1g_ref, w2_ref, b2_ref,
                    o_ref, xn_sc, acc_sc):
    f32 = jnp.float32
    hi = pl.program_id(2)
    nh = pl.num_programs(2)

    @pl.when(hi == 0)
    def _():
        xn_sc[...] = _scale_norm_bf16(x_ref[0], g_ref[...])
        acc_sc[...] = jnp.zeros_like(acc_sc)

    xn = xn_sc[...]                                                    # (TN, D) bf16
    val = jnp.dot(xn, w1v_ref[...], preferred_element_type=f32) + b1v_ref[0]
    gate = jnp.dot(xn, w1g_ref[...], preferred_element_type=f32) + b1g_ref[0]
    # TODO(synk): gelu(approximate=True) would use the EUP tanh path (faster on
    # v5e) but diverges slightly from the exact-erf PyTorch reference.
    act = (val * jax.nn.gelu(gate, approximate=False)).astype(jnp.bfloat16)
    acc_sc[...] += jnp.dot(act, w2_ref[...], preferred_element_type=f32)

    @pl.when(hi == nh - 1)
    def _():
        o_ref[0] = (x_ref[0] + acc_sc[...] + b2_ref[0]).astype(o_ref.dtype)


def ff_block(x, g, w1v, b1v, w1g, b1g, w2, b2, *, hidden):
    B, N, D = x.shape
    TN = _pick_tile(N, _FF_TN_CANDIDATES)
    TH = _pick_tile(hidden, _FF_TH_CANDIDATES)
    nt, nh = N // TN, hidden // TH

    return pl.pallas_call(
        ff_block_kernel,
        out_shape=jax.ShapeDtypeStruct((B, N, D), x.dtype),
        grid=(B, nt, nh),
        in_specs=[
            pl.BlockSpec((1, TN, D), lambda b, t, h: (b, t, 0)),
            pl.BlockSpec(g.shape, lambda b, t, h: (0, 0)),
            pl.BlockSpec((D, TH), lambda b, t, h: (0, h)),
            pl.BlockSpec((1, TH), lambda b, t, h: (0, h)),
            pl.BlockSpec((D, TH), lambda b, t, h: (0, h)),
            pl.BlockSpec((1, TH), lambda b, t, h: (0, h)),
            pl.BlockSpec((TH, D), lambda b, t, h: (h, 0)),
            pl.BlockSpec((1, D), lambda b, t, h: (0, 0)),
        ],
        out_specs=pl.BlockSpec((1, TN, D), lambda b, t, h: (b, t, 0)),
        scratch_shapes=[
            pltpu.VMEM((TN, D), jnp.bfloat16),   # normalized x tile
            pltpu.VMEM((TN, D), jnp.float32),    # output accumulator
        ],
        compiler_params=pltpu.CompilerParams(
            dimension_semantics=("parallel", "parallel", "arbitrary"),
            vmem_limit_bytes=_VMEM_LIMIT),
    )(x, g, w1v, b1v, w1g, b1g, w2, b2)


# ----------------------------------------------------------------------------
# Transformer: parameter init + forward
# ----------------------------------------------------------------------------
def init_transformer_params(key, *, dim, depth, heads, dim_head, ff_mult):
    inner = heads * dim_head
    hidden = dim * ff_mult
    params = []

    def w(k, shape):
        # Weights stored bf16 (matmul operand dtype); biases / g stay f32.
        return (0.02 * jax.random.normal(k, shape, jnp.float32)).astype(jnp.bfloat16)

    for _ in range(depth):
        key, kq, kk, kv, ko, k1v, k1g, k2 = jax.random.split(key, 8)
        params.append({
            # attention sub-block (qkv Linear split into q/k/v)
            "g_attn": jnp.ones((1, 1), jnp.float32),
            "wq": w(kq, (dim, inner)), "wk": w(kk, (dim, inner)), "wv": w(kv, (dim, inner)),
            "wout": w(ko, (inner, dim)),
            "bout": jnp.zeros((1, dim), jnp.float32),
            # feed-forward sub-block (first Linear split into value/gate halves)
            "g_ff": jnp.ones((1, 1), jnp.float32),
            "w1v": w(k1v, (dim, hidden)), "b1v": jnp.zeros((1, hidden), jnp.float32),
            "w1g": w(k1g, (dim, hidden)), "b1g": jnp.zeros((1, hidden), jnp.float32),
            "w2": w(k2, (hidden, dim)), "b2": jnp.zeros((1, dim), jnp.float32),
        })
    return params


def transformer_forward(params, x, *, heads, dim_head, ff_mult):
    # TODO(synk): optional `mask` kwarg routing (args_route) not implemented;
    # causal masking (causal=True) is handled inside the attention kernel.
    # Dropout layers are identity (p=0.0 / eval); reversible / sparse-attn
    # variants (non-default) are not implemented.
    hidden = int(x.shape[-1] * ff_mult)
    for p in params:
        x = attn_block(x, p["g_attn"], p["wq"], p["wk"], p["wv"], p["wout"], p["bout"],
                       heads=heads, dim_head=dim_head)
        x = ff_block(x, p["g_ff"], p["w1v"], p["b1v"], p["w1g"], p["b1g"],
                     p["w2"], p["b2"], hidden=hidden)
    return x


# ----------------------------------------------------------------------------
# Pure-JAX f32 reference (same math/params) for a sanity check of the kernels
# ----------------------------------------------------------------------------
def _ref_forward(params, x, *, heads, dim_head, ff_mult):
    def scale_norm(x, g):
        n = jnp.maximum(jnp.sqrt(jnp.sum(x * x, -1, keepdims=True)), EPS)
        return x / n * g

    B, N, D = x.shape
    inner = heads * dim_head
    for p in params:
        xn = scale_norm(x, p["g_attn"][0, 0])
        q = xn @ p["wq"].astype(jnp.float32)
        k = xn @ p["wk"].astype(jnp.float32)
        v = xn @ p["wv"].astype(jnp.float32)
        q = q.reshape(B, N, heads, dim_head).transpose(0, 2, 1, 3) * dim_head ** -0.5
        k = k.reshape(B, N, heads, dim_head).transpose(0, 2, 1, 3)
        v = v.reshape(B, N, heads, dim_head).transpose(0, 2, 1, 3)
        dots = jnp.einsum("bhid,bhjd->bhij", q, k)
        causal = jnp.triu(jnp.ones((N, N), bool), 1)
        dots = jnp.where(causal, -jnp.finfo(jnp.float32).max, dots)
        attn = jax.nn.softmax(dots, axis=-1)
        o = jnp.einsum("bhij,bhjd->bhid", attn, v)
        o = o.transpose(0, 2, 1, 3).reshape(B, N, inner)
        x = x + (o @ p["wout"].astype(jnp.float32) + p["bout"][0])

        xn = scale_norm(x, p["g_ff"][0, 0])
        val = xn @ p["w1v"].astype(jnp.float32) + p["b1v"][0]
        gate = xn @ p["w1g"].astype(jnp.float32) + p["b1g"][0]
        act = val * jax.nn.gelu(gate, approximate=False)
        x = x + (act @ p["w2"].astype(jnp.float32) + p["b2"][0])
    return x


if __name__ == "__main__":
    # Small shapes consistent with the module's forward: x is (batch, seq, dim).
    # N is chosen > TQ so the below-diagonal online-softmax loop and the
    # persistent K/V cache carry are exercised.
    B, N, D = 2, 512, 32
    depth, heads, dim_head, ff_mult = 2, 2, 16, 4

    key = jax.random.PRNGKey(0)
    kx, kp = jax.random.split(key)
    x = jax.random.normal(kx, (B, N, D), jnp.float32)
    params = init_transformer_params(kp, dim=D, depth=depth, heads=heads,
                                     dim_head=dim_head, ff_mult=ff_mult)

    out = transformer_forward(params, x, heads=heads, dim_head=dim_head,
                              ff_mult=ff_mult)
    out = jax.block_until_ready(out)

    ref = _ref_forward(params, x, heads=heads, dim_head=dim_head, ff_mult=ff_mult)
    assert out.shape == (B, N, D)
    # bf16 matmul operands in the kernel vs f32 reference -> loosened tolerance.
    assert jnp.allclose(out, ref, atol=2e-2, rtol=2e-2), "mismatch vs reference"

    print("KERNEL_OK")
</pallas_src>

<mosaic_0001>
module attributes {stable_mosaic.version = 11 : i64} {
  func.func @attn_block_kernel(%arg0: i32, %arg1: i32, %arg2: memref<1x256x32xf32, #tpu.memory_space<vmem>>, %arg3: memref<1x1xf32, #tpu.memory_space<vmem>>, %arg4: memref<2x32x16xbf16, #tpu.memory_space<vmem>>, %arg5: memref<2x32x16xbf16, #tpu.memory_space<vmem>>, %arg6: memref<2x32x16xbf16, #tpu.memory_space<vmem>>, %arg7: memref<2x16x32xbf16, #tpu.memory_space<vmem>>, %arg8: memref<1x32xf32, #tpu.memory_space<vmem>>, %arg9: memref<1x256x32xf32, #tpu.memory_space<vmem>>, %arg10: memref<2x512x16xbf16, #tpu.memory_space<vmem>>, %arg11: memref<2x512x16xbf16, #tpu.memory_space<vmem>>) attributes {dimension_semantics = [#tpu.dimension_semantics<parallel>, #tpu.dimension_semantics<arbitrary>], iteration_bounds = array<i64: 2, 2>, scalar_prefetch = 0 : i64, scratch_operands = 2 : i64, tpu.core_type = #tpu.core_type<tc>, window_params = [{transform_indices = @transform_0, window_bounds = array<i64: 1, 256, 32>}, {pipeline_mode = #tpu.pipeline_mode<synchronous>, transform_indices = @transform_1, window_bounds = array<i64: 1, 1>}, {pipeline_mode = #tpu.pipeline_mode<synchronous>, transform_indices = @transform_2, window_bounds = array<i64: 2, 32, 16>}, {pipeline_mode = #tpu.pipeline_mode<synchronous>, transform_indices = @transform_3, window_bounds = array<i64: 2, 32, 16>}, {pipeline_mode = #tpu.pipeline_mode<synchronous>, transform_indices = @transform_4, window_bounds = array<i64: 2, 32, 16>}, {pipeline_mode = #tpu.pipeline_mode<synchronous>, transform_indices = @transform_5, window_bounds = array<i64: 2, 16, 32>}, {pipeline_mode = #tpu.pipeline_mode<synchronous>, transform_indices = @transform_6, window_bounds = array<i64: 1, 32>}, {transform_indices = @transform_7, window_bounds = array<i64: 1, 256, 32>}]} {
    %c256_i32 = arith.constant 256 : i32
    %0 = arith.muli %arg1, %c256_i32 : i32
    %1 = tpu.assume_multiple %0, 256 : i32
    %c0 = arith.constant 0 : index
    %c0_0 = arith.constant 0 : index
    %c0_1 = arith.constant 0 : index
    %2 = vector.load %arg2[%c0, %c0_0, %c0_1] : memref<1x256x32xf32, #tpu.memory_space<vmem>>, vector<1x256x32xf32>
    %3 = vector.shape_cast %2 : vector<1x256x32xf32> to vector<256x32xf32>
    %c0_2 = arith.constant 0 : index
    %c0_3 = arith.constant 0 : index
    %4 = vector.load %arg3[%c0_2, %c0_3] : memref<1x1xf32, #tpu.memory_space<vmem>>, vector<1x1xf32>
    %5 = arith.mulf %3, %3 : vector<256x32xf32>
    %cst = arith.constant dense<0.000000e+00> : vector<256xf32>
    %6 = vector.multi_reduction <add>, %5, %cst [1] : vector<256x32xf32> to vector<256xf32>
    %7 = vector.shape_cast %6 : vector<256xf32> to vector<256x1xf32>
    %cst_4 = arith.constant 1.000000e-10 : f32
    %8 = vector.broadcast %cst_4 : f32 to vector<256x1xf32>
    %9 = arith.maximumf %7, %8 : vector<256x1xf32>
    %10 = math.rsqrt %9 : vector<256x1xf32>
    %11 = vector.broadcast %10 : vector<256x1xf32> to vector<256x32xf32>
    %12 = arith.mulf %3, %11 : vector<256x32xf32>
    %13 = vector.broadcast %4 : vector<1x1xf32> to vector<256x32xf32>
    %14 = arith.mulf %12, %13 : vector<256x32xf32>
    %15 = arith.truncf %14 : vector<256x32xf32> to vector<256x32xbf16>
    %16 = tpu.iota {dimensions = array<i32: 0>} : vector<256x256xi32>
    %17 = tpu.iota {dimensions = array<i32: 1>} : vector<256x256xi32>
    %18 = arith.cmpi sgt, %17, %16 : vector<256x256xi32>
    %c0_5 = arith.constant 0 : index
    %c0_6 = arith.constant 0 : index
    %19 = vector.load %arg8[%c0_5, %c0_6] : memref<1x32xf32, #tpu.memory_space<vmem>>, vector<1x32xf32>
    %20 = vector.shape_cast %19 : vector<1x32xf32> to vector<32xf32>
    %21 = vector.shape_cast %20 : vector<32xf32> to vector<1x32xf32>
    %22 = vector.broadcast %21 : vector<1x32xf32> to vector<256x32xf32>
    %23 = arith.addf %3, %22 : vector<256x32xf32>
    %c0_7 = arith.constant 0 : index
    %c0_8 = arith.constant 0 : index
    %c0_9 = arith.constant 0 : index
    %24 = vector.load %arg4[%c0_7, %c0_8, %c0_9] : memref<2x32x16xbf16, #tpu.memory_space<vmem>>, vector<1x32x16xbf16>
    %25 = vector.shape_cast %24 : vector<1x32x16xbf16> to vector<32x16xbf16>
    %cst_10 = arith.constant dense<0.000000e+00> : vector<256x16xf32>
    %26 = tpu.matmul %15, %25, %cst_10 {dimension_numbers = #tpu.dot_dimension_numbers<[1], [0], [0], [1], [0, 0, 1, 1], [], []>} : vector<256x32xbf16>, vector<32x16xbf16>, vector<256x16xf32> -> vector<256x16xf32>
    %27 = arith.truncf %26 : vector<256x16xf32> to vector<256x16xbf16>
    %c0_11 = arith.constant 0 : index
    %c0_12 = arith.constant 0 : index
    %c0_13 = arith.constant 0 : index
    %28 = vector.load %arg5[%c0_11, %c0_12, %c0_13] : memref<2x32x16xbf16, #tpu.memory_space<vmem>>, vector<1x32x16xbf16>
    %29 = vector.shape_cast %28 : vector<1x32x16xbf16> to vector<32x16xbf16>
    %cst_14 = arith.constant dense<0.000000e+00> : vector<256x16xf32>
    %30 = tpu.matmul %15, %29, %cst_14 {dimension_numbers = #tpu.dot_dimension_numbers<[1], [0], [0], [1], [0, 0, 1, 1], [], []>} : vector<256x32xbf16>, vector<32x16xbf16>, vector<256x16xf32> -> vector<256x16xf32>
    %31 = arith.truncf %30 : vector<256x16xf32> to vector<256x16xbf16>
    %c0_15 = arith.constant 0 : index
    %c0_16 = arith.constant 0 : index
    %c0_17 = arith.constant 0 : index
    %32 = vector.load %arg6[%c0_15, %c0_16, %c0_17] : memref<2x32x16xbf16, #tpu.memory_space<vmem>>, vector<1x32x16xbf16>
    %33 = vector.shape_cast %32 : vector<1x32x16xbf16> to vector<32x16xbf16>
    %cst_18 = arith.constant dense<0.000000e+00> : vector<256x16xf32>
    %34 = tpu.matmul %15, %33, %cst_18 {dimension_numbers = #tpu.dot_dimension_numbers<[1], [0], [0], [1], [0, 0, 1, 1], [], []>} : vector<256x32xbf16>, vector<32x16xbf16>, vector<256x16xf32> -> vector<256x16xf32>
    %35 = arith.truncf %34 : vector<256x16xf32> to vector<256x16xbf16>
    %c0_19 = arith.constant 0 : index
    %36 = arith.index_cast %1 : i32 to index
    %c0_20 = arith.constant 0 : index
    %37 = vector.load %arg10[%c0_19, %36, %c0_20] : memref<2x512x16xbf16, #tpu.memory_space<vmem>>, vector<1x256x16xbf16>
    %38 = vector.shape_cast %37 : vector<1x256x16xbf16> to vector<256x16xbf16>
    %39 = vector.shape_cast %31 : vector<256x16xbf16> to vector<1x256x16xbf16>
    tpu.vector_store %arg10[%c0_19, %36, %c0_20], %39 {strides = array<i32>} : memref<2x512x16xbf16, #tpu.memory_space<vmem>>, vector<1x256x16xbf16>,
    %c0_21 = arith.constant 0 : index
    %40 = arith.index_cast %1 : i32 to index
    %c0_22 = arith.constant 0 : index
    %41 = vector.load %arg11[%c0_21, %40, %c0_22] : memref<2x512x16xbf16, #tpu.memory_space<vmem>>, vector<1x256x16xbf16>
    %42 = vector.shape_cast %41 : vector<1x256x16xbf16> to vector<256x16xbf16>
    %43 = vector.shape_cast %35 : vector<256x16xbf16> to vector<1x256x16xbf16>
    tpu.vector_store %arg11[%c0_21, %40, %c0_22], %43 {strides = array<i32>} : memref<2x512x16xbf16, #tpu.memory_space<vmem>>, vector<1x256x16xbf16>,
    %cst_23 = arith.constant dense<0.000000e+00> : vector<256x256xf32>
    %44 = tpu.matmul %27, %31, %cst_23 {dimension_numbers = #tpu.dot_dimension_numbers<[1], [1], [0], [0], [0, 0, 1, 0], [], []>} : vector<256x16xbf16>, vector<256x16xbf16>, vector<256x256xf32> -> vector<256x256xf32>
    %cst_24 = arith.constant -1.000000e+30 : f32
    %45 = vector.broadcast %cst_24 : f32 to vector<256x256xf32>
    %46 = arith.select %18, %45, %44 : vector<256x256xi1>, vector<256x256xf32>
    %cst_25 = arith.constant dense<0xFF800000> : vector<256xf32>
    %47 = vector.multi_reduction <maximumf>, %46, %cst_25 [1] : vector<256x256xf32> to vector<256xf32>
    %48 = vector.shape_cast %47 : vector<256xf32> to vector<256x1xf32>
    %49 = vector.broadcast %48 : vector<256x1xf32> to vector<256x256xf32>
    %50 = arith.subf %46, %49 : vector<256x256xf32>
    %51 = math.exp %50 : vector<256x256xf32>
    %cst_26 = arith.constant dense<0.000000e+00> : vector<256xf32>
    %52 = vector.multi_reduction <add>, %51, %cst_26 [1] : vector<256x256xf32> to vector<256xf32>
    %53 = vector.shape_cast %52 : vector<256xf32> to vector<256x1xf32>
    %54 = arith.truncf %51 : vector<256x256xf32> to vector<256x256xbf16>
    %cst_27 = arith.constant dense<0.000000e+00> : vector<256x16xf32>
    %55 = tpu.matmul %54, %35, %cst_27 {dimension_numbers = #tpu.dot_dimension_numbers<[1], [0], [0], [1], [0, 0, 1, 1], [], []>} : vector<256x256xbf16>, vector<256x16xbf16>, vector<256x16xf32> -> vector<256x16xf32>
    %c0_i32 = arith.constant 0 : i32
    %56 = arith.subi %arg1, %c0_i32 : i32
    %57 = arith.addi %c0_i32, %56 : i32
    %c1_i32 = arith.constant 1 : i32
    %58:3 = scf.for %arg12 = %c0_i32 to %57 step %c1_i32 iter_args(%arg13 = %48, %arg14 = %53, %arg15 = %55) -> (vector<256x1xf32>, vector<256x1xf32>, vector<256x16xf32>)  : i32 {
      %c256_i32_61 = arith.constant 256 : i32
      %113 = arith.muli %arg12, %c256_i32_61 : i32
      %114 = tpu.assume_multiple %113, 256 : i32
      %c0_62 = arith.constant 0 : index
      %115 = arith.index_cast %114 : i32 to index
      %c0_63 = arith.constant 0 : index
      %116 = vector.load %arg10[%c0_62, %115, %c0_63] : memref<2x512x16xbf16, #tpu.memory_space<vmem>>, vector<1x256x16xbf16>
      %117 = vector.shape_cast %116 : vector<1x256x16xbf16> to vector<256x16xbf16>
      %c0_64 = arith.constant 0 : index
      %118 = arith.index_cast %114 : i32 to index
      %c0_65 = arith.constant 0 : index
      %119 = vector.load %arg11[%c0_64, %118, %c0_65] : memref<2x512x16xbf16, #tpu.memory_space<vmem>>, vector<1x256x16xbf16>
      %120 = vector.shape_cast %119 : vector<1x256x16xbf16> to vector<256x16xbf16>
      %cst_66 = arith.constant dense<0.000000e+00> : vector<256x256xf32>
      %121 = tpu.matmul %27, %117, %cst_66 {dimension_numbers = #tpu.dot_dimension_numbers<[1], [1], [0], [0], [0, 0, 1, 0], [], []>} : vector<256x16xbf16>, vector<256x16xbf16>, vector<256x256xf32> -> vector<256x256xf32>
      %cst_67 = arith.constant dense<0xFF800000> : vector<256xf32>
      %122 = vector.multi_reduction <maximumf>, %121, %cst_67 [1] : vector<256x256xf32> to vector<256xf32>
      %123 = vector.shape_cast %122 : vector<256xf32> to vector<256x1xf32>
      %124 = arith.maximumf %arg13, %123 : vector<256x1xf32>
      %125 = arith.subf %arg13, %124 : vector<256x1xf32>
      %126 = math.exp %125 : vector<256x1xf32>
      %127 = vector.broadcast %124 : vector<256x1xf32> to vector<256x256xf32>
      %128 = arith.subf %121, %127 : vector<256x256xf32>
      %129 = math.exp %128 : vector<256x256xf32>
      %130 = arith.mulf %126, %arg14 : vector<256x1xf32>
      %cst_68 = arith.constant dense<0.000000e+00> : vector<256xf32>
      %131 = vector.multi_reduction <add>, %129, %cst_68 [1] : vector<256x256xf32> to vector<256xf32>
      %132 = vector.shape_cast %131 : vector<256xf32> to vector<256x1xf32>
      %133 = arith.addf %130, %132 : vector<256x1xf32>
      %134 = vector.broadcast %126 : vector<256x1xf32> to vector<256x16xf32>
      %135 = arith.mulf %134, %arg15 : vector<256x16xf32>
      %136 = arith.truncf %129 : vector<256x256xf32> to vector<256x256xbf16>
      %cst_69 = arith.constant dense<0.000000e+00> : vector<256x16xf32>
      %137 = tpu.matmul %136, %120, %cst_69 {dimension_numbers = #tpu.dot_dimension_numbers<[1], [0], [0], [1], [0, 0, 1, 1], [], []>} : vector<256x256xbf16>, vector<256x16xbf16>, vector<256x16xf32> -> vector<256x16xf32>
      %138 = arith.addf %135, %137 : vector<256x16xf32>
      scf.yield %124, %133, %138 : vector<256x1xf32>, vector<256x1xf32>, vector<256x16xf32>
    }
    %59 = tpu.reciprocal %58#1 {approx = true} : vector<256x1xf32> -> vector<256x1xf32>
    %60 = vector.broadcast %59 : vector<256x1xf32> to vector<256x16xf32>
    %61 = arith.mulf %58#2, %60 : vector<256x16xf32>
    %62 = arith.truncf %61 : vector<256x16xf32> to vector<256x16xbf16>
    %c0_28 = arith.constant 0 : index
    %c0_29 = arith.constant 0 : index
    %c0_30 = arith.constant 0 : index
    %63 = vector.load %arg7[%c0_28, %c0_29, %c0_30] : memref<2x16x32xbf16, #tpu.memory_space<vmem>>, vector<1x16x32xbf16>
    %64 = vector.shape_cast %63 : vector<1x16x32xbf16> to vector<16x32xbf16>
    %cst_31 = arith.constant dense<0.000000e+00> : vector<256x32xf32>
    %65 = tpu.matmul %62, %64, %cst_31 {dimension_numbers = #tpu.dot_dimension_numbers<[1], [0], [0], [1], [0, 0, 1, 1], [], []>} : vector<256x16xbf16>, vector<16x32xbf16>, vector<256x32xf32> -> vector<256x32xf32>
    %66 = arith.addf %23, %65 : vector<256x32xf32>
    %c1 = arith.constant 1 : index
    %c0_32 = arith.constant 0 : index
    %c0_33 = arith.constant 0 : index
    %67 = vector.load %arg4[%c1, %c0_32, %c0_33] : memref<2x32x16xbf16, #tpu.memory_space<vmem>>, vector<1x32x16xbf16>
    %68 = vector.shape_cast %67 : vector<1x32x16xbf16> to vector<32x16xbf16>
    %cst_34 = arith.constant dense<0.000000e+00> : vector<256x16xf32>
    %69 = tpu.matmul %15, %68, %cst_34 {dimension_numbers = #tpu.dot_dimension_numbers<[1], [0], [0], [1], [0, 0, 1, 1], [], []>} : vector<256x32xbf16>, vector<32x16xbf16>, vector<256x16xf32> -> vector<256x16xf32>
    %70 = arith.truncf %69 : vector<256x16xf32> to vector<256x16xbf16>
    %c1_35 = arith.constant 1 : index
    %c0_36 = arith.constant 0 : index
    %c0_37 = arith.constant 0 : index
    %71 = vector.load %arg5[%c1_35, %c0_36, %c0_37] : memref<2x32x16xbf16, #tpu.memory_space<vmem>>, vector<1x32x16xbf16>
    %72 = vector.shape_cast %71 : vector<1x32x16xbf16> to vector<32x16xbf16>
    %cst_38 = arith.constant dense<0.000000e+00> : vector<256x16xf32>
    %73 = tpu.matmul %15, %72, %cst_38 {dimension_numbers = #tpu.dot_dimension_numbers<[1], [0], [0], [1], [0, 0, 1, 1], [], []>} : vector<256x32xbf16>, vector<32x16xbf16>, vector<256x16xf32> -> vector<256x16xf32>
    %74 = arith.truncf %73 : vector<256x16xf32> to vector<256x16xbf16>
    %c1_39 = arith.constant 1 : index
    %c0_40 = arith.constant 0 : index
    %c0_41 = arith.constant 0 : index
    %75 = vector.load %arg6[%c1_39, %c0_40, %c0_41] : memref<2x32x16xbf16, #tpu.memory_space<vmem>>, vector<1x32x16xbf16>
    %76 = vector.shape_cast %75 : vector<1x32x16xbf16> to vector<32x16xbf16>
    %cst_42 = arith.constant dense<0.000000e+00> : vector<256x16xf32>
    %77 = tpu.matmul %15, %76, %cst_42 {dimension_numbers = #tpu.dot_dimension_numbers<[1], [0], [0], [1], [0, 0, 1, 1], [], []>} : vector<256x32xbf16>, vector<32x16xbf16>, vector<256x16xf32> -> vector<256x16xf32>
    %78 = arith.truncf %77 : vector<256x16xf32> to vector<256x16xbf16>
    %c1_43 = arith.constant 1 : index
    %79 = arith.index_cast %1 : i32 to index
    %c0_44 = arith.constant 0 : index
    %80 = vector.load %arg10[%c1_43, %79, %c0_44] : memref<2x512x16xbf16, #tpu.memory_space<vmem>>, vector<1x256x16xbf16>
    %81 = vector.shape_cast %80 : vector<1x256x16xbf16> to vector<256x16xbf16>
    %82 = vector.shape_cast %74 : vector<256x16xbf16> to vector<1x256x16xbf16>
    tpu.vector_store %arg10[%c1_43, %79, %c0_44], %82 {strides = array<i32>} : memref<2x512x16xbf16, #tpu.memory_space<vmem>>, vector<1x256x16xbf16>,
    %c1_45 = arith.constant 1 : index
    %83 = arith.index_cast %1 : i32 to index
    %c0_46 = arith.constant 0 : index
    %84 = vector.load %arg11[%c1_45, %83, %c0_46] : memref<2x512x16xbf16, #tpu.memory_space<vmem>>, vector<1x256x16xbf16>
    %85 = vector.shape_cast %84 : vector<1x256x16xbf16> to vector<256x16xbf16>
    %86 = vector.shape_cast %78 : vector<256x16xbf16> to vector<1x256x16xbf16>
    tpu.vector_store %arg11[%c1_45, %83, %c0_46], %86 {strides = array<i32>} : memref<2x512x16xbf16, #tpu.memory_space<vmem>>, vector<1x256x16xbf16>,
    %cst_47 = arith.constant dense<0.000000e+00> : vector<256x256xf32>
    %87 = tpu.matmul %70, %74, %cst_47 {dimension_numbers = #tpu.dot_dimension_numbers<[1], [1], [0], [0], [0, 0, 1, 0], [], []>} : vector<256x16xbf16>, vector<256x16xbf16>, vector<256x256xf32> -> vector<256x256xf32>
    %cst_48 = arith.constant -1.000000e+30 : f32
    %88 = vector.broadcast %cst_48 : f32 to vector<256x256xf32>
    %89 = arith.select %18, %88, %87 : vector<256x256xi1>, vector<256x256xf32>
    %cst_49 = arith.constant dense<0xFF800000> : vector<256xf32>
    %90 = vector.multi_reduction <maximumf>, %89, %cst_49 [1] : vector<256x256xf32> to vector<256xf32>
    %91 = vector.shape_cast %90 : vector<256xf32> to vector<256x1xf32>
    %92 = vector.broadcast %91 : vector<256x1xf32> to vector<256x256xf32>
    %93 = arith.subf %89, %92 : vector<256x256xf32>
    %94 = math.exp %93 : vector<256x256xf32>
    %cst_50 = arith.constant dense<0.000000e+00> : vector<256xf32>
    %95 = vector.multi_reduction <add>, %94, %cst_50 [1] : vector<256x256xf32> to vector<256xf32>
    %96 = vector.shape_cast %95 : vector<256xf32> to vector<256x1xf32>
    %97 = arith.truncf %94 : vector<256x256xf32> to vector<256x256xbf16>
    %cst_51 = arith.constant dense<0.000000e+00> : vector<256x16xf32>
    %98 = tpu.matmul %97, %78, %cst_51 {dimension_numbers = #tpu.dot_dimension_numbers<[1], [0], [0], [1], [0, 0, 1, 1], [], []>} : vector<256x256xbf16>, vector<256x16xbf16>, vector<256x16xf32> -> vector<256x16xf32>
    %c0_i32_52 = arith.constant 0 : i32
    %99 = arith.subi %arg1, %c0_i32_52 : i32
    %100 = arith.addi %c0_i32_52, %99 : i32
    %c1_i32_53 = arith.constant 1 : i32
    %101:3 = scf.for %arg12 = %c0_i32_52 to %100 step %c1_i32_53 iter_args(%arg13 = %91, %arg14 = %96, %arg15 = %98) -> (vector<256x1xf32>, vector<256x1xf32>, vector<256x16xf32>)  : i32 {
      %c256_i32_61 = arith.constant 256 : i32
      %113 = arith.muli %arg12, %c256_i32_61 : i32
      %114 = tpu.assume_multiple %113, 256 : i32
      %c1_62 = arith.constant 1 : index
      %115 = arith.index_cast %114 : i32 to index
      %c0_63 = arith.constant 0 : index
      %116 = vector.load %arg10[%c1_62, %115, %c0_63] : memref<2x512x16xbf16, #tpu.memory_space<vmem>>, vector<1x256x16xbf16>
      %117 = vector.shape_cast %116 : vector<1x256x16xbf16> to vector<256x16xbf16>
      %c1_64 = arith.constant 1 : index
      %118 = arith.index_cast %114 : i32 to index
      %c0_65 = arith.constant 0 : index
      %119 = vector.load %arg11[%c1_64, %118, %c0_65] : memref<2x512x16xbf16, #tpu.memory_space<vmem>>, vector<1x256x16xbf16>
      %120 = vector.shape_cast %119 : vector<1x256x16xbf16> to vector<256x16xbf16>
      %cst_66 = arith.constant dense<0.000000e+00> : vector<256x256xf32>
      %121 = tpu.matmul %70, %117, %cst_66 {dimension_numbers = #tpu.dot_dimension_numbers<[1], [1], [0], [0], [0, 0, 1, 0], [], []>} : vector<256x16xbf16>, vector<256x16xbf16>, vector<256x256xf32> -> vector<256x256xf32>
      %cst_67 = arith.constant dense<0xFF800000> : vector<256xf32>
      %122 = vector.multi_reduction <maximumf>, %121, %cst_67 [1] : vector<256x256xf32> to vector<256xf32>
      %123 = vector.shape_cast %122 : vector<256xf32> to vector<256x1xf32>
      %124 = arith.maximumf %arg13, %123 : vector<256x1xf32>
      %125 = arith.subf %arg13, %124 : vector<256x1xf32>
      %126 = math.exp %125 : vector<256x1xf32>
      %127 = vector.broadcast %124 : vector<256x1xf32> to vector<256x256xf32>
      %128 = arith.subf %121, %127 : vector<256x256xf32>
      %129 = math.exp %128 : vector<256x256xf32>
      %130 = arith.mulf %126, %arg14 : vector<256x1xf32>
      %cst_68 = arith.constant dense<0.000000e+00> : vector<256xf32>
      %131 = vector.multi_reduction <add>, %129, %cst_68 [1] : vector<256x256xf32> to vector<256xf32>
      %132 = vector.shape_cast %131 : vector<256xf32> to vector<256x1xf32>
      %133 = arith.addf %130, %132 : vector<256x1xf32>
      %134 = vector.broadcast %126 : vector<256x1xf32> to vector<256x16xf32>
      %135 = arith.mulf %134, %arg15 : vector<256x16xf32>
      %136 = arith.truncf %129 : vector<256x256xf32> to vector<256x256xbf16>
      %cst_69 = arith.constant dense<0.000000e+00> : vector<256x16xf32>
      %137 = tpu.matmul %136, %120, %cst_69 {dimension_numbers = #tpu.dot_dimension_numbers<[1], [0], [0], [1], [0, 0, 1, 1], [], []>} : vector<256x256xbf16>, vector<256x16xbf16>, vector<256x16xf32> -> vector<256x16xf32>
      %138 = arith.addf %135, %137 : vector<256x16xf32>
      scf.yield %124, %133, %138 : vector<256x1xf32>, vector<256x1xf32>, vector<256x16xf32>
    }
    %102 = tpu.reciprocal %101#1 {approx = true} : vector<256x1xf32> -> vector<256x1xf32>
    %103 = vector.broadcast %102 : vector<256x1xf32> to vector<256x16xf32>
    %104 = arith.mulf %101#2, %103 : vector<256x16xf32>
    %105 = arith.truncf %104 : vector<256x16xf32> to vector<256x16xbf16>
    %c1_54 = arith.constant 1 : index
    %c0_55 = arith.constant 0 : index
    %c0_56 = arith.constant 0 : index
    %106 = vector.load %arg7[%c1_54, %c0_55, %c0_56] : memref<2x16x32xbf16, #tpu.memory_space<vmem>>, vector<1x16x32xbf16>
    %107 = vector.shape_cast %106 : vector<1x16x32xbf16> to vector<16x32xbf16>
    %cst_57 = arith.constant dense<0.000000e+00> : vector<256x32xf32>
    %108 = tpu.matmul %105, %107, %cst_57 {dimension_numbers = #tpu.dot_dimension_numbers<[1], [0], [0], [1], [0, 0, 1, 1], [], []>} : vector<256x16xbf16>, vector<16x32xbf16>, vector<256x32xf32> -> vector<256x32xf32>
    %109 = arith.addf %66, %108 : vector<256x32xf32>
    %c0_58 = arith.constant 0 : index
    %c0_59 = arith.constant 0 : index
    %c0_60 = arith.constant 0 : index
    %110 = vector.load %arg9[%c0_58, %c0_59, %c0_60] : memref<1x256x32xf32, #tpu.memory_space<vmem>>, vector<1x256x32xf32>
    %111 = vector.shape_cast %110 : vector<1x256x32xf32> to vector<256x32xf32>
    %112 = vector.shape_cast %109 : vector<256x32xf32> to vector<1x256x32xf32>
    tpu.vector_store %arg9[%c0_58, %c0_59, %c0_60], %112 {strides = array<i32>} : memref<1x256x32xf32, #tpu.memory_space<vmem>>, vector<1x256x32xf32>,
    return
  }
  func.func @transform_0(%arg0: i32, %arg1: i32) -> (i32, i32, i32) {
    %c0_i32 = arith.constant 0 : i32
    %c0_i32_0 = arith.constant 0 : i32
    return %arg0, %arg1, %c0_i32 : i32, i32, i32
  }
  func.func @transform_1(%arg0: i32, %arg1: i32) -> (i32, i32) {
    %c0_i32 = arith.constant 0 : i32
    %c0_i32_0 = arith.constant 0 : i32
    %c0_i32_1 = arith.constant 0 : i32
    return %c0_i32, %c0_i32_0 : i32, i32
  }
  func.func @transform_2(%arg0: i32, %arg1: i32) -> (i32, i32, i32) {
    %c0_i32 = arith.constant 0 : i32
    %c0_i32_0 = arith.constant 0 : i32
    %c0_i32_1 = arith.constant 0 : i32
    %c0_i32_2 = arith.constant 0 : i32
    return %c0_i32, %c0_i32_0, %c0_i32_1 : i32, i32, i32
  }
  func.func @transform_3(%arg0: i32, %arg1: i32) -> (i32, i32, i32) {
    %c0_i32 = arith.constant 0 : i32
    %c0_i32_0 = arith.constant 0 : i32
    %c0_i32_1 = arith.constant 0 : i32
    %c0_i32_2 = arith.constant 0 : i32
    return %c0_i32, %c0_i32_0, %c0_i32_1 : i32, i32, i32
  }
  func.func @transform_4(%arg0: i32, %arg1: i32) -> (i32, i32, i32) {
    %c0_i32 = arith.constant 0 : i32
    %c0_i32_0 = arith.constant 0 : i32
    %c0_i32_1 = arith.constant 0 : i32
    %c0_i32_2 = arith.constant 0 : i32
    return %c0_i32, %c0_i32_0, %c0_i32_1 : i32, i32, i32
  }
  func.func @transform_5(%arg0: i32, %arg1: i32) -> (i32, i32, i32) {
    %c0_i32 = arith.constant 0 : i32
    %c0_i32_0 = arith.constant 0 : i32
    %c0_i32_1 = arith.constant 0 : i32
    %c0_i32_2 = arith.constant 0 : i32
    return %c0_i32, %c0_i32_0, %c0_i32_1 : i32, i32, i32
  }
  func.func @transform_6(%arg0: i32, %arg1: i32) -> (i32, i32) {
    %c0_i32 = arith.constant 0 : i32
    %c0_i32_0 = arith.constant 0 : i32
    %c0_i32_1 = arith.constant 0 : i32
    return %c0_i32, %c0_i32_0 : i32, i32
  }
  func.func @transform_7(%arg0: i32, %arg1: i32) -> (i32, i32, i32) {
    %c0_i32 = arith.constant 0 : i32
    %c0_i32_0 = arith.constant 0 : i32
    return %arg0, %arg1, %c0_i32 : i32, i32, i32
  }
}

</mosaic_0001>

<llo_original>
// kernel: tpu_custom_call.1
$region0: #{tpu_custom_call.1}
  #allocation0 [shape = 'u32[]', space=smem, size = 0x4, offset = 0x4, fixed_abs, tag = 'smem constant byte address 0x4 - core index']
  #allocation1 [shape = 'u32[144,128]{1,0:T(1,128)}', space=vmem, size = 0x12000, scoped, tag = 'internal scratch']
  #allocation2 [shape = 'bf16[2,512,16]{2,1,0:T(16,128)(2,1)}', space=vmem, size = 0x40000, scoped, tag = 'scratch operand']
  #allocation3 [shape = 'bf16[2,512,16]{2,1,0:T(16,128)(2,1)}', space=vmem, size = 0x40000, scoped, tag = 'scratch operand']
  #allocation4 [shape = 'f32[1,1]{1,0:T(1,128)S(1)}', space=vmem, size = 0x200, scoped, tag = 'scoped memory for tpu_custom_call.1']
  %s0 = inlined_call_operand.hbm [shape: f32[2,512,32], index: 0, kind: input, shape index: {}]
  %s1 = inlined_call_operand.<no memory space> [shape: f32[1,1], index: 1, kind: input, shape index: {}]
  %s2 = inlined_call_operand.hbm [shape: bf16[2,32,16], index: 2, kind: input, shape index: {}]
  %s3 = inlined_call_operand.hbm [shape: bf16[2,32,16], index: 3, kind: input, shape index: {}]
  %s4 = inlined_call_operand.hbm [shape: bf16[2,32,16], index: 4, kind: input, shape index: {}]
  %s5 = inlined_call_operand.hbm [shape: bf16[2,16,32], index: 5, kind: input, shape index: {}]
  %s6 = inlined_call_operand.hbm [shape: f32[1,32], index: 6, kind: input, shape index: {}]
  %s7 = inlined_call_operand.hbm [shape: f32[2,512,32], index: 7, kind: output, shape index: {}]
  %s8 = sld [smem:[#allocation0]]
  $region99: #{tpu_custom_call.1} parent=0
    _
  %s10 = ssub.s32 1, %s8
  %s11 = scalar_select 0, %s10, %s8
  %v12 = vstv %s1
  %13 = vst [vmem:[#allocation4] sm:$0x1] %v12
  $region1: #{tpu_custom_call.1} parent=0
    #allocation5 [shape = 'u8[262144]{0}', space=vmem, size = 0x40000, scoped, tag = 'input window, operand 0']
    #allocation6 [shape = 's32[2]{0}', space=sflag, size = 0x8, scoped, tag = 'scoped memory for tpu_custom_call.1']
    #allocation7 [shape = 's32[2]{0}', space=sflag, size = 0x8, scoped, tag = 'scoped memory for tpu_custom_call.1']
    #allocation8 [shape = 'u8[16384]{0}', space=vmem, size = 0x4000, scoped, tag = 'input window, operand 2, single buffered']
    #allocation9 [shape = 's32[1]{0}', space=sflag, size = 0x4, scoped, tag = 'scoped memory for tpu_custom_call.1']
    #allocation10 [shape = 'u8[16384]{0}', space=vmem, size = 0x4000, scoped, tag = 'input window, operand 3, single buffered']
    #allocation11 [shape = 'u8[16384]{0}', space=vmem, size = 0x4000, scoped, tag = 'input window, operand 4, single buffered']
    #allocation12 [shape = 's32[1]{0}', space=sflag, size = 0x4, scoped, tag = 'scoped memory for tpu_custom_call.1']
    #allocation13 [shape = 'u8[8192]{0}', space=vmem, size = 0x2000, scoped, tag = 'input window, operand 5, single buffered']
    #allocation14 [shape = 'u8[512]{0}', space=vmem, size = 0x400, scoped, tag = 'input window, operand 6, single buffered']
    #allocation15 [shape = 's32[1]{0}', space=sflag, size = 0x4, scoped, tag = 'scoped memory for tpu_custom_call.1']
    #allocation16 [shape = 'u8[262144]{0}', space=vmem, size = 0x40000, scoped, tag = 'output window, operand 0']
    %14 = vsyncpa [#allocation6], 0
    %s15 = scalar_lea.sflag [#allocation6], 1
    %16 = vsyncpa %s15, 0
    %17 = vsyncpa [#allocation9], 0
    %18 = vsyncpa [#allocation12], 0
    %19 = vsyncpa [#allocation15], 0
    %20 = vsyncpa [#allocation7], 0
    %s21 = scalar_lea.sflag [#allocation7], 1
    %22 = vsyncpa %s21, 0
    loop: start=0, step=1, limit=6
    $region2: #{tpu_custom_call.1} parent=1 // loop_pre_header
      _
    $region3: #{tpu_custom_call.1} parent=1 // loop_header
      %s24 = sphi 0, %s28
      %p25 = scmp.ge.s32.totalorder %s24, 6
      %s31 = sphi 0, %s43
      %s32 = sphi 0, %s39
      %s33 = sphi 0, %s31
      %s34 = sphi 0, %s32
      %s35 = sphi 0, %s33
      %s36 = sphi 0, %s34
      %s48 = sphi 0, %s50
      %s51 = sphi 0, %s48
      %s52 = sphi 0, %s51
      %s68 = sphi 0, %s52
      %s72 = sphi 0, %s72
      %s74 = sphi 0, %s72
      %s75 = sphi 0, %s74
      %s89 = sphi 0, %s75
      %s93 = sphi 0, %s93
      %s95 = sphi 0, %s93
      %s96 = sphi 0, %s95
      %s110 = sphi 0, %s96
      %s114 = sphi 0, %s114
      %s116 = sphi 0, %s114
      %s117 = sphi 0, %s116
      %s131 = sphi 0, %s117
      %s135 = sphi 0, %s135
      %s137 = sphi 0, %s135
      %s138 = sphi 0, %s137
      %s152 = sphi 0, %s138
      %s156 = sphi 0, %s156
      %s158 = sphi 0, %s156
      %s159 = sphi 0, %s158
      %s173 = sphi 0, %s159
      %s177 = sphi 0, %s177
      %s179 = sphi 0, %s177
      %s180 = sphi 0, %s179
      %s194 = sphi 0, %s180
      %s202 = sphi 0, %s204
      %s205 = sphi 0, %s202
      %s206 = sphi 0, %s205
      %s222 = sphi 0, %s206
    $region4: #{tpu_custom_call.1} parent=1 // loop_header_branch
      %27 = sbr.rel (%p25) target = $region8
    $region5: #{tpu_custom_call.1} parent=1 // loop_body
      %s29 = ssub.s32 %s24, 1
      %s30 = ssub.s32 %s24, 2
      %s37 = sadd.s32 1, %s32
      %p38 = scmp.ge.s32.totalorder %s37, 2
      %s39 = scalar_select %p38, 0, %s37
      %s40 = sadd.s32 1, %s31
      %s41 = scalar_select %p38, %s40, %s31
      %p42 = scmp.ge.s32.totalorder %s41, 2
      %s43 = scalar_select %p42, 0, %s41
      %s44 = ssub.s32 %s31, %s43
      %s45 = ssub.s32 %s32, %s39
      %s46 = sor.u32 %s44, %s45
      %p47 = scmp.eq.s32.totalorder %s46, 0
      %s49 = sadd.s32 %s48, 1
      %s50 = scalar_select %p47, %s48, %s49
      %p53 = pneg %p47
      %p54 = scmp.eq.s32.totalorder %s24, 3
      %p55 = por %p53, %p54
      %p56 = scmp.ne.s32.totalorder %s48, %s51
      %p57 = scmp.eq.s32.totalorder %s24, 0
      %p58 = por %p56, %p57
      %p59 = scmp.ne.s32.totalorder %s48, %s51
      %p60 = scmp.eq.s32.totalorder %s29, 3
      %p61 = por %p59, %p60
      %p62 = scmp.ne.s32.totalorder %s51, %s52
      %p63 = scmp.eq.s32.totalorder %s29, 0
      %p64 = por %p62, %p63
      %p65 = scmp.ne.s32.totalorder %s51, %s52
      %p66 = scmp.eq.s32.totalorder %s30, 3
      %p67 = por %p65, %p66
      %p69 = scmp.ne.s32.totalorder %s52, %s68
      %p70 = scmp.eq.s32.totalorder %s30, 0
      %p71 = por %p69, %p70
      %s73 = sadd.s32 %s72, 1
      %p76 = scmp.eq.s32.totalorder %s24, 3
      %p77 = scmp.ne.s32.totalorder %s72, %s74
      %p78 = scmp.eq.s32.totalorder %s24, 0
      %p79 = por %p77, %p78
      %p80 = scmp.ne.s32.totalorder %s72, %s74
      %p81 = scmp.eq.s32.totalorder %s29, 3
      %p82 = por %p80, %p81
      %p83 = scmp.ne.s32.totalorder %s74, %s75
      %p84 = scmp.eq.s32.totalorder %s29, 0
      %p85 = por %p83, %p84
      %p86 = scmp.ne.s32.totalorder %s74, %s75
      %p87 = scmp.eq.s32.totalorder %s30, 3
      %p88 = por %p86, %p87
      %p90 = scmp.ne.s32.totalorder %s75, %s89
      %p91 = scmp.eq.s32.totalorder %s30, 0
      %p92 = por %p90, %p91
      %s94 = sadd.s32 %s93, 1
      %p97 = scmp.eq.s32.totalorder %s24, 3
      %p98 = scmp.ne.s32.totalorder %s93, %s95
      %p99 = scmp.eq.s32.totalorder %s24, 0
      %p100 = por %p98, %p99
      %p101 = scmp.ne.s32.totalorder %s93, %s95
      %p102 = scmp.eq.s32.totalorder %s29, 3
      %p103 = por %p101, %p102
      %p104 = scmp.ne.s32.totalorder %s95, %s96
      %p105 = scmp.eq.s32.totalorder %s29, 0
      %p106 = por %p104, %p105
      %p107 = scmp.ne.s32.totalorder %s95, %s96
      %p108 = scmp.eq.s32.totalorder %s30, 3
      %p109 = por %p107, %p108
      %p111 = scmp.ne.s32.totalorder %s96, %s110
      %p112 = scmp.eq.s32.totalorder %s30, 0
      %p113 = por %p111, %p112
      %s115 = sadd.s32 %s114, 1
      %p118 = scmp.eq.s32.totalorder %s24, 3
      %p119 = scmp.ne.s32.totalorder %s114, %s116
      %p120 = scmp.eq.s32.totalorder %s24, 0
      %p121 = por %p119, %p120
      %p122 = scmp.ne.s32.totalorder %s114, %s116
      %p123 = scmp.eq.s32.totalorder %s29, 3
      %p124 = por %p122, %p123
      %p125 = scmp.ne.s32.totalorder %s116, %s117
      %p126 = scmp.eq.s32.totalorder %s29, 0
      %p127 = por %p125, %p126
      %p128 = scmp.ne.s32.totalorder %s116, %s117
      %p129 = scmp.eq.s32.totalorder %s30, 3
      %p130 = por %p128, %p129
      %p132 = scmp.ne.s32.totalorder %s117, %s131
      %p133 = scmp.eq.s32.totalorder %s30, 0
      %p134 = por %p132, %p133
      %s136 = sadd.s32 %s135, 1
      %p139 = scmp.eq.s32.totalorder %s24, 3
      %p140 = scmp.ne.s32.totalorder %s135, %s137
      %p141 = scmp.eq.s32.totalorder %s24, 0
      %p142 = por %p140, %p141
      %p143 = scmp.ne.s32.totalorder %s135, %s137
      %p144 = scmp.eq.s32.totalorder %s29, 3
      %p145 = por %p143, %p144
      %p146 = scmp.ne.s32.totalorder %s137, %s138
      %p147 = scmp.eq.s32.totalorder %s29, 0
      %p148 = por %p146, %p147
      %p149 = scmp.ne.s32.totalorder %s137, %s138
      %p150 = scmp.eq.s32.totalorder %s30, 3
      %p151 = por %p149, %p150
      %p153 = scmp.ne.s32.totalorder %s138, %s152
      %p154 = scmp.eq.s32.totalorder %s30, 0
      %p155 = por %p153, %p154
      %s157 = sadd.s32 %s156, 1
      %p160 = scmp.eq.s32.totalorder %s24, 3
      %p161 = scmp.ne.s32.totalorder %s156, %s158
      %p162 = scmp.eq.s32.totalorder %s24, 0
      %p163 = por %p161, %p162
      %p164 = scmp.ne.s32.totalorder %s156, %s158
      %p165 = scmp.eq.s32.totalorder %s29, 3
      %p166 = por %p164, %p165
      %p167 = scmp.ne.s32.totalorder %s158, %s159
      %p168 = scmp.eq.s32.totalorder %s29, 0
      %p169 = por %p167, %p168
      %p170 = scmp.ne.s32.totalorder %s158, %s159
      %p171 = scmp.eq.s32.totalorder %s30, 3
      %p172 = por %p170, %p171
      %p174 = scmp.ne.s32.totalorder %s159, %s173
      %p175 = scmp.eq.s32.totalorder %s30, 0
      %p176 = por %p174, %p175
      %s178 = sadd.s32 %s177, 1
      %p181 = scmp.eq.s32.totalorder %s24, 3
      %p182 = scmp.ne.s32.totalorder %s177, %s179
      %p183 = scmp.eq.s32.totalorder %s24, 0
      %p184 = por %p182, %p183
      %p185 = scmp.ne.s32.totalorder %s177, %s179
      %p186 = scmp.eq.s32.totalorder %s29, 3
      %p187 = por %p185, %p186
      %p188 = scmp.ne.s32.totalorder %s179, %s180
      %p189 = scmp.eq.s32.totalorder %s29, 0
      %p190 = por %p188, %p189
      %p191 = scmp.ne.s32.totalorder %s179, %s180
      %p192 = scmp.eq.s32.totalorder %s30, 3
      %p193 = por %p191, %p192
      %p195 = scmp.ne.s32.totalorder %s180, %s194
      %p196 = scmp.eq.s32.totalorder %s30, 0
      %p197 = por %p195, %p196
      %s198 = ssub.s32 %s31, %s43
      %s199 = ssub.s32 %s32, %s39
      %s200 = sor.u32 %s198, %s199
      %p201 = scmp.eq.s32.totalorder %s200, 0
      %s203 = sadd.s32 %s202, 1
      %s204 = scalar_select %p201, %s202, %s203
      %p207 = pneg %p201
      %p208 = scmp.eq.s32.totalorder %s24, 3
      %p209 = por %p207, %p208
      %p210 = scmp.ne.s32.totalorder %s202, %s205
      %p211 = scmp.eq.s32.totalorder %s24, 0
      %p212 = por %p210, %p211
      %p213 = scmp.ne.s32.totalorder %s202, %s205
      %p214 = scmp.eq.s32.totalorder %s29, 3
      %p215 = por %p213, %p214
      %p216 = scmp.ne.s32.totalorder %s205, %s206
      %p217 = scmp.eq.s32.totalorder %s29, 0
      %p218 = por %p216, %p217
      %p219 = scmp.ne.s32.totalorder %s205, %s206
      %p220 = scmp.eq.s32.totalorder %s30, 3
      %p221 = por %p219, %p220
      %p223 = scmp.ne.s32.totalorder %s206, %s222
      %p224 = scmp.eq.s32.totalorder %s30, 0
      %p225 = por %p223, %p224
      %p226 = scmp.le.s32.totalorder 1, %s24
      %p227 = scmp.lt.s32.totalorder %s24, 5
      %p228 = pnand %p226, %p227
      %p229 = pneg %p228
      // Predicated region
      $region9: #{tpu_custom_call.1} parent=5 // pred_check
        _
      $region10: #{tpu_custom_call.1} parent=5 // pred_check_branch
        %231 = sbr.rel (%p228) target = $region12
      $region11: #{tpu_custom_call.1} parent=5 // pred_region
        %s232 = ssub.s32 %s24, 1
        // Predicated region
        $region13: #{tpu_custom_call.1} parent=11 // pred_check
          %p233 = pneg %p85
        $region14: #{tpu_custom_call.1} parent=11 // pred_check_branch
          %235 = sbr.rel (%p233) target = $region16
        $region15: #{tpu_custom_call.1} parent=11 // pred_region
          _
        $region16: #{tpu_custom_call.1} parent=11 // pred_fallthru
          _
        // Predicated region
        $region17: #{tpu_custom_call.1} parent=11 // pred_check
          %p236 = pneg %p106
        $region18: #{tpu_custom_call.1} parent=11 // pred_check_branch
          %238 = sbr.rel (%p236) target = $region20
        $region19: #{tpu_custom_call.1} parent=11 // pred_region
          %s240 = ssub.s32 512, 512
          %241 = vsyncadd [#allocation9], %s240
          %s242 = sshll.u32 [#allocation8], 4
          %s243 = int_to_ptr.vmem [resolvable:$true] %s242
          %248 = dma.hbm_to_vmem [thread:$0]  %s2, 512, %s243, [#allocation9], 64, 64, 4
        $region20: #{tpu_custom_call.1} parent=11 // pred_fallthru
          _
        // Predicated region
        $region21: #{tpu_custom_call.1} parent=11 // pred_check
          %p249 = pneg %p127
        $region22: #{tpu_custom_call.1} parent=11 // pred_check_branch
          %251 = sbr.rel (%p249) target = $region24
        $region23: #{tpu_custom_call.1} parent=11 // pred_region
          %s253 = ssub.s32 512, 512
          %254 = vsyncadd [#allocation9], %s253
          %s255 = sshll.u32 [#allocation10], 4
          %s256 = int_to_ptr.vmem [resolvable:$true] %s255
          %261 = dma.hbm_to_vmem [thread:$0]  %s3, 512, %s256, [#allocation9], 64, 64, 4
        $region24: #{tpu_custom_call.1} parent=11 // pred_fallthru
          _
        // Predicated region
        $region25: #{tpu_custom_call.1} parent=11 // pred_check
          %p262 = pneg %p148
        $region26: #{tpu_custom_call.1} parent=11 // pred_check_branch
          %264 = sbr.rel (%p262) target = $region28
        $region27: #{tpu_custom_call.1} parent=11 // pred_region
          %s266 = ssub.s32 512, 512
          %267 = vsyncadd [#allocation12], %s266
          %s268 = sshll.u32 [#allocation11], 4
          %s269 = int_to_ptr.vmem [resolvable:$true] %s268
          %274 = dma.hbm_to_vmem [thread:$0]  %s4, 512, %s269, [#allocation12], 64, 64, 4
        $region28: #{tpu_custom_call.1} parent=11 // pred_fallthru
          _
        // Predicated region
        $region29: #{tpu_custom_call.1} parent=11 // pred_check
          %p275 = pneg %p169
        $region30: #{tpu_custom_call.1} parent=11 // pred_check_branch
          %277 = sbr.rel (%p275) target = $region32
        $region31: #{tpu_custom_call.1} parent=11 // pred_region
          %s279 = ssub.s32 256, 256
          %280 = vsyncadd [#allocation12], %s279
          %s281 = sshll.u32 [#allocation13], 4
          %s282 = int_to_ptr.vmem [resolvable:$true] %s281
          %287 = dma.hbm_to_vmem [thread:$0]  %s5, 256, %s282, [#allocation12], 64, 64, 4
        $region32: #{tpu_custom_call.1} parent=11 // pred_fallthru
          _
        // Predicated region
        $region33: #{tpu_custom_call.1} parent=11 // pred_check
          %p288 = pneg %p190
        $region34: #{tpu_custom_call.1} parent=11 // pred_check_branch
          %290 = sbr.rel (%p288) target = $region36
        $region35: #{tpu_custom_call.1} parent=11 // pred_region
          %s292 = ssub.s32 16, 16
          %293 = vsyncadd [#allocation15], %s292
          %s295 = sshll.u32 [#allocation14], 4
          %s296 = int_to_ptr.vmem [resolvable:$true] %s295
          %298 = dma.hbm_to_vmem [thread:$0]  %s6, 16, %s296, [#allocation15]
        $region36: #{tpu_custom_call.1} parent=11 // pred_fallthru
          _
      $region12: #{tpu_custom_call.1} parent=5 // pred_fallthru
        _
      %p299 = scmp.lt.s32.totalorder %s24, 4
      // Predicated region
      $region37: #{tpu_custom_call.1} parent=5 // pred_check
        %p300 = pneg %p299
      $region38: #{tpu_custom_call.1} parent=5 // pred_check_branch
        %302 = sbr.rel (%p300) target = $region40
      $region39: #{tpu_custom_call.1} parent=5 // pred_region
        // Predicated region
        $region41: #{tpu_custom_call.1} parent=39 // pred_check
          %p303 = pneg %p58
        $region42: #{tpu_custom_call.1} parent=39 // pred_check_branch
          %305 = sbr.rel (%p303) target = $region44
        $region43: #{tpu_custom_call.1} parent=39 // pred_region
          %s306 = sand.u32 %s48, 1
          %s307 = scalar_lea.sflag [#allocation6], %s306
          %s308 = sand.u32 %s48, 1
          %s309 = smul.addr %s308, 256
          %s310 = scalar_lea.vmem [#allocation5], %s309
          %s311 = smul.u32 32, %s32
          %s313 = ssub.s32 4096, 4096
          %314 = vsyncadd %s307, %s313
          %s315 = smul.addr %s31, 64
          %s316 = sadd.s32 %s311, %s315
          %s317 = smul.addr %s316, 128
          %s318 = scalar_lea.hbm %s0, %s317
          %s319 = sshll.u32 %s310, 4
          %s320 = int_to_ptr.vmem [resolvable:$true] %s319
          %325 = dma.hbm_to_vmem [thread:$0]  %s318, 4096, %s320, %s307, 128, 128, 8
        $region44: #{tpu_custom_call.1} parent=39 // pred_fallthru
          _
      $region40: #{tpu_custom_call.1} parent=5 // pred_fallthru
        _
      %p326 = scmp.le.s32.totalorder 1, %s24
      %p327 = scmp.lt.s32.totalorder %s24, 5
      %p328 = pnand %p326, %p327
      %p329 = pneg %p328
      // Predicated region
      $region45: #{tpu_custom_call.1} parent=5 // pred_check
        _
      $region46: #{tpu_custom_call.1} parent=5 // pred_check_branch
        %331 = sbr.rel (%p328) target = $region48
      $region47: #{tpu_custom_call.1} parent=5 // pred_region
        %s332 = ssub.s32 %s24, 1
        %s333 = sand.u32 %s51, 1
        %s334 = scalar_lea.sflag [#allocation6], %s333
        %s335 = sand.u32 %s51, 1
        %s336 = smul.addr %s335, 256
        %s337 = scalar_lea.vmem [#allocation5], %s336
        // Predicated region
        $region49: #{tpu_custom_call.1} parent=47 // pred_check
          %p338 = pneg %p64
        $region50: #{tpu_custom_call.1} parent=47 // pred_check_branch
          %340 = sbr.rel (%p338) target = $region52
        $region51: #{tpu_custom_call.1} parent=47 // pred_region
          %341 = dma.done %s334, 4096
        $region52: #{tpu_custom_call.1} parent=47 // pred_fallthru
          _
        // Predicated region
        $region53: #{tpu_custom_call.1} parent=47 // pred_check
          %p342 = pneg %p106
        $region54: #{tpu_custom_call.1} parent=47 // pred_check_branch
          %344 = sbr.rel (%p342) target = $region56
        $region55: #{tpu_custom_call.1} parent=47 // pred_region
          %345 = dma.done [#allocation9], 512
        $region56: #{tpu_custom_call.1} parent=47 // pred_fallthru
          _
        // Predicated region
        $region57: #{tpu_custom_call.1} parent=47 // pred_check
          %p346 = pneg %p127
        $region58: #{tpu_custom_call.1} parent=47 // pred_check_branch
          %348 = sbr.rel (%p346) target = $region60
        $region59: #{tpu_custom_call.1} parent=47 // pred_region
          %349 = dma.done [#allocation9], 512
        $region60: #{tpu_custom_call.1} parent=47 // pred_fallthru
          _
        // Predicated region
        $region61: #{tpu_custom_call.1} parent=47 // pred_check
          %p350 = pneg %p148
        $region62: #{tpu_custom_call.1} parent=47 // pred_check_branch
          %352 = sbr.rel (%p350) target = $region64
        $region63: #{tpu_custom_call.1} parent=47 // pred_region
          %353 = dma.done [#allocation12], 512
        $region64: #{tpu_custom_call.1} parent=47 // pred_fallthru
          _
        // Predicated region
        $region65: #{tpu_custom_call.1} parent=47 // pred_check
          %p354 = pneg %p169
        $region66: #{tpu_custom_call.1} parent=47 // pred_check_branch
          %356 = sbr.rel (%p354) target = $region68
        $region67: #{tpu_custom_call.1} parent=47 // pred_region
          %357 = dma.done [#allocation12], 256
        $region68: #{tpu_custom_call.1} parent=47 // pred_fallthru
          _
        // Predicated region
        $region69: #{tpu_custom_call.1} parent=47 // pred_check
          %p358 = pneg %p190
        $region70: #{tpu_custom_call.1} parent=47 // pred_check_branch
          %360 = sbr.rel (%p358) target = $region72
        $region71: #{tpu_custom_call.1} parent=47 // pred_region
          %361 = dma.done [#allocation15], 16
        $region72: #{tpu_custom_call.1} parent=47 // pred_fallthru
          _
        %s362 = sand.u32 %s51, 1
        %s363 = scalar_lea.sflag [#allocation6], %s362
        %s364 = sand.u32 %s51, 1
        %s365 = smul.addr %s364, 256
        %s366 = scalar_lea.vmem [#allocation5], %s365
        %p367 = pneg %p64
        %p368 = pneg %p61
        %p369 = pneg %p85
        %p370 = pneg %p82
        %p371 = pneg %p106
        %p372 = pneg %p103
        %p373 = pneg %p127
        %p374 = pneg %p124
        %p375 = pneg %p148
        %p376 = pneg %p145
        %p377 = pneg %p169
        %p378 = pneg %p166
        %p379 = pneg %p190
        %p380 = pneg %p187
        %p381 = pneg %p218
        %p382 = pneg %p215
        %s383 = sand.u32 %s205, 1
        %s384 = scalar_lea.sflag [#allocation7], %s383
        %s385 = sand.u32 %s205, 1
        %s386 = smul.addr %s385, 256
        %s387 = scalar_lea.vmem [#allocation16], %s386
        %s388 = smul.u32 32, %s34
        %s389 = smul.u32 32, %s34
        %s391 = smul.u32 %s34, 256
        %v392 = vld [vmem:[%s337] sm:$0xff]
        %v393 = vld [vmem:[%s337 + $0x8] sm:$0xff]
        %v394 = vld [vmem:[%s337 + $0x10] sm:$0xff]
        %v395 = vld [vmem:[%s337 + $0x18] sm:$0xff]
        %v396 = vld [vmem:[%s337 + $0x20] sm:$0xff]
        %v397 = vld [vmem:[%s337 + $0x28] sm:$0xff]
        %v398 = vld [vmem:[%s337 + $0x30] sm:$0xff]
        %v399 = vld [vmem:[%s337 + $0x38] sm:$0xff]
        %v400 = vld [vmem:[%s337 + $0x40] sm:$0xff]
        %v401 = vld [vmem:[%s337 + $0x48] sm:$0xff]
        %v402 = vld [vmem:[%s337 + $0x50] sm:$0xff]
        %v403 = vld [vmem:[%s337 + $0x58] sm:$0xff]
        %v404 = vld [vmem:[%s337 + $0x60] sm:$0xff]
        %v405 = vld [vmem:[%s337 + $0x68] sm:$0xff]
        %v406 = vld [vmem:[%s337 + $0x70] sm:$0xff]
        %v407 = vld [vmem:[%s337 + $0x78] sm:$0xff]
        %v408 = vld [vmem:[%s337 + $0x80] sm:$0xff]
        %v409 = vld [vmem:[%s337 + $0x88] sm:$0xff]
        %v410 = vld [vmem:[%s337 + $0x90] sm:$0xff]
        %v411 = vld [vmem:[%s337 + $0x98] sm:$0xff]
        %v412 = vld [vmem:[%s337 + $0xa0] sm:$0xff]
        %v413 = vld [vmem:[%s337 + $0xa8] sm:$0xff]
        %v414 = vld [vmem:[%s337 + $0xb0] sm:$0xff]
        %v415 = vld [vmem:[%s337 + $0xb8] sm:$0xff]
        %v416 = vld [vmem:[%s337 + $0xc0] sm:$0xff]
        %v417 = vld [vmem:[%s337 + $0xc8] sm:$0xff]
        %v418 = vld [vmem:[%s337 + $0xd0] sm:$0xff]
        %v419 = vld [vmem:[%s337 + $0xd8] sm:$0xff]
        %v420 = vld [vmem:[%s337 + $0xe0] sm:$0xff]
        %v421 = vld [vmem:[%s337 + $0xe8] sm:$0xff]
        %v422 = vld [vmem:[%s337 + $0xf0] sm:$0xff]
        %v423 = vld [vmem:[%s337 + $0xf8] sm:$0xff]
        %v424 = vld [vmem:[#allocation4] sm:$0x1]
        %v425 = vmul.f32 %v392, %v392
        %v426 = vmul.f32 %v393, %v393
        %v427 = vmul.f32 %v394, %v394
        %v428 = vmul.f32 %v395, %v395
        %v429 = vmul.f32 %v396, %v396
        %v430 = vmul.f32 %v397, %v397
        %v431 = vmul.f32 %v398, %v398
        %v432 = vmul.f32 %v399, %v399
        %v433 = vmul.f32 %v400, %v400
        %v434 = vmul.f32 %v401, %v401
        %v435 = vmul.f32 %v402, %v402
        %v436 = vmul.f32 %v403, %v403
        %v437 = vmul.f32 %v404, %v404
        %v438 = vmul.f32 %v405, %v405
        %v439 = vmul.f32 %v406, %v406
        %v440 = vmul.f32 %v407, %v407
        %v441 = vmul.f32 %v408, %v408
        %v442 = vmul.f32 %v409, %v409
        %v443 = vmul.f32 %v410, %v410
        %v444 = vmul.f32 %v411, %v411
        %v445 = vmul.f32 %v412, %v412
        %v446 = vmul.f32 %v413, %v413
        %v447 = vmul.f32 %v414, %v414
        %v448 = vmul.f32 %v415, %v415
        %v449 = vmul.f32 %v416, %v416
        %v450 = vmul.f32 %v417, %v417
        %v451 = vmul.f32 %v418, %v418
        %v452 = vmul.f32 %v419, %v419
        %v453 = vmul.f32 %v420, %v420
        %v454 = vmul.f32 %v421, %v421
        %v455 = vmul.f32 %v422, %v422
        %v456 = vmul.f32 %v423, %v423
        %vm457 = vcmask 261120
        %v458 = vsel %vm457, %v425, 0.0
        %459 = vadd.xlane.f32.xlu0 %v458
        %v460 = vpop.xlane.xlu0 %459
        %v461 = vsel %vm457, %v426, 0.0
        %462 = vadd.xlane.f32.xlu0 %v461
        %v463 = vpop.xlane.xlu0 %462
        %v464 = vsel %vm457, %v427, 0.0
        %465 = vadd.xlane.f32.xlu0 %v464
        %v466 = vpop.xlane.xlu0 %465
        %v467 = vsel %vm457, %v428, 0.0
        %468 = vadd.xlane.f32.xlu0 %v467
        %v469 = vpop.xlane.xlu0 %468
        %v470 = vsel %vm457, %v429, 0.0
        %471 = vadd.xlane.f32.xlu0 %v470
        %v472 = vpop.xlane.xlu0 %471
        %v473 = vsel %vm457, %v430, 0.0
        %474 = vadd.xlane.f32.xlu0 %v473
        %v475 = vpop.xlane.xlu0 %474
        %v476 = vsel %vm457, %v431, 0.0
        %477 = vadd.xlane.f32.xlu0 %v476
        %v478 = vpop.xlane.xlu0 %477
        %v479 = vsel %vm457, %v432, 0.0
        %480 = vadd.xlane.f32.xlu0 %v479
        %v481 = vpop.xlane.xlu0 %480
        %v482 = vsel %vm457, %v433, 0.0
        %483 = vadd.xlane.f32.xlu0 %v482
        %v484 = vpop.xlane.xlu0 %483
        %v485 = vsel %vm457, %v434, 0.0
        %486 = vadd.xlane.f32.xlu0 %v485
        %v487 = vpop.xlane.xlu0 %486
        %v488 = vsel %vm457, %v435, 0.0
        %489 = vadd.xlane.f32.xlu0 %v488
        %v490 = vpop.xlane.xlu0 %489
        %v491 = vsel %vm457, %v436, 0.0
        %492 = vadd.xlane.f32.xlu0 %v491
        %v493 = vpop.xlane.xlu0 %492
        %v494 = vsel %vm457, %v437, 0.0
        %495 = vadd.xlane.f32.xlu0 %v494
        %v496 = vpop.xlane.xlu0 %495
        %v497 = vsel %vm457, %v438, 0.0
        %498 = vadd.xlane.f32.xlu0 %v497
        %v499 = vpop.xlane.xlu0 %498
        %v500 = vsel %vm457, %v439, 0.0
        %501 = vadd.xlane.f32.xlu0 %v500
        %v502 = vpop.xlane.xlu0 %501
        %v503 = vsel %vm457, %v440, 0.0
        %504 = vadd.xlane.f32.xlu0 %v503
        %v505 = vpop.xlane.xlu0 %504
        %v506 = vsel %vm457, %v441, 0.0
        %507 = vadd.xlane.f32.xlu0 %v506
        %v508 = vpop.xlane.xlu0 %507
        %v509 = vsel %vm457, %v442, 0.0
        %510 = vadd.xlane.f32.xlu0 %v509
        %v511 = vpop.xlane.xlu0 %510
        %v512 = vsel %vm457, %v443, 0.0
        %513 = vadd.xlane.f32.xlu0 %v512
        %v514 = vpop.xlane.xlu0 %513
        %v515 = vsel %vm457, %v444, 0.0
        %516 = vadd.xlane.f32.xlu0 %v515
        %v517 = vpop.xlane.xlu0 %516
        %v518 = vsel %vm457, %v445, 0.0
        %519 = vadd.xlane.f32.xlu0 %v518
        %v520 = vpop.xlane.xlu0 %519
        %v521 = vsel %vm457, %v446, 0.0
        %522 = vadd.xlane.f32.xlu0 %v521
        %v523 = vpop.xlane.xlu0 %522
        %v524 = vsel %vm457, %v447, 0.0
        %525 = vadd.xlane.f32.xlu0 %v524
        %v526 = vpop.xlane.xlu0 %525
        %v527 = vsel %vm457, %v448, 0.0
        %528 = vadd.xlane.f32.xlu0 %v527
        %v529 = vpop.xlane.xlu0 %528
        %v530 = vsel %vm457, %v449, 0.0
        %531 = vadd.xlane.f32.xlu0 %v530
        %v532 = vpop.xlane.xlu0 %531
        %v533 = vsel %vm457, %v450, 0.0
        %534 = vadd.xlane.f32.xlu0 %v533
        %v535 = vpop.xlane.xlu0 %534
        %v536 = vsel %vm457, %v451, 0.0
        %537 = vadd.xlane.f32.xlu0 %v536
        %v538 = vpop.xlane.xlu0 %537
        %v539 = vsel %vm457, %v452, 0.0
        %540 = vadd.xlane.f32.xlu0 %v539
        %v541 = vpop.xlane.xlu0 %540
        %v542 = vsel %vm457, %v453, 0.0
        %543 = vadd.xlane.f32.xlu0 %v542
        %v544 = vpop.xlane.xlu0 %543
        %v545 = vsel %vm457, %v454, 0.0
        %546 = vadd.xlane.f32.xlu0 %v545
        %v547 = vpop.xlane.xlu0 %546
        %v548 = vsel %vm457, %v455, 0.0
        %549 = vadd.xlane.f32.xlu0 %v548
        %v550 = vpop.xlane.xlu0 %549
        %v551 = vsel %vm457, %v456, 0.0
        %552 = vadd.xlane.f32.xlu0 %v551
        %v553 = vpop.xlane.xlu0 %552
        %v554 = vmax.f32 %v460, 1e-10
        %v555 = vmax.f32 %v463, 1e-10
        %v556 = vmax.f32 %v466, 1e-10
        %v557 = vmax.f32 %v469, 1e-10
        %v558 = vmax.f32 %v472, 1e-10
        %v559 = vmax.f32 %v475, 1e-10
        %v560 = vmax.f32 %v478, 1e-10
        %v561 = vmax.f32 %v481, 1e-10
        %v562 = vmax.f32 %v484, 1e-10
        %v563 = vmax.f32 %v487, 1e-10
        %v564 = vmax.f32 %v490, 1e-10
        %v565 = vmax.f32 %v493, 1e-10
        %v566 = vmax.f32 %v496, 1e-10
        %v567 = vmax.f32 %v499, 1e-10
        %v568 = vmax.f32 %v502, 1e-10
        %v569 = vmax.f32 %v505, 1e-10
        %v570 = vmax.f32 %v508, 1e-10
        %v571 = vmax.f32 %v511, 1e-10
        %v572 = vmax.f32 %v514, 1e-10
        %v573 = vmax.f32 %v517, 1e-10
        %v574 = vmax.f32 %v520, 1e-10
        %v575 = vmax.f32 %v523, 1e-10
        %v576 = vmax.f32 %v526, 1e-10
        %v577 = vmax.f32 %v529, 1e-10
        %v578 = vmax.f32 %v532, 1e-10
        %v579 = vmax.f32 %v535, 1e-10
        %v580 = vmax.f32 %v538, 1e-10
        %v581 = vmax.f32 %v541, 1e-10
        %v582 = vmax.f32 %v544, 1e-10
        %v583 = vmax.f32 %v547, 1e-10
        %v584 = vmax.f32 %v550, 1e-10
        %v585 = vmax.f32 %v553, 1e-10
        %v586 = vrsqrt.pop %v554
        %v587 = vrsqrt.pop %v555
        %v588 = vrsqrt.pop %v556
        %v589 = vrsqrt.pop %v557
        %v590 = vrsqrt.pop %v558
        %v591 = vrsqrt.pop %v559
        %v592 = vrsqrt.pop %v560
        %v593 = vrsqrt.pop %v561
        %v594 = vrsqrt.pop %v562
        %v595 = vrsqrt.pop %v563
        %v596 = vrsqrt.pop %v564
        %v597 = vrsqrt.pop %v565
        %v598 = vrsqrt.pop %v566
        %v599 = vrsqrt.pop %v567
        %v600 = vrsqrt.pop %v568
        %v601 = vrsqrt.pop %v569
        %v602 = vrsqrt.pop %v570
        %v603 = vrsqrt.pop %v571
        %v604 = vrsqrt.pop %v572
        %v605 = vrsqrt.pop %v573
        %v606 = vrsqrt.pop %v574
        %v607 = vrsqrt.pop %v575
        %v608 = vrsqrt.pop %v576
        %v609 = vrsqrt.pop %v577
        %v610 = vrsqrt.pop %v578
        %v611 = vrsqrt.pop %v579
        %v612 = vrsqrt.pop %v580
        %v613 = vrsqrt.pop %v581
        %v614 = vrsqrt.pop %v582
        %v615 = vrsqrt.pop %v583
        %v616 = vrsqrt.pop %v584
        %v617 = vrsqrt.pop %v585
        %v618 = vmul.f32 %v392, %v586
        %v619 = vmul.f32 %v393, %v587
        %v620 = vmul.f32 %v394, %v588
        %v621 = vmul.f32 %v395, %v589
        %v622 = vmul.f32 %v396, %v590
        %v623 = vmul.f32 %v397, %v591
        %v624 = vmul.f32 %v398, %v592
        %v625 = vmul.f32 %v399, %v593
        %v626 = vmul.f32 %v400, %v594
        %v627 = vmul.f32 %v401, %v595
        %v628 = vmul.f32 %v402, %v596
        %v629 = vmul.f32 %v403, %v597
        %v630 = vmul.f32 %v404, %v598
        %v631 = vmul.f32 %v405, %v599
        %v632 = vmul.f32 %v406, %v600
        %v633 = vmul.f32 %v407, %v601
        %v634 = vmul.f32 %v408, %v602
        %v635 = vmul.f32 %v409, %v603
        %v636 = vmul.f32 %v410, %v604
        %v637 = vmul.f32 %v411, %v605
        %v638 = vmul.f32 %v412, %v606
        %v639 = vmul.f32 %v413, %v607
        %v640 = vmul.f32 %v414, %v608
        %v641 = vmul.f32 %v415, %v609
        %v642 = vmul.f32 %v416, %v610
        %v643 = vmul.f32 %v417, %v611
        %v644 = vmul.f32 %v418, %v612
        %v645 = vmul.f32 %v419, %v613
        %v646 = vmul.f32 %v420, %v614
        %v647 = vmul.f32 %v421, %v615
        %v648 = vmul.f32 %v422, %v616
        %v649 = vmul.f32 %v423, %v617
        %v651 = vlaneseq
        %v652 = vshrl.u32 %v651, 7
        %v653 = vsub.s32 0, %v652
        %v654 = vrot.slane %v424, %v653
        %655 = vset.pattern.permute.xlu0 0
        %656 = vperm.xlu0 %655, %v654
        %v657 = vpop.permute.xlu0 %656
        %v659 = vmul.f32 %v618, %v657
        %v660 = vmul.f32 %v619, %v657
        %v661 = vmul.f32 %v620, %v657
        %v662 = vmul.f32 %v621, %v657
        %v663 = vmul.f32 %v622, %v657
        %v664 = vmul.f32 %v623, %v657
        %v665 = vmul.f32 %v624, %v657
        %v666 = vmul.f32 %v625, %v657
        %v667 = vmul.f32 %v626, %v657
        %v668 = vmul.f32 %v627, %v657
        %v669 = vmul.f32 %v628, %v657
        %v670 = vmul.f32 %v629, %v657
        %v671 = vmul.f32 %v630, %v657
        %v672 = vmul.f32 %v631, %v657
        %v673 = vmul.f32 %v632, %v657
        %v674 = vmul.f32 %v633, %v657
        %v675 = vmul.f32 %v634, %v657
        %v676 = vmul.f32 %v635, %v657
        %v677 = vmul.f32 %v636, %v657
        %v678 = vmul.f32 %v637, %v657
        %v679 = vmul.f32 %v638, %v657
        %v680 = vmul.f32 %v639, %v657
        %v681 = vmul.f32 %v640, %v657
        %v682 = vmul.f32 %v641, %v657
        %v683 = vmul.f32 %v642, %v657
        %v684 = vmul.f32 %v643, %v657
        %v685 = vmul.f32 %v644, %v657
        %v686 = vmul.f32 %v645, %v657
        %v687 = vmul.f32 %v646, %v657
        %v688 = vmul.f32 %v647, %v657
        %v689 = vmul.f32 %v648, %v657
        %v690 = vmul.f32 %v649, %v657
        %v691 = vpack.c.bf16 %v660, %v659
        %v692 = vpack.c.bf16 %v662, %v661
        %v693 = vpack.c.bf16 %v664, %v663
        %v694 = vpack.c.bf16 %v666, %v665
        %v695 = vpack.c.bf16 %v668, %v667
        %v696 = vpack.c.bf16 %v670, %v669
        %v697 = vpack.c.bf16 %v672, %v671
        %v698 = vpack.c.bf16 %v674, %v673
        %v699 = vpack.c.bf16 %v676, %v675
        %v700 = vpack.c.bf16 %v678, %v677
        %v701 = vpack.c.bf16 %v680, %v679
        %v702 = vpack.c.bf16 %v682, %v681
        %v703 = vpack.c.bf16 %v684, %v683
        %v704 = vpack.c.bf16 %v686, %v685
        %v705 = vpack.c.bf16 %v688, %v687
        %v706 = vpack.c.bf16 %v690, %v689
        %v707 = vlaneseq
        %v708 = vshrl.u32 %v707, 7
        %v709 = vadd.s32 %v708, 8
        %v710 = vadd.s32 %v708, 16
        %v711 = vadd.s32 %v708, 24
        %v712 = vadd.s32 %v708, 32
        %v713 = vadd.s32 %v708, 40
        %v714 = vadd.s32 %v708, 48
        %v715 = vadd.s32 %v708, 56
        %v716 = vadd.s32 %v708, 64
        %v717 = vadd.s32 %v708, 72
        %v718 = vadd.s32 %v708, 80
        %v719 = vadd.s32 %v708, 88
        %v720 = vadd.s32 %v708, 96
        %v721 = vadd.s32 %v708, 104
        %v722 = vadd.s32 %v708, 112
        %v723 = vadd.s32 %v708, 120
        %v724 = vadd.s32 %v708, 128
        %v725 = vadd.s32 %v708, 136
        %v726 = vadd.s32 %v708, 144
        %v727 = vadd.s32 %v708, 152
        %v728 = vadd.s32 %v708, 160
        %v729 = vadd.s32 %v708, 168
        %v730 = vadd.s32 %v708, 176
        %v731 = vadd.s32 %v708, 184
        %v732 = vadd.s32 %v708, 192
        %v733 = vadd.s32 %v708, 200
        %v734 = vadd.s32 %v708, 208
        %v735 = vadd.s32 %v708, 216
        %v736 = vadd.s32 %v708, 224
        %v737 = vadd.s32 %v708, 232
        %v738 = vadd.s32 %v708, 240
        %v739 = vadd.s32 %v708, 248
        %v740 = vlaneseq
        %v741 = vand.u32 %v740, 127
        %v742 = vadd.s32 %v741, 128
        %vm743 = vcmp.gt.s32.totalorder %v741, %v708
        %vm744 = vcmp.gt.s32.totalorder %v742, %v708
        %vm745 = vcmp.gt.s32.totalorder %v741, %v709
        %vm746 = vcmp.gt.s32.totalorder %v742, %v709
        %vm747 = vcmp.gt.s32.totalorder %v741, %v710
        %vm748 = vcmp.gt.s32.totalorder %v742, %v710
        %vm749 = vcmp.gt.s32.totalorder %v741, %v711
        %vm750 = vcmp.gt.s32.totalorder %v742, %v711
        %vm751 = vcmp.gt.s32.totalorder %v741, %v712
        %vm752 = vcmp.gt.s32.totalorder %v742, %v712
        %vm753 = vcmp.gt.s32.totalorder %v741, %v713
        %vm754 = vcmp.gt.s32.totalorder %v742, %v713
        %vm755 = vcmp.gt.s32.totalorder %v741, %v714
        %vm756 = vcmp.gt.s32.totalorder %v742, %v714
        %vm757 = vcmp.gt.s32.totalorder %v741, %v715
        %vm758 = vcmp.gt.s32.totalorder %v742, %v715
        %vm759 = vcmp.gt.s32.totalorder %v741, %v716
        %vm760 = vcmp.gt.s32.totalorder %v742, %v716
        %vm761 = vcmp.gt.s32.totalorder %v741, %v717
        %vm762 = vcmp.gt.s32.totalorder %v742, %v717
        %vm763 = vcmp.gt.s32.totalorder %v741, %v718
        %vm764 = vcmp.gt.s32.totalorder %v742, %v718
        %vm765 = vcmp.gt.s32.totalorder %v741, %v719
        %vm766 = vcmp.gt.s32.totalorder %v742, %v719
        %vm767 = vcmp.gt.s32.totalorder %v741, %v720
        %vm768 = vcmp.gt.s32.totalorder %v742, %v720
        %vm769 = vcmp.gt.s32.totalorder %v741, %v721
        %vm770 = vcmp.gt.s32.totalorder %v742, %v721
        %vm771 = vcmp.gt.s32.totalorder %v741, %v722
        %vm772 = vcmp.gt.s32.totalorder %v742, %v722
        %vm773 = vcmp.gt.s32.totalorder %v741, %v723
        %vm774 = vcmp.gt.s32.totalorder %v742, %v723
        %vm775 = vcmp.gt.s32.totalorder %v741, %v724
        %vm776 = vcmp.gt.s32.totalorder %v742, %v724
        %vm777 = vcmp.gt.s32.totalorder %v741, %v725
        %vm778 = vcmp.gt.s32.totalorder %v742, %v725
        %vm779 = vcmp.gt.s32.totalorder %v741, %v726
        %vm780 = vcmp.gt.s32.totalorder %v742, %v726
        %vm781 = vcmp.gt.s32.totalorder %v741, %v727
        %vm782 = vcmp.gt.s32.totalorder %v742, %v727
        %vm783 = vcmp.gt.s32.totalorder %v741, %v728
        %vm784 = vcmp.gt.s32.totalorder %v742, %v728
        %vm785 = vcmp.gt.s32.totalorder %v741, %v729
        %vm786 = vcmp.gt.s32.totalorder %v742, %v729
        %vm787 = vcmp.gt.s32.totalorder %v741, %v730
        %vm788 = vcmp.gt.s32.totalorder %v742, %v730
        %vm789 = vcmp.gt.s32.totalorder %v741, %v731
        %vm790 = vcmp.gt.s32.totalorder %v742, %v731
        %vm791 = vcmp.gt.s32.totalorder %v741, %v732
        %vm792 = vcmp.gt.s32.totalorder %v742, %v732
        %vm793 = vcmp.gt.s32.totalorder %v741, %v733
        %vm794 = vcmp.gt.s32.totalorder %v742, %v733
        %vm795 = vcmp.gt.s32.totalorder %v741, %v734
        %vm796 = vcmp.gt.s32.totalorder %v742, %v734
        %vm797 = vcmp.gt.s32.totalorder %v741, %v735
        %vm798 = vcmp.gt.s32.totalorder %v742, %v735
        %vm799 = vcmp.gt.s32.totalorder %v741, %v736
        %vm800 = vcmp.gt.s32.totalorder %v742, %v736
        %vm801 = vcmp.gt.s32.totalorder %v741, %v737
        %vm802 = vcmp.gt.s32.totalorder %v742, %v737
        %vm803 = vcmp.gt.s32.totalorder %v741, %v738
        %vm804 = vcmp.gt.s32.totalorder %v742, %v738
        %vm805 = vcmp.gt.s32.totalorder %v741, %v739
        %vm806 = vcmp.gt.s32.totalorder %v742, %v739
        %v807 = vld [vmem:[#allocation14] sm:$0x1]
        %v809 = vlaneseq
        %v810 = vshrl.u32 %v809, 7
        %v811 = vsub.s32 0, %v810
        %v812 = vrot.slane %v807, %v811
        %v814 = vadd.f32 %v392, %v812
        %v815 = vadd.f32 %v393, %v812
        %v816 = vadd.f32 %v394, %v812
        %v817 = vadd.f32 %v395, %v812
        %v818 = vadd.f32 %v396, %v812
        %v819 = vadd.f32 %v397, %v812
        %v820 = vadd.f32 %v398, %v812
        %v821 = vadd.f32 %v399, %v812
        %v822 = vadd.f32 %v400, %v812
        %v823 = vadd.f32 %v401, %v812
        %v824 = vadd.f32 %v402, %v812
        %v825 = vadd.f32 %v403, %v812
        %v826 = vadd.f32 %v404, %v812
        %v827 = vadd.f32 %v405, %v812
        %v828 = vadd.f32 %v406, %v812
        %v829 = vadd.f32 %v407, %v812
        %v830 = vadd.f32 %v408, %v812
        %v831 = vadd.f32 %v409, %v812
        %v832 = vadd.f32 %v410, %v812
        %v833 = vadd.f32 %v411, %v812
        %v834 = vadd.f32 %v412, %v812
        %v835 = vadd.f32 %v413, %v812
        %v836 = vadd.f32 %v414, %v812
        %v837 = vadd.f32 %v415, %v812
        %v838 = vadd.f32 %v416, %v812
        %v839 = vadd.f32 %v417, %v812
        %v840 = vadd.f32 %v418, %v812
        %v841 = vadd.f32 %v419, %v812
        %v842 = vadd.f32 %v420, %v812
        %v843 = vadd.f32 %v421, %v812
        %v844 = vadd.f32 %v422, %v812
        %v845 = vadd.f32 %v423, %v812
        %v846 = vld [vmem:[#allocation8] sm:$0xf]
        %v847 = vld [vmem:[#allocation8 + $0x4] sm:$0xf]
        %v848 = vld [vmem:[#allocation8 + $0x8] sm:$0xf]
        %v849 = vld [vmem:[#allocation8 + $0xc] sm:$0xf]
        %v854 = vunpack.c.l.b16 %v846
        %v855 = vunpack.c.l.b16 %v847
        %v856 = vunpack.c.l.b16 %v848
        %v857 = vunpack.c.l.b16 %v849
        %v858 = vpack.c.b16 %v855, %v854
        %v859 = vpack.c.b16 %v857, %v856
        %v863 = vsel %vm457, %v691, 0
        %v866 = vsel %vm457, %v692, 0
        %v869 = vsel %vm457, %v693, 0
        %v872 = vsel %vm457, %v694, 0
        %v875 = vsel %vm457, %v695, 0
        %v878 = vsel %vm457, %v696, 0
        %v881 = vsel %vm457, %v697, 0
        %v884 = vsel %vm457, %v698, 0
        %v887 = vsel %vm457, %v699, 0
        %v890 = vsel %vm457, %v700, 0
        %v893 = vsel %vm457, %v701, 0
        %v896 = vsel %vm457, %v702, 0
        %v899 = vsel %vm457, %v703, 0
        %v902 = vsel %vm457, %v704, 0
        %v905 = vsel %vm457, %v705, 0
        %v908 = vsel %vm457, %v706, 0
        %910 = vmatprep.subr.bf16.mxu0 0
        %911 = vmatpush1.bf16.msra.mxu0 %v858
        %912 = vmatprep.subr.bf16.mxu0 0
        %913 = vmatpush1.bf16.msra.mxu0 %v859
        %914 = vmatprep.subr.bf16.mxu0 0
        %915 = vmatpush1.bf16.msra.mxu0 0
        %916 = vmatprep.subr.bf16.mxu0 0
        %917 = vmatpush1.bf16.msra.mxu0 0
        %918 = vmatprep.subr.bf16.mxu0 0
        %919 = vmatpush1.bf16.msra.mxu0 0
        %920 = vmatprep.subr.bf16.mxu0 0
        %921 = vmatpush1.bf16.msra.mxu0 0
        %922 = vmatprep.subr.bf16.mxu0 0
        %923 = vmatpush1.bf16.msra.mxu0 0
        %924 = vmatprep.subr.bf16.mxu0 0
        %925 = vmatpush1.bf16.msra.mxu0 0
        %926 = vmatprep.subr.bf16.mxu0 0
        %927 = vmatpush1.bf16.msra.mxu0 0
        %928 = vmatprep.subr.bf16.mxu0 0
        %929 = vmatpush1.bf16.msra.mxu0 0
        %930 = vmatprep.subr.bf16.mxu0 0
        %931 = vmatpush1.bf16.msra.mxu0 0
        %932 = vmatprep.subr.bf16.mxu0 0
        %933 = vmatpush1.bf16.msra.mxu0 0
        %934 = vmatprep.subr.bf16.mxu0 0
        %935 = vmatpush1.bf16.msra.mxu0 0
        %936 = vmatprep.subr.bf16.mxu0 0
        %937 = vmatpush1.bf16.msra.mxu0 0
        %938 = vmatprep.subr.bf16.mxu0 0
        %939 = vmatpush1.bf16.msra.mxu0 0
        %940 = vmatprep.subr.bf16.mxu0 0
        %941 = vmatpush1.bf16.msra.mxu0 0
        %942 = vmatprep.mubr.bf16.mxu0 0
        %943 = vmatmul.mubr.bf16.gmra.mrb[0].mxu0 %v863
        %v944 = vpop.f32.mrb[0].mxu0
        %v945 = vadd.f32 0.0, %v944
        %v946 = vpop.f32.mrb[0].mxu0
        %v947 = vpop.f32.mrb[0].mxu0
        %v948 = vadd.f32 0.0, %v947
        %v949 = vpop.f32.mrb[0].mxu0
        %950 = vmatprep.mubr.bf16.mxu0 0
        %951 = vmatmul.mubr.bf16.gmra.mrb[0].mxu0 %v866
        %v952 = vpop.f32.mrb[0].mxu0
        %v953 = vadd.f32 0.0, %v952
        %v954 = vpop.f32.mrb[0].mxu0
        %v955 = vpop.f32.mrb[0].mxu0
        %v956 = vadd.f32 0.0, %v955
        %v957 = vpop.f32.mrb[0].mxu0
        %958 = vmatprep.mubr.bf16.mxu0 0
        %959 = vmatmul.mubr.bf16.gmra.mrb[0].mxu0 %v869
        %v960 = vpop.f32.mrb[0].mxu0
        %v961 = vadd.f32 0.0, %v960
        %v962 = vpop.f32.mrb[0].mxu0
        %v963 = vpop.f32.mrb[0].mxu0
        %v964 = vadd.f32 0.0, %v963
        %v965 = vpop.f32.mrb[0].mxu0
        %966 = vmatprep.mubr.bf16.mxu0 0
        %967 = vmatmul.mubr.bf16.gmra.mrb[0].mxu0 %v872
        %v968 = vpop.f32.mrb[0].mxu0
        %v969 = vadd.f32 0.0, %v968
        %v970 = vpop.f32.mrb[0].mxu0
        %v971 = vpop.f32.mrb[0].mxu0
        %v972 = vadd.f32 0.0, %v971
        %v973 = vpop.f32.mrb[0].mxu0
        %974 = vmatprep.mubr.bf16.mxu0 0
        %975 = vmatmul.mubr.bf16.gmra.mrb[0].mxu0 %v875
        %v976 = vpop.f32.mrb[0].mxu0
        %v977 = vadd.f32 0.0, %v976
        %v978 = vpop.f32.mrb[0].mxu0
        %v979 = vpop.f32.mrb[0].mxu0
        %v980 = vadd.f32 0.0, %v979
        %v981 = vpop.f32.mrb[0].mxu0
        %982 = vmatprep.mubr.bf16.mxu0 0
        %983 = vmatmul.mubr.bf16.gmra.mrb[0].mxu0 %v878
        %v984 = vpop.f32.mrb[0].mxu0
        %v985 = vadd.f32 0.0, %v984
        %v986 = vpop.f32.mrb[0].mxu0
        %v987 = vpop.f32.mrb[0].mxu0
        %v988 = vadd.f32 0.0, %v987
        %v989 = vpop.f32.mrb[0].mxu0
        %990 = vmatprep.mubr.bf16.mxu0 0
        %991 = vmatmul.mubr.bf16.gmra.mrb[0].mxu0 %v881
        %v992 = vpop.f32.mrb[0].mxu0
        %v993 = vadd.f32 0.0, %v992
        %v994 = vpop.f32.mrb[0].mxu0
        %v995 = vpop.f32.mrb[0].mxu0
        %v996 = vadd.f32 0.0, %v995
        %v997 = vpop.f32.mrb[0].mxu0
        %998 = vmatprep.mubr.bf16.mxu0 0
        %999 = vmatmul.mubr.bf16.gmra.mrb[0].mxu0 %v884
        %v1000 = vpop.f32.mrb[0].mxu0
        %v1001 = vadd.f32 0.0, %v1000
        %v1002 = vpop.f32.mrb[0].mxu0
        %v1003 = vpop.f32.mrb[0].mxu0
        %v1004 = vadd.f32 0.0, %v1003
        %v1005 = vpop.f32.mrb[0].mxu0
        %1006 = vmatprep.mubr.bf16.mxu0 0
        %1007 = vmatmul.mubr.bf16.gmra.mrb[0].mxu0 %v887
        %v1008 = vpop.f32.mrb[0].mxu0
        %v1009 = vadd.f32 0.0, %v1008
        %v1010 = vpop.f32.mrb[0].mxu0
        %v1011 = vpop.f32.mrb[0].mxu0
        %v1012 = vadd.f32 0.0, %v1011
        %v1013 = vpop.f32.mrb[0].mxu0
        %1014 = vmatprep.mubr.bf16.mxu0 0
        %1015 = vmatmul.mubr.bf16.gmra.mrb[0].mxu0 %v890
        %v1016 = vpop.f32.mrb[0].mxu0
        %v1017 = vadd.f32 0.0, %v1016
        %v1018 = vpop.f32.mrb[0].mxu0
        %v1019 = vpop.f32.mrb[0].mxu0
        %v1020 = vadd.f32 0.0, %v1019
        %v1021 = vpop.f32.mrb[0].mxu0
        %1022 = vmatprep.mubr.bf16.mxu0 0
        %1023 = vmatmul.mubr.bf16.gmra.mrb[0].mxu0 %v893
        %v1024 = vpop.f32.mrb[0].mxu0
        %v1025 = vadd.f32 0.0, %v1024
        %v1026 = vpop.f32.mrb[0].mxu0
        %v1027 = vpop.f32.mrb[0].mxu0
        %v1028 = vadd.f32 0.0, %v1027
        %v1029 = vpop.f32.mrb[0].mxu0
        %1030 = vmatprep.mubr.bf16.mxu0 0
        %1031 = vmatmul.mubr.bf16.gmra.mrb[0].mxu0 %v896
        %v1032 = vpop.f32.mrb[0].mxu0
        %v1033 = vadd.f32 0.0, %v1032
        %v1034 = vpop.f32.mrb[0].mxu0
        %v1035 = vpop.f32.mrb[0].mxu0
        %v1036 = vadd.f32 0.0, %v1035
        %v1037 = vpop.f32.mrb[0].mxu0
        %1038 = vmatprep.mubr.bf16.mxu0 0
        %1039 = vmatmul.mubr.bf16.gmra.mrb[0].mxu0 %v899
        %v1040 = vpop.f32.mrb[0].mxu0
        %v1041 = vadd.f32 0.0, %v1040
        %v1042 = vpop.f32.mrb[0].mxu0
        %v1043 = vpop.f32.mrb[0].mxu0
        %v1044 = vadd.f32 0.0, %v1043
        %v1045 = vpop.f32.mrb[0].mxu0
        %1046 = vmatprep.mubr.bf16.mxu0 0
        %1047 = vmatmul.mubr.bf16.gmra.mrb[0].mxu0 %v902
        %v1048 = vpop.f32.mrb[0].mxu0
        %v1049 = vadd.f32 0.0, %v1048
        %v1050 = vpop.f32.mrb[0].mxu0
        %v1051 = vpop.f32.mrb[0].mxu0
        %v1052 = vadd.f32 0.0, %v1051
        %v1053 = vpop.f32.mrb[0].mxu0
        %1054 = vmatprep.mubr.bf16.mxu0 0
        %1055 = vmatmul.mubr.bf16.gmra.mrb[0].mxu0 %v905
        %v1056 = vpop.f32.mrb[0].mxu0
        %v1057 = vadd.f32 0.0, %v1056
        %v1058 = vpop.f32.mrb[0].mxu0
        %v1059 = vpop.f32.mrb[0].mxu0
        %v1060 = vadd.f32 0.0, %v1059
        %v1061 = vpop.f32.mrb[0].mxu0
        %1062 = vmatprep.mubr.bf16.mxu0 0
        %1063 = vmatmul.mubr.bf16.gmra.mrb[0].mxu0 %v908
        %v1064 = vpop.f32.mrb[0].mxu0
        %v1065 = vadd.f32 0.0, %v1064
        %v1066 = vpop.f32.mrb[0].mxu0
        %v1067 = vpop.f32.mrb[0].mxu0
        %v1068 = vadd.f32 0.0, %v1067
        %v1069 = vpop.f32.mrb[0].mxu0
        %1070 = vdwg.mxu0
        %v1071 = vpack.c.bf16 %v948, %v945
        %v1072 = vpack.c.bf16 %v956, %v953
        %v1073 = vpack.c.bf16 %v964, %v961
        %v1074 = vpack.c.bf16 %v972, %v969
        %v1075 = vpack.c.bf16 %v980, %v977
        %v1076 = vpack.c.bf16 %v988, %v985
        %v1077 = vpack.c.bf16 %v996, %v993
        %v1078 = vpack.c.bf16 %v1004, %v1001
        %v1079 = vpack.c.bf16 %v1012, %v1009
        %v1080 = vpack.c.bf16 %v1020, %v1017
        %v1081 = vpack.c.bf16 %v1028, %v1025
        %v1082 = vpack.c.bf16 %v1036, %v1033
        %v1083 = vpack.c.bf16 %v1044, %v1041
        %v1084 = vpack.c.bf16 %v1052, %v1049
        %v1085 = vpack.c.bf16 %v1060, %v1057
        %v1086 = vpack.c.bf16 %v1068, %v1065
        %v1087 = vld [vmem:[#allocation10] sm:$0xf]
        %v1088 = vld [vmem:[#allocation10 + $0x4] sm:$0xf]
        %v1089 = vld [vmem:[#allocation10 + $0x8] sm:$0xf]
        %v1090 = vld [vmem:[#allocation10 + $0xc] sm:$0xf]
        %v1095 = vunpack.c.l.b16 %v1087
        %v1096 = vunpack.c.l.b16 %v1088
        %v1097 = vunpack.c.l.b16 %v1089
        %v1098 = vunpack.c.l.b16 %v1090
        %v1099 = vpack.c.b16 %v1096, %v1095
        %v1100 = vpack.c.b16 %v1098, %v1097
        %1103 = vmatprep.subr.bf16.mxu0 0
        %1104 = vmatpush1.bf16.msra.mxu0 %v1099
        %1105 = vmatprep.subr.bf16.mxu0 0
        %1106 = vmatpush1.bf16.msra.mxu0 %v1100
        %1107 = vmatprep.subr.bf16.mxu0 0
        %1108 = vmatpush1.bf16.msra.mxu0 0
        %1109 = vmatprep.subr.bf16.mxu0 0
        %1110 = vmatpush1.bf16.msra.mxu0 0
        %1111 = vmatprep.subr.bf16.mxu0 0
        %1112 = vmatpush1.bf16.msra.mxu0 0
        %1113 = vmatprep.subr.bf16.mxu0 0
        %1114 = vmatpush1.bf16.msra.mxu0 0
        %1115 = vmatprep.subr.bf16.mxu0 0
        %1116 = vmatpush1.bf16.msra.mxu0 0
        %1117 = vmatprep.subr.bf16.mxu0 0
        %1118 = vmatpush1.bf16.msra.mxu0 0
        %1119 = vmatprep.subr.bf16.mxu0 0
        %1120 = vmatpush1.bf16.msra.mxu0 0
        %1121 = vmatprep.subr.bf16.mxu0 0
        %1122 = vmatpush1.bf16.msra.mxu0 0
        %1123 = vmatprep.subr.bf16.mxu0 0
        %1124 = vmatpush1.bf16.msra.mxu0 0
        %1125 = vmatprep.subr.bf16.mxu0 0
        %1126 = vmatpush1.bf16.msra.mxu0 0
        %1127 = vmatprep.subr.bf16.mxu0 0
        %1128 = vmatpush1.bf16.msra.mxu0 0
        %1129 = vmatprep.subr.bf16.mxu0 0
        %1130 = vmatpush1.bf16.msra.mxu0 0
        %1131 = vmatprep.subr.bf16.mxu0 0
        %1132 = vmatpush1.bf16.msra.mxu0 0
        %1133 = vmatprep.subr.bf16.mxu0 0
        %1134 = vmatpush1.bf16.msra.mxu0 0
        %1135 = vmatprep.mubr.bf16.mxu0 0
        %1136 = vmatmul.mubr.bf16.gmra.mrb[0].mxu0 %v863
        %v1137 = vpop.f32.mrb[0].mxu0
        %v1138 = vadd.f32 0.0, %v1137
        %v1139 = vpop.f32.mrb[0].mxu0
        %v1140 = vpop.f32.mrb[0].mxu0
        %v1141 = vadd.f32 0.0, %v1140
        %v1142 = vpop.f32.mrb[0].mxu0
        %1143 = vmatprep.mubr.bf16.mxu0 0
        %1144 = vmatmul.mubr.bf16.gmra.mrb[0].mxu0 %v866
        %v1145 = vpop.f32.mrb[0].mxu0
        %v1146 = vadd.f32 0.0, %v1145
        %v1147 = vpop.f32.mrb[0].mxu0
        %v1148 = vpop.f32.mrb[0].mxu0
        %v1149 = vadd.f32 0.0, %v1148
        %v1150 = vpop.f32.mrb[0].mxu0
        %1151 = vmatprep.mubr.bf16.mxu0 0
        %1152 = vmatmul.mubr.bf16.gmra.mrb[0].mxu0 %v869
        %v1153 = vpop.f32.mrb[0].mxu0
        %v1154 = vadd.f32 0.0, %v1153
        %v1155 = vpop.f32.mrb[0].mxu0
        %v1156 = vpop.f32.mrb[0].mxu0
        %v1157 = vadd.f32 0.0, %v1156
        %v1158 = vpop.f32.mrb[0].mxu0
        %1159 = vmatprep.mubr.bf16.mxu0 0
        %1160 = vmatmul.mubr.bf16.gmra.mrb[0].mxu0 %v872
        %v1161 = vpop.f32.mrb[0].mxu0
        %v1162 = vadd.f32 0.0, %v1161
        %v1163 = vpop.f32.mrb[0].mxu0
        %v1164 = vpop.f32.mrb[0].mxu0
        %v1165 = vadd.f32 0.0, %v1164
        %v1166 = vpop.f32.mrb[0].mxu0
        %1167 = vmatprep.mubr.bf16.mxu0 0
        %1168 = vmatmul.mubr.bf16.gmra.mrb[0].mxu0 %v875
        %v1169 = vpop.f32.mrb[0].mxu0
        %v1170 = vadd.f32 0.0, %v1169
        %v1171 = vpop.f32.mrb[0].mxu0
        %v1172 = vpop.f32.mrb[0].mxu0
        %v1173 = vadd.f32 0.0, %v1172
        %v1174 = vpop.f32.mrb[0].mxu0
        %1175 = vmatprep.mubr.bf16.mxu0 0
        %1176 = vmatmul.mubr.bf16.gmra.mrb[0].mxu0 %v878
        %v1177 = vpop.f32.mrb[0].mxu0
        %v1178 = vadd.f32 0.0, %v1177
        %v1179 = vpop.f32.mrb[0].mxu0
        %v1180 = vpop.f32.mrb[0].mxu0
        %v1181 = vadd.f32 0.0, %v1180
        %v1182 = vpop.f32.mrb[0].mxu0
        %1183 = vmatprep.mubr.bf16.mxu0 0
        %1184 = vmatmul.mubr.bf16.gmra.mrb[0].mxu0 %v881
        %v1185 = vpop.f32.mrb[0].mxu0
        %v1186 = vadd.f32 0.0, %v1185
        %v1187 = vpop.f32.mrb[0].mxu0
        %v1188 = vpop.f32.mrb[0].mxu0
        %v1189 = vadd.f32 0.0, %v1188
        %v1190 = vpop.f32.mrb[0].mxu0
        %1191 = vmatprep.mubr.bf16.mxu0 0
        %1192 = vmatmul.mubr.bf16.gmra.mrb[0].mxu0 %v884
        %v1193 = vpop.f32.mrb[0].mxu0
        %v1194 = vadd.f32 0.0, %v1193
        %v1195 = vpop.f32.mrb[0].mxu0
        %v1196 = vpop.f32.mrb[0].mxu0
        %v1197 = vadd.f32 0.0, %v1196
        %v1198 = vpop.f32.mrb[0].mxu0
        %1199 = vmatprep.mubr.bf16.mxu0 0
        %1200 = vmatmul.mubr.bf16.gmra.mrb[0].mxu0 %v887
        %v1201 = vpop.f32.mrb[0].mxu0
        %v1202 = vadd.f32 0.0, %v1201
        %v1203 = vpop.f32.mrb[0].mxu0
        %v1204 = vpop.f32.mrb[0].mxu0
        %v1205 = vadd.f32 0.0, %v1204
        %v1206 = vpop.f32.mrb[0].mxu0
        %1207 = vmatprep.mubr.bf16.mxu0 0
        %1208 = vmatmul.mubr.bf16.gmra.mrb[0].mxu0 %v890
        %v1209 = vpop.f32.mrb[0].mxu0
        %v1210 = vadd.f32 0.0, %v1209
        %v1211 = vpop.f32.mrb[0].mxu0
        %v1212 = vpop.f32.mrb[0].mxu0
        %v1213 = vadd.f32 0.0, %v1212
        %v1214 = vpop.f32.mrb[0].mxu0
        %1215 = vmatprep.mubr.bf16.mxu0 0
        %1216 = vmatmul.mubr.bf16.gmra.mrb[0].mxu0 %v893
        %v1217 = vpop.f32.mrb[0].mxu0
        %v1218 = vadd.f32 0.0, %v1217
        %v1219 = vpop.f32.mrb[0].mxu0
        %v1220 = vpop.f32.mrb[0].mxu0
        %v1221 = vadd.f32 0.0, %v1220
        %v1222 = vpop.f32.mrb[0].mxu0
        %1223 = vmatprep.mubr.bf16.mxu0 0
        %1224 = vmatmul.mubr.bf16.gmra.mrb[0].mxu0 %v896
        %v1225 = vpop.f32.mrb[0].mxu0
        %v1226 = vadd.f32 0.0, %v1225
        %v1227 = vpop.f32.mrb[0].mxu0
        %v1228 = vpop.f32.mrb[0].mxu0
        %v1229 = vadd.f32 0.0, %v1228
        %v1230 = vpop.f32.mrb[0].mxu0
        %1231 = vmatprep.mubr.bf16.mxu0 0
        %1232 = vmatmul.mubr.bf16.gmra.mrb[0].mxu0 %v899
        %v1233 = vpop.f32.mrb[0].mxu0
        %v1234 = vadd.f32 0.0, %v1233
        %v1235 = vpop.f32.mrb[0].mxu0
        %v1236 = vpop.f32.mrb[0].mxu0
        %v1237 = vadd.f32 0.0, %v1236
        %v1238 = vpop.f32.mrb[0].mxu0
        %1239 = vmatprep.mubr.bf16.mxu0 0
        %1240 = vmatmul.mubr.bf16.gmra.mrb[0].mxu0 %v902
        %v1241 = vpop.f32.mrb[0].mxu0
        %v1242 = vadd.f32 0.0, %v1241
        %v1243 = vpop.f32.mrb[0].mxu0
        %v1244 = vpop.f32.mrb[0].mxu0
        %v1245 = vadd.f32 0.0, %v1244
        %v1246 = vpop.f32.mrb[0].mxu0
        %1247 = vmatprep.mubr.bf16.mxu0 0
        %1248 = vmatmul.mubr.bf16.gmra.mrb[0].mxu0 %v905
        %v1249 = vpop.f32.mrb[0].mxu0
        %v1250 = vadd.f32 0.0, %v1249
        %v1251 = vpop.f32.mrb[0].mxu0
        %v1252 = vpop.f32.mrb[0].mxu0
        %v1253 = vadd.f32 0.0, %v1252
        %v1254 = vpop.f32.mrb[0].mxu0
        %1255 = vmatprep.mubr.bf16.mxu0 0
        %1256 = vmatmul.mubr.bf16.gmra.mrb[0].mxu0 %v908
        %v1257 = vpop.f32.mrb[0].mxu0
        %v1258 = vadd.f32 0.0, %v1257
        %v1259 = vpop.f32.mrb[0].mxu0
        %v1260 = vpop.f32.mrb[0].mxu0
        %v1261 = vadd.f32 0.0, %v1260
        %v1262 = vpop.f32.mrb[0].mxu0
        %1263 = vdwg.mxu0
        %v1264 = vpack.c.bf16 %v1141, %v1138
        %v1265 = vpack.c.bf16 %v1149, %v1146
        %v1266 = vpack.c.bf16 %v1157, %v1154
        %v1267 = vpack.c.bf16 %v1165, %v1162
        %v1268 = vpack.c.bf16 %v1173, %v1170
        %v1269 = vpack.c.bf16 %v1181, %v1178
        %v1270 = vpack.c.bf16 %v1189, %v1186
        %v1271 = vpack.c.bf16 %v1197, %v1194
        %v1272 = vpack.c.bf16 %v1205, %v1202
        %v1273 = vpack.c.bf16 %v1213, %v1210
        %v1274 = vpack.c.bf16 %v1221, %v1218
        %v1275 = vpack.c.bf16 %v1229, %v1226
        %v1276 = vpack.c.bf16 %v1237, %v1234
        %v1277 = vpack.c.bf16 %v1245, %v1242
        %v1278 = vpack.c.bf16 %v1253, %v1250
        %v1279 = vpack.c.bf16 %v1261, %v1258
        %v1280 = vld [vmem:[#allocation11] sm:$0xf]
        %v1281 = vld [vmem:[#allocation11 + $0x4] sm:$0xf]
        %v1282 = vld [vmem:[#allocation11 + $0x8] sm:$0xf]
        %v1283 = vld [vmem:[#allocation11 + $0xc] sm:$0xf]
        %v1288 = vunpack.c.l.b16 %v1280
        %v1289 = vunpack.c.l.b16 %v1281
        %v1290 = vunpack.c.l.b16 %v1282
        %v1291 = vunpack.c.l.b16 %v1283
        %v1292 = vpack.c.b16 %v1289, %v1288
        %v1293 = vpack.c.b16 %v1291, %v1290
        %1296 = vmatprep.subr.bf16.mxu0 0
        %1297 = vmatpush1.bf16.msra.mxu0 %v1292
        %1298 = vmatprep.subr.bf16.mxu0 0
        %1299 = vmatpush1.bf16.msra.mxu0 %v1293
        %1300 = vmatprep.subr.bf16.mxu0 0
        %1301 = vmatpush1.bf16.msra.mxu0 0
        %1302 = vmatprep.subr.bf16.mxu0 0
        %1303 = vmatpush1.bf16.msra.mxu0 0
        %1304 = vmatprep.subr.bf16.mxu0 0
        %1305 = vmatpush1.bf16.msra.mxu0 0
        %1306 = vmatprep.subr.bf16.mxu0 0
        %1307 = vmatpush1.bf16.msra.mxu0 0
        %1308 = vmatprep.subr.bf16.mxu0 0
        %1309 = vmatpush1.bf16.msra.mxu0 0
        %1310 = vmatprep.subr.bf16.mxu0 0
        %1311 = vmatpush1.bf16.msra.mxu0 0
        %1312 = vmatprep.subr.bf16.mxu0 0
        %1313 = vmatpush1.bf16.msra.mxu0 0
        %1314 = vmatprep.subr.bf16.mxu0 0
        %1315 = vmatpush1.bf16.msra.mxu0 0
        %1316 = vmatprep.subr.bf16.mxu0 0
        %1317 = vmatpush1.bf16.msra.mxu0 0
        %1318 = vmatprep.subr.bf16.mxu0 0
        %1319 = vmatpush1.bf16.msra.mxu0 0
        %1320 = vmatprep.subr.bf16.mxu0 0
        %1321 = vmatpush1.bf16.msra.mxu0 0
        %1322 = vmatprep.subr.bf16.mxu0 0
        %1323 = vmatpush1.bf16.msra.mxu0 0
        %1324 = vmatprep.subr.bf16.mxu0 0
        %1325 = vmatpush1.bf16.msra.mxu0 0
        %1326 = vmatprep.subr.bf16.mxu0 0
        %1327 = vmatpush1.bf16.msra.mxu0 0
        %1328 = vmatprep.mubr.bf16.mxu0 0
        %1329 = vmatmul.mubr.bf16.gmra.mrb[0].mxu0 %v863
        %v1330 = vpop.f32.mrb[0].mxu0
        %v1331 = vadd.f32 0.0, %v1330
        %v1332 = vpop.f32.mrb[0].mxu0
        %v1333 = vpop.f32.mrb[0].mxu0
        %v1334 = vadd.f32 0.0, %v1333
        %v1335 = vpop.f32.mrb[0].mxu0
        %1336 = vmatprep.mubr.bf16.mxu0 0
        %1337 = vmatmul.mubr.bf16.gmra.mrb[0].mxu0 %v866
        %v1338 = vpop.f32.mrb[0].mxu0
        %v1339 = vadd.f32 0.0, %v1338
        %v1340 = vpop.f32.mrb[0].mxu0
        %v1341 = vpop.f32.mrb[0].mxu0
        %v1342 = vadd.f32 0.0, %v1341
        %v1343 = vpop.f32.mrb[0].mxu0
        %1344 = vmatprep.mubr.bf16.mxu0 0
        %1345 = vmatmul.mubr.bf16.gmra.mrb[0].mxu0 %v869
        %v1346 = vpop.f32.mrb[0].mxu0
        %v1347 = vadd.f32 0.0, %v1346
        %v1348 = vpop.f32.mrb[0].mxu0
        %v1349 = vpop.f32.mrb[0].mxu0
        %v1350 = vadd.f32 0.0, %v1349
        %v1351 = vpop.f32.mrb[0].mxu0
        %1352 = vmatprep.mubr.bf16.mxu0 0
        %1353 = vmatmul.mubr.bf16.gmra.mrb[0].mxu0 %v872
        %v1354 = vpop.f32.mrb[0].mxu0
        %v1355 = vadd.f32 0.0, %v1354
        %v1356 = vpop.f32.mrb[0].mxu0
        %v1357 = vpop.f32.mrb[0].mxu0
        %v1358 = vadd.f32 0.0, %v1357
        %v1359 = vpop.f32.mrb[0].mxu0
        %1360 = vmatprep.mubr.bf16.mxu0 0
        %1361 = vmatmul.mubr.bf16.gmra.mrb[0].mxu0 %v875
        %v1362 = vpop.f32.mrb[0].mxu0
        %v1363 = vadd.f32 0.0, %v1362
        %v1364 = vpop.f32.mrb[0].mxu0
        %v1365 = vpop.f32.mrb[0].mxu0
        %v1366 = vadd.f32 0.0, %v1365
        %v1367 = vpop.f32.mrb[0].mxu0
        %1368 = vmatprep.mubr.bf16.mxu0 0
        %1369 = vmatmul.mubr.bf16.gmra.mrb[0].mxu0 %v878
        %v1370 = vpop.f32.mrb[0].mxu0
        %v1371 = vadd.f32 0.0, %v1370
        %v1372 = vpop.f32.mrb[0].mxu0
        %v1373 = vpop.f32.mrb[0].mxu0
        %v1374 = vadd.f32 0.0, %v1373
        %v1375 = vpop.f32.mrb[0].mxu0
        %1376 = vmatprep.mubr.bf16.mxu0 0
        %1377 = vmatmul.mubr.bf16.gmra.mrb[0].mxu0 %v881
        %v1378 = vpop.f32.mrb[0].mxu0
        %v1379 = vadd.f32 0.0, %v1378
        %v1380 = vpop.f32.mrb[0].mxu0
        %v1381 = vpop.f32.mrb[0].mxu0
        %v1382 = vadd.f32 0.0, %v1381
        %v1383 = vpop.f32.mrb[0].mxu0
        %1384 = vmatprep.mubr.bf16.mxu0 0
        %1385 = vmatmul.mubr.bf16.gmra.mrb[0].mxu0 %v884
        %v1386 = vpop.f32.mrb[0].mxu0
        %v1387 = vadd.f32 0.0, %v1386
        %v1388 = vpop.f32.mrb[0].mxu0
        %v1389 = vpop.f32.mrb[0].mxu0
        %v1390 = vadd.f32 0.0, %v1389
        %v1391 = vpop.f32.mrb[0].mxu0
        %1392 = vmatprep.mubr.bf16.mxu0 0
        %1393 = vmatmul.mubr.bf16.gmra.mrb[0].mxu0 %v887
        %v1394 = vpop.f32.mrb[0].mxu0
        %v1395 = vadd.f32 0.0, %v1394
        %v1396 = vpop.f32.mrb[0].mxu0
        %v1397 = vpop.f32.mrb[0].mxu0
        %v1398 = vadd.f32 0.0, %v1397
        %v1399 = vpop.f32.mrb[0].mxu0
        %1400 = vmatprep.mubr.bf16.mxu0 0
        %1401 = vmatmul.mubr.bf16.gmra.mrb[0].mxu0 %v890
        %v1402 = vpop.f32.mrb[0].mxu0
        %v1403 = vadd.f32 0.0, %v1402
        %v1404 = vpop.f32.mrb[0].mxu0
        %v1405 = vpop.f32.mrb[0].mxu0
        %v1406 = vadd.f32 0.0, %v1405
        %v1407 = vpop.f32.mrb[0].mxu0
        %1408 = vmatprep.mubr.bf16.mxu0 0
        %1409 = vmatmul.mubr.bf16.gmra.mrb[0].mxu0 %v893
        %v1410 = vpop.f32.mrb[0].mxu0
        %v1411 = vadd.f32 0.0, %v1410
        %v1412 = vpop.f32.mrb[0].mxu0
        %v1413 = vpop.f32.mrb[0].mxu0
        %v1414 = vadd.f32 0.0, %v1413
        %v1415 = vpop.f32.mrb[0].mxu0
        %1416 = vmatprep.mubr.bf16.mxu0 0
        %1417 = vmatmul.mubr.bf16.gmra.mrb[0].mxu0 %v896
        %v1418 = vpop.f32.mrb[0].mxu0
        %v1419 = vadd.f32 0.0, %v1418
        %v1420 = vpop.f32.mrb[0].mxu0
        %v1421 = vpop.f32.mrb[0].mxu0
        %v1422 = vadd.f32 0.0, %v1421
        %v1423 = vpop.f32.mrb[0].mxu0
        %1424 = vmatprep.mubr.bf16.mxu0 0
        %1425 = vmatmul.mubr.bf16.gmra.mrb[0].mxu0 %v899
        %v1426 = vpop.f32.mrb[0].mxu0
        %v1427 = vadd.f32 0.0, %v1426
        %v1428 = vpop.f32.mrb[0].mxu0
        %v1429 = vpop.f32.mrb[0].mxu0
        %v1430 = vadd.f32 0.0, %v1429
        %v1431 = vpop.f32.mrb[0].mxu0
        %1432 = vmatprep.mubr.bf16.mxu0 0
        %1433 = vmatmul.mubr.bf16.gmra.mrb[0].mxu0 %v902
        %v1434 = vpop.f32.mrb[0].mxu0
        %v1435 = vadd.f32 0.0, %v1434
        %v1436 = vpop.f32.mrb[0].mxu0
        %v1437 = vpop.f32.mrb[0].mxu0
        %v1438 = vadd.f32 0.0, %v1437
        %v1439 = vpop.f32.mrb[0].mxu0
        %1440 = vmatprep.mubr.bf16.mxu0 0
        %1441 = vmatmul.mubr.bf16.gmra.mrb[0].mxu0 %v905
        %v1442 = vpop.f32.mrb[0].mxu0
        %v1443 = vadd.f32 0.0, %v1442
        %v1444 = vpop.f32.mrb[0].mxu0
        %v1445 = vpop.f32.mrb[0].mxu0
        %v1446 = vadd.f32 0.0, %v1445
        %v1447 = vpop.f32.mrb[0].mxu0
        %1448 = vmatprep.mubr.bf16.mxu0 0
        %1449 = vmatmul.mubr.bf16.gmra.mrb[0].mxu0 %v908
        %v1450 = vpop.f32.mrb[0].mxu0
        %v1451 = vadd.f32 0.0, %v1450
        %v1452 = vpop.f32.mrb[0].mxu0
        %v1453 = vpop.f32.mrb[0].mxu0
        %v1454 = vadd.f32 0.0, %v1453
        %v1455 = vpop.f32.mrb[0].mxu0
        %1456 = vdwg.mxu0
        %v1457 = vpack.c.bf16 %v1334, %v1331
        %v1458 = vpack.c.bf16 %v1342, %v1339
        %v1459 = vpack.c.bf16 %v1350, %v1347
        %v1460 = vpack.c.bf16 %v1358, %v1355
        %v1461 = vpack.c.bf16 %v1366, %v1363
        %v1462 = vpack.c.bf16 %v1374, %v1371
        %v1463 = vpack.c.bf16 %v1382, %v1379
        %v1464 = vpack.c.bf16 %v1390, %v1387
        %v1465 = vpack.c.bf16 %v1398, %v1395
        %v1466 = vpack.c.bf16 %v1406, %v1403
        %v1467 = vpack.c.bf16 %v1414, %v1411
        %v1468 = vpack.c.bf16 %v1422, %v1419
        %v1469 = vpack.c.bf16 %v1430, %v1427
        %v1470 = vpack.c.bf16 %v1438, %v1435
        %v1471 = vpack.c.bf16 %v1446, %v1443
        %v1472 = vpack.c.bf16 %v1454, %v1451
        %s1473 = sshra.s32 %s391, 4
        %s1474 = sand.u32 %s391, 15
        %s1475 = smul.addr %s1473, 8
        %s1476 = scalar_lea.vmem [#allocation2], %s1475
        %vm1477 = vcmask 130048
        %1478 = vst.msk [vmem:[%s1476] sm:$0xff] %vm1477, %v1264
        %1479 = vst.msk [vmem:[%s1476 + $0x8] sm:$0xff] %vm1477, %v1265
        %1480 = vst.msk [vmem:[%s1476 + $0x10] sm:$0xff] %vm1477, %v1266
        %1481 = vst.msk [vmem:[%s1476 + $0x18] sm:$0xff] %vm1477, %v1267
        %1482 = vst.msk [vmem:[%s1476 + $0x20] sm:$0xff] %vm1477, %v1268
        %1483 = vst.msk [vmem:[%s1476 + $0x28] sm:$0xff] %vm1477, %v1269
        %1484 = vst.msk [vmem:[%s1476 + $0x30] sm:$0xff] %vm1477, %v1270
        %1485 = vst.msk [vmem:[%s1476 + $0x38] sm:$0xff] %vm1477, %v1271
        %1486 = vst.msk [vmem:[%s1476 + $0x40] sm:$0xff] %vm1477, %v1272
        %1487 = vst.msk [vmem:[%s1476 + $0x48] sm:$0xff] %vm1477, %v1273
        %1488 = vst.msk [vmem:[%s1476 + $0x50] sm:$0xff] %vm1477, %v1274
        %1489 = vst.msk [vmem:[%s1476 + $0x58] sm:$0xff] %vm1477, %v1275
        %1490 = vst.msk [vmem:[%s1476 + $0x60] sm:$0xff] %vm1477, %v1276
        %1491 = vst.msk [vmem:[%s1476 + $0x68] sm:$0xff] %vm1477, %v1277
        %1492 = vst.msk [vmem:[%s1476 + $0x70] sm:$0xff] %vm1477, %v1278
        %1493 = vst.msk [vmem:[%s1476 + $0x78] sm:$0xff] %vm1477, %v1279
        %s1494 = smul.addr %s1473, 8
        %s1495 = scalar_lea.vmem [#allocation3], %s1494
        %1496 = vst.msk [vmem:[%s1495] sm:$0xff] %vm1477, %v1457
        %1497 = vst.msk [vmem:[%s1495 + $0x8] sm:$0xff] %vm1477, %v1458
        %1498 = vst.msk [vmem:[%s1495 + $0x10] sm:$0xff] %vm1477, %v1459
        %1499 = vst.msk [vmem:[%s1495 + $0x18] sm:$0xff] %vm1477, %v1460
        %1500 = vst.msk [vmem:[%s1495 + $0x20] sm:$0xff] %vm1477, %v1461
        %1501 = vst.msk [vmem:[%s1495 + $0x28] sm:$0xff] %vm1477, %v1462
        %1502 = vst.msk [vmem:[%s1495 + $0x30] sm:$0xff] %vm1477, %v1463
        %1503 = vst.msk [vmem:[%s1495 + $0x38] sm:$0xff] %vm1477, %v1464
        %1504 = vst.msk [vmem:[%s1495 + $0x40] sm:$0xff] %vm1477, %v1465
        %1505 = vst.msk [vmem:[%s1495 + $0x48] sm:$0xff] %vm1477, %v1466
        %1506 = vst.msk [vmem:[%s1495 + $0x50] sm:$0xff] %vm1477, %v1467
        %1507 = vst.msk [vmem:[%s1495 + $0x58] sm:$0xff] %vm1477, %v1468
        %1508 = vst.msk [vmem:[%s1495 + $0x60] sm:$0xff] %vm1477, %v1469
        %1509 = vst.msk [vmem:[%s1495 + $0x68] sm:$0xff] %vm1477, %v1470
        %1510 = vst.msk [vmem:[%s1495 + $0x70] sm:$0xff] %vm1477, %v1471
        %1511 = vst.msk [vmem:[%s1495 + $0x78] sm:$0xff] %vm1477, %v1472
        %v1513 = vsel %vm1477, %v1071, 0
        %v1516 = vsel %vm1477, %v1072, 0
        %v1519 = vsel %vm1477, %v1073, 0
        %v1522 = vsel %vm1477, %v1074, 0
        %v1525 = vsel %vm1477, %v1075, 0
        %v1528 = vsel %vm1477, %v1076, 0
        %v1531 = vsel %vm1477, %v1077, 0
        %v1534 = vsel %vm1477, %v1078, 0
        %v1537 = vsel %vm1477, %v1079, 0
        %v1540 = vsel %vm1477, %v1080, 0
        %v1543 = vsel %vm1477, %v1081, 0
        %v1546 = vsel %vm1477, %v1082, 0
        %v1549 = vsel %vm1477, %v1083, 0
        %v1552 = vsel %vm1477, %v1084, 0
        %v1555 = vsel %vm1477, %v1085, 0
        %v1558 = vsel %vm1477, %v1086, 0
        %v1561 = vsel %vm1477, %v1264, 0
        %v1564 = vsel %vm1477, %v1265, 0
        %v1567 = vsel %vm1477, %v1266, 0
        %v1570 = vsel %vm1477, %v1267, 0
        %v1573 = vsel %vm1477, %v1268, 0
        %v1576 = vsel %vm1477, %v1269, 0
        %v1579 = vsel %vm1477, %v1270, 0
        %v1582 = vsel %vm1477, %v1271, 0
        %v1585 = vsel %vm1477, %v1272, 0
        %v1588 = vsel %vm1477, %v1273, 0
        %v1591 = vsel %vm1477, %v1274, 0
        %v1594 = vsel %vm1477, %v1275, 0
        %v1597 = vsel %vm1477, %v1276, 0
        %v1600 = vsel %vm1477, %v1277, 0
        %v1603 = vsel %vm1477, %v1278, 0
        %v1606 = vsel %vm1477, %v1279, 0
        %1608 = vmatprep.subr.bf16.mxu0 0
        %1609 = vmatpush1.bf16.xpose.msra.mxu0 %v1561
        %1610 = vmatprep.subr.bf16.mxu0 0
        %1611 = vmatpush1.bf16.xpose.msra.mxu0 %v1564
        %1612 = vmatprep.subr.bf16.mxu0 0
        %1613 = vmatpush1.bf16.xpose.msra.mxu0 %v1567
        %1614 = vmatprep.subr.bf16.mxu0 0
        %1615 = vmatpush1.bf16.xpose.msra.mxu0 %v1570
        %1616 = vmatprep.subr.bf16.mxu0 0
        %1617 = vmatpush1.bf16.xpose.msra.mxu0 %v1573
        %1618 = vmatprep.subr.bf16.mxu0 0
        %1619 = vmatpush1.bf16.xpose.msra.mxu0 %v1576
        %1620 = vmatprep.subr.bf16.mxu0 0
        %1621 = vmatpush1.bf16.xpose.msra.mxu0 %v1579
        %1622 = vmatprep.subr.bf16.mxu0 0
        %1623 = vmatpush1.bf16.xpose.msra.mxu0 %v1582
        %1624 = vmatprep.subr.bf16.mxu0 0
        %1625 = vmatpush1.bf16.xpose.msra.mxu0 %v1585
        %1626 = vmatprep.subr.bf16.mxu0 0
        %1627 = vmatpush1.bf16.xpose.msra.mxu0 %v1588
        %1628 = vmatprep.subr.bf16.mxu0 0
        %1629 = vmatpush1.bf16.xpose.msra.mxu0 %v1591
        %1630 = vmatprep.subr.bf16.mxu0 0
        %1631 = vmatpush1.bf16.xpose.msra.mxu0 %v1594
        %1632 = vmatprep.subr.bf16.mxu0 0
        %1633 = vmatpush1.bf16.xpose.msra.mxu0 %v1597
        %1634 = vmatprep.subr.bf16.mxu0 0
        %1635 = vmatpush1.bf16.xpose.msra.mxu0 %v1600
        %1636 = vmatprep.subr.bf16.mxu0 0
        %1637 = vmatpush1.bf16.xpose.msra.mxu0 %v1603
        %1638 = vmatprep.subr.bf16.mxu0 0
        %1639 = vmatpush1.bf16.xpose.msra.mxu0 %v1606
        %1640 = vmatprep.mubr.bf16.mxu0 0
        %1641 = vmatmul.mubr.bf16.gmra.mrb[0].mxu0 %v1513
        %v1642 = vpop.f32.mrb[0].mxu0
        %v1643 = vadd.f32 0.0, %v1642
        %v1644 = vpop.f32.mrb[0].mxu0
        %v1645 = vadd.f32 0.0, %v1644
        %v1646 = vpop.f32.mrb[0].mxu0
        %v1647 = vadd.f32 0.0, %v1646
        %v1648 = vpop.f32.mrb[0].mxu0
        %v1649 = vadd.f32 0.0, %v1648
        %1650 = vmatprep.mubr.bf16.mxu0 0
        %1651 = vmatmul.mubr.bf16.gmra.mrb[0].mxu0 %v1516
        %v1652 = vpop.f32.mrb[0].mxu0
        %v1653 = vadd.f32 0.0, %v1652
        %v1654 = vpop.f32.mrb[0].mxu0
        %v1655 = vadd.f32 0.0, %v1654
        %v1656 = vpop.f32.mrb[0].mxu0
        %v1657 = vadd.f32 0.0, %v1656
        %v1658 = vpop.f32.mrb[0].mxu0
        %v1659 = vadd.f32 0.0, %v1658
        %1660 = vmatprep.mubr.bf16.mxu0 0
        %1661 = vmatmul.mubr.bf16.gmra.mrb[0].mxu0 %v1519
        %v1662 = vpop.f32.mrb[0].mxu0
        %v1663 = vadd.f32 0.0, %v1662
        %v1664 = vpop.f32.mrb[0].mxu0
        %v1665 = vadd.f32 0.0, %v1664
        %v1666 = vpop.f32.mrb[0].mxu0
        %v1667 = vadd.f32 0.0, %v1666
        %v1668 = vpop.f32.mrb[0].mxu0
        %v1669 = vadd.f32 0.0, %v1668
        %1670 = vmatprep.mubr.bf16.mxu0 0
        %1671 = vmatmul.mubr.bf16.gmra.mrb[0].mxu0 %v1522
        %v1672 = vpop.f32.mrb[0].mxu0
        %v1673 = vadd.f32 0.0, %v1672
        %v1674 = vpop.f32.mrb[0].mxu0
        %v1675 = vadd.f32 0.0, %v1674
        %v1676 = vpop.f32.mrb[0].mxu0
        %v1677 = vadd.f32 0.0, %v1676
        %v1678 = vpop.f32.mrb[0].mxu0
        %v1679 = vadd.f32 0.0, %v1678
        %1680 = vmatprep.mubr.bf16.mxu0 0
        %1681 = vmatmul.mubr.bf16.gmra.mrb[0].mxu0 %v1525
        %v1682 = vpop.f32.mrb[0].mxu0
        %v1683 = vadd.f32 0.0, %v1682
        %v1684 = vpop.f32.mrb[0].mxu0
        %v1685 = vadd.f32 0.0, %v1684
        %v1686 = vpop.f32.mrb[0].mxu0
        %v1687 = vadd.f32 0.0, %v1686
        %v1688 = vpop.f32.mrb[0].mxu0
        %v1689 = vadd.f32 0.0, %v1688
        %1690 = vmatprep.mubr.bf16.mxu0 0
        %1691 = vmatmul.mubr.bf16.gmra.mrb[0].mxu0 %v1528
        %v1692 = vpop.f32.mrb[0].mxu0
        %v1693 = vadd.f32 0.0, %v1692
        %v1694 = vpop.f32.mrb[0].mxu0
        %v1695 = vadd.f32 0.0, %v1694
        %v1696 = vpop.f32.mrb[0].mxu0
        %v1697 = vadd.f32 0.0, %v1696
        %v1698 = vpop.f32.mrb[0].mxu0
        %v1699 = vadd.f32 0.0, %v1698
        %1700 = vmatprep.mubr.bf16.mxu0 0
        %1701 = vmatmul.mubr.bf16.gmra.mrb[0].mxu0 %v1531
        %v1702 = vpop.f32.mrb[0].mxu0
        %v1703 = vadd.f32 0.0, %v1702
        %v1704 = vpop.f32.mrb[0].mxu0
        %v1705 = vadd.f32 0.0, %v1704
        %v1706 = vpop.f32.mrb[0].mxu0
        %v1707 = vadd.f32 0.0, %v1706
        %v1708 = vpop.f32.mrb[0].mxu0
        %v1709 = vadd.f32 0.0, %v1708
        %1710 = vmatprep.mubr.bf16.mxu0 0
        %1711 = vmatmul.mubr.bf16.gmra.mrb[0].mxu0 %v1534
        %v1712 = vpop.f32.mrb[0].mxu0
        %v1713 = vadd.f32 0.0, %v1712
        %v1714 = vpop.f32.mrb[0].mxu0
        %v1715 = vadd.f32 0.0, %v1714
        %v1716 = vpop.f32.mrb[0].mxu0
        %v1717 = vadd.f32 0.0, %v1716
        %v1718 = vpop.f32.mrb[0].mxu0
        %v1719 = vadd.f32 0.0, %v1718
        %1720 = vmatprep.mubr.bf16.mxu0 0
        %1721 = vmatmul.mubr.bf16.gmra.mrb[0].mxu0 %v1537
        %v1722 = vpop.f32.mrb[0].mxu0
        %v1723 = vadd.f32 0.0, %v1722
        %v1724 = vpop.f32.mrb[0].mxu0
        %v1725 = vadd.f32 0.0, %v1724
        %v1726 = vpop.f32.mrb[0].mxu0
        %v1727 = vadd.f32 0.0, %v1726
        %v1728 = vpop.f32.mrb[0].mxu0
        %v1729 = vadd.f32 0.0, %v1728
        %1730 = vmatprep.mubr.bf16.mxu0 0
        %1731 = vmatmul.mubr.bf16.gmra.mrb[0].mxu0 %v1540
        %v1732 = vpop.f32.mrb[0].mxu0
        %v1733 = vadd.f32 0.0, %v1732
        %v1734 = vpop.f32.mrb[0].mxu0
        %v1735 = vadd.f32 0.0, %v1734
        %v1736 = vpop.f32.mrb[0].mxu0
        %v1737 = vadd.f32 0.0, %v1736
        %v1738 = vpop.f32.mrb[0].mxu0
        %v1739 = vadd.f32 0.0, %v1738
        %1740 = vmatprep.mubr.bf16.mxu0 0
        %1741 = vmatmul.mubr.bf16.gmra.mrb[0].mxu0 %v1543
        %v1742 = vpop.f32.mrb[0].mxu0
        %v1743 = vadd.f32 0.0, %v1742
        %v1744 = vpop.f32.mrb[0].mxu0
        %v1745 = vadd.f32 0.0, %v1744
        %v1746 = vpop.f32.mrb[0].mxu0
        %v1747 = vadd.f32 0.0, %v1746
        %v1748 = vpop.f32.mrb[0].mxu0
        %v1749 = vadd.f32 0.0, %v1748
        %1750 = vmatprep.mubr.bf16.mxu0 0
        %1751 = vmatmul.mubr.bf16.gmra.mrb[0].mxu0 %v1546
        %v1752 = vpop.f32.mrb[0].mxu0
        %v1753 = vadd.f32 0.0, %v1752
        %v1754 = vpop.f32.mrb[0].mxu0
        %v1755 = vadd.f32 0.0, %v1754
        %v1756 = vpop.f32.mrb[0].mxu0
        %v1757 = vadd.f32 0.0, %v1756
        %v1758 = vpop.f32.mrb[0].mxu0
        %v1759 = vadd.f32 0.0, %v1758
        %1760 = vmatprep.mubr.bf16.mxu0 0
        %1761 = vmatmul.mubr.bf16.gmra.mrb[0].mxu0 %v1549
        %v1762 = vpop.f32.mrb[0].mxu0
        %v1763 = vadd.f32 0.0, %v1762
        %v1764 = vpop.f32.mrb[0].mxu0
        %v1765 = vadd.f32 0.0, %v1764
        %v1766 = vpop.f32.mrb[0].mxu0
        %v1767 = vadd.f32 0.0, %v1766
        %v1768 = vpop.f32.mrb[0].mxu0
        %v1769 = vadd.f32 0.0, %v1768
        %1770 = vmatprep.mubr.bf16.mxu0 0
        %1771 = vmatmul.mubr.bf16.gmra.mrb[0].mxu0 %v1552
        %v1772 = vpop.f32.mrb[0].mxu0
        %v1773 = vadd.f32 0.0, %v1772
        %v1774 = vpop.f32.mrb[0].mxu0
        %v1775 = vadd.f32 0.0, %v1774
        %v1776 = vpop.f32.mrb[0].mxu0
        %v1777 = vadd.f32 0.0, %v1776
        %v1778 = vpop.f32.mrb[0].mxu0
        %v1779 = vadd.f32 0.0, %v1778
        %1780 = vmatprep.mubr.bf16.mxu0 0
        %1781 = vmatmul.mubr.bf16.gmra.mrb[0].mxu0 %v1555
        %v1782 = vpop.f32.mrb[0].mxu0
        %v1783 = vadd.f32 0.0, %v1782
        %v1784 = vpop.f32.mrb[0].mxu0
        %v1785 = vadd.f32 0.0, %v1784
        %v1786 = vpop.f32.mrb[0].mxu0
        %v1787 = vadd.f32 0.0, %v1786
        %v1788 = vpop.f32.mrb[0].mxu0
        %v1789 = vadd.f32 0.0, %v1788
        %1790 = vmatprep.mubr.bf16.mxu0 0
        %1791 = vmatmul.mubr.bf16.gmra.mrb[0].mxu0 %v1558
        %v1792 = vpop.f32.mrb[0].mxu0
        %v1793 = vadd.f32 0.0, %v1792
        %v1794 = vpop.f32.mrb[0].mxu0
        %v1795 = vadd.f32 0.0, %v1794
        %v1796 = vpop.f32.mrb[0].mxu0
        %v1797 = vadd.f32 0.0, %v1796
        %v1798 = vpop.f32.mrb[0].mxu0
        %v1799 = vadd.f32 0.0, %v1798
        %1800 = vdwg.mxu0
        %v1801 = vsel %vm743, -1e+30, %v1643
        %v1802 = vsel %vm744, -1e+30, %v1645
        %v1803 = vsel %vm745, -1e+30, %v1647
        %v1804 = vsel %vm746, -1e+30, %v1649
        %v1805 = vsel %vm747, -1e+30, %v1653
        %v1806 = vsel %vm748, -1e+30, %v1655
        %v1807 = vsel %vm749, -1e+30, %v1657
        %v1808 = vsel %vm750, -1e+30, %v1659
        %v1809 = vsel %vm751, -1e+30, %v1663
        %v1810 = vsel %vm752, -1e+30, %v1665
        %v1811 = vsel %vm753, -1e+30, %v1667
        %v1812 = vsel %vm754, -1e+30, %v1669
        %v1813 = vsel %vm755, -1e+30, %v1673
        %v1814 = vsel %vm756, -1e+30, %v1675
        %v1815 = vsel %vm757, -1e+30, %v1677
        %v1816 = vsel %vm758, -1e+30, %v1679
        %v1817 = vsel %vm759, -1e+30, %v1683
        %v1818 = vsel %vm760, -1e+30, %v1685
        %v1819 = vsel %vm761, -1e+30, %v1687
        %v1820 = vsel %vm762, -1e+30, %v1689
        %v1821 = vsel %vm763, -1e+30, %v1693
        %v1822 = vsel %vm764, -1e+30, %v1695
        %v1823 = vsel %vm765, -1e+30, %v1697
        %v1824 = vsel %vm766, -1e+30, %v1699
        %v1825 = vsel %vm767, -1e+30, %v1703
        %v1826 = vsel %vm768, -1e+30, %v1705
        %v1827 = vsel %vm769, -1e+30, %v1707
        %v1828 = vsel %vm770, -1e+30, %v1709
        %v1829 = vsel %vm771, -1e+30, %v1713
        %v1830 = vsel %vm772, -1e+30, %v1715
        %v1831 = vsel %vm773, -1e+30, %v1717
        %v1832 = vsel %vm774, -1e+30, %v1719
        %v1833 = vsel %vm775, -1e+30, %v1723
        %v1834 = vsel %vm776, -1e+30, %v1725
        %v1835 = vsel %vm777, -1e+30, %v1727
        %v1836 = vsel %vm778, -1e+30, %v1729
        %v1837 = vsel %vm779, -1e+30, %v1733
        %v1838 = vsel %vm780, -1e+30, %v1735
        %v1839 = vsel %vm781, -1e+30, %v1737
        %v1840 = vsel %vm782, -1e+30, %v1739
        %v1841 = vsel %vm783, -1e+30, %v1743
        %v1842 = vsel %vm784, -1e+30, %v1745
        %v1843 = vsel %vm785, -1e+30, %v1747
        %v1844 = vsel %vm786, -1e+30, %v1749
        %v1845 = vsel %vm787, -1e+30, %v1753
        %v1846 = vsel %vm788, -1e+30, %v1755
        %v1847 = vsel %vm789, -1e+30, %v1757
        %v1848 = vsel %vm790, -1e+30, %v1759
        %v1849 = vsel %vm791, -1e+30, %v1763
        %v1850 = vsel %vm792, -1e+30, %v1765
        %v1851 = vsel %vm793, -1e+30, %v1767
        %v1852 = vsel %vm794, -1e+30, %v1769
        %v1853 = vsel %vm795, -1e+30, %v1773
        %v1854 = vsel %vm796, -1e+30, %v1775
        %v1855 = vsel %vm797, -1e+30, %v1777
        %v1856 = vsel %vm798, -1e+30, %v1779
        %v1857 = vsel %vm799, -1e+30, %v1783
        %v1858 = vsel %vm800, -1e+30, %v1785
        %v1859 = vsel %vm801, -1e+30, %v1787
        %v1860 = vsel %vm802, -1e+30, %v1789
        %v1861 = vsel %vm803, -1e+30, %v1793
        %v1862 = vsel %vm804, -1e+30, %v1795
        %v1863 = vsel %vm805, -1e+30, %v1797
        %v1864 = vsel %vm806, -1e+30, %v1799
        %v1865 = vmax.f32 %v1801, %v1802
        %1866 = vmax.xlane.f32.xlu0 %v1865
        %v1867 = vpop.xlane.xlu0 %1866
        %v1868 = vmax.f32 %v1803, %v1804
        %1869 = vmax.xlane.f32.xlu0 %v1868
        %v1870 = vpop.xlane.xlu0 %1869
        %v1871 = vmax.f32 %v1805, %v1806
        %1872 = vmax.xlane.f32.xlu0 %v1871
        %v1873 = vpop.xlane.xlu0 %1872
        %v1874 = vmax.f32 %v1807, %v1808
        %1875 = vmax.xlane.f32.xlu0 %v1874
        %v1876 = vpop.xlane.xlu0 %1875
        %v1877 = vmax.f32 %v1809, %v1810
        %1878 = vmax.xlane.f32.xlu0 %v1877
        %v1879 = vpop.xlane.xlu0 %1878
        %v1880 = vmax.f32 %v1811, %v1812
        %1881 = vmax.xlane.f32.xlu0 %v1880
        %v1882 = vpop.xlane.xlu0 %1881
        %v1883 = vmax.f32 %v1813, %v1814
        %1884 = vmax.xlane.f32.xlu0 %v1883
        %v1885 = vpop.xlane.xlu0 %1884
        %v1886 = vmax.f32 %v1815, %v1816
        %1887 = vmax.xlane.f32.xlu0 %v1886
        %v1888 = vpop.xlane.xlu0 %1887
        %v1889 = vmax.f32 %v1817, %v1818
        %1890 = vmax.xlane.f32.xlu0 %v1889
        %v1891 = vpop.xlane.xlu0 %1890
        %v1892 = vmax.f32 %v1819, %v1820
        %1893 = vmax.xlane.f32.xlu0 %v1892
        %v1894 = vpop.xlane.xlu0 %1893
        %v1895 = vmax.f32 %v1821, %v1822
        %1896 = vmax.xlane.f32.xlu0 %v1895
        %v1897 = vpop.xlane.xlu0 %1896
        %v1898 = vmax.f32 %v1823, %v1824
        %1899 = vmax.xlane.f32.xlu0 %v1898
        %v1900 = vpop.xlane.xlu0 %1899
        %v1901 = vmax.f32 %v1825, %v1826
        %1902 = vmax.xlane.f32.xlu0 %v1901
        %v1903 = vpop.xlane.xlu0 %1902
        %v1904 = vmax.f32 %v1827, %v1828
        %1905 = vmax.xlane.f32.xlu0 %v1904
        %v1906 = vpop.xlane.xlu0 %1905
        %v1907 = vmax.f32 %v1829, %v1830
        %1908 = vmax.xlane.f32.xlu0 %v1907
        %v1909 = vpop.xlane.xlu0 %1908
        %v1910 = vmax.f32 %v1831, %v1832
        %1911 = vmax.xlane.f32.xlu0 %v1910
        %v1912 = vpop.xlane.xlu0 %1911
        %v1913 = vmax.f32 %v1833, %v1834
        %1914 = vmax.xlane.f32.xlu0 %v1913
        %v1915 = vpop.xlane.xlu0 %1914
        %v1916 = vmax.f32 %v1835, %v1836
        %1917 = vmax.xlane.f32.xlu0 %v1916
        %v1918 = vpop.xlane.xlu0 %1917
        %v1919 = vmax.f32 %v1837, %v1838
        %1920 = vmax.xlane.f32.xlu0 %v1919
        %v1921 = vpop.xlane.xlu0 %1920
        %v1922 = vmax.f32 %v1839, %v1840
        %1923 = vmax.xlane.f32.xlu0 %v1922
        %v1924 = vpop.xlane.xlu0 %1923
        %v1925 = vmax.f32 %v1841, %v1842
        %1926 = vmax.xlane.f32.xlu0 %v1925
        %v1927 = vpop.xlane.xlu0 %1926
        %v1928 = vmax.f32 %v1843, %v1844
        %1929 = vmax.xlane.f32.xlu0 %v1928
        %v1930 = vpop.xlane.xlu0 %1929
        %v1931 = vmax.f32 %v1845, %v1846
        %1932 = vmax.xlane.f32.xlu0 %v1931
        %v1933 = vpop.xlane.xlu0 %1932
        %v1934 = vmax.f32 %v1847, %v1848
        %1935 = vmax.xlane.f32.xlu0 %v1934
        %v1936 = vpop.xlane.xlu0 %1935
        %v1937 = vmax.f32 %v1849, %v1850
        %1938 = vmax.xlane.f32.xlu0 %v1937
        %v1939 = vpop.xlane.xlu0 %1938
        %v1940 = vmax.f32 %v1851, %v1852
        %1941 = vmax.xlane.f32.xlu0 %v1940
        %v1942 = vpop.xlane.xlu0 %1941
        %v1943 = vmax.f32 %v1853, %v1854
        %1944 = vmax.xlane.f32.xlu0 %v1943
        %v1945 = vpop.xlane.xlu0 %1944
        %v1946 = vmax.f32 %v1855, %v1856
        %1947 = vmax.xlane.f32.xlu0 %v1946
        %v1948 = vpop.xlane.xlu0 %1947
        %v1949 = vmax.f32 %v1857, %v1858
        %1950 = vmax.xlane.f32.xlu0 %v1949
        %v1951 = vpop.xlane.xlu0 %1950
        %v1952 = vmax.f32 %v1859, %v1860
        %1953 = vmax.xlane.f32.xlu0 %v1952
        %v1954 = vpop.xlane.xlu0 %1953
        %v1955 = vmax.f32 %v1861, %v1862
        %1956 = vmax.xlane.f32.xlu0 %v1955
        %v1957 = vpop.xlane.xlu0 %1956
        %v1958 = vmax.f32 %v1863, %v1864
        %1959 = vmax.xlane.f32.xlu0 %v1958
        %v1960 = vpop.xlane.xlu0 %1959
        %v1961 = vsub.f32 %v1801, %v1867
        %v1962 = vsub.f32 %v1802, %v1867
        %v1963 = vsub.f32 %v1803, %v1870
        %v1964 = vsub.f32 %v1804, %v1870
        %v1965 = vsub.f32 %v1805, %v1873
        %v1966 = vsub.f32 %v1806, %v1873
        %v1967 = vsub.f32 %v1807, %v1876
        %v1968 = vsub.f32 %v1808, %v1876
        %v1969 = vsub.f32 %v1809, %v1879
        %v1970 = vsub.f32 %v1810, %v1879
        %v1971 = vsub.f32 %v1811, %v1882
        %v1972 = vsub.f32 %v1812, %v1882
        %v1973 = vsub.f32 %v1813, %v1885
        %v1974 = vsub.f32 %v1814, %v1885
        %v1975 = vsub.f32 %v1815, %v1888
        %v1976 = vsub.f32 %v1816, %v1888
        %v1977 = vsub.f32 %v1817, %v1891
        %v1978 = vsub.f32 %v1818, %v1891
        %v1979 = vsub.f32 %v1819, %v1894
        %v1980 = vsub.f32 %v1820, %v1894
        %v1981 = vsub.f32 %v1821, %v1897
        %v1982 = vsub.f32 %v1822, %v1897
        %v1983 = vsub.f32 %v1823, %v1900
        %v1984 = vsub.f32 %v1824, %v1900
        %v1985 = vsub.f32 %v1825, %v1903
        %v1986 = vsub.f32 %v1826, %v1903
        %v1987 = vsub.f32 %v1827, %v1906
        %v1988 = vsub.f32 %v1828, %v1906
        %v1989 = vsub.f32 %v1829, %v1909
        %v1990 = vsub.f32 %v1830, %v1909
        %v1991 = vsub.f32 %v1831, %v1912
        %v1992 = vsub.f32 %v1832, %v1912
        %v1993 = vsub.f32 %v1833, %v1915
        %v1994 = vsub.f32 %v1834, %v1915
        %v1995 = vsub.f32 %v1835, %v1918
        %v1996 = vsub.f32 %v1836, %v1918
        %v1997 = vsub.f32 %v1837, %v1921
        %v1998 = vsub.f32 %v1838, %v1921
        %v1999 = vsub.f32 %v1839, %v1924
        %v2000 = vsub.f32 %v1840, %v1924
        %v2001 = vsub.f32 %v1841, %v1927
        %v2002 = vsub.f32 %v1842, %v1927
        %v2003 = vsub.f32 %v1843, %v1930
        %v2004 = vsub.f32 %v1844, %v1930
        %v2005 = vsub.f32 %v1845, %v1933
        %v2006 = vsub.f32 %v1846, %v1933
        %v2007 = vsub.f32 %v1847, %v1936
        %v2008 = vsub.f32 %v1848, %v1936
        %v2009 = vsub.f32 %v1849, %v1939
        %v2010 = vsub.f32 %v1850, %v1939
        %v2011 = vsub.f32 %v1851, %v1942
        %v2012 = vsub.f32 %v1852, %v1942
        %v2013 = vsub.f32 %v1853, %v1945
        %v2014 = vsub.f32 %v1854, %v1945
        %v2015 = vsub.f32 %v1855, %v1948
        %v2016 = vsub.f32 %v1856, %v1948
        %v2017 = vsub.f32 %v1857, %v1951
        %v2018 = vsub.f32 %v1858, %v1951
        %v2019 = vsub.f32 %v1859, %v1954
        %v2020 = vsub.f32 %v1860, %v1954
        %v2021 = vsub.f32 %v1861, %v1957
        %v2022 = vsub.f32 %v1862, %v1957
        %v2023 = vsub.f32 %v1863, %v1960
        %v2024 = vsub.f32 %v1864, %v1960
        %v2025 = vmul.f32 %v1961, 1.442695
        %v2026 = vpow.pop %v2025
        %v2027 = vmul.f32 %v1962, 1.442695
        %v2028 = vpow.pop %v2027
        %v2029 = vmul.f32 %v1963, 1.442695
        %v2030 = vpow.pop %v2029
        %v2031 = vmul.f32 %v1964, 1.442695
        %v2032 = vpow.pop %v2031
        %v2033 = vmul.f32 %v1965, 1.442695
        %v2034 = vpow.pop %v2033
        %v2035 = vmul.f32 %v1966, 1.442695
        %v2036 = vpow.pop %v2035
        %v2037 = vmul.f32 %v1967, 1.442695
        %v2038 = vpow.pop %v2037
        %v2039 = vmul.f32 %v1968, 1.442695
        %v2040 = vpow.pop %v2039
        %v2041 = vmul.f32 %v1969, 1.442695
        %v2042 = vpow.pop %v2041
        %v2043 = vmul.f32 %v1970, 1.442695
        %v2044 = vpow.pop %v2043
        %v2045 = vmul.f32 %v1971, 1.442695
        %v2046 = vpow.pop %v2045
        %v2047 = vmul.f32 %v1972, 1.442695
        %v2048 = vpow.pop %v2047
        %v2049 = vmul.f32 %v1973, 1.442695
        %v2050 = vpow.pop %v2049
        %v2051 = vmul.f32 %v1974, 1.442695
        %v2052 = vpow.pop %v2051
        %v2053 = vmul.f32 %v1975, 1.442695
        %v2054 = vpow.pop %v2053
        %v2055 = vmul.f32 %v1976, 1.442695
        %v2056 = vpow.pop %v2055
        %v2057 = vmul.f32 %v1977, 1.442695
        %v2058 = vpow.pop %v2057
        %v2059 = vmul.f32 %v1978, 1.442695
        %v2060 = vpow.pop %v2059
        %v2061 = vmul.f32 %v1979, 1.442695
        %v2062 = vpow.pop %v2061
        %v2063 = vmul.f32 %v1980, 1.442695
        %v2064 = vpow.pop %v2063
        %v2065 = vmul.f32 %v1981, 1.442695
        %v2066 = vpow.pop %v2065
        %v2067 = vmul.f32 %v1982, 1.442695
        %v2068 = vpow.pop %v2067
        %v2069 = vmul.f32 %v1983, 1.442695
        %v2070 = vpow.pop %v2069
        %v2071 = vmul.f32 %v1984, 1.442695
        %v2072 = vpow.pop %v2071
        %v2073 = vmul.f32 %v1985, 1.442695
        %v2074 = vpow.pop %v2073
        %v2075 = vmul.f32 %v1986, 1.442695
        %v2076 = vpow.pop %v2075
        %v2077 = vmul.f32 %v1987, 1.442695
        %v2078 = vpow.pop %v2077
        %v2079 = vmul.f32 %v1988, 1.442695
        %v2080 = vpow.pop %v2079
        %v2081 = vmul.f32 %v1989, 1.442695
        %v2082 = vpow.pop %v2081
        %v2083 = vmul.f32 %v1990, 1.442695
        %v2084 = vpow.pop %v2083
        %v2085 = vmul.f32 %v1991, 1.442695
        %v2086 = vpow.pop %v2085
        %v2087 = vmul.f32 %v1992, 1.442695
        %v2088 = vpow.pop %v2087
        %v2089 = vmul.f32 %v1993, 1.442695
        %v2090 = vpow.pop %v2089
        %v2091 = vmul.f32 %v1994, 1.442695
        %v2092 = vpow.pop %v2091
        %v2093 = vmul.f32 %v1995, 1.442695
        %v2094 = vpow.pop %v2093
        %v2095 = vmul.f32 %v1996, 1.442695
        %v2096 = vpow.pop %v2095
        %v2097 = vmul.f32 %v1997, 1.442695
        %v2098 = vpow.pop %v2097
        %v2099 = vmul.f32 %v1998, 1.442695
        %v2100 = vpow.pop %v2099
        %v2101 = vmul.f32 %v1999, 1.442695
        %v2102 = vpow.pop %v2101
        %v2103 = vmul.f32 %v2000, 1.442695
        %v2104 = vpow.pop %v2103
        %v2105 = vmul.f32 %v2001, 1.442695
        %v2106 = vpow.pop %v2105
        %v2107 = vmul.f32 %v2002, 1.442695
        %v2108 = vpow.pop %v2107
        %v2109 = vmul.f32 %v2003, 1.442695
        %v2110 = vpow.pop %v2109
        %v2111 = vmul.f32 %v2004, 1.442695
        %v2112 = vpow.pop %v2111
        %v2113 = vmul.f32 %v2005, 1.442695
        %v2114 = vpow.pop %v2113
        %v2115 = vmul.f32 %v2006, 1.442695
        %v2116 = vpow.pop %v2115
        %v2117 = vmul.f32 %v2007, 1.442695
        %v2118 = vpow.pop %v2117
        %v2119 = vmul.f32 %v2008, 1.442695
        %v2120 = vpow.pop %v2119
        %v2121 = vmul.f32 %v2009, 1.442695
        %v2122 = vpow.pop %v2121
        %v2123 = vmul.f32 %v2010, 1.442695
        %v2124 = vpow.pop %v2123
        %v2125 = vmul.f32 %v2011, 1.442695
        %v2126 = vpow.pop %v2125
        %v2127 = vmul.f32 %v2012, 1.442695
        %v2128 = vpow.pop %v2127
        %v2129 = vmul.f32 %v2013, 1.442695
        %v2130 = vpow.pop %v2129
        %v2131 = vmul.f32 %v2014, 1.442695
        %v2132 = vpow.pop %v2131
        %v2133 = vmul.f32 %v2015, 1.442695
        %v2134 = vpow.pop %v2133
        %v2135 = vmul.f32 %v2016, 1.442695
        %v2136 = vpow.pop %v2135
        %v2137 = vmul.f32 %v2017, 1.442695
        %v2138 = vpow.pop %v2137
        %v2139 = vmul.f32 %v2018, 1.442695
        %v2140 = vpow.pop %v2139
        %v2141 = vmul.f32 %v2019, 1.442695
        %v2142 = vpow.pop %v2141
        %v2143 = vmul.f32 %v2020, 1.442695
        %v2144 = vpow.pop %v2143
        %v2145 = vmul.f32 %v2021, 1.442695
        %v2146 = vpow.pop %v2145
        %v2147 = vmul.f32 %v2022, 1.442695
        %v2148 = vpow.pop %v2147
        %v2149 = vmul.f32 %v2023, 1.442695
        %v2150 = vpow.pop %v2149
        %v2151 = vmul.f32 %v2024, 1.442695
        %v2152 = vpow.pop %v2151
        %v2153 = vadd.f32 %v2026, %v2028
        %2154 = vadd.xlane.f32.xlu0 %v2153
        %v2155 = vpop.xlane.xlu0 %2154
        %v2156 = vadd.f32 %v2030, %v2032
        %2157 = vadd.xlane.f32.xlu0 %v2156
        %v2158 = vpop.xlane.xlu0 %2157
        %v2159 = vadd.f32 %v2034, %v2036
        %2160 = vadd.xlane.f32.xlu0 %v2159
        %v2161 = vpop.xlane.xlu0 %2160
        %v2162 = vadd.f32 %v2038, %v2040
        %2163 = vadd.xlane.f32.xlu0 %v2162
        %v2164 = vpop.xlane.xlu0 %2163
        %v2165 = vadd.f32 %v2042, %v2044
        %2166 = vadd.xlane.f32.xlu0 %v2165
        %v2167 = vpop.xlane.xlu0 %2166
        %v2168 = vadd.f32 %v2046, %v2048
        %2169 = vadd.xlane.f32.xlu0 %v2168
        %v2170 = vpop.xlane.xlu0 %2169
        %v2171 = vadd.f32 %v2050, %v2052
        %2172 = vadd.xlane.f32.xlu0 %v2171
        %v2173 = vpop.xlane.xlu0 %2172
        %v2174 = vadd.f32 %v2054, %v2056
        %2175 = vadd.xlane.f32.xlu0 %v2174
        %v2176 = vpop.xlane.xlu0 %2175
        %v2177 = vadd.f32 %v2058, %v2060
        %2178 = vadd.xlane.f32.xlu0 %v2177
        %v2179 = vpop.xlane.xlu0 %2178
        %v2180 = vadd.f32 %v2062, %v2064
        %2181 = vadd.xlane.f32.xlu0 %v2180
        %v2182 = vpop.xlane.xlu0 %2181
        %v2183 = vadd.f32 %v2066, %v2068
        %2184 = vadd.xlane.f32.xlu0 %v2183
        %v2185 = vpop.xlane.xlu0 %2184
        %v2186 = vadd.f32 %v2070, %v2072
        %2187 = vadd.xlane.f32.xlu0 %v2186
        %v2188 = vpop.xlane.xlu0 %2187
        %v2189 = vadd.f32 %v2074, %v2076
        %2190 = vadd.xlane.f32.xlu0 %v2189
        %v2191 = vpop.xlane.xlu0 %2190
        %v2192 = vadd.f32 %v2078, %v2080
        %2193 = vadd.xlane.f32.xlu0 %v2192
        %v2194 = vpop.xlane.xlu0 %2193
        %v2195 = vadd.f32 %v2082, %v2084
        %2196 = vadd.xlane.f32.xlu0 %v2195
        %v2197 = vpop.xlane.xlu0 %2196
        %v2198 = vadd.f32 %v2086, %v2088
        %2199 = vadd.xlane.f32.xlu0 %v2198
        %v2200 = vpop.xlane.xlu0 %2199
        %v2201 = vadd.f32 %v2090, %v2092
        %2202 = vadd.xlane.f32.xlu0 %v2201
        %v2203 = vpop.xlane.xlu0 %2202
        %v2204 = vadd.f32 %v2094, %v2096
        %2205 = vadd.xlane.f32.xlu0 %v2204
        %v2206 = vpop.xlane.xlu0 %2205
        %v2207 = vadd.f32 %v2098, %v2100
        %2208 = vadd.xlane.f32.xlu0 %v2207
        %v2209 = vpop.xlane.xlu0 %2208
        %v2210 = vadd.f32 %v2102, %v2104
        %2211 = vadd.xlane.f32.xlu0 %v2210
        %v2212 = vpop.xlane.xlu0 %2211
        %v2213 = vadd.f32 %v2106, %v2108
        %2214 = vadd.xlane.f32.xlu0 %v2213
        %v2215 = vpop.xlane.xlu0 %2214
        %v2216 = vadd.f32 %v2110, %v2112
        %2217 = vadd.xlane.f32.xlu0 %v2216
        %v2218 = vpop.xlane.xlu0 %2217
        %v2219 = vadd.f32 %v2114, %v2116
        %2220 = vadd.xlane.f32.xlu0 %v2219
        %v2221 = vpop.xlane.xlu0 %2220
        %v2222 = vadd.f32 %v2118, %v2120
        %2223 = vadd.xlane.f32.xlu0 %v2222
        %v2224 = vpop.xlane.xlu0 %2223
        %v2225 = vadd.f32 %v2122, %v2124
        %2226 = vadd.xlane.f32.xlu0 %v2225
        %v2227 = vpop.xlane.xlu0 %2226
        %v2228 = vadd.f32 %v2126, %v2128
        %2229 = vadd.xlane.f32.xlu0 %v2228
        %v2230 = vpop.xlane.xlu0 %2229
        %v2231 = vadd.f32 %v2130, %v2132
        %2232 = vadd.xlane.f32.xlu0 %v2231
        %v2233 = vpop.xlane.xlu0 %2232
        %v2234 = vadd.f32 %v2134, %v2136
        %2235 = vadd.xlane.f32.xlu0 %v2234
        %v2236 = vpop.xlane.xlu0 %2235
        %v2237 = vadd.f32 %v2138, %v2140
        %2238 = vadd.xlane.f32.xlu0 %v2237
        %v2239 = vpop.xlane.xlu0 %2238
        %v2240 = vadd.f32 %v2142, %v2144
        %2241 = vadd.xlane.f32.xlu0 %v2240
        %v2242 = vpop.xlane.xlu0 %2241
        %v2243 = vadd.f32 %v2146, %v2148
        %2244 = vadd.xlane.f32.xlu0 %v2243
        %v2245 = vpop.xlane.xlu0 %2244
        %v2246 = vadd.f32 %v2150, %v2152
        %2247 = vadd.xlane.f32.xlu0 %v2246
        %v2248 = vpop.xlane.xlu0 %2247
        %v2249 = vpack.c.bf16 %v2030, %v2026
        %v2250 = vpack.c.bf16 %v2032, %v2028
        %v2251 = vpack.c.bf16 %v2038, %v2034
        %v2252 = vpack.c.bf16 %v2040, %v2036
        %v2253 = vpack.c.bf16 %v2046, %v2042
        %v2254 = vpack.c.bf16 %v2048, %v2044
        %v2255 = vpack.c.bf16 %v2054, %v2050
        %v2256 = vpack.c.bf16 %v2056, %v2052
        %v2257 = vpack.c.bf16 %v2062, %v2058
        %v2258 = vpack.c.bf16 %v2064, %v2060
        %v2259 = vpack.c.bf16 %v2070, %v2066
        %v2260 = vpack.c.bf16 %v2072, %v2068
        %v2261 = vpack.c.bf16 %v2078, %v2074
        %v2262 = vpack.c.bf16 %v2080, %v2076
        %v2263 = vpack.c.bf16 %v2086, %v2082
        %v2264 = vpack.c.bf16 %v2088, %v2084
        %v2265 = vpack.c.bf16 %v2094, %v2090
        %v2266 = vpack.c.bf16 %v2096, %v2092
        %v2267 = vpack.c.bf16 %v2102, %v2098
        %v2268 = vpack.c.bf16 %v2104, %v2100
        %v2269 = vpack.c.bf16 %v2110, %v2106
        %v2270 = vpack.c.bf16 %v2112, %v2108
        %v2271 = vpack.c.bf16 %v2118, %v2114
        %v2272 = vpack.c.bf16 %v2120, %v2116
        %v2273 = vpack.c.bf16 %v2126, %v2122
        %v2274 = vpack.c.bf16 %v2128, %v2124
        %v2275 = vpack.c.bf16 %v2134, %v2130
        %v2276 = vpack.c.bf16 %v2136, %v2132
        %v2277 = vpack.c.bf16 %v2142, %v2138
        %v2278 = vpack.c.bf16 %v2144, %v2140
        %v2279 = vpack.c.bf16 %v2150, %v2146
        %v2280 = vpack.c.bf16 %v2152, %v2148
        %2281 = vmatprep.subr.bf16.mxu0 0
        %2282 = vmatpush1.bf16.msra.mxu0 %v1457
        %2283 = vmatprep.subr.bf16.mxu0 0
        %2284 = vmatpush1.bf16.msra.mxu0 %v1458
        %2285 = vmatprep.subr.bf16.mxu0 0
        %2286 = vmatpush1.bf16.msra.mxu0 %v1459
        %2287 = vmatprep.subr.bf16.mxu0 0
        %2288 = vmatpush1.bf16.msra.mxu0 %v1460
        %2289 = vmatprep.subr.bf16.mxu0 0
        %2290 = vmatpush1.bf16.msra.mxu0 %v1461
        %2291 = vmatprep.subr.bf16.mxu0 0
        %2292 = vmatpush1.bf16.msra.mxu0 %v1462
        %2293 = vmatprep.subr.bf16.mxu0 0
        %2294 = vmatpush1.bf16.msra.mxu0 %v1463
        %2295 = vmatprep.subr.bf16.mxu0 0
        %2296 = vmatpush1.bf16.msra.mxu0 %v1464
        %2297 = vmatprep.subr.bf16.mxu0 0
        %2298 = vmatpush1.bf16.msra.mxu0 %v1465
        %2299 = vmatprep.subr.bf16.mxu0 0
        %2300 = vmatpush1.bf16.msra.mxu0 %v1466
        %2301 = vmatprep.subr.bf16.mxu0 0
        %2302 = vmatpush1.bf16.msra.mxu0 %v1467
        %2303 = vmatprep.subr.bf16.mxu0 0
        %2304 = vmatpush1.bf16.msra.mxu0 %v1468
        %2305 = vmatprep.subr.bf16.mxu0 0
        %2306 = vmatpush1.bf16.msra.mxu0 %v1469
        %2307 = vmatprep.subr.bf16.mxu0 0
        %2308 = vmatpush1.bf16.msra.mxu0 %v1470
        %2309 = vmatprep.subr.bf16.mxu0 0
        %2310 = vmatpush1.bf16.msra.mxu0 %v1471
        %2311 = vmatprep.subr.bf16.mxu0 0
        %2312 = vmatpush1.bf16.msra.mxu0 %v1472
        %2313 = vmatprep.mubr.bf16.mxu0 %v2250
        %2314 = vmatmul.mubr.bf16.gmra.mrb[0].mxu0 %v2249
        %v2315 = vpop.f32.mrb[0].mxu0
        %v2316 = vadd.f32 0.0, %v2315
        %v2317 = vpop.f32.mrb[0].mxu0
        %v2318 = vpop.f32.mrb[0].mxu0
        %v2319 = vadd.f32 0.0, %v2318
        %v2320 = vpop.f32.mrb[0].mxu0
        %2321 = vmatprep.mubr.bf16.mxu0 %v2252
        %2322 = vmatmul.mubr.bf16.gmra.mrb[0].mxu0 %v2251
        %v2323 = vpop.f32.mrb[0].mxu0
        %v2324 = vadd.f32 0.0, %v2323
        %v2325 = vpop.f32.mrb[0].mxu0
        %v2326 = vpop.f32.mrb[0].mxu0
        %v2327 = vadd.f32 0.0, %v2326
        %v2328 = vpop.f32.mrb[0].mxu0
        %2329 = vmatprep.mubr.bf16.mxu0 %v2254
        %2330 = vmatmul.mubr.bf16.gmra.mrb[0].mxu0 %v2253
        %v2331 = vpop.f32.mrb[0].mxu0
        %v2332 = vadd.f32 0.0, %v2331
        %v2333 = vpop.f32.mrb[0].mxu0
        %v2334 = vpop.f32.mrb[0].mxu0
        %v2335 = vadd.f32 0.0, %v2334
        %v2336 = vpop.f32.mrb[0].mxu0
        %2337 = vmatprep.mubr.bf16.mxu0 %v2256
        %2338 = vmatmul.mubr.bf16.gmra.mrb[0].mxu0 %v2255
        %v2339 = vpop.f32.mrb[0].mxu0
        %v2340 = vadd.f32 0.0, %v2339
        %v2341 = vpop.f32.mrb[0].mxu0
        %v2342 = vpop.f32.mrb[0].mxu0
        %v2343 = vadd.f32 0.0, %v2342
        %v2344 = vpop.f32.mrb[0].mxu0
        %2345 = vmatprep.mubr.bf16.mxu0 %v2258
        %2346 = vmatmul.mubr.bf16.gmra.mrb[0].mxu0 %v2257
        %v2347 = vpop.f32.mrb[0].mxu0
        %v2348 = vadd.f32 0.0, %v2347
        %v2349 = vpop.f32.mrb[0].mxu0
        %v2350 = vpop.f32.mrb[0].mxu0
        %v2351 = vadd.f32 0.0, %v2350
        %v2352 = vpop.f32.mrb[0].mxu0
        %2353 = vmatprep.mubr.bf16.mxu0 %v2260
        %2354 = vmatmul.mubr.bf16.gmra.mrb[0].mxu0 %v2259
        %v2355 = vpop.f32.mrb[0].mxu0
        %v2356 = vadd.f32 0.0, %v2355
        %v2357 = vpop.f32.mrb[0].mxu0
        %v2358 = vpop.f32.mrb[0].mxu0
        %v2359 = vadd.f32 0.0, %v2358
        %v2360 = vpop.f32.mrb[0].mxu0
        %2361 = vmatprep.mubr.bf16.mxu0 %v2262
        %2362 = vmatmul.mubr.bf16.gmra.mrb[0].mxu0 %v2261
        %v2363 = vpop.f32.mrb[0].mxu0
        %v2364 = vadd.f32 0.0, %v2363
        %v2365 = vpop.f32.mrb[0].mxu0
        %v2366 = vpop.f32.mrb[0].mxu0
        %v2367 = vadd.f32 0.0, %v2366
        %v2368 = vpop.f32.mrb[0].mxu0
        %2369 = vmatprep.mubr.bf16.mxu0 %v2264
        %2370 = vmatmul.mubr.bf16.gmra.mrb[0].mxu0 %v2263
        %v2371 = vpop.f32.mrb[0].mxu0
        %v2372 = vadd.f32 0.0, %v2371
        %v2373 = vpop.f32.mrb[0].mxu0
        %v2374 = vpop.f32.mrb[0].mxu0
        %v2375 = vadd.f32 0.0, %v2374
        %v2376 = vpop.f32.mrb[0].mxu0
        %2377 = vmatprep.mubr.bf16.mxu0 %v2266
        %2378 = vmatmul.mubr.bf16.gmra.mrb[0].mxu0 %v2265
        %v2379 = vpop.f32.mrb[0].mxu0
        %v2380 = vadd.f32 0.0, %v2379
        %v2381 = vpop.f32.mrb[0].mxu0
        %v2382 = vpop.f32.mrb[0].mxu0
        %v2383 = vadd.f32 0.0, %v2382
        %v2384 = vpop.f32.mrb[0].mxu0
        %2385 = vmatprep.mubr.bf16.mxu0 %v2268
        %2386 = vmatmul.mubr.bf16.gmra.mrb[0].mxu0 %v2267
        %v2387 = vpop.f32.mrb[0].mxu0
        %v2388 = vadd.f32 0.0, %v2387
        %v2389 = vpop.f32.mrb[0].mxu0
        %v2390 = vpop.f32.mrb[0].mxu0
        %v2391 = vadd.f32 0.0, %v2390
        %v2392 = vpop.f32.mrb[0].mxu0
        %2393 = vmatprep.mubr.bf16.mxu0 %v2270
        %2394 = vmatmul.mubr.bf16.gmra.mrb[0].mxu0 %v2269
        %v2395 = vpop.f32.mrb[0].mxu0
        %v2396 = vadd.f32 0.0, %v2395
        %v2397 = vpop.f32.mrb[0].mxu0
        %v2398 = vpop.f32.mrb[0].mxu0
        %v2399 = vadd.f32 0.0, %v2398
        %v2400 = vpop.f32.mrb[0].mxu0
        %2401 = vmatprep.mubr.bf16.mxu0 %v2272
        %2402 = vmatmul.mubr.bf16.gmra.mrb[0].mxu0 %v2271
        %v2403 = vpop.f32.mrb[0].mxu0
        %v2404 = vadd.f32 0.0, %v2403
        %v2405 = vpop.f32.mrb[0].mxu0
        %v2406 = vpop.f32.mrb[0].mxu0
        %v2407 = vadd.f32 0.0, %v2406
        %v2408 = vpop.f32.mrb[0].mxu0
        %2409 = vmatprep.mubr.bf16.mxu0 %v2274
        %2410 = vmatmul.mubr.bf16.gmra.mrb[0].mxu0 %v2273
        %v2411 = vpop.f32.mrb[0].mxu0
        %v2412 = vadd.f32 0.0, %v2411
        %v2413 = vpop.f32.mrb[0].mxu0
        %v2414 = vpop.f32.mrb[0].mxu0
        %v2415 = vadd.f32 0.0, %v2414
        %v2416 = vpop.f32.mrb[0].mxu0
        %2417 = vmatprep.mubr.bf16.mxu0 %v2276
        %2418 = vmatmul.mubr.bf16.gmra.mrb[0].mxu0 %v2275
        %v2419 = vpop.f32.mrb[0].mxu0
        %v2420 = vadd.f32 0.0, %v2419
        %v2421 = vpop.f32.mrb[0].mxu0
        %v2422 = vpop.f32.mrb[0].mxu0
        %v2423 = vadd.f32 0.0, %v2422
        %v2424 = vpop.f32.mrb[0].mxu0
        %2425 = vmatprep.mubr.bf16.mxu0 %v2278
        %2426 = vmatmul.mubr.bf16.gmra.mrb[0].mxu0 %v2277
        %v2427 = vpop.f32.mrb[0].mxu0
        %v2428 = vadd.f32 0.0, %v2427
        %v2429 = vpop.f32.mrb[0].mxu0
        %v2430 = vpop.f32.mrb[0].mxu0
        %v2431 = vadd.f32 0.0, %v2430
        %v2432 = vpop.f32.mrb[0].mxu0
        %2433 = vmatprep.mubr.bf16.mxu0 %v2280
        %2434 = vmatmul.mubr.bf16.gmra.mrb[0].mxu0 %v2279
        %v2435 = vpop.f32.mrb[0].mxu0
        %v2436 = vadd.f32 0.0, %v2435
        %v2437 = vpop.f32.mrb[0].mxu0
        %v2438 = vpop.f32.mrb[0].mxu0
        %v2439 = vadd.f32 0.0, %v2438
        %v2440 = vpop.f32.mrb[0].mxu0
        %2441 = vdwg.mxu0
        // While loop
        $region73: #{tpu_custom_call.1} parent=47 // loop_pre_header
          _
        $region74: #{tpu_custom_call.1} parent=47 // loop_header
          %s2443 = sphi 0, %s2445
          %p2444 = scmp.ge.s32.totalorder %s2443, %s34
          %v2448 = vphi %v1867, %v2920
          %v2449 = vphi %v1870, %v2921
          %v2450 = vphi %v1873, %v2922
          %v2451 = vphi %v1876, %v2923
          %v2452 = vphi %v1879, %v2924
          %v2453 = vphi %v1882, %v2925
          %v2454 = vphi %v1885, %v2926
          %v2455 = vphi %v1888, %v2927
          %v2456 = vphi %v1891, %v2928
          %v2457 = vphi %v1894, %v2929
          %v2458 = vphi %v1897, %v2930
          %v2459 = vphi %v1900, %v2931
          %v2460 = vphi %v1903, %v2932
          %v2461 = vphi %v1906, %v2933
          %v2462 = vphi %v1909, %v2934
          %v2463 = vphi %v1912, %v2935
          %v2464 = vphi %v1915, %v2936
          %v2465 = vphi %v1918, %v2937
          %v2466 = vphi %v1921, %v2938
          %v2467 = vphi %v1924, %v2939
          %v2468 = vphi %v1927, %v2940
          %v2469 = vphi %v1930, %v2941
          %v2470 = vphi %v1933, %v2942
          %v2471 = vphi %v1936, %v2943
          %v2472 = vphi %v1939, %v2944
          %v2473 = vphi %v1942, %v2945
          %v2474 = vphi %v1945, %v2946
          %v2475 = vphi %v1948, %v2947
          %v2476 = vphi %v1951, %v2948
          %v2477 = vphi %v1954, %v2949
          %v2478 = vphi %v1957, %v2950
          %v2479 = vphi %v1960, %v2951
          %v2480 = vphi %v2155, %v3368
          %v2481 = vphi %v2158, %v3369
          %v2482 = vphi %v2161, %v3370
          %v2483 = vphi %v2164, %v3371
          %v2484 = vphi %v2167, %v3372
          %v2485 = vphi %v2170, %v3373
          %v2486 = vphi %v2173, %v3374
          %v2487 = vphi %v2176, %v3375
          %v2488 = vphi %v2179, %v3376
          %v2489 = vphi %v2182, %v3377
          %v2490 = vphi %v2185, %v3378
          %v2491 = vphi %v2188, %v3379
          %v2492 = vphi %v2191, %v3380
          %v2493 = vphi %v2194, %v3381
          %v2494 = vphi %v2197, %v3382
          %v2495 = vphi %v2200, %v3383
          %v2496 = vphi %v2203, %v3384
          %v2497 = vphi %v2206, %v3385
          %v2498 = vphi %v2209, %v3386
          %v2499 = vphi %v2212, %v3387
          %v2500 = vphi %v2215, %v3388
          %v2501 = vphi %v2218, %v3389
          %v2502 = vphi %v2221, %v3390
          %v2503 = vphi %v2224, %v3391
          %v2504 = vphi %v2227, %v3392
          %v2505 = vphi %v2230, %v3393
          %v2506 = vphi %v2233, %v3394
          %v2507 = vphi %v2236, %v3395
          %v2508 = vphi %v2239, %v3396
          %v2509 = vphi %v2242, %v3397
          %v2510 = vphi %v2245, %v3398
          %v2511 = vphi %v2248, %v3399
          %v2512 = vphi %v2316, %v3625
          %v2513 = vphi %v2319, %v3626
          %v2514 = vphi %v2324, %v3627
          %v2515 = vphi %v2327, %v3628
          %v2516 = vphi %v2332, %v3629
          %v2517 = vphi %v2335, %v3630
          %v2518 = vphi %v2340, %v3631
          %v2519 = vphi %v2343, %v3632
          %v2520 = vphi %v2348, %v3633
          %v2521 = vphi %v2351, %v3634
          %v2522 = vphi %v2356, %v3635
          %v2523 = vphi %v2359, %v3636
          %v2524 = vphi %v2364, %v3637
          %v2525 = vphi %v2367, %v3638
          %v2526 = vphi %v2372, %v3639
          %v2527 = vphi %v2375, %v3640
          %v2528 = vphi %v2380, %v3641
          %v2529 = vphi %v2383, %v3642
          %v2530 = vphi %v2388, %v3643
          %v2531 = vphi %v2391, %v3644
          %v2532 = vphi %v2396, %v3645
          %v2533 = vphi %v2399, %v3646
          %v2534 = vphi %v2404, %v3647
          %v2535 = vphi %v2407, %v3648
          %v2536 = vphi %v2412, %v3649
          %v2537 = vphi %v2415, %v3650
          %v2538 = vphi %v2420, %v3651
          %v2539 = vphi %v2423, %v3652
          %v2540 = vphi %v2428, %v3653
          %v2541 = vphi %v2431, %v3654
          %v2542 = vphi %v2436, %v3655
          %v2543 = vphi %v2439, %v3656
        $region75: #{tpu_custom_call.1} parent=47 // loop_header_branch
          %2447 = sbr.rel (%p2444) target = $region79
        $region76: #{tpu_custom_call.1} parent=47 // loop_body
          %s2544 = smul.u32 %s2443, 256
          %s2545 = sshra.s32 %s2544, 4
          %s2546 = sand.u32 %s2544, 15
          %s2547 = smul.addr %s2545, 8
          %s2548 = scalar_lea.vmem [#allocation2], %s2547
          %v2549 = vld [vmem:[%s2548] sm:$0xff]
          %v2550 = vld [vmem:[%s2548 + $0x8] sm:$0xff]
          %v2551 = vld [vmem:[%s2548 + $0x10] sm:$0xff]
          %v2552 = vld [vmem:[%s2548 + $0x18] sm:$0xff]
          %v2553 = vld [vmem:[%s2548 + $0x20] sm:$0xff]
          %v2554 = vld [vmem:[%s2548 + $0x28] sm:$0xff]
          %v2555 = vld [vmem:[%s2548 + $0x30] sm:$0xff]
          %v2556 = vld [vmem:[%s2548 + $0x38] sm:$0xff]
          %v2557 = vld [vmem:[%s2548 + $0x40] sm:$0xff]
          %v2558 = vld [vmem:[%s2548 + $0x48] sm:$0xff]
          %v2559 = vld [vmem:[%s2548 + $0x50] sm:$0xff]
          %v2560 = vld [vmem:[%s2548 + $0x58] sm:$0xff]
          %v2561 = vld [vmem:[%s2548 + $0x60] sm:$0xff]
          %v2562 = vld [vmem:[%s2548 + $0x68] sm:$0xff]
          %v2563 = vld [vmem:[%s2548 + $0x70] sm:$0xff]
          %v2564 = vld [vmem:[%s2548 + $0x78] sm:$0xff]
          %s2565 = smul.addr %s2545, 8
          %s2566 = scalar_lea.vmem [#allocation3], %s2565
          %v2567 = vld [vmem:[%s2566] sm:$0xff]
          %v2568 = vld [vmem:[%s2566 + $0x8] sm:$0xff]
          %v2569 = vld [vmem:[%s2566 + $0x10] sm:$0xff]
          %v2570 = vld [vmem:[%s2566 + $0x18] sm:$0xff]
          %v2571 = vld [vmem:[%s2566 + $0x20] sm:$0xff]
          %v2572 = vld [vmem:[%s2566 + $0x28] sm:$0xff]
          %v2573 = vld [vmem:[%s2566 + $0x30] sm:$0xff]
          %v2574 = vld [vmem:[%s2566 + $0x38] sm:$0xff]
          %v2575 = vld [vmem:[%s2566 + $0x40] sm:$0xff]
          %v2576 = vld [vmem:[%s2566 + $0x48] sm:$0xff]
          %v2577 = vld [vmem:[%s2566 + $0x50] sm:$0xff]
          %v2578 = vld [vmem:[%s2566 + $0x58] sm:$0xff]
          %v2579 = vld [vmem:[%s2566 + $0x60] sm:$0xff]
          %v2580 = vld [vmem:[%s2566 + $0x68] sm:$0xff]
          %v2581 = vld [vmem:[%s2566 + $0x70] sm:$0xff]
          %v2582 = vld [vmem:[%s2566 + $0x78] sm:$0xff]
          %v2584 = vsel %vm1477, %v2549, 0
          %v2587 = vsel %vm1477, %v2550, 0
          %v2590 = vsel %vm1477, %v2551, 0
          %v2593 = vsel %vm1477, %v2552, 0
          %v2596 = vsel %vm1477, %v2553, 0
          %v2599 = vsel %vm1477, %v2554, 0
          %v2602 = vsel %vm1477, %v2555, 0
          %v2605 = vsel %vm1477, %v2556, 0
          %v2608 = vsel %vm1477, %v2557, 0
          %v2611 = vsel %vm1477, %v2558, 0
          %v2614 = vsel %vm1477, %v2559, 0
          %v2617 = vsel %vm1477, %v2560, 0
          %v2620 = vsel %vm1477, %v2561, 0
          %v2623 = vsel %vm1477, %v2562, 0
          %v2626 = vsel %vm1477, %v2563, 0
          %v2629 = vsel %vm1477, %v2564, 0
          %2631 = vmatprep.subr.bf16.mxu0 0
          %2632 = vmatpush1.bf16.xpose.msra.mxu0 %v2584
          %2633 = vmatprep.subr.bf16.mxu0 0
          %2634 = vmatpush1.bf16.xpose.msra.mxu0 %v2587
          %2635 = vmatprep.subr.bf16.mxu0 0
          %2636 = vmatpush1.bf16.xpose.msra.mxu0 %v2590
          %2637 = vmatprep.subr.bf16.mxu0 0
          %2638 = vmatpush1.bf16.xpose.msra.mxu0 %v2593
          %2639 = vmatprep.subr.bf16.mxu0 0
          %2640 = vmatpush1.bf16.xpose.msra.mxu0 %v2596
          %2641 = vmatprep.subr.bf16.mxu0 0
          %2642 = vmatpush1.bf16.xpose.msra.mxu0 %v2599
          %2643 = vmatprep.subr.bf16.mxu0 0
          %2644 = vmatpush1.bf16.xpose.msra.mxu0 %v2602
          %2645 = vmatprep.subr.bf16.mxu0 0
          %2646 = vmatpush1.bf16.xpose.msra.mxu0 %v2605
          %2647 = vmatprep.subr.bf16.mxu0 0
          %2648 = vmatpush1.bf16.xpose.msra.mxu0 %v2608
          %2649 = vmatprep.subr.bf16.mxu0 0
          %2650 = vmatpush1.bf16.xpose.msra.mxu0 %v2611
          %2651 = vmatprep.subr.bf16.mxu0 0
          %2652 = vmatpush1.bf16.xpose.msra.mxu0 %v2614
          %2653 = vmatprep.subr.bf16.mxu0 0
          %2654 = vmatpush1.bf16.xpose.msra.mxu0 %v2617
          %2655 = vmatprep.subr.bf16.mxu0 0
          %2656 = vmatpush1.bf16.xpose.msra.mxu0 %v2620
          %2657 = vmatprep.subr.bf16.mxu0 0
          %2658 = vmatpush1.bf16.xpose.msra.mxu0 %v2623
          %2659 = vmatprep.subr.bf16.mxu0 0
          %2660 = vmatpush1.bf16.xpose.msra.mxu0 %v2626
          %2661 = vmatprep.subr.bf16.mxu0 0
          %2662 = vmatpush1.bf16.xpose.msra.mxu0 %v2629
          %2663 = vmatprep.mubr.bf16.mxu0 0
          %2664 = vmatmul.mubr.bf16.gmra.mrb[0].mxu0 %v1513
          %v2665 = vpop.f32.mrb[0].mxu0
          %v2666 = vadd.f32 0.0, %v2665
          %v2667 = vpop.f32.mrb[0].mxu0
          %v2668 = vadd.f32 0.0, %v2667
          %v2669 = vpop.f32.mrb[0].mxu0
          %v2670 = vadd.f32 0.0, %v2669
          %v2671 = vpop.f32.mrb[0].mxu0
          %v2672 = vadd.f32 0.0, %v2671
          %2673 = vmatprep.mubr.bf16.mxu0 0
          %2674 = vmatmul.mubr.bf16.gmra.mrb[0].mxu0 %v1516
          %v2675 = vpop.f32.mrb[0].mxu0
          %v2676 = vadd.f32 0.0, %v2675
          %v2677 = vpop.f32.mrb[0].mxu0
          %v2678 = vadd.f32 0.0, %v2677
          %v2679 = vpop.f32.mrb[0].mxu0
          %v2680 = vadd.f32 0.0, %v2679
          %v2681 = vpop.f32.mrb[0].mxu0
          %v2682 = vadd.f32 0.0, %v2681
          %2683 = vmatprep.mubr.bf16.mxu0 0
          %2684 = vmatmul.mubr.bf16.gmra.mrb[0].mxu0 %v1519
          %v2685 = vpop.f32.mrb[0].mxu0
          %v2686 = vadd.f32 0.0, %v2685
          %v2687 = vpop.f32.mrb[0].mxu0
          %v2688 = vadd.f32 0.0, %v2687
          %v2689 = vpop.f32.mrb[0].mxu0
          %v2690 = vadd.f32 0.0, %v2689
          %v2691 = vpop.f32.mrb[0].mxu0
          %v2692 = vadd.f32 0.0, %v2691
          %2693 = vmatprep.mubr.bf16.mxu0 0
          %2694 = vmatmul.mubr.bf16.gmra.mrb[0].mxu0 %v1522
          %v2695 = vpop.f32.mrb[0].mxu0
          %v2696 = vadd.f32 0.0, %v2695
          %v2697 = vpop.f32.mrb[0].mxu0
          %v2698 = vadd.f32 0.0, %v2697
          %v2699 = vpop.f32.mrb[0].mxu0
          %v2700 = vadd.f32 0.0, %v2699
          %v2701 = vpop.f32.mrb[0].mxu0
          %v2702 = vadd.f32 0.0, %v2701
          %2703 = vmatprep.mubr.bf16.mxu0 0
          %2704 = vmatmul.mubr.bf16.gmra.mrb[0].mxu0 %v1525
          %v2705 = vpop.f32.mrb[0].mxu0
          %v2706 = vadd.f32 0.0, %v2705
          %v2707 = vpop.f32.mrb[0].mxu0
          %v2708 = vadd.f32 0.0, %v2707
          %v2709 = vpop.f32.mrb[0].mxu0
          %v2710 = vadd.f32 0.0, %v2709
          %v2711 = vpop.f32.mrb[0].mxu0
          %v2712 = vadd.f32 0.0, %v2711
          %2713 = vmatprep.mubr.bf16.mxu0 0
          %2714 = vmatmul.mubr.bf16.gmra.mrb[0].mxu0 %v1528
          %v2715 = vpop.f32.mrb[0].mxu0
          %v2716 = vadd.f32 0.0, %v2715
          %v2717 = vpop.f32.mrb[0].mxu0
          %v2718 = vadd.f32 0.0, %v2717
          %v2719 = vpop.f32.mrb[0].mxu0
          %v2720 = vadd.f32 0.0, %v2719
          %v2721 = vpop.f32.mrb[0].mxu0
          %v2722 = vadd.f32 0.0, %v2721
          %2723 = vmatprep.mubr.bf16.mxu0 0
          %2724 = vmatmul.mubr.bf16.gmra.mrb[0].mxu0 %v1531
          %v2725 = vpop.f32.mrb[0].mxu0
          %v2726 = vadd.f32 0.0, %v2725
          %v2727 = vpop.f32.mrb[0].mxu0
          %v2728 = vadd.f32 0.0, %v2727
          %v2729 = vpop.f32.mrb[0].mxu0
          %v2730 = vadd.f32 0.0, %v2729
          %v2731 = vpop.f32.mrb[0].mxu0
          %v2732 = vadd.f32 0.0, %v2731
          %2733 = vmatprep.mubr.bf16.mxu0 0
          %2734 = vmatmul.mubr.bf16.gmra.mrb[0].mxu0 %v1534
          %v2735 = vpop.f32.mrb[0].mxu0
          %v2736 = vadd.f32 0.0, %v2735
          %v2737 = vpop.f32.mrb[0].mxu0
          %v2738 = vadd.f32 0.0, %v2737
          %v2739 = vpop.f32.mrb[0].mxu0
          %v2740 = vadd.f32 0.0, %v2739
          %v2741 = vpop.f32.mrb[0].mxu0
          %v2742 = vadd.f32 0.0, %v2741
          %2743 = vmatprep.mubr.bf16.mxu0 0
          %2744 = vmatmul.mubr.bf16.gmra.mrb[0].mxu0 %v1537
          %v2745 = vpop.f32.mrb[0].mxu0
          %v2746 = vadd.f32 0.0, %v2745
          %v2747 = vpop.f32.mrb[0].mxu0
          %v2748 = vadd.f32 0.0, %v2747
          %v2749 = vpop.f32.mrb[0].mxu0
          %v2750 = vadd.f32 0.0, %v2749
          %v2751 = vpop.f32.mrb[0].mxu0
          %v2752 = vadd.f32 0.0, %v2751
          %2753 = vmatprep.mubr.bf16.mxu0 0
          %2754 = vmatmul.mubr.bf16.gmra.mrb[0].mxu0 %v1540
          %v2755 = vpop.f32.mrb[0].mxu0
          %v2756 = vadd.f32 0.0, %v2755
          %v2757 = vpop.f32.mrb[0].mxu0
          %v2758 = vadd.f32 0.0, %v2757
          %v2759 = vpop.f32.mrb[0].mxu0
          %v2760 = vadd.f32 0.0, %v2759
          %v2761 = vpop.f32.mrb[0].mxu0
          %v2762 = vadd.f32 0.0, %v2761
          %2763 = vmatprep.mubr.bf16.mxu0 0
          %2764 = vmatmul.mubr.bf16.gmra.mrb[0].mxu0 %v1543
          %v2765 = vpop.f32.mrb[0].mxu0
          %v2766 = vadd.f32 0.0, %v2765
          %v2767 = vpop.f32.mrb[0].mxu0
          %v2768 = vadd.f32 0.0, %v2767
          %v2769 = vpop.f32.mrb[0].mxu0
          %v2770 = vadd.f32 0.0, %v2769
          %v2771 = vpop.f32.mrb[0].mxu0
          %v2772 = vadd.f32 0.0, %v2771
          %2773 = vmatprep.mubr.bf16.mxu0 0
          %2774 = vmatmul.mubr.bf16.gmra.mrb[0].mxu0 %v1546
          %v2775 = vpop.f32.mrb[0].mxu0
          %v2776 = vadd.f32 0.0, %v2775
          %v2777 = vpop.f32.mrb[0].mxu0
          %v2778 = vadd.f32 0.0, %v2777
          %v2779 = vpop.f32.mrb[0].mxu0
          %v2780 = vadd.f32 0.0, %v2779
          %v2781 = vpop.f32.mrb[0].mxu0
          %v2782 = vadd.f32 0.0, %v2781
          %2783 = vmatprep.mubr.bf16.mxu0 0
          %2784 = vmatmul.mubr.bf16.gmra.mrb[0].mxu0 %v1549
          %v2785 = vpop.f32.mrb[0].mxu0
          %v2786 = vadd.f32 0.0, %v2785
          %v2787 = vpop.f32.mrb[0].mxu0
          %v2788 = vadd.f32 0.0, %v2787
          %v2789 = vpop.f32.mrb[0].mxu0
          %v2790 = vadd.f32 0.0, %v2789
          %v2791 = vpop.f32.mrb[0].mxu0
          %v2792 = vadd.f32 0.0, %v2791
          %2793 = vmatprep.mubr.bf16.mxu0 0
          %2794 = vmatmul.mubr.bf16.gmra.mrb[0].mxu0 %v1552
          %v2795 = vpop.f32.mrb[0].mxu0
          %v2796 = vadd.f32 0.0, %v2795
          %v2797 = vpop.f32.mrb[0].mxu0
          %v2798 = vadd.f32 0.0, %v2797
          %v2799 = vpop.f32.mrb[0].mxu0
          %v2800 = vadd.f32 0.0, %v2799
          %v2801 = vpop.f32.mrb[0].mxu0
          %v2802 = vadd.f32 0.0, %v2801
          %2803 = vmatprep.mubr.bf16.mxu0 0
          %2804 = vmatmul.mubr.bf16.gmra.mrb[0].mxu0 %v1555
          %v2805 = vpop.f32.mrb[0].mxu0
          %v2806 = vadd.f32 0.0, %v2805
          %v2807 = vpop.f32.mrb[0].mxu0
          %v2808 = vadd.f32 0.0, %v2807
          %v2809 = vpop.f32.mrb[0].mxu0
          %v2810 = vadd.f32 0.0, %v2809
          %v2811 = vpop.f32.mrb[0].mxu0
          %v2812 = vadd.f32 0.0, %v2811
          %2813 = vmatprep.mubr.bf16.mxu0 0
          %2814 = vmatmul.mubr.bf16.gmra.mrb[0].mxu0 %v1558
          %v2815 = vpop.f32.mrb[0].mxu0
          %v2816 = vadd.f32 0.0, %v2815
          %v2817 = vpop.f32.mrb[0].mxu0
          %v2818 = vadd.f32 0.0, %v2817
          %v2819 = vpop.f32.mrb[0].mxu0
          %v2820 = vadd.f32 0.0, %v2819
          %v2821 = vpop.f32.mrb[0].mxu0
          %v2822 = vadd.f32 0.0, %v2821
          %2823 = vdwg.mxu0
          %v2824 = vmax.f32 %v2666, %v2668
          %2825 = vmax.xlane.f32.xlu0 %v2824
          %v2826 = vpop.xlane.xlu0 %2825
          %v2827 = vmax.f32 %v2670, %v2672
          %2828 = vmax.xlane.f32.xlu0 %v2827
          %v2829 = vpop.xlane.xlu0 %2828
          %v2830 = vmax.f32 %v2676, %v2678
          %2831 = vmax.xlane.f32.xlu0 %v2830
          %v2832 = vpop.xlane.xlu0 %2831
          %v2833 = vmax.f32 %v2680, %v2682
          %2834 = vmax.xlane.f32.xlu0 %v2833
          %v2835 = vpop.xlane.xlu0 %2834
          %v2836 = vmax.f32 %v2686, %v2688
          %2837 = vmax.xlane.f32.xlu0 %v2836
          %v2838 = vpop.xlane.xlu0 %2837
          %v2839 = vmax.f32 %v2690, %v2692
          %2840 = vmax.xlane.f32.xlu0 %v2839
          %v2841 = vpop.xlane.xlu0 %2840
          %v2842 = vmax.f32 %v2696, %v2698
          %2843 = vmax.xlane.f32.xlu0 %v2842
          %v2844 = vpop.xlane.xlu0 %2843
          %v2845 = vmax.f32 %v2700, %v2702
          %2846 = vmax.xlane.f32.xlu0 %v2845
          %v2847 = vpop.xlane.xlu0 %2846
          %v2848 = vmax.f32 %v2706, %v2708
          %2849 = vmax.xlane.f32.xlu0 %v2848
          %v2850 = vpop.xlane.xlu0 %2849
          %v2851 = vmax.f32 %v2710, %v2712
          %2852 = vmax.xlane.f32.xlu0 %v2851
          %v2853 = vpop.xlane.xlu0 %2852
          %v2854 = vmax.f32 %v2716, %v2718
          %2855 = vmax.xlane.f32.xlu0 %v2854
          %v2856 = vpop.xlane.xlu0 %2855
          %v2857 = vmax.f32 %v2720, %v2722
          %2858 = vmax.xlane.f32.xlu0 %v2857
          %v2859 = vpop.xlane.xlu0 %2858
          %v2860 = vmax.f32 %v2726, %v2728
          %2861 = vmax.xlane.f32.xlu0 %v2860
          %v2862 = vpop.xlane.xlu0 %2861
          %v2863 = vmax.f32 %v2730, %v2732
          %2864 = vmax.xlane.f32.xlu0 %v2863
          %v2865 = vpop.xlane.xlu0 %2864
          %v2866 = vmax.f32 %v2736, %v2738
          %2867 = vmax.xlane.f32.xlu0 %v2866
          %v2868 = vpop.xlane.xlu0 %2867
          %v2869 = vmax.f32 %v2740, %v2742
          %2870 = vmax.xlane.f32.xlu0 %v2869
          %v2871 = vpop.xlane.xlu0 %2870
          %v2872 = vmax.f32 %v2746, %v2748
          %2873 = vmax.xlane.f32.xlu0 %v2872
          %v2874 = vpop.xlane.xlu0 %2873
          %v2875 = vmax.f32 %v2750, %v2752
          %2876 = vmax.xlane.f32.xlu0 %v2875
          %v2877 = vpop.xlane.xlu0 %2876
          %v2878 = vmax.f32 %v2756, %v2758
          %2879 = vmax.xlane.f32.xlu0 %v2878
          %v2880 = vpop.xlane.xlu0 %2879
          %v2881 = vmax.f32 %v2760, %v2762
          %2882 = vmax.xlane.f32.xlu0 %v2881
          %v2883 = vpop.xlane.xlu0 %2882
          %v2884 = vmax.f32 %v2766, %v2768
          %2885 = vmax.xlane.f32.xlu0 %v2884
          %v2886 = vpop.xlane.xlu0 %2885
          %v2887 = vmax.f32 %v2770, %v2772
          %2888 = vmax.xlane.f32.xlu0 %v2887
          %v2889 = vpop.xlane.xlu0 %2888
          %v2890 = vmax.f32 %v2776, %v2778
          %2891 = vmax.xlane.f32.xlu0 %v2890
          %v2892 = vpop.xlane.xlu0 %2891
          %v2893 = vmax.f32 %v2780, %v2782
          %2894 = vmax.xlane.f32.xlu0 %v2893
          %v2895 = vpop.xlane.xlu0 %2894
          %v2896 = vmax.f32 %v2786, %v2788
          %2897 = vmax.xlane.f32.xlu0 %v2896
          %v2898 = vpop.xlane.xlu0 %2897
          %v2899 = vmax.f32 %v2790, %v2792
          %2900 = vmax.xlane.f32.xlu0 %v2899
          %v2901 = vpop.xlane.xlu0 %2900
          %v2902 = vmax.f32 %v2796, %v2798
          %2903 = vmax.xlane.f32.xlu0 %v2902
          %v2904 = vpop.xlane.xlu0 %2903
          %v2905 = vmax.f32 %v2800, %v2802
          %2906 = vmax.xlane.f32.xlu0 %v2905
          %v2907 = vpop.xlane.xlu0 %2906
          %v2908 = vmax.f32 %v2806, %v2808
          %2909 = vmax.xlane.f32.xlu0 %v2908
          %v2910 = vpop.xlane.xlu0 %2909
          %v2911 = vmax.f32 %v2810, %v2812
          %2912 = vmax.xlane.f32.xlu0 %v2911
          %v2913 = vpop.xlane.xlu0 %2912
          %v2914 = vmax.f32 %v2816, %v2818
          %2915 = vmax.xlane.f32.xlu0 %v2914
          %v2916 = vpop.xlane.xlu0 %2915
          %v2917 = vmax.f32 %v2820, %v2822
          %2918 = vmax.xlane.f32.xlu0 %v2917
          %v2919 = vpop.xlane.xlu0 %2918
          %v2920 = vmax.f32 %v2448, %v2826
          %v2921 = vmax.f32 %v2449, %v2829
          %v2922 = vmax.f32 %v2450, %v2832
          %v2923 = vmax.f32 %v2451, %v2835
          %v2924 = vmax.f32 %v2452, %v2838
          %v2925 = vmax.f32 %v2453, %v2841
          %v2926 = vmax.f32 %v2454, %v2844
          %v2927 = vmax.f32 %v2455, %v2847
          %v2928 = vmax.f32 %v2456, %v2850
          %v2929 = vmax.f32 %v2457, %v2853
          %v2930 = vmax.f32 %v2458, %v2856
          %v2931 = vmax.f32 %v2459, %v2859
          %v2932 = vmax.f32 %v2460, %v2862
          %v2933 = vmax.f32 %v2461, %v2865
          %v2934 = vmax.f32 %v2462, %v2868
          %v2935 = vmax.f32 %v2463, %v2871
          %v2936 = vmax.f32 %v2464, %v2874
          %v2937 = vmax.f32 %v2465, %v2877
          %v2938 = vmax.f32 %v2466, %v2880
          %v2939 = vmax.f32 %v2467, %v2883
          %v2940 = vmax.f32 %v2468, %v2886
          %v2941 = vmax.f32 %v2469, %v2889
          %v2942 = vmax.f32 %v2470, %v2892
          %v2943 = vmax.f32 %v2471, %v2895
          %v2944 = vmax.f32 %v2472, %v2898
          %v2945 = vmax.f32 %v2473, %v2901
          %v2946 = vmax.f32 %v2474, %v2904
          %v2947 = vmax.f32 %v2475, %v2907
          %v2948 = vmax.f32 %v2476, %v2910
          %v2949 = vmax.f32 %v2477, %v2913
          %v2950 = vmax.f32 %v2478, %v2916
          %v2951 = vmax.f32 %v2479, %v2919
          %v2952 = vsub.f32 %v2448, %v2920
          %v2953 = vsub.f32 %v2449, %v2921
          %v2954 = vsub.f32 %v2450, %v2922
          %v2955 = vsub.f32 %v2451, %v2923
          %v2956 = vsub.f32 %v2452, %v2924
          %v2957 = vsub.f32 %v2453, %v2925
          %v2958 = vsub.f32 %v2454, %v2926
          %v2959 = vsub.f32 %v2455, %v2927
          %v2960 = vsub.f32 %v2456, %v2928
          %v2961 = vsub.f32 %v2457, %v2929
          %v2962 = vsub.f32 %v2458, %v2930
          %v2963 = vsub.f32 %v2459, %v2931
          %v2964 = vsub.f32 %v2460, %v2932
          %v2965 = vsub.f32 %v2461, %v2933
          %v2966 = vsub.f32 %v2462, %v2934
          %v2967 = vsub.f32 %v2463, %v2935
          %v2968 = vsub.f32 %v2464, %v2936
          %v2969 = vsub.f32 %v2465, %v2937
          %v2970 = vsub.f32 %v2466, %v2938
          %v2971 = vsub.f32 %v2467, %v2939
          %v2972 = vsub.f32 %v2468, %v2940
          %v2973 = vsub.f32 %v2469, %v2941
          %v2974 = vsub.f32 %v2470, %v2942
          %v2975 = vsub.f32 %v2471, %v2943
          %v2976 = vsub.f32 %v2472, %v2944
          %v2977 = vsub.f32 %v2473, %v2945
          %v2978 = vsub.f32 %v2474, %v2946
          %v2979 = vsub.f32 %v2475, %v2947
          %v2980 = vsub.f32 %v2476, %v2948
          %v2981 = vsub.f32 %v2477, %v2949
          %v2982 = vsub.f32 %v2478, %v2950
          %v2983 = vsub.f32 %v2479, %v2951
          %v2984 = vmul.f32 %v2952, 1.442695
          %v2985 = vpow.pop %v2984
          %v2986 = vmul.f32 %v2953, 1.442695
          %v2987 = vpow.pop %v2986
          %v2988 = vmul.f32 %v2954, 1.442695
          %v2989 = vpow.pop %v2988
          %v2990 = vmul.f32 %v2955, 1.442695
          %v2991 = vpow.pop %v2990
          %v2992 = vmul.f32 %v2956, 1.442695
          %v2993 = vpow.pop %v2992
          %v2994 = vmul.f32 %v2957, 1.442695
          %v2995 = vpow.pop %v2994
          %v2996 = vmul.f32 %v2958, 1.442695
          %v2997 = vpow.pop %v2996
          %v2998 = vmul.f32 %v2959, 1.442695
          %v2999 = vpow.pop %v2998
          %v3000 = vmul.f32 %v2960, 1.442695
          %v3001 = vpow.pop %v3000
          %v3002 = vmul.f32 %v2961, 1.442695
          %v3003 = vpow.pop %v3002
          %v3004 = vmul.f32 %v2962, 1.442695
          %v3005 = vpow.pop %v3004
          %v3006 = vmul.f32 %v2963, 1.442695
          %v3007 = vpow.pop %v3006
          %v3008 = vmul.f32 %v2964, 1.442695
          %v3009 = vpow.pop %v3008
          %v3010 = vmul.f32 %v2965, 1.442695
          %v3011 = vpow.pop %v3010
          %v3012 = vmul.f32 %v2966, 1.442695
          %v3013 = vpow.pop %v3012
          %v3014 = vmul.f32 %v2967, 1.442695
          %v3015 = vpow.pop %v3014
          %v3016 = vmul.f32 %v2968, 1.442695
          %v3017 = vpow.pop %v3016
          %v3018 = vmul.f32 %v2969, 1.442695
          %v3019 = vpow.pop %v3018
          %v3020 = vmul.f32 %v2970, 1.442695
          %v3021 = vpow.pop %v3020
          %v3022 = vmul.f32 %v2971, 1.442695
          %v3023 = vpow.pop %v3022
          %v3024 = vmul.f32 %v2972, 1.442695
          %v3025 = vpow.pop %v3024
          %v3026 = vmul.f32 %v2973, 1.442695
          %v3027 = vpow.pop %v3026
          %v3028 = vmul.f32 %v2974, 1.442695
          %v3029 = vpow.pop %v3028
          %v3030 = vmul.f32 %v2975, 1.442695
          %v3031 = vpow.pop %v3030
          %v3032 = vmul.f32 %v2976, 1.442695
          %v3033 = vpow.pop %v3032
          %v3034 = vmul.f32 %v2977, 1.442695
          %v3035 = vpow.pop %v3034
          %v3036 = vmul.f32 %v2978, 1.442695
          %v3037 = vpow.pop %v3036
          %v3038 = vmul.f32 %v2979, 1.442695
          %v3039 = vpow.pop %v3038
          %v3040 = vmul.f32 %v2980, 1.442695
          %v3041 = vpow.pop %v3040
          %v3042 = vmul.f32 %v2981, 1.442695
          %v3043 = vpow.pop %v3042
          %v3044 = vmul.f32 %v2982, 1.442695
          %v3045 = vpow.pop %v3044
          %v3046 = vmul.f32 %v2983, 1.442695
          %v3047 = vpow.pop %v3046
          %v3048 = vsub.f32 %v2666, %v2920
          %v3049 = vsub.f32 %v2668, %v2920
          %v3050 = vsub.f32 %v2670, %v2921
          %v3051 = vsub.f32 %v2672, %v2921
          %v3052 = vsub.f32 %v2676, %v2922
          %v3053 = vsub.f32 %v2678, %v2922
          %v3054 = vsub.f32 %v2680, %v2923
          %v3055 = vsub.f32 %v2682, %v2923
          %v3056 = vsub.f32 %v2686, %v2924
          %v3057 = vsub.f32 %v2688, %v2924
          %v3058 = vsub.f32 %v2690, %v2925
          %v3059 = vsub.f32 %v2692, %v2925
          %v3060 = vsub.f32 %v2696, %v2926
          %v3061 = vsub.f32 %v2698, %v2926
          %v3062 = vsub.f32 %v2700, %v2927
          %v3063 = vsub.f32 %v2702, %v2927
          %v3064 = vsub.f32 %v2706, %v2928
          %v3065 = vsub.f32 %v2708, %v2928
          %v3066 = vsub.f32 %v2710, %v2929
          %v3067 = vsub.f32 %v2712, %v2929
          %v3068 = vsub.f32 %v2716, %v2930
          %v3069 = vsub.f32 %v2718, %v2930
          %v3070 = vsub.f32 %v2720, %v2931
          %v3071 = vsub.f32 %v2722, %v2931
          %v3072 = vsub.f32 %v2726, %v2932
          %v3073 = vsub.f32 %v2728, %v2932
          %v3074 = vsub.f32 %v2730, %v2933
          %v3075 = vsub.f32 %v2732, %v2933
          %v3076 = vsub.f32 %v2736, %v2934
          %v3077 = vsub.f32 %v2738, %v2934
          %v3078 = vsub.f32 %v2740, %v2935
          %v3079 = vsub.f32 %v2742, %v2935
          %v3080 = vsub.f32 %v2746, %v2936
          %v3081 = vsub.f32 %v2748, %v2936
          %v3082 = vsub.f32 %v2750, %v2937
          %v3083 = vsub.f32 %v2752, %v2937
          %v3084 = vsub.f32 %v2756, %v2938
          %v3085 = vsub.f32 %v2758, %v2938
          %v3086 = vsub.f32 %v2760, %v2939
          %v3087 = vsub.f32 %v2762, %v2939
          %v3088 = vsub.f32 %v2766, %v2940
          %v3089 = vsub.f32 %v2768, %v2940
          %v3090 = vsub.f32 %v2770, %v2941
          %v3091 = vsub.f32 %v2772, %v2941
          %v3092 = vsub.f32 %v2776, %v2942
          %v3093 = vsub.f32 %v2778, %v2942
          %v3094 = vsub.f32 %v2780, %v2943
          %v3095 = vsub.f32 %v2782, %v2943
          %v3096 = vsub.f32 %v2786, %v2944
          %v3097 = vsub.f32 %v2788, %v2944
          %v3098 = vsub.f32 %v2790, %v2945
          %v3099 = vsub.f32 %v2792, %v2945
          %v3100 = vsub.f32 %v2796, %v2946
          %v3101 = vsub.f32 %v2798, %v2946
          %v3102 = vsub.f32 %v2800, %v2947
          %v3103 = vsub.f32 %v2802, %v2947
          %v3104 = vsub.f32 %v2806, %v2948
          %v3105 = vsub.f32 %v2808, %v2948
          %v3106 = vsub.f32 %v2810, %v2949
          %v3107 = vsub.f32 %v2812, %v2949
          %v3108 = vsub.f32 %v2816, %v2950
          %v3109 = vsub.f32 %v2818, %v2950
          %v3110 = vsub.f32 %v2820, %v2951
          %v3111 = vsub.f32 %v2822, %v2951
          %v3112 = vmul.f32 %v3048, 1.442695
          %v3113 = vpow.pop %v3112
          %v3114 = vmul.f32 %v3049, 1.442695
          %v3115 = vpow.pop %v3114
          %v3116 = vmul.f32 %v3050, 1.442695
          %v3117 = vpow.pop %v3116
          %v3118 = vmul.f32 %v3051, 1.442695
          %v3119 = vpow.pop %v3118
          %v3120 = vmul.f32 %v3052, 1.442695
          %v3121 = vpow.pop %v3120
          %v3122 = vmul.f32 %v3053, 1.442695
          %v3123 = vpow.pop %v3122
          %v3124 = vmul.f32 %v3054, 1.442695
          %v3125 = vpow.pop %v3124
          %v3126 = vmul.f32 %v3055, 1.442695
          %v3127 = vpow.pop %v3126
          %v3128 = vmul.f32 %v3056, 1.442695
          %v3129 = vpow.pop %v3128
          %v3130 = vmul.f32 %v3057, 1.442695
          %v3131 = vpow.pop %v3130
          %v3132 = vmul.f32 %v3058, 1.442695
          %v3133 = vpow.pop %v3132
          %v3134 = vmul.f32 %v3059, 1.442695
          %v3135 = vpow.pop %v3134
          %v3136 = vmul.f32 %v3060, 1.442695
          %v3137 = vpow.pop %v3136
          %v3138 = vmul.f32 %v3061, 1.442695
          %v3139 = vpow.pop %v3138
          %v3140 = vmul.f32 %v3062, 1.442695
          %v3141 = vpow.pop %v3140
          %v3142 = vmul.f32 %v3063, 1.442695
          %v3143 = vpow.pop %v3142
          %v3144 = vmul.f32 %v3064, 1.442695
          %v3145 = vpow.pop %v3144
          %v3146 = vmul.f32 %v3065, 1.442695
          %v3147 = vpow.pop %v3146
          %v3148 = vmul.f32 %v3066, 1.442695
          %v3149 = vpow.pop %v3148
          %v3150 = vmul.f32 %v3067, 1.442695
          %v3151 = vpow.pop %v3150
          %v3152 = vmul.f32 %v3068, 1.442695
          %v3153 = vpow.pop %v3152
          %v3154 = vmul.f32 %v3069, 1.442695
          %v3155 = vpow.pop %v3154
          %v3156 = vmul.f32 %v3070, 1.442695
          %v3157 = vpow.pop %v3156
          %v3158 = vmul.f32 %v3071, 1.442695
          %v3159 = vpow.pop %v3158
          %v3160 = vmul.f32 %v3072, 1.442695
          %v3161 = vpow.pop %v3160
          %v3162 = vmul.f32 %v3073, 1.442695
          %v3163 = vpow.pop %v3162
          %v3164 = vmul.f32 %v3074, 1.442695
          %v3165 = vpow.pop %v3164
          %v3166 = vmul.f32 %v3075, 1.442695
          %v3167 = vpow.pop %v3166
          %v3168 = vmul.f32 %v3076, 1.442695
          %v3169 = vpow.pop %v3168
          %v3170 = vmul.f32 %v3077, 1.442695
          %v3171 = vpow.pop %v3170
          %v3172 = vmul.f32 %v3078, 1.442695
          %v3173 = vpow.pop %v3172
          %v3174 = vmul.f32 %v3079, 1.442695
          %v3175 = vpow.pop %v3174
          %v3176 = vmul.f32 %v3080, 1.442695
          %v3177 = vpow.pop %v3176
          %v3178 = vmul.f32 %v3081, 1.442695
          %v3179 = vpow.pop %v3178
          %v3180 = vmul.f32 %v3082, 1.442695
          %v3181 = vpow.pop %v3180
          %v3182 = vmul.f32 %v3083, 1.442695
          %v3183 = vpow.pop %v3182
          %v3184 = vmul.f32 %v3084, 1.442695
          %v3185 = vpow.pop %v3184
          %v3186 = vmul.f32 %v3085, 1.442695
          %v3187 = vpow.pop %v3186
          %v3188 = vmul.f32 %v3086, 1.442695
          %v3189 = vpow.pop %v3188
          %v3190 = vmul.f32 %v3087, 1.442695
          %v3191 = vpow.pop %v3190
          %v3192 = vmul.f32 %v3088, 1.442695
          %v3193 = vpow.pop %v3192
          %v3194 = vmul.f32 %v3089, 1.442695
          %v3195 = vpow.pop %v3194
          %v3196 = vmul.f32 %v3090, 1.442695
          %v3197 = vpow.pop %v3196
          %v3198 = vmul.f32 %v3091, 1.442695
          %v3199 = vpow.pop %v3198
          %v3200 = vmul.f32 %v3092, 1.442695
          %v3201 = vpow.pop %v3200
          %v3202 = vmul.f32 %v3093, 1.442695
          %v3203 = vpow.pop %v3202
          %v3204 = vmul.f32 %v3094, 1.442695
          %v3205 = vpow.pop %v3204
          %v3206 = vmul.f32 %v3095, 1.442695
          %v3207 = vpow.pop %v3206
          %v3208 = vmul.f32 %v3096, 1.442695
          %v3209 = vpow.pop %v3208
          %v3210 = vmul.f32 %v3097, 1.442695
          %v3211 = vpow.pop %v3210
          %v3212 = vmul.f32 %v3098, 1.442695
          %v3213 = vpow.pop %v3212
          %v3214 = vmul.f32 %v3099, 1.442695
          %v3215 = vpow.pop %v3214
          %v3216 = vmul.f32 %v3100, 1.442695
          %v3217 = vpow.pop %v3216
          %v3218 = vmul.f32 %v3101, 1.442695
          %v3219 = vpow.pop %v3218
          %v3220 = vmul.f32 %v3102, 1.442695
          %v3221 = vpow.pop %v3220
          %v3222 = vmul.f32 %v3103, 1.442695
          %v3223 = vpow.pop %v3222
          %v3224 = vmul.f32 %v3104, 1.442695
          %v3225 = vpow.pop %v3224
          %v3226 = vmul.f32 %v3105, 1.442695
          %v3227 = vpow.pop %v3226
          %v3228 = vmul.f32 %v3106, 1.442695
          %v3229 = vpow.pop %v3228
          %v3230 = vmul.f32 %v3107, 1.442695
          %v3231 = vpow.pop %v3230
          %v3232 = vmul.f32 %v3108, 1.442695
          %v3233 = vpow.pop %v3232
          %v3234 = vmul.f32 %v3109, 1.442695
          %v3235 = vpow.pop %v3234
          %v3236 = vmul.f32 %v3110, 1.442695
          %v3237 = vpow.pop %v3236
          %v3238 = vmul.f32 %v3111, 1.442695
          %v3239 = vpow.pop %v3238
          %v3240 = vmul.f32 %v2985, %v2480
          %v3241 = vmul.f32 %v2987, %v2481
          %v3242 = vmul.f32 %v2989, %v2482
          %v3243 = vmul.f32 %v2991, %v2483
          %v3244 = vmul.f32 %v2993, %v2484
          %v3245 = vmul.f32 %v2995, %v2485
          %v3246 = vmul.f32 %v2997, %v2486
          %v3247 = vmul.f32 %v2999, %v2487
          %v3248 = vmul.f32 %v3001, %v2488
          %v3249 = vmul.f32 %v3003, %v2489
          %v3250 = vmul.f32 %v3005, %v2490
          %v3251 = vmul.f32 %v3007, %v2491
          %v3252 = vmul.f32 %v3009, %v2492
          %v3253 = vmul.f32 %v3011, %v2493
          %v3254 = vmul.f32 %v3013, %v2494
          %v3255 = vmul.f32 %v3015, %v2495
          %v3256 = vmul.f32 %v3017, %v2496
          %v3257 = vmul.f32 %v3019, %v2497
          %v3258 = vmul.f32 %v3021, %v2498
          %v3259 = vmul.f32 %v3023, %v2499
          %v3260 = vmul.f32 %v3025, %v2500
          %v3261 = vmul.f32 %v3027, %v2501
          %v3262 = vmul.f32 %v3029, %v2502
          %v3263 = vmul.f32 %v3031, %v2503
          %v3264 = vmul.f32 %v3033, %v2504
          %v3265 = vmul.f32 %v3035, %v2505
          %v3266 = vmul.f32 %v3037, %v2506
          %v3267 = vmul.f32 %v3039, %v2507
          %v3268 = vmul.f32 %v3041, %v2508
          %v3269 = vmul.f32 %v3043, %v2509
          %v3270 = vmul.f32 %v3045, %v2510
          %v3271 = vmul.f32 %v3047, %v2511
          %v3272 = vadd.f32 %v3113, %v3115
          %3273 = vadd.xlane.f32.xlu0 %v3272
          %v3274 = vpop.xlane.xlu0 %3273
          %v3275 = vadd.f32 %v3117, %v3119
          %3276 = vadd.xlane.f32.xlu0 %v3275
          %v3277 = vpop.xlane.xlu0 %3276
          %v3278 = vadd.f32 %v3121, %v3123
          %3279 = vadd.xlane.f32.xlu0 %v3278
          %v3280 = vpop.xlane.xlu0 %3279
          %v3281 = vadd.f32 %v3125, %v3127
          %3282 = vadd.xlane.f32.xlu0 %v3281
          %v3283 = vpop.xlane.xlu0 %3282
          %v3284 = vadd.f32 %v3129, %v3131
          %3285 = vadd.xlane.f32.xlu0 %v3284
          %v3286 = vpop.xlane.xlu0 %3285
          %v3287 = vadd.f32 %v3133, %v3135
          %3288 = vadd.xlane.f32.xlu0 %v3287
          %v3289 = vpop.xlane.xlu0 %3288
          %v3290 = vadd.f32 %v3137, %v3139
          %3291 = vadd.xlane.f32.xlu0 %v3290
          %v3292 = vpop.xlane.xlu0 %3291
          %v3293 = vadd.f32 %v3141, %v3143
          %3294 = vadd.xlane.f32.xlu0 %v3293
          %v3295 = vpop.xlane.xlu0 %3294
          %v3296 = vadd.f32 %v3145, %v3147
          %3297 = vadd.xlane.f32.xlu0 %v3296
          %v3298 = vpop.xlane.xlu0 %3297
          %v3299 = vadd.f32 %v3149, %v3151
          %3300 = vadd.xlane.f32.xlu0 %v3299
          %v3301 = vpop.xlane.xlu0 %3300
          %v3302 = vadd.f32 %v3153, %v3155
          %3303 = vadd.xlane.f32.xlu0 %v3302
          %v3304 = vpop.xlane.xlu0 %3303
          %v3305 = vadd.f32 %v3157, %v3159
          %3306 = vadd.xlane.f32.xlu0 %v3305
          %v3307 = vpop.xlane.xlu0 %3306
          %v3308 = vadd.f32 %v3161, %v3163
          %3309 = vadd.xlane.f32.xlu0 %v3308
          %v3310 = vpop.xlane.xlu0 %3309
          %v3311 = vadd.f32 %v3165, %v3167
          %3312 = vadd.xlane.f32.xlu0 %v3311
          %v3313 = vpop.xlane.xlu0 %3312
          %v3314 = vadd.f32 %v3169, %v3171
          %3315 = vadd.xlane.f32.xlu0 %v3314
          %v3316 = vpop.xlane.xlu0 %3315
          %v3317 = vadd.f32 %v3173, %v3175
          %3318 = vadd.xlane.f32.xlu0 %v3317
          %v3319 = vpop.xlane.xlu0 %3318
          %v3320 = vadd.f32 %v3177, %v3179
          %3321 = vadd.xlane.f32.xlu0 %v3320
          %v3322 = vpop.xlane.xlu0 %3321
          %v3323 = vadd.f32 %v3181, %v3183
          %3324 = vadd.xlane.f32.xlu0 %v3323
          %v3325 = vpop.xlane.xlu0 %3324
          %v3326 = vadd.f32 %v3185, %v3187
          %3327 = vadd.xlane.f32.xlu0 %v3326
          %v3328 = vpop.xlane.xlu0 %3327
          %v3329 = vadd.f32 %v3189, %v3191
          %3330 = vadd.xlane.f32.xlu0 %v3329
          %v3331 = vpop.xlane.xlu0 %3330
          %v3332 = vadd.f32 %v3193, %v3195
          %3333 = vadd.xlane.f32.xlu0 %v3332
          %v3334 = vpop.xlane.xlu0 %3333
          %v3335 = vadd.f32 %v3197, %v3199
          %3336 = vadd.xlane.f32.xlu0 %v3335
          %v3337 = vpop.xlane.xlu0 %3336
          %v3338 = vadd.f32 %v3201, %v3203
          %3339 = vadd.xlane.f32.xlu0 %v3338
          %v3340 = vpop.xlane.xlu0 %3339
          %v3341 = vadd.f32 %v3205, %v3207
          %3342 = vadd.xlane.f32.xlu0 %v3341
          %v3343 = vpop.xlane.xlu0 %3342
          %v3344 = vadd.f32 %v3209, %v3211
          %3345 = vadd.xlane.f32.xlu0 %v3344
          %v3346 = vpop.xlane.xlu0 %3345
          %v3347 = vadd.f32 %v3213, %v3215
          %3348 = vadd.xlane.f32.xlu0 %v3347
          %v3349 = vpop.xlane.xlu0 %3348
          %v3350 = vadd.f32 %v3217, %v3219
          %3351 = vadd.xlane.f32.xlu0 %v3350
          %v3352 = vpop.xlane.xlu0 %3351
          %v3353 = vadd.f32 %v3221, %v3223
          %3354 = vadd.xlane.f32.xlu0 %v3353
          %v3355 = vpop.xlane.xlu0 %3354
          %v3356 = vadd.f32 %v3225, %v3227
          %3357 = vadd.xlane.f32.xlu0 %v3356
          %v3358 = vpop.xlane.xlu0 %3357
          %v3359 = vadd.f32 %v3229, %v3231
          %3360 = vadd.xlane.f32.xlu0 %v3359
          %v3361 = vpop.xlane.xlu0 %3360
          %v3362 = vadd.f32 %v3233, %v3235
          %3363 = vadd.xlane.f32.xlu0 %v3362
          %v3364 = vpop.xlane.xlu0 %3363
          %v3365 = vadd.f32 %v3237, %v3239
          %3366 = vadd.xlane.f32.xlu0 %v3365
          %v3367 = vpop.xlane.xlu0 %3366
          %v3368 = vadd.f32 %v3240, %v3274
          %v3369 = vadd.f32 %v3241, %v3277
          %v3370 = vadd.f32 %v3242, %v3280
          %v3371 = vadd.f32 %v3243, %v3283
          %v3372 = vadd.f32 %v3244, %v3286
          %v3373 = vadd.f32 %v3245, %v3289
          %v3374 = vadd.f32 %v3246, %v3292
          %v3375 = vadd.f32 %v3247, %v3295
          %v3376 = vadd.f32 %v3248, %v3298
          %v3377 = vadd.f32 %v3249, %v3301
          %v3378 = vadd.f32 %v3250, %v3304
          %v3379 = vadd.f32 %v3251, %v3307
          %v3380 = vadd.f32 %v3252, %v3310
          %v3381 = vadd.f32 %v3253, %v3313
          %v3382 = vadd.f32 %v3254, %v3316
          %v3383 = vadd.f32 %v3255, %v3319
          %v3384 = vadd.f32 %v3256, %v3322
          %v3385 = vadd.f32 %v3257, %v3325
          %v3386 = vadd.f32 %v3258, %v3328
          %v3387 = vadd.f32 %v3259, %v3331
          %v3388 = vadd.f32 %v3260, %v3334
          %v3389 = vadd.f32 %v3261, %v3337
          %v3390 = vadd.f32 %v3262, %v3340
          %v3391 = vadd.f32 %v3263, %v3343
          %v3392 = vadd.f32 %v3264, %v3346
          %v3393 = vadd.f32 %v3265, %v3349
          %v3394 = vadd.f32 %v3266, %v3352
          %v3395 = vadd.f32 %v3267, %v3355
          %v3396 = vadd.f32 %v3268, %v3358
          %v3397 = vadd.f32 %v3269, %v3361
          %v3398 = vadd.f32 %v3270, %v3364
          %v3399 = vadd.f32 %v3271, %v3367
          %v3400 = vmul.f32 %v2985, %v2512
          %v3401 = vmul.f32 %v2987, %v2513
          %v3402 = vmul.f32 %v2989, %v2514
          %v3403 = vmul.f32 %v2991, %v2515
          %v3404 = vmul.f32 %v2993, %v2516
          %v3405 = vmul.f32 %v2995, %v2517
          %v3406 = vmul.f32 %v2997, %v2518
          %v3407 = vmul.f32 %v2999, %v2519
          %v3408 = vmul.f32 %v3001, %v2520
          %v3409 = vmul.f32 %v3003, %v2521
          %v3410 = vmul.f32 %v3005, %v2522
          %v3411 = vmul.f32 %v3007, %v2523
          %v3412 = vmul.f32 %v3009, %v2524
          %v3413 = vmul.f32 %v3011, %v2525
          %v3414 = vmul.f32 %v3013, %v2526
          %v3415 = vmul.f32 %v3015, %v2527
          %v3416 = vmul.f32 %v3017, %v2528
          %v3417 = vmul.f32 %v3019, %v2529
          %v3418 = vmul.f32 %v3021, %v2530
          %v3419 = vmul.f32 %v3023, %v2531
          %v3420 = vmul.f32 %v3025, %v2532
          %v3421 = vmul.f32 %v3027, %v2533
          %v3422 = vmul.f32 %v3029, %v2534
          %v3423 = vmul.f32 %v3031, %v2535
          %v3424 = vmul.f32 %v3033, %v2536
          %v3425 = vmul.f32 %v3035, %v2537
          %v3426 = vmul.f32 %v3037, %v2538
          %v3427 = vmul.f32 %v3039, %v2539
          %v3428 = vmul.f32 %v3041, %v2540
          %v3429 = vmul.f32 %v3043, %v2541
          %v3430 = vmul.f32 %v3045, %v2542
          %v3431 = vmul.f32 %v3047, %v2543
          %v3432 = vpack.c.bf16 %v3117, %v3113
          %v3433 = vpack.c.bf16 %v3119, %v3115
          %v3434 = vpack.c.bf16 %v3125, %v3121
          %v3435 = vpack.c.bf16 %v3127, %v3123
          %v3436 = vpack.c.bf16 %v3133, %v3129
          %v3437 = vpack.c.bf16 %v3135, %v3131
          %v3438 = vpack.c.bf16 %v3141, %v3137
          %v3439 = vpack.c.bf16 %v3143, %v3139
          %v3440 = vpack.c.bf16 %v3149, %v3145
          %v3441 = vpack.c.bf16 %v3151, %v3147
          %v3442 = vpack.c.bf16 %v3157, %v3153
          %v3443 = vpack.c.bf16 %v3159, %v3155
          %v3444 = vpack.c.bf16 %v3165, %v3161
          %v3445 = vpack.c.bf16 %v3167, %v3163
          %v3446 = vpack.c.bf16 %v3173, %v3169
          %v3447 = vpack.c.bf16 %v3175, %v3171
          %v3448 = vpack.c.bf16 %v3181, %v3177
          %v3449 = vpack.c.bf16 %v3183, %v3179
          %v3450 = vpack.c.bf16 %v3189, %v3185
          %v3451 = vpack.c.bf16 %v3191, %v3187
          %v3452 = vpack.c.bf16 %v3197, %v3193
          %v3453 = vpack.c.bf16 %v3199, %v3195
          %v3454 = vpack.c.bf16 %v3205, %v3201
          %v3455 = vpack.c.bf16 %v3207, %v3203
          %v3456 = vpack.c.bf16 %v3213, %v3209
          %v3457 = vpack.c.bf16 %v3215, %v3211
          %v3458 = vpack.c.bf16 %v3221, %v3217
          %v3459 = vpack.c.bf16 %v3223, %v3219
          %v3460 = vpack.c.bf16 %v3229, %v3225
          %v3461 = vpack.c.bf16 %v3231, %v3227
          %v3462 = vpack.c.bf16 %v3237, %v3233
          %v3463 = vpack.c.bf16 %v3239, %v3235
          %3464 = vmatprep.subr.bf16.mxu0 0
          %3465 = vmatpush1.bf16.msra.mxu0 %v2567
          %3466 = vmatprep.subr.bf16.mxu0 0
          %3467 = vmatpush1.bf16.msra.mxu0 %v2568
          %3468 = vmatprep.subr.bf16.mxu0 0
          %3469 = vmatpush1.bf16.msra.mxu0 %v2569
          %3470 = vmatprep.subr.bf16.mxu0 0
          %3471 = vmatpush1.bf16.msra.mxu0 %v2570
          %3472 = vmatprep.subr.bf16.mxu0 0
          %3473 = vmatpush1.bf16.msra.mxu0 %v2571
          %3474 = vmatprep.subr.bf16.mxu0 0
          %3475 = vmatpush1.bf16.msra.mxu0 %v2572
          %3476 = vmatprep.subr.bf16.mxu0 0
          %3477 = vmatpush1.bf16.msra.mxu0 %v2573
          %3478 = vmatprep.subr.bf16.mxu0 0
          %3479 = vmatpush1.bf16.msra.mxu0 %v2574
          %3480 = vmatprep.subr.bf16.mxu0 0
          %3481 = vmatpush1.bf16.msra.mxu0 %v2575
          %3482 = vmatprep.subr.bf16.mxu0 0
          %3483 = vmatpush1.bf16.msra.mxu0 %v2576
          %3484 = vmatprep.subr.bf16.mxu0 0
          %3485 = vmatpush1.bf16.msra.mxu0 %v2577
          %3486 = vmatprep.subr.bf16.mxu0 0
          %3487 = vmatpush1.bf16.msra.mxu0 %v2578
          %3488 = vmatprep.subr.bf16.mxu0 0
          %3489 = vmatpush1.bf16.msra.mxu0 %v2579
          %3490 = vmatprep.subr.bf16.mxu0 0
          %3491 = vmatpush1.bf16.msra.mxu0 %v2580
          %3492 = vmatprep.subr.bf16.mxu0 0
          %3493 = vmatpush1.bf16.msra.mxu0 %v2581
          %3494 = vmatprep.subr.bf16.mxu0 0
          %3495 = vmatpush1.bf16.msra.mxu0 %v2582
          %3496 = vmatprep.mubr.bf16.mxu0 %v3433
          %3497 = vmatmul.mubr.bf16.gmra.mrb[0].mxu0 %v3432
          %v3498 = vpop.f32.mrb[0].mxu0
          %v3499 = vadd.f32 0.0, %v3498
          %v3500 = vpop.f32.mrb[0].mxu0
          %v3501 = vpop.f32.mrb[0].mxu0
          %v3502 = vadd.f32 0.0, %v3501
          %v3503 = vpop.f32.mrb[0].mxu0
          %3504 = vmatprep.mubr.bf16.mxu0 %v3435
          %3505 = vmatmul.mubr.bf16.gmra.mrb[0].mxu0 %v3434
          %v3506 = vpop.f32.mrb[0].mxu0
          %v3507 = vadd.f32 0.0, %v3506
          %v3508 = vpop.f32.mrb[0].mxu0
          %v3509 = vpop.f32.mrb[0].mxu0
          %v3510 = vadd.f32 0.0, %v3509
          %v3511 = vpop.f32.mrb[0].mxu0
          %3512 = vmatprep.mubr.bf16.mxu0 %v3437
          %3513 = vmatmul.mubr.bf16.gmra.mrb[0].mxu0 %v3436
          %v3514 = vpop.f32.mrb[0].mxu0
          %v3515 = vadd.f32 0.0, %v3514
          %v3516 = vpop.f32.mrb[0].mxu0
          %v3517 = vpop.f32.mrb[0].mxu0
          %v3518 = vadd.f32 0.0, %v3517
          %v3519 = vpop.f32.mrb[0].mxu0
          %3520 = vmatprep.mubr.bf16.mxu0 %v3439
          %3521 = vmatmul.mubr.bf16.gmra.mrb[0].mxu0 %v3438
          %v3522 = vpop.f32.mrb[0].mxu0
          %v3523 = vadd.f32 0.0, %v3522
          %v3524 = vpop.f32.mrb[0].mxu0
          %v3525 = vpop.f32.mrb[0].mxu0
          %v3526 = vadd.f32 0.0, %v3525
          %v3527 = vpop.f32.mrb[0].mxu0
          %3528 = vmatprep.mubr.bf16.mxu0 %v3441
          %3529 = vmatmul.mubr.bf16.gmra.mrb[0].mxu0 %v3440
          %v3530 = vpop.f32.mrb[0].mxu0
          %v3531 = vadd.f32 0.0, %v3530
          %v3532 = vpop.f32.mrb[0].mxu0
          %v3533 = vpop.f32.mrb[0].mxu0
          %v3534 = vadd.f32 0.0, %v3533
          %v3535 = vpop.f32.mrb[0].mxu0
          %3536 = vmatprep.mubr.bf16.mxu0 %v3443
          %3537 = vmatmul.mubr.bf16.gmra.mrb[0].mxu0 %v3442
          %v3538 = vpop.f32.mrb[0].mxu0
          %v3539 = vadd.f32 0.0, %v3538
          %v3540 = vpop.f32.mrb[0].mxu0
          %v3541 = vpop.f32.mrb[0].mxu0
          %v3542 = vadd.f32 0.0, %v3541
          %v3543 = vpop.f32.mrb[0].mxu0
          %3544 = vmatprep.mubr.bf16.mxu0 %v3445
          %3545 = vmatmul.mubr.bf16.gmra.mrb[0].mxu0 %v3444
          %v3546 = vpop.f32.mrb[0].mxu0
          %v3547 = vadd.f32 0.0, %v3546
          %v3548 = vpop.f32.mrb[0].mxu0
          %v3549 = vpop.f32.mrb[0].mxu0
          %v3550 = vadd.f32 0.0, %v3549
          %v3551 = vpop.f32.mrb[0].mxu0
          %3552 = vmatprep.mubr.bf16.mxu0 %v3447
          %3553 = vmatmul.mubr.bf16.gmra.mrb[0].mxu0 %v3446
          %v3554 = vpop.f32.mrb[0].mxu0
          %v3555 = vadd.f32 0.0, %v3554
          %v3556 = vpop.f32.mrb[0].mxu0
          %v3557 = vpop.f32.mrb[0].mxu0
          %v3558 = vadd.f32 0.0, %v3557
          %v3559 = vpop.f32.mrb[0].mxu0
          %3560 = vmatprep.mubr.bf16.mxu0 %v3449
          %3561 = vmatmul.mubr.bf16.gmra.mrb[0].mxu0 %v3448
          %v3562 = vpop.f32.mrb[0].mxu0
          %v3563 = vadd.f32 0.0, %v3562
          %v3564 = vpop.f32.mrb[0].mxu0
          %v3565 = vpop.f32.mrb[0].mxu0
          %v3566 = vadd.f32 0.0, %v3565
          %v3567 = vpop.f32.mrb[0].mxu0
          %3568 = vmatprep.mubr.bf16.mxu0 %v3451
          %3569 = vmatmul.mubr.bf16.gmra.mrb[0].mxu0 %v3450
          %v3570 = vpop.f32.mrb[0].mxu0
          %v3571 = vadd.f32 0.0, %v3570
          %v3572 = vpop.f32.mrb[0].mxu0
          %v3573 = vpop.f32.mrb[0].mxu0
          %v3574 = vadd.f32 0.0, %v3573
          %v3575 = vpop.f32.mrb[0].mxu0
          %3576 = vmatprep.mubr.bf16.mxu0 %v3453
          %3577 = vmatmul.mubr.bf16.gmra.mrb[0].mxu0 %v3452
          %v3578 = vpop.f32.mrb[0].mxu0
          %v3579 = vadd.f32 0.0, %v3578
          %v3580 = vpop.f32.mrb[0].mxu0
          %v3581 = vpop.f32.mrb[0].mxu0
          %v3582 = vadd.f32 0.0, %v3581
          %v3583 = vpop.f32.mrb[0].mxu0
          %3584 = vmatprep.mubr.bf16.mxu0 %v3455
          %3585 = vmatmul.mubr.bf16.gmra.mrb[0].mxu0 %v3454
          %v3586 = vpop.f32.mrb[0].mxu0
          %v3587 = vadd.f32 0.0, %v3586
          %v3588 = vpop.f32.mrb[0].mxu0
          %v3589 = vpop.f32.mrb[0].mxu0
          %v3590 = vadd.f32 0.0, %v3589
          %v3591 = vpop.f32.mrb[0].mxu0
          %3592 = vmatprep.mubr.bf16.mxu0 %v3457
          %3593 = vmatmul.mubr.bf16.gmra.mrb[0].mxu0 %v3456
          %v3594 = vpop.f32.mrb[0].mxu0
          %v3595 = vadd.f32 0.0, %v3594
          %v3596 = vpop.f32.mrb[0].mxu0
          %v3597 = vpop.f32.mrb[0].mxu0
          %v3598 = vadd.f32 0.0, %v3597
          %v3599 = vpop.f32.mrb[0].mxu0
          %3600 = vmatprep.mubr.bf16.mxu0 %v3459
          %3601 = vmatmul.mubr.bf16.gmra.mrb[0].mxu0 %v3458
          %v3602 = vpop.f32.mrb[0].mxu0
          %v3603 = vadd.f32 0.0, %v3602
          %v3604 = vpop.f32.mrb[0].mxu0
          %v3605 = vpop.f32.mrb[0].mxu0
          %v3606 = vadd.f32 0.0, %v3605
          %v3607 = vpop.f32.mrb[0].mxu0
          %3608 = vmatprep.mubr.bf16.mxu0 %v3461
          %3609 = vmatmul.mubr.bf16.gmra.mrb[0].mxu0 %v3460
          %v3610 = vpop.f32.mrb[0].mxu0
          %v3611 = vadd.f32 0.0, %v3610
          %v3612 = vpop.f32.mrb[0].mxu0
          %v3613 = vpop.f32.mrb[0].mxu0
          %v3614 = vadd.f32 0.0, %v3613
          %v3615 = vpop.f32.mrb[0].mxu0
          %3616 = vmatprep.mubr.bf16.mxu0 %v3463
          %3617 = vmatmul.mubr.bf16.gmra.mrb[0].mxu0 %v3462
          %v3618 = vpop.f32.mrb[0].mxu0
          %v3619 = vadd.f32 0.0, %v3618
          %v3620 = vpop.f32.mrb[0].mxu0
          %v3621 = vpop.f32.mrb[0].mxu0
          %v3622 = vadd.f32 0.0, %v3621
          %v3623 = vpop.f32.mrb[0].mxu0
          %3624 = vdwg.mxu0
          %v3625 = vadd.f32 %v3400, %v3499
          %v3626 = vadd.f32 %v3401, %v3502
          %v3627 = vadd.f32 %v3402, %v3507
          %v3628 = vadd.f32 %v3403, %v3510
          %v3629 = vadd.f32 %v3404, %v3515
          %v3630 = vadd.f32 %v3405, %v3518
          %v3631 = vadd.f32 %v3406, %v3523
          %v3632 = vadd.f32 %v3407, %v3526
          %v3633 = vadd.f32 %v3408, %v3531
          %v3634 = vadd.f32 %v3409, %v3534
          %v3635 = vadd.f32 %v3410, %v3539
          %v3636 = vadd.f32 %v3411, %v3542
          %v3637 = vadd.f32 %v3412, %v3547
          %v3638 = vadd.f32 %v3413, %v3550
          %v3639 = vadd.f32 %v3414, %v3555
          %v3640 = vadd.f32 %v3415, %v3558
          %v3641 = vadd.f32 %v3416, %v3563
          %v3642 = vadd.f32 %v3417, %v3566
          %v3643 = vadd.f32 %v3418, %v3571
          %v3644 = vadd.f32 %v3419, %v3574
          %v3645 = vadd.f32 %v3420, %v3579
          %v3646 = vadd.f32 %v3421, %v3582
          %v3647 = vadd.f32 %v3422, %v3587
          %v3648 = vadd.f32 %v3423, %v3590
          %v3649 = vadd.f32 %v3424, %v3595
          %v3650 = vadd.f32 %v3425, %v3598
          %v3651 = vadd.f32 %v3426, %v3603
          %v3652 = vadd.f32 %v3427, %v3606
          %v3653 = vadd.f32 %v3428, %v3611
          %v3654 = vadd.f32 %v3429, %v3614
          %v3655 = vadd.f32 %v3430, %v3619
          %v3656 = vadd.f32 %v3431, %v3622
        $region77: #{tpu_custom_call.1} parent=47 // loop_footer
          %s2445 = sadd.s32 %s2443, 1
        $region78: #{tpu_custom_call.1} parent=47 // loop_footer_branch
          %2442 = sbr.rel target = $region74
        $region79: #{tpu_custom_call.1} parent=47 // loop_exit
          _
        %v3657 = vrcp.pop %v2480
        %v3658 = vrcp.pop %v2481
        %v3659 = vrcp.pop %v2482
        %v3660 = vrcp.pop %v2483
        %v3661 = vrcp.pop %v2484
        %v3662 = vrcp.pop %v2485
        %v3663 = vrcp.pop %v2486
        %v3664 = vrcp.pop %v2487
        %v3665 = vrcp.pop %v2488
        %v3666 = vrcp.pop %v2489
        %v3667 = vrcp.pop %v2490
        %v3668 = vrcp.pop %v2491
        %v3669 = vrcp.pop %v2492
        %v3670 = vrcp.pop %v2493
        %v3671 = vrcp.pop %v2494
        %v3672 = vrcp.pop %v2495
        %v3673 = vrcp.pop %v2496
        %v3674 = vrcp.pop %v2497
        %v3675 = vrcp.pop %v2498
        %v3676 = vrcp.pop %v2499
        %v3677 = vrcp.pop %v2500
        %v3678 = vrcp.pop %v2501
        %v3679 = vrcp.pop %v2502
        %v3680 = vrcp.pop %v2503
        %v3681 = vrcp.pop %v2504
        %v3682 = vrcp.pop %v2505
        %v3683 = vrcp.pop %v2506
        %v3684 = vrcp.pop %v2507
        %v3685 = vrcp.pop %v2508
        %v3686 = vrcp.pop %v2509
        %v3687 = vrcp.pop %v2510
        %v3688 = vrcp.pop %v2511
        %v3689 = vmul.f32 %v2512, %v3657
        %v3690 = vmul.f32 %v2513, %v3658
        %v3691 = vmul.f32 %v2514, %v3659
        %v3692 = vmul.f32 %v2515, %v3660
        %v3693 = vmul.f32 %v2516, %v3661
        %v3694 = vmul.f32 %v2517, %v3662
        %v3695 = vmul.f32 %v2518, %v3663
        %v3696 = vmul.f32 %v2519, %v3664
        %v3697 = vmul.f32 %v2520, %v3665
        %v3698 = vmul.f32 %v2521, %v3666
        %v3699 = vmul.f32 %v2522, %v3667
        %v3700 = vmul.f32 %v2523, %v3668
        %v3701 = vmul.f32 %v2524, %v3669
        %v3702 = vmul.f32 %v2525, %v3670
        %v3703 = vmul.f32 %v2526, %v3671
        %v3704 = vmul.f32 %v2527, %v3672
        %v3705 = vmul.f32 %v2528, %v3673
        %v3706 = vmul.f32 %v2529, %v3674
        %v3707 = vmul.f32 %v2530, %v3675
        %v3708 = vmul.f32 %v2531, %v3676
        %v3709 = vmul.f32 %v2532, %v3677
        %v3710 = vmul.f32 %v2533, %v3678
        %v3711 = vmul.f32 %v2534, %v3679
        %v3712 = vmul.f32 %v2535, %v3680
        %v3713 = vmul.f32 %v2536, %v3681
        %v3714 = vmul.f32 %v2537, %v3682
        %v3715 = vmul.f32 %v2538, %v3683
        %v3716 = vmul.f32 %v2539, %v3684
        %v3717 = vmul.f32 %v2540, %v3685
        %v3718 = vmul.f32 %v2541, %v3686
        %v3719 = vmul.f32 %v2542, %v3687
        %v3720 = vmul.f32 %v2543, %v3688
        %v3721 = vpack.c.bf16 %v3690, %v3689
        %v3722 = vpack.c.bf16 %v3692, %v3691
        %v3723 = vpack.c.bf16 %v3694, %v3693
        %v3724 = vpack.c.bf16 %v3696, %v3695
        %v3725 = vpack.c.bf16 %v3698, %v3697
        %v3726 = vpack.c.bf16 %v3700, %v3699
        %v3727 = vpack.c.bf16 %v3702, %v3701
        %v3728 = vpack.c.bf16 %v3704, %v3703
        %v3729 = vpack.c.bf16 %v3706, %v3705
        %v3730 = vpack.c.bf16 %v3708, %v3707
        %v3731 = vpack.c.bf16 %v3710, %v3709
        %v3732 = vpack.c.bf16 %v3712, %v3711
        %v3733 = vpack.c.bf16 %v3714, %v3713
        %v3734 = vpack.c.bf16 %v3716, %v3715
        %v3735 = vpack.c.bf16 %v3718, %v3717
        %v3736 = vpack.c.bf16 %v3720, %v3719
        %v3737 = vld [vmem:[#allocation13] sm:$0xf]
        %v3738 = vld [vmem:[#allocation13 + $0x4] sm:$0xf]
        %v3741 = vunpack.c.l.b16 %v3737
        %v3742 = vunpack.c.l.b16 %v3738
        %v3743 = vpack.c.b16 %v3742, %v3741
        %v3746 = vsel %vm1477, %v3721, 0
        %v3749 = vsel %vm1477, %v3722, 0
        %v3752 = vsel %vm1477, %v3723, 0
        %v3755 = vsel %vm1477, %v3724, 0
        %v3758 = vsel %vm1477, %v3725, 0
        %v3761 = vsel %vm1477, %v3726, 0
        %v3764 = vsel %vm1477, %v3727, 0
        %v3767 = vsel %vm1477, %v3728, 0
        %v3770 = vsel %vm1477, %v3729, 0
        %v3773 = vsel %vm1477, %v3730, 0
        %v3776 = vsel %vm1477, %v3731, 0
        %v3779 = vsel %vm1477, %v3732, 0
        %v3782 = vsel %vm1477, %v3733, 0
        %v3785 = vsel %vm1477, %v3734, 0
        %v3788 = vsel %vm1477, %v3735, 0
        %v3791 = vsel %vm1477, %v3736, 0
        %3793 = vmatprep.subr.bf16.mxu0 0
        %3794 = vmatpush1.bf16.msra.mxu0 %v3743
        %3795 = vmatprep.subr.bf16.mxu0 0
        %3796 = vmatpush1.bf16.msra.mxu0 0
        %3797 = vmatprep.subr.bf16.mxu0 0
        %3798 = vmatpush1.bf16.msra.mxu0 0
        %3799 = vmatprep.subr.bf16.mxu0 0
        %3800 = vmatpush1.bf16.msra.mxu0 0
        %3801 = vmatprep.subr.bf16.mxu0 0
        %3802 = vmatpush1.bf16.msra.mxu0 0
        %3803 = vmatprep.subr.bf16.mxu0 0
        %3804 = vmatpush1.bf16.msra.mxu0 0
        %3805 = vmatprep.subr.bf16.mxu0 0
        %3806 = vmatpush1.bf16.msra.mxu0 0
        %3807 = vmatprep.subr.bf16.mxu0 0
        %3808 = vmatpush1.bf16.msra.mxu0 0
        %3809 = vmatprep.subr.bf16.mxu0 0
        %3810 = vmatpush1.bf16.msra.mxu0 0
        %3811 = vmatprep.subr.bf16.mxu0 0
        %3812 = vmatpush1.bf16.msra.mxu0 0
        %3813 = vmatprep.subr.bf16.mxu0 0
        %3814 = vmatpush1.bf16.msra.mxu0 0
        %3815 = vmatprep.subr.bf16.mxu0 0
        %3816 = vmatpush1.bf16.msra.mxu0 0
        %3817 = vmatprep.subr.bf16.mxu0 0
        %3818 = vmatpush1.bf16.msra.mxu0 0
        %3819 = vmatprep.subr.bf16.mxu0 0
        %3820 = vmatpush1.bf16.msra.mxu0 0
        %3821 = vmatprep.subr.bf16.mxu0 0
        %3822 = vmatpush1.bf16.msra.mxu0 0
        %3823 = vmatprep.subr.bf16.mxu0 0
        %3824 = vmatpush1.bf16.msra.mxu0 0
        %3825 = vmatprep.mubr.bf16.mxu0 0
        %3826 = vmatmul.mubr.bf16.gmra.mrb[0].mxu0 %v3746
        %v3827 = vpop.f32.mrb[0].mxu0
        %v3828 = vadd.f32 0.0, %v3827
        %v3829 = vpop.f32.mrb[0].mxu0
        %v3830 = vpop.f32.mrb[0].mxu0
        %v3831 = vadd.f32 0.0, %v3830
        %v3832 = vpop.f32.mrb[0].mxu0
        %3833 = vmatprep.mubr.bf16.mxu0 0
        %3834 = vmatmul.mubr.bf16.gmra.mrb[0].mxu0 %v3749
        %v3835 = vpop.f32.mrb[0].mxu0
        %v3836 = vadd.f32 0.0, %v3835
        %v3837 = vpop.f32.mrb[0].mxu0
        %v3838 = vpop.f32.mrb[0].mxu0
        %v3839 = vadd.f32 0.0, %v3838
        %v3840 = vpop.f32.mrb[0].mxu0
        %3841 = vmatprep.mubr.bf16.mxu0 0
        %3842 = vmatmul.mubr.bf16.gmra.mrb[0].mxu0 %v3752
        %v3843 = vpop.f32.mrb[0].mxu0
        %v3844 = vadd.f32 0.0, %v3843
        %v3845 = vpop.f32.mrb[0].mxu0
        %v3846 = vpop.f32.mrb[0].mxu0
        %v3847 = vadd.f32 0.0, %v3846
        %v3848 = vpop.f32.mrb[0].mxu0
        %3849 = vmatprep.mubr.bf16.mxu0 0
        %3850 = vmatmul.mubr.bf16.gmra.mrb[0].mxu0 %v3755
        %v3851 = vpop.f32.mrb[0].mxu0
        %v3852 = vadd.f32 0.0, %v3851
        %v3853 = vpop.f32.mrb[0].mxu0
        %v3854 = vpop.f32.mrb[0].mxu0
        %v3855 = vadd.f32 0.0, %v3854
        %v3856 = vpop.f32.mrb[0].mxu0
        %3857 = vmatprep.mubr.bf16.mxu0 0
        %3858 = vmatmul.mubr.bf16.gmra.mrb[0].mxu0 %v3758
        %v3859 = vpop.f32.mrb[0].mxu0
        %v3860 = vadd.f32 0.0, %v3859
        %v3861 = vpop.f32.mrb[0].mxu0
        %v3862 = vpop.f32.mrb[0].mxu0
        %v3863 = vadd.f32 0.0, %v3862
        %v3864 = vpop.f32.mrb[0].mxu0
        %3865 = vmatprep.mubr.bf16.mxu0 0
        %3866 = vmatmul.mubr.bf16.gmra.mrb[0].mxu0 %v3761
        %v3867 = vpop.f32.mrb[0].mxu0
        %v3868 = vadd.f32 0.0, %v3867
        %v3869 = vpop.f32.mrb[0].mxu0
        %v3870 = vpop.f32.mrb[0].mxu0
        %v3871 = vadd.f32 0.0, %v3870
        %v3872 = vpop.f32.mrb[0].mxu0
        %3873 = vmatprep.mubr.bf16.mxu0 0
        %3874 = vmatmul.mubr.bf16.gmra.mrb[0].mxu0 %v3764
        %v3875 = vpop.f32.mrb[0].mxu0
        %v3876 = vadd.f32 0.0, %v3875
        %v3877 = vpop.f32.mrb[0].mxu0
        %v3878 = vpop.f32.mrb[0].mxu0
        %v3879 = vadd.f32 0.0, %v3878
        %v3880 = vpop.f32.mrb[0].mxu0
        %3881 = vmatprep.mubr.bf16.mxu0 0
        %3882 = vmatmul.mubr.bf16.gmra.mrb[0].mxu0 %v3767
        %v3883 = vpop.f32.mrb[0].mxu0
        %v3884 = vadd.f32 0.0, %v3883
        %v3885 = vpop.f32.mrb[0].mxu0
        %v3886 = vpop.f32.mrb[0].mxu0
        %v3887 = vadd.f32 0.0, %v3886
        %v3888 = vpop.f32.mrb[0].mxu0
        %3889 = vmatprep.mubr.bf16.mxu0 0
        %3890 = vmatmul.mubr.bf16.gmra.mrb[0].mxu0 %v3770
        %v3891 = vpop.f32.mrb[0].mxu0
        %v3892 = vadd.f32 0.0, %v3891
        %v3893 = vpop.f32.mrb[0].mxu0
        %v3894 = vpop.f32.mrb[0].mxu0
        %v3895 = vadd.f32 0.0, %v3894
        %v3896 = vpop.f32.mrb[0].mxu0
        %3897 = vmatprep.mubr.bf16.mxu0 0
        %3898 = vmatmul.mubr.bf16.gmra.mrb[0].mxu0 %v3773
        %v3899 = vpop.f32.mrb[0].mxu0
        %v3900 = vadd.f32 0.0, %v3899
        %v3901 = vpop.f32.mrb[0].mxu0
        %v3902 = vpop.f32.mrb[0].mxu0
        %v3903 = vadd.f32 0.0, %v3902
        %v3904 = vpop.f32.mrb[0].mxu0
        %3905 = vmatprep.mubr.bf16.mxu0 0
        %3906 = vmatmul.mubr.bf16.gmra.mrb[0].mxu0 %v3776
        %v3907 = vpop.f32.mrb[0].mxu0
        %v3908 = vadd.f32 0.0, %v3907
        %v3909 = vpop.f32.mrb[0].mxu0
        %v3910 = vpop.f32.mrb[0].mxu0
        %v3911 = vadd.f32 0.0, %v3910
        %v3912 = vpop.f32.mrb[0].mxu0
        %3913 = vmatprep.mubr.bf16.mxu0 0
        %3914 = vmatmul.mubr.bf16.gmra.mrb[0].mxu0 %v3779
        %v3915 = vpop.f32.mrb[0].mxu0
        %v3916 = vadd.f32 0.0, %v3915
        %v3917 = vpop.f32.mrb[0].mxu0
        %v3918 = vpop.f32.mrb[0].mxu0
        %v3919 = vadd.f32 0.0, %v3918
        %v3920 = vpop.f32.mrb[0].mxu0
        %3921 = vmatprep.mubr.bf16.mxu0 0
        %3922 = vmatmul.mubr.bf16.gmra.mrb[0].mxu0 %v3782
        %v3923 = vpop.f32.mrb[0].mxu0
        %v3924 = vadd.f32 0.0, %v3923
        %v3925 = vpop.f32.mrb[0].mxu0
        %v3926 = vpop.f32.mrb[0].mxu0
        %v3927 = vadd.f32 0.0, %v3926
        %v3928 = vpop.f32.mrb[0].mxu0
        %3929 = vmatprep.mubr.bf16.mxu0 0
        %3930 = vmatmul.mubr.bf16.gmra.mrb[0].mxu0 %v3785
        %v3931 = vpop.f32.mrb[0].mxu0
        %v3932 = vadd.f32 0.0, %v3931
        %v3933 = vpop.f32.mrb[0].mxu0
        %v3934 = vpop.f32.mrb[0].mxu0
        %v3935 = vadd.f32 0.0, %v3934
        %v3936 = vpop.f32.mrb[0].mxu0
        %3937 = vmatprep.mubr.bf16.mxu0 0
        %3938 = vmatmul.mubr.bf16.gmra.mrb[0].mxu0 %v3788
        %v3939 = vpop.f32.mrb[0].mxu0
        %v3940 = vadd.f32 0.0, %v3939
        %v3941 = vpop.f32.mrb[0].mxu0
        %v3942 = vpop.f32.mrb[0].mxu0
        %v3943 = vadd.f32 0.0, %v3942
        %v3944 = vpop.f32.mrb[0].mxu0
        %3945 = vmatprep.mubr.bf16.mxu0 0
        %3946 = vmatmul.mubr.bf16.gmra.mrb[0].mxu0 %v3791
        %v3947 = vpop.f32.mrb[0].mxu0
        %v3948 = vadd.f32 0.0, %v3947
        %v3949 = vpop.f32.mrb[0].mxu0
        %v3950 = vpop.f32.mrb[0].mxu0
        %v3951 = vadd.f32 0.0, %v3950
        %v3952 = vpop.f32.mrb[0].mxu0
        %3953 = vdwg.mxu0
        %v3954 = vadd.f32 %v814, %v3828
        %v3955 = vadd.f32 %v815, %v3831
        %v3956 = vadd.f32 %v816, %v3836
        %v3957 = vadd.f32 %v817, %v3839
        %v3958 = vadd.f32 %v818, %v3844
        %v3959 = vadd.f32 %v819, %v3847
        %v3960 = vadd.f32 %v820, %v3852
        %v3961 = vadd.f32 %v821, %v3855
        %v3962 = vadd.f32 %v822, %v3860
        %v3963 = vadd.f32 %v823, %v3863
        %v3964 = vadd.f32 %v824, %v3868
        %v3965 = vadd.f32 %v825, %v3871
        %v3966 = vadd.f32 %v826, %v3876
        %v3967 = vadd.f32 %v827, %v3879
        %v3968 = vadd.f32 %v828, %v3884
        %v3969 = vadd.f32 %v829, %v3887
        %v3970 = vadd.f32 %v830, %v3892
        %v3971 = vadd.f32 %v831, %v3895
        %v3972 = vadd.f32 %v832, %v3900
        %v3973 = vadd.f32 %v833, %v3903
        %v3974 = vadd.f32 %v834, %v3908
        %v3975 = vadd.f32 %v835, %v3911
        %v3976 = vadd.f32 %v836, %v3916
        %v3977 = vadd.f32 %v837, %v3919
        %v3978 = vadd.f32 %v838, %v3924
        %v3979 = vadd.f32 %v839, %v3927
        %v3980 = vadd.f32 %v840, %v3932
        %v3981 = vadd.f32 %v841, %v3935
        %v3982 = vadd.f32 %v842, %v3940
        %v3983 = vadd.f32 %v843, %v3943
        %v3984 = vadd.f32 %v844, %v3948
        %v3985 = vadd.f32 %v845, %v3951
        %s3986 = scalar_lea.vmem [#allocation8], 16
        %v3987 = vld [vmem:[%s3986] sm:$0xf]
        %v3988 = vld [vmem:[%s3986 + $0x4] sm:$0xf]
        %v3989 = vld [vmem:[%s3986 + $0x8] sm:$0xf]
        %v3990 = vld [vmem:[%s3986 + $0xc] sm:$0xf]
        %v3995 = vunpack.c.l.b16 %v3987
        %v3996 = vunpack.c.l.b16 %v3988
        %v3997 = vunpack.c.l.b16 %v3989
        %v3998 = vunpack.c.l.b16 %v3990
        %v3999 = vpack.c.b16 %v3996, %v3995
        %v4000 = vpack.c.b16 %v3998, %v3997
        %4003 = vmatprep.subr.bf16.mxu0 0
        %4004 = vmatpush1.bf16.msra.mxu0 %v3999
        %4005 = vmatprep.subr.bf16.mxu0 0
        %4006 = vmatpush1.bf16.msra.mxu0 %v4000
        %4007 = vmatprep.subr.bf16.mxu0 0
        %4008 = vmatpush1.bf16.msra.mxu0 0
        %4009 = vmatprep.subr.bf16.mxu0 0
        %4010 = vmatpush1.bf16.msra.mxu0 0
        %4011 = vmatprep.subr.bf16.mxu0 0
        %4012 = vmatpush1.bf16.msra.mxu0 0
        %4013 = vmatprep.subr.bf16.mxu0 0
        %4014 = vmatpush1.bf16.msra.mxu0 0
        %4015 = vmatprep.subr.bf16.mxu0 0
        %4016 = vmatpush1.bf16.msra.mxu0 0
        %4017 = vmatprep.subr.bf16.mxu0 0
        %4018 = vmatpush1.bf16.msra.mxu0 0
        %4019 = vmatprep.subr.bf16.mxu0 0
        %4020 = vmatpush1.bf16.msra.mxu0 0
        %4021 = vmatprep.subr.bf16.mxu0 0
        %4022 = vmatpush1.bf16.msra.mxu0 0
        %4023 = vmatprep.subr.bf16.mxu0 0
        %4024 = vmatpush1.bf16.msra.mxu0 0
        %4025 = vmatprep.subr.bf16.mxu0 0
        %4026 = vmatpush1.bf16.msra.mxu0 0
        %4027 = vmatprep.subr.bf16.mxu0 0
        %4028 = vmatpush1.bf16.msra.mxu0 0
        %4029 = vmatprep.subr.bf16.mxu0 0
        %4030 = vmatpush1.bf16.msra.mxu0 0
        %4031 = vmatprep.subr.bf16.mxu0 0
        %4032 = vmatpush1.bf16.msra.mxu0 0
        %4033 = vmatprep.subr.bf16.mxu0 0
        %4034 = vmatpush1.bf16.msra.mxu0 0
        %4035 = vmatprep.mubr.bf16.mxu0 0
        %4036 = vmatmul.mubr.bf16.gmra.mrb[0].mxu0 %v863
        %v4037 = vpop.f32.mrb[0].mxu0
        %v4038 = vadd.f32 0.0, %v4037
        %v4039 = vpop.f32.mrb[0].mxu0
        %v4040 = vpop.f32.mrb[0].mxu0
        %v4041 = vadd.f32 0.0, %v4040
        %v4042 = vpop.f32.mrb[0].mxu0
        %4043 = vmatprep.mubr.bf16.mxu0 0
        %4044 = vmatmul.mubr.bf16.gmra.mrb[0].mxu0 %v866
        %v4045 = vpop.f32.mrb[0].mxu0
        %v4046 = vadd.f32 0.0, %v4045
        %v4047 = vpop.f32.mrb[0].mxu0
        %v4048 = vpop.f32.mrb[0].mxu0
        %v4049 = vadd.f32 0.0, %v4048
        %v4050 = vpop.f32.mrb[0].mxu0
        %4051 = vmatprep.mubr.bf16.mxu0 0
        %4052 = vmatmul.mubr.bf16.gmra.mrb[0].mxu0 %v869
        %v4053 = vpop.f32.mrb[0].mxu0
        %v4054 = vadd.f32 0.0, %v4053
        %v4055 = vpop.f32.mrb[0].mxu0
        %v4056 = vpop.f32.mrb[0].mxu0
        %v4057 = vadd.f32 0.0, %v4056
        %v4058 = vpop.f32.mrb[0].mxu0
        %4059 = vmatprep.mubr.bf16.mxu0 0
        %4060 = vmatmul.mubr.bf16.gmra.mrb[0].mxu0 %v872
        %v4061 = vpop.f32.mrb[0].mxu0
        %v4062 = vadd.f32 0.0, %v4061
        %v4063 = vpop.f32.mrb[0].mxu0
        %v4064 = vpop.f32.mrb[0].mxu0
        %v4065 = vadd.f32 0.0, %v4064
        %v4066 = vpop.f32.mrb[0].mxu0
        %4067 = vmatprep.mubr.bf16.mxu0 0
        %4068 = vmatmul.mubr.bf16.gmra.mrb[0].mxu0 %v875
        %v4069 = vpop.f32.mrb[0].mxu0
        %v4070 = vadd.f32 0.0, %v4069
        %v4071 = vpop.f32.mrb[0].mxu0
        %v4072 = vpop.f32.mrb[0].mxu0
        %v4073 = vadd.f32 0.0, %v4072
        %v4074 = vpop.f32.mrb[0].mxu0
        %4075 = vmatprep.mubr.bf16.mxu0 0
        %4076 = vmatmul.mubr.bf16.gmra.mrb[0].mxu0 %v878
        %v4077 = vpop.f32.mrb[0].mxu0
        %v4078 = vadd.f32 0.0, %v4077
        %v4079 = vpop.f32.mrb[0].mxu0
        %v4080 = vpop.f32.mrb[0].mxu0
        %v4081 = vadd.f32 0.0, %v4080
        %v4082 = vpop.f32.mrb[0].mxu0
        %4083 = vmatprep.mubr.bf16.mxu0 0
        %4084 = vmatmul.mubr.bf16.gmra.mrb[0].mxu0 %v881
        %v4085 = vpop.f32.mrb[0].mxu0
        %v4086 = vadd.f32 0.0, %v4085
        %v4087 = vpop.f32.mrb[0].mxu0
        %v4088 = vpop.f32.mrb[0].mxu0
        %v4089 = vadd.f32 0.0, %v4088
        %v4090 = vpop.f32.mrb[0].mxu0
        %4091 = vmatprep.mubr.bf16.mxu0 0
        %4092 = vmatmul.mubr.bf16.gmra.mrb[0].mxu0 %v884
        %v4093 = vpop.f32.mrb[0].mxu0
        %v4094 = vadd.f32 0.0, %v4093
        %v4095 = vpop.f32.mrb[0].mxu0
        %v4096 = vpop.f32.mrb[0].mxu0
        %v4097 = vadd.f32 0.0, %v4096
        %v4098 = vpop.f32.mrb[0].mxu0
        %4099 = vmatprep.mubr.bf16.mxu0 0
        %4100 = vmatmul.mubr.bf16.gmra.mrb[0].mxu0 %v887
        %v4101 = vpop.f32.mrb[0].mxu0
        %v4102 = vadd.f32 0.0, %v4101
        %v4103 = vpop.f32.mrb[0].mxu0
        %v4104 = vpop.f32.mrb[0].mxu0
        %v4105 = vadd.f32 0.0, %v4104
        %v4106 = vpop.f32.mrb[0].mxu0
        %4107 = vmatprep.mubr.bf16.mxu0 0
        %4108 = vmatmul.mubr.bf16.gmra.mrb[0].mxu0 %v890
        %v4109 = vpop.f32.mrb[0].mxu0
        %v4110 = vadd.f32 0.0, %v4109
        %v4111 = vpop.f32.mrb[0].mxu0
        %v4112 = vpop.f32.mrb[0].mxu0
        %v4113 = vadd.f32 0.0, %v4112
        %v4114 = vpop.f32.mrb[0].mxu0
        %4115 = vmatprep.mubr.bf16.mxu0 0
        %4116 = vmatmul.mubr.bf16.gmra.mrb[0].mxu0 %v893
        %v4117 = vpop.f32.mrb[0].mxu0
        %v4118 = vadd.f32 0.0, %v4117
        %v4119 = vpop.f32.mrb[0].mxu0
        %v4120 = vpop.f32.mrb[0].mxu0
        %v4121 = vadd.f32 0.0, %v4120
        %v4122 = vpop.f32.mrb[0].mxu0
        %4123 = vmatprep.mubr.bf16.mxu0 0
        %4124 = vmatmul.mubr.bf16.gmra.mrb[0].mxu0 %v896
        %v4125 = vpop.f32.mrb[0].mxu0
        %v4126 = vadd.f32 0.0, %v4125
        %v4127 = vpop.f32.mrb[0].mxu0
        %v4128 = vpop.f32.mrb[0].mxu0
        %v4129 = vadd.f32 0.0, %v4128
        %v4130 = vpop.f32.mrb[0].mxu0
        %4131 = vmatprep.mubr.bf16.mxu0 0
        %4132 = vmatmul.mubr.bf16.gmra.mrb[0].mxu0 %v899
        %v4133 = vpop.f32.mrb[0].mxu0
        %v4134 = vadd.f32 0.0, %v4133
        %v4135 = vpop.f32.mrb[0].mxu0
        %v4136 = vpop.f32.mrb[0].mxu0
        %v4137 = vadd.f32 0.0, %v4136
        %v4138 = vpop.f32.mrb[0].mxu0
        %4139 = vmatprep.mubr.bf16.mxu0 0
        %4140 = vmatmul.mubr.bf16.gmra.mrb[0].mxu0 %v902
        %v4141 = vpop.f32.mrb[0].mxu0
        %v4142 = vadd.f32 0.0, %v4141
        %v4143 = vpop.f32.mrb[0].mxu0
        %v4144 = vpop.f32.mrb[0].mxu0
        %v4145 = vadd.f32 0.0, %v4144
        %v4146 = vpop.f32.mrb[0].mxu0
        %4147 = vmatprep.mubr.bf16.mxu0 0
        %4148 = vmatmul.mubr.bf16.gmra.mrb[0].mxu0 %v905
        %v4149 = vpop.f32.mrb[0].mxu0
        %v4150 = vadd.f32 0.0, %v4149
        %v4151 = vpop.f32.mrb[0].mxu0
        %v4152 = vpop.f32.mrb[0].mxu0
        %v4153 = vadd.f32 0.0, %v4152
        %v4154 = vpop.f32.mrb[0].mxu0
        %4155 = vmatprep.mubr.bf16.mxu0 0
        %4156 = vmatmul.mubr.bf16.gmra.mrb[0].mxu0 %v908
        %v4157 = vpop.f32.mrb[0].mxu0
        %v4158 = vadd.f32 0.0, %v4157
        %v4159 = vpop.f32.mrb[0].mxu0
        %v4160 = vpop.f32.mrb[0].mxu0
        %v4161 = vadd.f32 0.0, %v4160
        %v4162 = vpop.f32.mrb[0].mxu0
        %4163 = vdwg.mxu0
        %v4164 = vpack.c.bf16 %v4041, %v4038
        %v4165 = vpack.c.bf16 %v4049, %v4046
        %v4166 = vpack.c.bf16 %v4057, %v4054
        %v4167 = vpack.c.bf16 %v4065, %v4062
        %v4168 = vpack.c.bf16 %v4073, %v4070
        %v4169 = vpack.c.bf16 %v4081, %v4078
        %v4170 = vpack.c.bf16 %v4089, %v4086
        %v4171 = vpack.c.bf16 %v4097, %v4094
        %v4172 = vpack.c.bf16 %v4105, %v4102
        %v4173 = vpack.c.bf16 %v4113, %v4110
        %v4174 = vpack.c.bf16 %v4121, %v4118
        %v4175 = vpack.c.bf16 %v4129, %v4126
        %v4176 = vpack.c.bf16 %v4137, %v4134
        %v4177 = vpack.c.bf16 %v4145, %v4142
        %v4178 = vpack.c.bf16 %v4153, %v4150
        %v4179 = vpack.c.bf16 %v4161, %v4158
        %s4180 = scalar_lea.vmem [#allocation10], 16
        %v4181 = vld [vmem:[%s4180] sm:$0xf]
        %v4182 = vld [vmem:[%s4180 + $0x4] sm:$0xf]
        %v4183 = vld [vmem:[%s4180 + $0x8] sm:$0xf]
        %v4184 = vld [vmem:[%s4180 + $0xc] sm:$0xf]
        %v4189 = vunpack.c.l.b16 %v4181
        %v4190 = vunpack.c.l.b16 %v4182
        %v4191 = vunpack.c.l.b16 %v4183
        %v4192 = vunpack.c.l.b16 %v4184
        %v4193 = vpack.c.b16 %v4190, %v4189
        %v4194 = vpack.c.b16 %v4192, %v4191
        %4197 = vmatprep.subr.bf16.mxu0 0
        %4198 = vmatpush1.bf16.msra.mxu0 %v4193
        %4199 = vmatprep.subr.bf16.mxu0 0
        %4200 = vmatpush1.bf16.msra.mxu0 %v4194
        %4201 = vmatprep.subr.bf16.mxu0 0
        %4202 = vmatpush1.bf16.msra.mxu0 0
        %4203 = vmatprep.subr.bf16.mxu0 0
        %4204 = vmatpush1.bf16.msra.mxu0 0
        %4205 = vmatprep.subr.bf16.mxu0 0
        %4206 = vmatpush1.bf16.msra.mxu0 0
        %4207 = vmatprep.subr.bf16.mxu0 0
        %4208 = vmatpush1.bf16.msra.mxu0 0
        %4209 = vmatprep.subr.bf16.mxu0 0
        %4210 = vmatpush1.bf16.msra.mxu0 0
        %4211 = vmatprep.subr.bf16.mxu0 0
        %4212 = vmatpush1.bf16.msra.mxu0 0
        %4213 = vmatprep.subr.bf16.mxu0 0
        %4214 = vmatpush1.bf16.msra.mxu0 0
        %4215 = vmatprep.subr.bf16.mxu0 0
        %4216 = vmatpush1.bf16.msra.mxu0 0
        %4217 = vmatprep.subr.bf16.mxu0 0
        %4218 = vmatpush1.bf16.msra.mxu0 0
        %4219 = vmatprep.subr.bf16.mxu0 0
        %4220 = vmatpush1.bf16.msra.mxu0 0
        %4221 = vmatprep.subr.bf16.mxu0 0
        %4222 = vmatpush1.bf16.msra.mxu0 0
        %4223 = vmatprep.subr.bf16.mxu0 0
        %4224 = vmatpush1.bf16.msra.mxu0 0
        %4225 = vmatprep.subr.bf16.mxu0 0
        %4226 = vmatpush1.bf16.msra.mxu0 0
        %4227 = vmatprep.subr.bf16.mxu0 0
        %4228 = vmatpush1.bf16.msra.mxu0 0
        %4229 = vmatprep.mubr.bf16.mxu0 0
        %4230 = vmatmul.mubr.bf16.gmra.mrb[0].mxu0 %v863
        %v4231 = vpop.f32.mrb[0].mxu0
        %v4232 = vadd.f32 0.0, %v4231
        %v4233 = vpop.f32.mrb[0].mxu0
        %v4234 = vpop.f32.mrb[0].mxu0
        %v4235 = vadd.f32 0.0, %v4234
        %v4236 = vpop.f32.mrb[0].mxu0
        %4237 = vmatprep.mubr.bf16.mxu0 0
        %4238 = vmatmul.mubr.bf16.gmra.mrb[0].mxu0 %v866
        %v4239 = vpop.f32.mrb[0].mxu0
        %v4240 = vadd.f32 0.0, %v4239
        %v4241 = vpop.f32.mrb[0].mxu0
        %v4242 = vpop.f32.mrb[0].mxu0
        %v4243 = vadd.f32 0.0, %v4242
        %v4244 = vpop.f32.mrb[0].mxu0
        %4245 = vmatprep.mubr.bf16.mxu0 0
        %4246 = vmatmul.mubr.bf16.gmra.mrb[0].mxu0 %v869
        %v4247 = vpop.f32.mrb[0].mxu0
        %v4248 = vadd.f32 0.0, %v4247
        %v4249 = vpop.f32.mrb[0].mxu0
        %v4250 = vpop.f32.mrb[0].mxu0
        %v4251 = vadd.f32 0.0, %v4250
        %v4252 = vpop.f32.mrb[0].mxu0
        %4253 = vmatprep.mubr.bf16.mxu0 0
        %4254 = vmatmul.mubr.bf16.gmra.mrb[0].mxu0 %v872
        %v4255 = vpop.f32.mrb[0].mxu0
        %v4256 = vadd.f32 0.0, %v4255
        %v4257 = vpop.f32.mrb[0].mxu0
        %v4258 = vpop.f32.mrb[0].mxu0
        %v4259 = vadd.f32 0.0, %v4258
        %v4260 = vpop.f32.mrb[0].mxu0
        %4261 = vmatprep.mubr.bf16.mxu0 0
        %4262 = vmatmul.mubr.bf16.gmra.mrb[0].mxu0 %v875
        %v4263 = vpop.f32.mrb[0].mxu0
        %v4264 = vadd.f32 0.0, %v4263
        %v4265 = vpop.f32.mrb[0].mxu0
        %v4266 = vpop.f32.mrb[0].mxu0
        %v4267 = vadd.f32 0.0, %v4266
        %v4268 = vpop.f32.mrb[0].mxu0
        %4269 = vmatprep.mubr.bf16.mxu0 0
        %4270 = vmatmul.mubr.bf16.gmra.mrb[0].mxu0 %v878
        %v4271 = vpop.f32.mrb[0].mxu0
        %v4272 = vadd.f32 0.0, %v4271
        %v4273 = vpop.f32.mrb[0].mxu0
        %v4274 = vpop.f32.mrb[0].mxu0
        %v4275 = vadd.f32 0.0, %v4274
        %v4276 = vpop.f32.mrb[0].mxu0
        %4277 = vmatprep.mubr.bf16.mxu0 0
        %4278 = vmatmul.mubr.bf16.gmra.mrb[0].mxu0 %v881
        %v4279 = vpop.f32.mrb[0].mxu0
        %v4280 = vadd.f32 0.0, %v4279
        %v4281 = vpop.f32.mrb[0].mxu0
        %v4282 = vpop.f32.mrb[0].mxu0
        %v4283 = vadd.f32 0.0, %v4282
        %v4284 = vpop.f32.mrb[0].mxu0
        %4285 = vmatprep.mubr.bf16.mxu0 0
        %4286 = vmatmul.mubr.bf16.gmra.mrb[0].mxu0 %v884
        %v4287 = vpop.f32.mrb[0].mxu0
        %v4288 = vadd.f32 0.0, %v4287
        %v4289 = vpop.f32.mrb[0].mxu0
        %v4290 = vpop.f32.mrb[0].mxu0
        %v4291 = vadd.f32 0.0, %v4290
        %v4292 = vpop.f32.mrb[0].mxu0
        %4293 = vmatprep.mubr.bf16.mxu0 0
        %4294 = vmatmul.mubr.bf16.gmra.mrb[0].mxu0 %v887
        %v4295 = vpop.f32.mrb[0].mxu0
        %v4296 = vadd.f32 0.0, %v4295
        %v4297 = vpop.f32.mrb[0].mxu0
        %v4298 = vpop.f32.mrb[0].mxu0
        %v4299 = vadd.f32 0.0, %v4298
        %v4300 = vpop.f32.mrb[0].mxu0
        %4301 = vmatprep.mubr.bf16.mxu0 0
        %4302 = vmatmul.mubr.bf16.gmra.mrb[0].mxu0 %v890
        %v4303 = vpop.f32.mrb[0].mxu0
        %v4304 = vadd.f32 0.0, %v4303
        %v4305 = vpop.f32.mrb[0].mxu0
        %v4306 = vpop.f32.mrb[0].mxu0
        %v4307 = vadd.f32 0.0, %v4306
        %v4308 = vpop.f32.mrb[0].mxu0
        %4309 = vmatprep.mubr.bf16.mxu0 0
        %4310 = vmatmul.mubr.bf16.gmra.mrb[0].mxu0 %v893
        %v4311 = vpop.f32.mrb[0].mxu0
        %v4312 = vadd.f32 0.0, %v4311
        %v4313 = vpop.f32.mrb[0].mxu0
        %v4314 = vpop.f32.mrb[0].mxu0
        %v4315 = vadd.f32 0.0, %v4314
        %v4316 = vpop.f32.mrb[0].mxu0
        %4317 = vmatprep.mubr.bf16.mxu0 0
        %4318 = vmatmul.mubr.bf16.gmra.mrb[0].mxu0 %v896
        %v4319 = vpop.f32.mrb[0].mxu0
        %v4320 = vadd.f32 0.0, %v4319
        %v4321 = vpop.f32.mrb[0].mxu0
        %v4322 = vpop.f32.mrb[0].mxu0
        %v4323 = vadd.f32 0.0, %v4322
        %v4324 = vpop.f32.mrb[0].mxu0
        %4325 = vmatprep.mubr.bf16.mxu0 0
        %4326 = vmatmul.mubr.bf16.gmra.mrb[0].mxu0 %v899
        %v4327 = vpop.f32.mrb[0].mxu0
        %v4328 = vadd.f32 0.0, %v4327
        %v4329 = vpop.f32.mrb[0].mxu0
        %v4330 = vpop.f32.mrb[0].mxu0
        %v4331 = vadd.f32 0.0, %v4330
        %v4332 = vpop.f32.mrb[0].mxu0
        %4333 = vmatprep.mubr.bf16.mxu0 0
        %4334 = vmatmul.mubr.bf16.gmra.mrb[0].mxu0 %v902
        %v4335 = vpop.f32.mrb[0].mxu0
        %v4336 = vadd.f32 0.0, %v4335
        %v4337 = vpop.f32.mrb[0].mxu0
        %v4338 = vpop.f32.mrb[0].mxu0
        %v4339 = vadd.f32 0.0, %v4338
        %v4340 = vpop.f32.mrb[0].mxu0
        %4341 = vmatprep.mubr.bf16.mxu0 0
        %4342 = vmatmul.mubr.bf16.gmra.mrb[0].mxu0 %v905
        %v4343 = vpop.f32.mrb[0].mxu0
        %v4344 = vadd.f32 0.0, %v4343
        %v4345 = vpop.f32.mrb[0].mxu0
        %v4346 = vpop.f32.mrb[0].mxu0
        %v4347 = vadd.f32 0.0, %v4346
        %v4348 = vpop.f32.mrb[0].mxu0
        %4349 = vmatprep.mubr.bf16.mxu0 0
        %4350 = vmatmul.mubr.bf16.gmra.mrb[0].mxu0 %v908
        %v4351 = vpop.f32.mrb[0].mxu0
        %v4352 = vadd.f32 0.0, %v4351
        %v4353 = vpop.f32.mrb[0].mxu0
        %v4354 = vpop.f32.mrb[0].mxu0
        %v4355 = vadd.f32 0.0, %v4354
        %v4356 = vpop.f32.mrb[0].mxu0
        %4357 = vdwg.mxu0
        %v4358 = vpack.c.bf16 %v4235, %v4232
        %v4359 = vpack.c.bf16 %v4243, %v4240
        %v4360 = vpack.c.bf16 %v4251, %v4248
        %v4361 = vpack.c.bf16 %v4259, %v4256
        %v4362 = vpack.c.bf16 %v4267, %v4264
        %v4363 = vpack.c.bf16 %v4275, %v4272
        %v4364 = vpack.c.bf16 %v4283, %v4280
        %v4365 = vpack.c.bf16 %v4291, %v4288
        %v4366 = vpack.c.bf16 %v4299, %v4296
        %v4367 = vpack.c.bf16 %v4307, %v4304
        %v4368 = vpack.c.bf16 %v4315, %v4312
        %v4369 = vpack.c.bf16 %v4323, %v4320
        %v4370 = vpack.c.bf16 %v4331, %v4328
        %v4371 = vpack.c.bf16 %v4339, %v4336
        %v4372 = vpack.c.bf16 %v4347, %v4344
        %v4373 = vpack.c.bf16 %v4355, %v4352
        %s4374 = scalar_lea.vmem [#allocation11], 16
        %v4375 = vld [vmem:[%s4374] sm:$0xf]
        %v4376 = vld [vmem:[%s4374 + $0x4] sm:$0xf]
        %v4377 = vld [vmem:[%s4374 + $0x8] sm:$0xf]
        %v4378 = vld [vmem:[%s4374 + $0xc] sm:$0xf]
        %v4383 = vunpack.c.l.b16 %v4375
        %v4384 = vunpack.c.l.b16 %v4376
        %v4385 = vunpack.c.l.b16 %v4377
        %v4386 = vunpack.c.l.b16 %v4378
        %v4387 = vpack.c.b16 %v4384, %v4383
        %v4388 = vpack.c.b16 %v4386, %v4385
        %4391 = vmatprep.subr.bf16.mxu0 0
        %4392 = vmatpush1.bf16.msra.mxu0 %v4387
        %4393 = vmatprep.subr.bf16.mxu0 0
        %4394 = vmatpush1.bf16.msra.mxu0 %v4388
        %4395 = vmatprep.subr.bf16.mxu0 0
        %4396 = vmatpush1.bf16.msra.mxu0 0
        %4397 = vmatprep.subr.bf16.mxu0 0
        %4398 = vmatpush1.bf16.msra.mxu0 0
        %4399 = vmatprep.subr.bf16.mxu0 0
        %4400 = vmatpush1.bf16.msra.mxu0 0
        %4401 = vmatprep.subr.bf16.mxu0 0
        %4402 = vmatpush1.bf16.msra.mxu0 0
        %4403 = vmatprep.subr.bf16.mxu0 0
        %4404 = vmatpush1.bf16.msra.mxu0 0
        %4405 = vmatprep.subr.bf16.mxu0 0
        %4406 = vmatpush1.bf16.msra.mxu0 0
        %4407 = vmatprep.subr.bf16.mxu0 0
        %4408 = vmatpush1.bf16.msra.mxu0 0
        %4409 = vmatprep.subr.bf16.mxu0 0
        %4410 = vmatpush1.bf16.msra.mxu0 0
        %4411 = vmatprep.subr.bf16.mxu0 0
        %4412 = vmatpush1.bf16.msra.mxu0 0
        %4413 = vmatprep.subr.bf16.mxu0 0
        %4414 = vmatpush1.bf16.msra.mxu0 0
        %4415 = vmatprep.subr.bf16.mxu0 0
        %4416 = vmatpush1.bf16.msra.mxu0 0
        %4417 = vmatprep.subr.bf16.mxu0 0
        %4418 = vmatpush1.bf16.msra.mxu0 0
        %4419 = vmatprep.subr.bf16.mxu0 0
        %4420 = vmatpush1.bf16.msra.mxu0 0
        %4421 = vmatprep.subr.bf16.mxu0 0
        %4422 = vmatpush1.bf16.msra.mxu0 0
        %4423 = vmatprep.mubr.bf16.mxu0 0
        %4424 = vmatmul.mubr.bf16.gmra.mrb[0].mxu0 %v863
        %v4425 = vpop.f32.mrb[0].mxu0
        %v4426 = vadd.f32 0.0, %v4425
        %v4427 = vpop.f32.mrb[0].mxu0
        %v4428 = vpop.f32.mrb[0].mxu0
        %v4429 = vadd.f32 0.0, %v4428
        %v4430 = vpop.f32.mrb[0].mxu0
        %4431 = vmatprep.mubr.bf16.mxu0 0
        %4432 = vmatmul.mubr.bf16.gmra.mrb[0].mxu0 %v866
        %v4433 = vpop.f32.mrb[0].mxu0
        %v4434 = vadd.f32 0.0, %v4433
        %v4435 = vpop.f32.mrb[0].mxu0
        %v4436 = vpop.f32.mrb[0].mxu0
        %v4437 = vadd.f32 0.0, %v4436
        %v4438 = vpop.f32.mrb[0].mxu0
        %4439 = vmatprep.mubr.bf16.mxu0 0
        %4440 = vmatmul.mubr.bf16.gmra.mrb[0].mxu0 %v869
        %v4441 = vpop.f32.mrb[0].mxu0
        %v4442 = vadd.f32 0.0, %v4441
        %v4443 = vpop.f32.mrb[0].mxu0
        %v4444 = vpop.f32.mrb[0].mxu0
        %v4445 = vadd.f32 0.0, %v4444
        %v4446 = vpop.f32.mrb[0].mxu0
        %4447 = vmatprep.mubr.bf16.mxu0 0
        %4448 = vmatmul.mubr.bf16.gmra.mrb[0].mxu0 %v872
        %v4449 = vpop.f32.mrb[0].mxu0
        %v4450 = vadd.f32 0.0, %v4449
        %v4451 = vpop.f32.mrb[0].mxu0
        %v4452 = vpop.f32.mrb[0].mxu0
        %v4453 = vadd.f32 0.0, %v4452
        %v4454 = vpop.f32.mrb[0].mxu0
        %4455 = vmatprep.mubr.bf16.mxu0 0
        %4456 = vmatmul.mubr.bf16.gmra.mrb[0].mxu0 %v875
        %v4457 = vpop.f32.mrb[0].mxu0
        %v4458 = vadd.f32 0.0, %v4457
        %v4459 = vpop.f32.mrb[0].mxu0
        %v4460 = vpop.f32.mrb[0].mxu0
        %v4461 = vadd.f32 0.0, %v4460
        %v4462 = vpop.f32.mrb[0].mxu0
        %4463 = vmatprep.mubr.bf16.mxu0 0
        %4464 = vmatmul.mubr.bf16.gmra.mrb[0].mxu0 %v878
        %v4465 = vpop.f32.mrb[0].mxu0
        %v4466 = vadd.f32 0.0, %v4465
        %v4467 = vpop.f32.mrb[0].mxu0
        %v4468 = vpop.f32.mrb[0].mxu0
        %v4469 = vadd.f32 0.0, %v4468
        %v4470 = vpop.f32.mrb[0].mxu0
        %4471 = vmatprep.mubr.bf16.mxu0 0
        %4472 = vmatmul.mubr.bf16.gmra.mrb[0].mxu0 %v881
        %v4473 = vpop.f32.mrb[0].mxu0
        %v4474 = vadd.f32 0.0, %v4473
        %v4475 = vpop.f32.mrb[0].mxu0
        %v4476 = vpop.f32.mrb[0].mxu0
        %v4477 = vadd.f32 0.0, %v4476
        %v4478 = vpop.f32.mrb[0].mxu0
        %4479 = vmatprep.mubr.bf16.mxu0 0
        %4480 = vmatmul.mubr.bf16.gmra.mrb[0].mxu0 %v884
        %v4481 = vpop.f32.mrb[0].mxu0
        %v4482 = vadd.f32 0.0, %v4481
        %v4483 = vpop.f32.mrb[0].mxu0
        %v4484 = vpop.f32.mrb[0].mxu0
        %v4485 = vadd.f32 0.0, %v4484
        %v4486 = vpop.f32.mrb[0].mxu0
        %4487 = vmatprep.mubr.bf16.mxu0 0
        %4488 = vmatmul.mubr.bf16.gmra.mrb[0].mxu0 %v887
        %v4489 = vpop.f32.mrb[0].mxu0
        %v4490 = vadd.f32 0.0, %v4489
        %v4491 = vpop.f32.mrb[0].mxu0
        %v4492 = vpop.f32.mrb[0].mxu0
        %v4493 = vadd.f32 0.0, %v4492
        %v4494 = vpop.f32.mrb[0].mxu0
        %4495 = vmatprep.mubr.bf16.mxu0 0
        %4496 = vmatmul.mubr.bf16.gmra.mrb[0].mxu0 %v890
        %v4497 = vpop.f32.mrb[0].mxu0
        %v4498 = vadd.f32 0.0, %v4497
        %v4499 = vpop.f32.mrb[0].mxu0
        %v4500 = vpop.f32.mrb[0].mxu0
        %v4501 = vadd.f32 0.0, %v4500
        %v4502 = vpop.f32.mrb[0].mxu0
        %4503 = vmatprep.mubr.bf16.mxu0 0
        %4504 = vmatmul.mubr.bf16.gmra.mrb[0].mxu0 %v893
        %v4505 = vpop.f32.mrb[0].mxu0
        %v4506 = vadd.f32 0.0, %v4505
        %v4507 = vpop.f32.mrb[0].mxu0
        %v4508 = vpop.f32.mrb[0].mxu0
        %v4509 = vadd.f32 0.0, %v4508
        %v4510 = vpop.f32.mrb[0].mxu0
        %4511 = vmatprep.mubr.bf16.mxu0 0
        %4512 = vmatmul.mubr.bf16.gmra.mrb[0].mxu0 %v896
        %v4513 = vpop.f32.mrb[0].mxu0
        %v4514 = vadd.f32 0.0, %v4513
        %v4515 = vpop.f32.mrb[0].mxu0
        %v4516 = vpop.f32.mrb[0].mxu0
        %v4517 = vadd.f32 0.0, %v4516
        %v4518 = vpop.f32.mrb[0].mxu0
        %4519 = vmatprep.mubr.bf16.mxu0 0
        %4520 = vmatmul.mubr.bf16.gmra.mrb[0].mxu0 %v899
        %v4521 = vpop.f32.mrb[0].mxu0
        %v4522 = vadd.f32 0.0, %v4521
        %v4523 = vpop.f32.mrb[0].mxu0
        %v4524 = vpop.f32.mrb[0].mxu0
        %v4525 = vadd.f32 0.0, %v4524
        %v4526 = vpop.f32.mrb[0].mxu0
        %4527 = vmatprep.mubr.bf16.mxu0 0
        %4528 = vmatmul.mubr.bf16.gmra.mrb[0].mxu0 %v902
        %v4529 = vpop.f32.mrb[0].mxu0
        %v4530 = vadd.f32 0.0, %v4529
        %v4531 = vpop.f32.mrb[0].mxu0
        %v4532 = vpop.f32.mrb[0].mxu0
        %v4533 = vadd.f32 0.0, %v4532
        %v4534 = vpop.f32.mrb[0].mxu0
        %4535 = vmatprep.mubr.bf16.mxu0 0
        %4536 = vmatmul.mubr.bf16.gmra.mrb[0].mxu0 %v905
        %v4537 = vpop.f32.mrb[0].mxu0
        %v4538 = vadd.f32 0.0, %v4537
        %v4539 = vpop.f32.mrb[0].mxu0
        %v4540 = vpop.f32.mrb[0].mxu0
        %v4541 = vadd.f32 0.0, %v4540
        %v4542 = vpop.f32.mrb[0].mxu0
        %4543 = vmatprep.mubr.bf16.mxu0 0
        %4544 = vmatmul.mubr.bf16.gmra.mrb[0].mxu0 %v908
        %v4545 = vpop.f32.mrb[0].mxu0
        %v4546 = vadd.f32 0.0, %v4545
        %v4547 = vpop.f32.mrb[0].mxu0
        %v4548 = vpop.f32.mrb[0].mxu0
        %v4549 = vadd.f32 0.0, %v4548
        %v4550 = vpop.f32.mrb[0].mxu0
        %4551 = vdwg.mxu0
        %v4552 = vpack.c.bf16 %v4429, %v4426
        %v4553 = vpack.c.bf16 %v4437, %v4434
        %v4554 = vpack.c.bf16 %v4445, %v4442
        %v4555 = vpack.c.bf16 %v4453, %v4450
        %v4556 = vpack.c.bf16 %v4461, %v4458
        %v4557 = vpack.c.bf16 %v4469, %v4466
        %v4558 = vpack.c.bf16 %v4477, %v4474
        %v4559 = vpack.c.bf16 %v4485, %v4482
        %v4560 = vpack.c.bf16 %v4493, %v4490
        %v4561 = vpack.c.bf16 %v4501, %v4498
        %v4562 = vpack.c.bf16 %v4509, %v4506
        %v4563 = vpack.c.bf16 %v4517, %v4514
        %v4564 = vpack.c.bf16 %v4525, %v4522
        %v4565 = vpack.c.bf16 %v4533, %v4530
        %v4566 = vpack.c.bf16 %v4541, %v4538
        %v4567 = vpack.c.bf16 %v4549, %v4546
        %s4568 = sadd.s32 %s1473, 32
        %s4569 = smul.addr %s4568, 8
        %s4570 = scalar_lea.vmem [#allocation2], %s4569
        %4571 = vst.msk [vmem:[%s4570] sm:$0xff] %vm1477, %v4358
        %4572 = vst.msk [vmem:[%s4570 + $0x8] sm:$0xff] %vm1477, %v4359
        %4573 = vst.msk [vmem:[%s4570 + $0x10] sm:$0xff] %vm1477, %v4360
        %4574 = vst.msk [vmem:[%s4570 + $0x18] sm:$0xff] %vm1477, %v4361
        %4575 = vst.msk [vmem:[%s4570 + $0x20] sm:$0xff] %vm1477, %v4362
        %4576 = vst.msk [vmem:[%s4570 + $0x28] sm:$0xff] %vm1477, %v4363
        %4577 = vst.msk [vmem:[%s4570 + $0x30] sm:$0xff] %vm1477, %v4364
        %4578 = vst.msk [vmem:[%s4570 + $0x38] sm:$0xff] %vm1477, %v4365
        %4579 = vst.msk [vmem:[%s4570 + $0x40] sm:$0xff] %vm1477, %v4366
        %4580 = vst.msk [vmem:[%s4570 + $0x48] sm:$0xff] %vm1477, %v4367
        %4581 = vst.msk [vmem:[%s4570 + $0x50] sm:$0xff] %vm1477, %v4368
        %4582 = vst.msk [vmem:[%s4570 + $0x58] sm:$0xff] %vm1477, %v4369
        %4583 = vst.msk [vmem:[%s4570 + $0x60] sm:$0xff] %vm1477, %v4370
        %4584 = vst.msk [vmem:[%s4570 + $0x68] sm:$0xff] %vm1477, %v4371
        %4585 = vst.msk [vmem:[%s4570 + $0x70] sm:$0xff] %vm1477, %v4372
        %4586 = vst.msk [vmem:[%s4570 + $0x78] sm:$0xff] %vm1477, %v4373
        %s4587 = smul.addr %s4568, 8
        %s4588 = scalar_lea.vmem [#allocation3], %s4587
        %4589 = vst.msk [vmem:[%s4588] sm:$0xff] %vm1477, %v4552
        %4590 = vst.msk [vmem:[%s4588 + $0x8] sm:$0xff] %vm1477, %v4553
        %4591 = vst.msk [vmem:[%s4588 + $0x10] sm:$0xff] %vm1477, %v4554
        %4592 = vst.msk [vmem:[%s4588 + $0x18] sm:$0xff] %vm1477, %v4555
        %4593 = vst.msk [vmem:[%s4588 + $0x20] sm:$0xff] %vm1477, %v4556
        %4594 = vst.msk [vmem:[%s4588 + $0x28] sm:$0xff] %vm1477, %v4557
        %4595 = vst.msk [vmem:[%s4588 + $0x30] sm:$0xff] %vm1477, %v4558
        %4596 = vst.msk [vmem:[%s4588 + $0x38] sm:$0xff] %vm1477, %v4559
        %4597 = vst.msk [vmem:[%s4588 + $0x40] sm:$0xff] %vm1477, %v4560
        %4598 = vst.msk [vmem:[%s4588 + $0x48] sm:$0xff] %vm1477, %v4561
        %4599 = vst.msk [vmem:[%s4588 + $0x50] sm:$0xff] %vm1477, %v4562
        %4600 = vst.msk [vmem:[%s4588 + $0x58] sm:$0xff] %vm1477, %v4563
        %4601 = vst.msk [vmem:[%s4588 + $0x60] sm:$0xff] %vm1477, %v4564
        %4602 = vst.msk [vmem:[%s4588 + $0x68] sm:$0xff] %vm1477, %v4565
        %4603 = vst.msk [vmem:[%s4588 + $0x70] sm:$0xff] %vm1477, %v4566
        %4604 = vst.msk [vmem:[%s4588 + $0x78] sm:$0xff] %vm1477, %v4567
        %v4606 = vsel %vm1477, %v4164, 0
        %v4609 = vsel %vm1477, %v4165, 0
        %v4612 = vsel %vm1477, %v4166, 0
        %v4615 = vsel %vm1477, %v4167, 0
        %v4618 = vsel %vm1477, %v4168, 0
        %v4621 = vsel %vm1477, %v4169, 0
        %v4624 = vsel %vm1477, %v4170, 0
        %v4627 = vsel %vm1477, %v4171, 0
        %v4630 = vsel %vm1477, %v4172, 0
        %v4633 = vsel %vm1477, %v4173, 0
        %v4636 = vsel %vm1477, %v4174, 0
        %v4639 = vsel %vm1477, %v4175, 0
        %v4642 = vsel %vm1477, %v4176, 0
        %v4645 = vsel %vm1477, %v4177, 0
        %v4648 = vsel %vm1477, %v4178, 0
        %v4651 = vsel %vm1477, %v4179, 0
        %v4654 = vsel %vm1477, %v4358, 0
        %v4657 = vsel %vm1477, %v4359, 0
        %v4660 = vsel %vm1477, %v4360, 0
        %v4663 = vsel %vm1477, %v4361, 0
        %v4666 = vsel %vm1477, %v4362, 0
        %v4669 = vsel %vm1477, %v4363, 0
        %v4672 = vsel %vm1477, %v4364, 0
        %v4675 = vsel %vm1477, %v4365, 0
        %v4678 = vsel %vm1477, %v4366, 0
        %v4681 = vsel %vm1477, %v4367, 0
        %v4684 = vsel %vm1477, %v4368, 0
        %v4687 = vsel %vm1477, %v4369, 0
        %v4690 = vsel %vm1477, %v4370, 0
        %v4693 = vsel %vm1477, %v4371, 0
        %v4696 = vsel %vm1477, %v4372, 0
        %v4699 = vsel %vm1477, %v4373, 0
        %4701 = vmatprep.subr.bf16.mxu0 0
        %4702 = vmatpush1.bf16.xpose.msra.mxu0 %v4654
        %4703 = vmatprep.subr.bf16.mxu0 0
        %4704 = vmatpush1.bf16.xpose.msra.mxu0 %v4657
        %4705 = vmatprep.subr.bf16.mxu0 0
        %4706 = vmatpush1.bf16.xpose.msra.mxu0 %v4660
        %4707 = vmatprep.subr.bf16.mxu0 0
        %4708 = vmatpush1.bf16.xpose.msra.mxu0 %v4663
        %4709 = vmatprep.subr.bf16.mxu0 0
        %4710 = vmatpush1.bf16.xpose.msra.mxu0 %v4666
        %4711 = vmatprep.subr.bf16.mxu0 0
        %4712 = vmatpush1.bf16.xpose.msra.mxu0 %v4669
        %4713 = vmatprep.subr.bf16.mxu0 0
        %4714 = vmatpush1.bf16.xpose.msra.mxu0 %v4672
        %4715 = vmatprep.subr.bf16.mxu0 0
        %4716 = vmatpush1.bf16.xpose.msra.mxu0 %v4675
        %4717 = vmatprep.subr.bf16.mxu0 0
        %4718 = vmatpush1.bf16.xpose.msra.mxu0 %v4678
        %4719 = vmatprep.subr.bf16.mxu0 0
        %4720 = vmatpush1.bf16.xpose.msra.mxu0 %v4681
        %4721 = vmatprep.subr.bf16.mxu0 0
        %4722 = vmatpush1.bf16.xpose.msra.mxu0 %v4684
        %4723 = vmatprep.subr.bf16.mxu0 0
        %4724 = vmatpush1.bf16.xpose.msra.mxu0 %v4687
        %4725 = vmatprep.subr.bf16.mxu0 0
        %4726 = vmatpush1.bf16.xpose.msra.mxu0 %v4690
        %4727 = vmatprep.subr.bf16.mxu0 0
        %4728 = vmatpush1.bf16.xpose.msra.mxu0 %v4693
        %4729 = vmatprep.subr.bf16.mxu0 0
        %4730 = vmatpush1.bf16.xpose.msra.mxu0 %v4696
        %4731 = vmatprep.subr.bf16.mxu0 0
        %4732 = vmatpush1.bf16.xpose.msra.mxu0 %v4699
        %4733 = vmatprep.mubr.bf16.mxu0 0
        %4734 = vmatmul.mubr.bf16.gmra.mrb[0].mxu0 %v4606
        %v4735 = vpop.f32.mrb[0].mxu0
        %v4736 = vadd.f32 0.0, %v4735
        %v4737 = vpop.f32.mrb[0].mxu0
        %v4738 = vadd.f32 0.0, %v4737
        %v4739 = vpop.f32.mrb[0].mxu0
        %v4740 = vadd.f32 0.0, %v4739
        %v4741 = vpop.f32.mrb[0].mxu0
        %v4742 = vadd.f32 0.0, %v4741
        %4743 = vmatprep.mubr.bf16.mxu0 0
        %4744 = vmatmul.mubr.bf16.gmra.mrb[0].mxu0 %v4609
        %v4745 = vpop.f32.mrb[0].mxu0
        %v4746 = vadd.f32 0.0, %v4745
        %v4747 = vpop.f32.mrb[0].mxu0
        %v4748 = vadd.f32 0.0, %v4747
        %v4749 = vpop.f32.mrb[0].mxu0
        %v4750 = vadd.f32 0.0, %v4749
        %v4751 = vpop.f32.mrb[0].mxu0
        %v4752 = vadd.f32 0.0, %v4751
        %4753 = vmatprep.mubr.bf16.mxu0 0
        %4754 = vmatmul.mubr.bf16.gmra.mrb[0].mxu0 %v4612
        %v4755 = vpop.f32.mrb[0].mxu0
        %v4756 = vadd.f32 0.0, %v4755
        %v4757 = vpop.f32.mrb[0].mxu0
        %v4758 = vadd.f32 0.0, %v4757
        %v4759 = vpop.f32.mrb[0].mxu0
        %v4760 = vadd.f32 0.0, %v4759
        %v4761 = vpop.f32.mrb[0].mxu0
        %v4762 = vadd.f32 0.0, %v4761
        %4763 = vmatprep.mubr.bf16.mxu0 0
        %4764 = vmatmul.mubr.bf16.gmra.mrb[0].mxu0 %v4615
        %v4765 = vpop.f32.mrb[0].mxu0
        %v4766 = vadd.f32 0.0, %v4765
        %v4767 = vpop.f32.mrb[0].mxu0
        %v4768 = vadd.f32 0.0, %v4767
        %v4769 = vpop.f32.mrb[0].mxu0
        %v4770 = vadd.f32 0.0, %v4769
        %v4771 = vpop.f32.mrb[0].mxu0
        %v4772 = vadd.f32 0.0, %v4771
        %4773 = vmatprep.mubr.bf16.mxu0 0
        %4774 = vmatmul.mubr.bf16.gmra.mrb[0].mxu0 %v4618
        %v4775 = vpop.f32.mrb[0].mxu0
        %v4776 = vadd.f32 0.0, %v4775
        %v4777 = vpop.f32.mrb[0].mxu0
        %v4778 = vadd.f32 0.0, %v4777
        %v4779 = vpop.f32.mrb[0].mxu0
        %v4780 = vadd.f32 0.0, %v4779
        %v4781 = vpop.f32.mrb[0].mxu0
        %v4782 = vadd.f32 0.0, %v4781
        %4783 = vmatprep.mubr.bf16.mxu0 0
        %4784 = vmatmul.mubr.bf16.gmra.mrb[0].mxu0 %v4621
        %v4785 = vpop.f32.mrb[0].mxu0
        %v4786 = vadd.f32 0.0, %v4785
        %v4787 = vpop.f32.mrb[0].mxu0
        %v4788 = vadd.f32 0.0, %v4787
        %v4789 = vpop.f32.mrb[0].mxu0
        %v4790 = vadd.f32 0.0, %v4789
        %v4791 = vpop.f32.mrb[0].mxu0
        %v4792 = vadd.f32 0.0, %v4791
        %4793 = vmatprep.mubr.bf16.mxu0 0
        %4794 = vmatmul.mubr.bf16.gmra.mrb[0].mxu0 %v4624
        %v4795 = vpop.f32.mrb[0].mxu0
        %v4796 = vadd.f32 0.0, %v4795
        %v4797 = vpop.f32.mrb[0].mxu0
        %v4798 = vadd.f32 0.0, %v4797
        %v4799 = vpop.f32.mrb[0].mxu0
        %v4800 = vadd.f32 0.0, %v4799
        %v4801 = vpop.f32.mrb[0].mxu0
        %v4802 = vadd.f32 0.0, %v4801
        %4803 = vmatprep.mubr.bf16.mxu0 0
        %4804 = vmatmul.mubr.bf16.gmra.mrb[0].mxu0 %v4627
        %v4805 = vpop.f32.mrb[0].mxu0
        %v4806 = vadd.f32 0.0, %v4805
        %v4807 = vpop.f32.mrb[0].mxu0
        %v4808 = vadd.f32 0.0, %v4807
        %v4809 = vpop.f32.mrb[0].mxu0
        %v4810 = vadd.f32 0.0, %v4809
        %v4811 = vpop.f32.mrb[0].mxu0
        %v4812 = vadd.f32 0.0, %v4811
        %4813 = vmatprep.mubr.bf16.mxu0 0
        %4814 = vmatmul.mubr.bf16.gmra.mrb[0].mxu0 %v4630
        %v4815 = vpop.f32.mrb[0].mxu0
        %v4816 = vadd.f32 0.0, %v4815
        %v4817 = vpop.f32.mrb[0].mxu0
        %v4818 = vadd.f32 0.0, %v4817
        %v4819 = vpop.f32.mrb[0].mxu0
        %v4820 = vadd.f32 0.0, %v4819
        %v4821 = vpop.f32.mrb[0].mxu0
        %v4822 = vadd.f32 0.0, %v4821
        %4823 = vmatprep.mubr.bf16.mxu0 0
        %4824 = vmatmul.mubr.bf16.gmra.mrb[0].mxu0 %v4633
        %v4825 = vpop.f32.mrb[0].mxu0
        %v4826 = vadd.f32 0.0, %v4825
        %v4827 = vpop.f32.mrb[0].mxu0
        %v4828 = vadd.f32 0.0, %v4827
        %v4829 = vpop.f32.mrb[0].mxu0
        %v4830 = vadd.f32 0.0, %v4829
        %v4831 = vpop.f32.mrb[0].mxu0
        %v4832 = vadd.f32 0.0, %v4831
        %4833 = vmatprep.mubr.bf16.mxu0 0
        %4834 = vmatmul.mubr.bf16.gmra.mrb[0].mxu0 %v4636
        %v4835 = vpop.f32.mrb[0].mxu0
        %v4836 = vadd.f32 0.0, %v4835
        %v4837 = vpop.f32.mrb[0].mxu0
        %v4838 = vadd.f32 0.0, %v4837
        %v4839 = vpop.f32.mrb[0].mxu0
        %v4840 = vadd.f32 0.0, %v4839
        %v4841 = vpop.f32.mrb[0].mxu0
        %v4842 = vadd.f32 0.0, %v4841
        %4843 = vmatprep.mubr.bf16.mxu0 0
        %4844 = vmatmul.mubr.bf16.gmra.mrb[0].mxu0 %v4639
        %v4845 = vpop.f32.mrb[0].mxu0
        %v4846 = vadd.f32 0.0, %v4845
        %v4847 = vpop.f32.mrb[0].mxu0
        %v4848 = vadd.f32 0.0, %v4847
        %v4849 = vpop.f32.mrb[0].mxu0
        %v4850 = vadd.f32 0.0, %v4849
        %v4851 = vpop.f32.mrb[0].mxu0
        %v4852 = vadd.f32 0.0, %v4851
        %4853 = vmatprep.mubr.bf16.mxu0 0
        %4854 = vmatmul.mubr.bf16.gmra.mrb[0].mxu0 %v4642
        %v4855 = vpop.f32.mrb[0].mxu0
        %v4856 = vadd.f32 0.0, %v4855
        %v4857 = vpop.f32.mrb[0].mxu0
        %v4858 = vadd.f32 0.0, %v4857
        %v4859 = vpop.f32.mrb[0].mxu0
        %v4860 = vadd.f32 0.0, %v4859
        %v4861 = vpop.f32.mrb[0].mxu0
        %v4862 = vadd.f32 0.0, %v4861
        %4863 = vmatprep.mubr.bf16.mxu0 0
        %4864 = vmatmul.mubr.bf16.gmra.mrb[0].mxu0 %v4645
        %v4865 = vpop.f32.mrb[0].mxu0
        %v4866 = vadd.f32 0.0, %v4865
        %v4867 = vpop.f32.mrb[0].mxu0
        %v4868 = vadd.f32 0.0, %v4867
        %v4869 = vpop.f32.mrb[0].mxu0
        %v4870 = vadd.f32 0.0, %v4869
        %v4871 = vpop.f32.mrb[0].mxu0
        %v4872 = vadd.f32 0.0, %v4871
        %4873 = vmatprep.mubr.bf16.mxu0 0
        %4874 = vmatmul.mubr.bf16.gmra.mrb[0].mxu0 %v4648
        %v4875 = vpop.f32.mrb[0].mxu0
        %v4876 = vadd.f32 0.0, %v4875
        %v4877 = vpop.f32.mrb[0].mxu0
        %v4878 = vadd.f32 0.0, %v4877
        %v4879 = vpop.f32.mrb[0].mxu0
        %v4880 = vadd.f32 0.0, %v4879
        %v4881 = vpop.f32.mrb[0].mxu0
        %v4882 = vadd.f32 0.0, %v4881
        %4883 = vmatprep.mubr.bf16.mxu0 0
        %4884 = vmatmul.mubr.bf16.gmra.mrb[0].mxu0 %v4651
        %v4885 = vpop.f32.mrb[0].mxu0
        %v4886 = vadd.f32 0.0, %v4885
        %v4887 = vpop.f32.mrb[0].mxu0
        %v4888 = vadd.f32 0.0, %v4887
        %v4889 = vpop.f32.mrb[0].mxu0
        %v4890 = vadd.f32 0.0, %v4889
        %v4891 = vpop.f32.mrb[0].mxu0
        %v4892 = vadd.f32 0.0, %v4891
        %4893 = vdwg.mxu0
        %v4894 = vsel %vm743, -1e+30, %v4736
        %v4895 = vsel %vm744, -1e+30, %v4738
        %v4896 = vsel %vm745, -1e+30, %v4740
        %v4897 = vsel %vm746, -1e+30, %v4742
        %v4898 = vsel %vm747, -1e+30, %v4746
        %v4899 = vsel %vm748, -1e+30, %v4748
        %v4900 = vsel %vm749, -1e+30, %v4750
        %v4901 = vsel %vm750, -1e+30, %v4752
        %v4902 = vsel %vm751, -1e+30, %v4756
        %v4903 = vsel %vm752, -1e+30, %v4758
        %v4904 = vsel %vm753, -1e+30, %v4760
        %v4905 = vsel %vm754, -1e+30, %v4762
        %v4906 = vsel %vm755, -1e+30, %v4766
        %v4907 = vsel %vm756, -1e+30, %v4768
        %v4908 = vsel %vm757, -1e+30, %v4770
        %v4909 = vsel %vm758, -1e+30, %v4772
        %v4910 = vsel %vm759, -1e+30, %v4776
        %v4911 = vsel %vm760, -1e+30, %v4778
        %v4912 = vsel %vm761, -1e+30, %v4780
        %v4913 = vsel %vm762, -1e+30, %v4782
        %v4914 = vsel %vm763, -1e+30, %v4786
        %v4915 = vsel %vm764, -1e+30, %v4788
        %v4916 = vsel %vm765, -1e+30, %v4790
        %v4917 = vsel %vm766, -1e+30, %v4792
        %v4918 = vsel %vm767, -1e+30, %v4796
        %v4919 = vsel %vm768, -1e+30, %v4798
        %v4920 = vsel %vm769, -1e+30, %v4800
        %v4921 = vsel %vm770, -1e+30, %v4802
        %v4922 = vsel %vm771, -1e+30, %v4806
        %v4923 = vsel %vm772, -1e+30, %v4808
        %v4924 = vsel %vm773, -1e+30, %v4810
        %v4925 = vsel %vm774, -1e+30, %v4812
        %v4926 = vsel %vm775, -1e+30, %v4816
        %v4927 = vsel %vm776, -1e+30, %v4818
        %v4928 = vsel %vm777, -1e+30, %v4820
        %v4929 = vsel %vm778, -1e+30, %v4822
        %v4930 = vsel %vm779, -1e+30, %v4826
        %v4931 = vsel %vm780, -1e+30, %v4828
        %v4932 = vsel %vm781, -1e+30, %v4830
        %v4933 = vsel %vm782, -1e+30, %v4832
        %v4934 = vsel %vm783, -1e+30, %v4836
        %v4935 = vsel %vm784, -1e+30, %v4838
        %v4936 = vsel %vm785, -1e+30, %v4840
        %v4937 = vsel %vm786, -1e+30, %v4842
        %v4938 = vsel %vm787, -1e+30, %v4846
        %v4939 = vsel %vm788, -1e+30, %v4848
        %v4940 = vsel %vm789, -1e+30, %v4850
        %v4941 = vsel %vm790, -1e+30, %v4852
        %v4942 = vsel %vm791, -1e+30, %v4856
        %v4943 = vsel %vm792, -1e+30, %v4858
        %v4944 = vsel %vm793, -1e+30, %v4860
        %v4945 = vsel %vm794, -1e+30, %v4862
        %v4946 = vsel %vm795, -1e+30, %v4866
        %v4947 = vsel %vm796, -1e+30, %v4868
        %v4948 = vsel %vm797, -1e+30, %v4870
        %v4949 = vsel %vm798, -1e+30, %v4872
        %v4950 = vsel %vm799, -1e+30, %v4876
        %v4951 = vsel %vm800, -1e+30, %v4878
        %v4952 = vsel %vm801, -1e+30, %v4880
        %v4953 = vsel %vm802, -1e+30, %v4882
        %v4954 = vsel %vm803, -1e+30, %v4886
        %v4955 = vsel %vm804, -1e+30, %v4888
        %v4956 = vsel %vm805, -1e+30, %v4890
        %v4957 = vsel %vm806, -1e+30, %v4892
        %v4958 = vmax.f32 %v4894, %v4895
        %4959 = vmax.xlane.f32.xlu0 %v4958
        %v4960 = vpop.xlane.xlu0 %4959
        %v4961 = vmax.f32 %v4896, %v4897
        %4962 = vmax.xlane.f32.xlu0 %v4961
        %v4963 = vpop.xlane.xlu0 %4962
        %v4964 = vmax.f32 %v4898, %v4899
        %4965 = vmax.xlane.f32.xlu0 %v4964
        %v4966 = vpop.xlane.xlu0 %4965
        %v4967 = vmax.f32 %v4900, %v4901
        %4968 = vmax.xlane.f32.xlu0 %v4967
        %v4969 = vpop.xlane.xlu0 %4968
        %v4970 = vmax.f32 %v4902, %v4903
        %4971 = vmax.xlane.f32.xlu0 %v4970
        %v4972 = vpop.xlane.xlu0 %4971
        %v4973 = vmax.f32 %v4904, %v4905
        %4974 = vmax.xlane.f32.xlu0 %v4973
        %v4975 = vpop.xlane.xlu0 %4974
        %v4976 = vmax.f32 %v4906, %v4907
        %4977 = vmax.xlane.f32.xlu0 %v4976
        %v4978 = vpop.xlane.xlu0 %4977
        %v4979 = vmax.f32 %v4908, %v4909
        %4980 = vmax.xlane.f32.xlu0 %v4979
        %v4981 = vpop.xlane.xlu0 %4980
        %v4982 = vmax.f32 %v4910, %v4911
        %4983 = vmax.xlane.f32.xlu0 %v4982
        %v4984 = vpop.xlane.xlu0 %4983
        %v4985 = vmax.f32 %v4912, %v4913
        %4986 = vmax.xlane.f32.xlu0 %v4985
        %v4987 = vpop.xlane.xlu0 %4986
        %v4988 = vmax.f32 %v4914, %v4915
        %4989 = vmax.xlane.f32.xlu0 %v4988
        %v4990 = vpop.xlane.xlu0 %4989
        %v4991 = vmax.f32 %v4916, %v4917
        %4992 = vmax.xlane.f32.xlu0 %v4991
        %v4993 = vpop.xlane.xlu0 %4992
        %v4994 = vmax.f32 %v4918, %v4919
        %4995 = vmax.xlane.f32.xlu0 %v4994
        %v4996 = vpop.xlane.xlu0 %4995
        %v4997 = vmax.f32 %v4920, %v4921
        %4998 = vmax.xlane.f32.xlu0 %v4997
        %v4999 = vpop.xlane.xlu0 %4998
        %v5000 = vmax.f32 %v4922, %v4923
        %5001 = vmax.xlane.f32.xlu0 %v5000
        %v5002 = vpop.xlane.xlu0 %5001
        %v5003 = vmax.f32 %v4924, %v4925
        %5004 = vmax.xlane.f32.xlu0 %v5003
        %v5005 = vpop.xlane.xlu0 %5004
        %v5006 = vmax.f32 %v4926, %v4927
        %5007 = vmax.xlane.f32.xlu0 %v5006
        %v5008 = vpop.xlane.xlu0 %5007
        %v5009 = vmax.f32 %v4928, %v4929
        %5010 = vmax.xlane.f32.xlu0 %v5009
        %v5011 = vpop.xlane.xlu0 %5010
        %v5012 = vmax.f32 %v4930, %v4931
        %5013 = vmax.xlane.f32.xlu0 %v5012
        %v5014 = vpop.xlane.xlu0 %5013
        %v5015 = vmax.f32 %v4932, %v4933
        %5016 = vmax.xlane.f32.xlu0 %v5015
        %v5017 = vpop.xlane.xlu0 %5016
        %v5018 = vmax.f32 %v4934, %v4935
        %5019 = vmax.xlane.f32.xlu0 %v5018
        %v5020 = vpop.xlane.xlu0 %5019
        %v5021 = vmax.f32 %v4936, %v4937
        %5022 = vmax.xlane.f32.xlu0 %v5021
        %v5023 = vpop.xlane.xlu0 %5022
        %v5024 = vmax.f32 %v4938, %v4939
        %5025 = vmax.xlane.f32.xlu0 %v5024
        %v5026 = vpop.xlane.xlu0 %5025
        %v5027 = vmax.f32 %v4940, %v4941
        %5028 = vmax.xlane.f32.xlu0 %v5027
        %v5029 = vpop.xlane.xlu0 %5028
        %v5030 = vmax.f32 %v4942, %v4943
        %5031 = vmax.xlane.f32.xlu0 %v5030
        %v5032 = vpop.xlane.xlu0 %5031
        %v5033 = vmax.f32 %v4944, %v4945
        %5034 = vmax.xlane.f32.xlu0 %v5033
        %v5035 = vpop.xlane.xlu0 %5034
        %v5036 = vmax.f32 %v4946, %v4947
        %5037 = vmax.xlane.f32.xlu0 %v5036
        %v5038 = vpop.xlane.xlu0 %5037
        %v5039 = vmax.f32 %v4948, %v4949
        %5040 = vmax.xlane.f32.xlu0 %v5039
        %v5041 = vpop.xlane.xlu0 %5040
        %v5042 = vmax.f32 %v4950, %v4951
        %5043 = vmax.xlane.f32.xlu0 %v5042
        %v5044 = vpop.xlane.xlu0 %5043
        %v5045 = vmax.f32 %v4952, %v4953
        %5046 = vmax.xlane.f32.xlu0 %v5045
        %v5047 = vpop.xlane.xlu0 %5046
        %v5048 = vmax.f32 %v4954, %v4955
        %5049 = vmax.xlane.f32.xlu0 %v5048
        %v5050 = vpop.xlane.xlu0 %5049
        %v5051 = vmax.f32 %v4956, %v4957
        %5052 = vmax.xlane.f32.xlu0 %v5051
        %v5053 = vpop.xlane.xlu0 %5052
        %v5054 = vsub.f32 %v4894, %v4960
        %v5055 = vsub.f32 %v4895, %v4960
        %v5056 = vsub.f32 %v4896, %v4963
        %v5057 = vsub.f32 %v4897, %v4963
        %v5058 = vsub.f32 %v4898, %v4966
        %v5059 = vsub.f32 %v4899, %v4966
        %v5060 = vsub.f32 %v4900, %v4969
        %v5061 = vsub.f32 %v4901, %v4969
        %v5062 = vsub.f32 %v4902, %v4972
        %v5063 = vsub.f32 %v4903, %v4972
        %v5064 = vsub.f32 %v4904, %v4975
        %v5065 = vsub.f32 %v4905, %v4975
        %v5066 = vsub.f32 %v4906, %v4978
        %v5067 = vsub.f32 %v4907, %v4978
        %v5068 = vsub.f32 %v4908, %v4981
        %v5069 = vsub.f32 %v4909, %v4981
        %v5070 = vsub.f32 %v4910, %v4984
        %v5071 = vsub.f32 %v4911, %v4984
        %v5072 = vsub.f32 %v4912, %v4987
        %v5073 = vsub.f32 %v4913, %v4987
        %v5074 = vsub.f32 %v4914, %v4990
        %v5075 = vsub.f32 %v4915, %v4990
        %v5076 = vsub.f32 %v4916, %v4993
        %v5077 = vsub.f32 %v4917, %v4993
        %v5078 = vsub.f32 %v4918, %v4996
        %v5079 = vsub.f32 %v4919, %v4996
        %v5080 = vsub.f32 %v4920, %v4999
        %v5081 = vsub.f32 %v4921, %v4999
        %v5082 = vsub.f32 %v4922, %v5002
        %v5083 = vsub.f32 %v4923, %v5002
        %v5084 = vsub.f32 %v4924, %v5005
        %v5085 = vsub.f32 %v4925, %v5005
        %v5086 = vsub.f32 %v4926, %v5008
        %v5087 = vsub.f32 %v4927, %v5008
        %v5088 = vsub.f32 %v4928, %v5011
        %v5089 = vsub.f32 %v4929, %v5011
        %v5090 = vsub.f32 %v4930, %v5014
        %v5091 = vsub.f32 %v4931, %v5014
        %v5092 = vsub.f32 %v4932, %v5017
        %v5093 = vsub.f32 %v4933, %v5017
        %v5094 = vsub.f32 %v4934, %v5020
        %v5095 = vsub.f32 %v4935, %v5020
        %v5096 = vsub.f32 %v4936, %v5023
        %v5097 = vsub.f32 %v4937, %v5023
        %v5098 = vsub.f32 %v4938, %v5026
        %v5099 = vsub.f32 %v4939, %v5026
        %v5100 = vsub.f32 %v4940, %v5029
        %v5101 = vsub.f32 %v4941, %v5029
        %v5102 = vsub.f32 %v4942, %v5032
        %v5103 = vsub.f32 %v4943, %v5032
        %v5104 = vsub.f32 %v4944, %v5035
        %v5105 = vsub.f32 %v4945, %v5035
        %v5106 = vsub.f32 %v4946, %v5038
        %v5107 = vsub.f32 %v4947, %v5038
        %v5108 = vsub.f32 %v4948, %v5041
        %v5109 = vsub.f32 %v4949, %v5041
        %v5110 = vsub.f32 %v4950, %v5044
        %v5111 = vsub.f32 %v4951, %v5044
        %v5112 = vsub.f32 %v4952, %v5047
        %v5113 = vsub.f32 %v4953, %v5047
        %v5114 = vsub.f32 %v4954, %v5050
        %v5115 = vsub.f32 %v4955, %v5050
        %v5116 = vsub.f32 %v4956, %v5053
        %v5117 = vsub.f32 %v4957, %v5053
        %v5118 = vmul.f32 %v5054, 1.442695
        %v5119 = vpow.pop %v5118
        %v5120 = vmul.f32 %v5055, 1.442695
        %v5121 = vpow.pop %v5120
        %v5122 = vmul.f32 %v5056, 1.442695
        %v5123 = vpow.pop %v5122
        %v5124 = vmul.f32 %v5057, 1.442695
        %v5125 = vpow.pop %v5124
        %v5126 = vmul.f32 %v5058, 1.442695
        %v5127 = vpow.pop %v5126
        %v5128 = vmul.f32 %v5059, 1.442695
        %v5129 = vpow.pop %v5128
        %v5130 = vmul.f32 %v5060, 1.442695
        %v5131 = vpow.pop %v5130
        %v5132 = vmul.f32 %v5061, 1.442695
        %v5133 = vpow.pop %v5132
        %v5134 = vmul.f32 %v5062, 1.442695
        %v5135 = vpow.pop %v5134
        %v5136 = vmul.f32 %v5063, 1.442695
        %v5137 = vpow.pop %v5136
        %v5138 = vmul.f32 %v5064, 1.442695
        %v5139 = vpow.pop %v5138
        %v5140 = vmul.f32 %v5065, 1.442695
        %v5141 = vpow.pop %v5140
        %v5142 = vmul.f32 %v5066, 1.442695
        %v5143 = vpow.pop %v5142
        %v5144 = vmul.f32 %v5067, 1.442695
        %v5145 = vpow.pop %v5144
        %v5146 = vmul.f32 %v5068, 1.442695
        %v5147 = vpow.pop %v5146
        %v5148 = vmul.f32 %v5069, 1.442695
        %v5149 = vpow.pop %v5148
        %v5150 = vmul.f32 %v5070, 1.442695
        %v5151 = vpow.pop %v5150
        %v5152 = vmul.f32 %v5071, 1.442695
        %v5153 = vpow.pop %v5152
        %v5154 = vmul.f32 %v5072, 1.442695
        %v5155 = vpow.pop %v5154
        %v5156 = vmul.f32 %v5073, 1.442695
        %v5157 = vpow.pop %v5156
        %v5158 = vmul.f32 %v5074, 1.442695
        %v5159 = vpow.pop %v5158
        %v5160 = vmul.f32 %v5075, 1.442695
        %v5161 = vpow.pop %v5160
        %v5162 = vmul.f32 %v5076, 1.442695
        %v5163 = vpow.pop %v5162
        %v5164 = vmul.f32 %v5077, 1.442695
        %v5165 = vpow.pop %v5164
        %v5166 = vmul.f32 %v5078, 1.442695
        %v5167 = vpow.pop %v5166
        %v5168 = vmul.f32 %v5079, 1.442695
        %v5169 = vpow.pop %v5168
        %v5170 = vmul.f32 %v5080, 1.442695
        %v5171 = vpow.pop %v5170
        %v5172 = vmul.f32 %v5081, 1.442695
        %v5173 = vpow.pop %v5172
        %v5174 = vmul.f32 %v5082, 1.442695
        %v5175 = vpow.pop %v5174
        %v5176 = vmul.f32 %v5083, 1.442695
        %v5177 = vpow.pop %v5176
        %v5178 = vmul.f32 %v5084, 1.442695
        %v5179 = vpow.pop %v5178
        %v5180 = vmul.f32 %v5085, 1.442695
        %v5181 = vpow.pop %v5180
        %v5182 = vmul.f32 %v5086, 1.442695
        %v5183 = vpow.pop %v5182
        %v5184 = vmul.f32 %v5087, 1.442695
        %v5185 = vpow.pop %v5184
        %v5186 = vmul.f32 %v5088, 1.442695
        %v5187 = vpow.pop %v5186
        %v5188 = vmul.f32 %v5089, 1.442695
        %v5189 = vpow.pop %v5188
        %v5190 = vmul.f32 %v5090, 1.442695
        %v5191 = vpow.pop %v5190
        %v5192 = vmul.f32 %v5091, 1.442695
        %v5193 = vpow.pop %v5192
        %v5194 = vmul.f32 %v5092, 1.442695
        %v5195 = vpow.pop %v5194
        %v5196 = vmul.f32 %v5093, 1.442695
        %v5197 = vpow.pop %v5196
        %v5198 = vmul.f32 %v5094, 1.442695
        %v5199 = vpow.pop %v5198
        %v5200 = vmul.f32 %v5095, 1.442695
        %v5201 = vpow.pop %v5200
        %v5202 = vmul.f32 %v5096, 1.442695
        %v5203 = vpow.pop %v5202
        %v5204 = vmul.f32 %v5097, 1.442695
        %v5205 = vpow.pop %v5204
        %v5206 = vmul.f32 %v5098, 1.442695
        %v5207 = vpow.pop %v5206
        %v5208 = vmul.f32 %v5099, 1.442695
        %v5209 = vpow.pop %v5208
        %v5210 = vmul.f32 %v5100, 1.442695
        %v5211 = vpow.pop %v5210
        %v5212 = vmul.f32 %v5101, 1.442695
        %v5213 = vpow.pop %v5212
        %v5214 = vmul.f32 %v5102, 1.442695
        %v5215 = vpow.pop %v5214
        %v5216 = vmul.f32 %v5103, 1.442695
        %v5217 = vpow.pop %v5216
        %v5218 = vmul.f32 %v5104, 1.442695
        %v5219 = vpow.pop %v5218
        %v5220 = vmul.f32 %v5105, 1.442695
        %v5221 = vpow.pop %v5220
        %v5222 = vmul.f32 %v5106, 1.442695
        %v5223 = vpow.pop %v5222
        %v5224 = vmul.f32 %v5107, 1.442695
        %v5225 = vpow.pop %v5224
        %v5226 = vmul.f32 %v5108, 1.442695
        %v5227 = vpow.pop %v5226
        %v5228 = vmul.f32 %v5109, 1.442695
        %v5229 = vpow.pop %v5228
        %v5230 = vmul.f32 %v5110, 1.442695
        %v5231 = vpow.pop %v5230
        %v5232 = vmul.f32 %v5111, 1.442695
        %v5233 = vpow.pop %v5232
        %v5234 = vmul.f32 %v5112, 1.442695
        %v5235 = vpow.pop %v5234
        %v5236 = vmul.f32 %v5113, 1.442695
        %v5237 = vpow.pop %v5236
        %v5238 = vmul.f32 %v5114, 1.442695
        %v5239 = vpow.pop %v5238
        %v5240 = vmul.f32 %v5115, 1.442695
        %v5241 = vpow.pop %v5240
        %v5242 = vmul.f32 %v5116, 1.442695
        %v5243 = vpow.pop %v5242
        %v5244 = vmul.f32 %v5117, 1.442695
        %v5245 = vpow.pop %v5244
        %v5246 = vadd.f32 %v5119, %v5121
        %5247 = vadd.xlane.f32.xlu0 %v5246
        %v5248 = vpop.xlane.xlu0 %5247
        %v5249 = vadd.f32 %v5123, %v5125
        %5250 = vadd.xlane.f32.xlu0 %v5249
        %v5251 = vpop.xlane.xlu0 %5250
        %v5252 = vadd.f32 %v5127, %v5129
        %5253 = vadd.xlane.f32.xlu0 %v5252
        %v5254 = vpop.xlane.xlu0 %5253
        %v5255 = vadd.f32 %v5131, %v5133
        %5256 = vadd.xlane.f32.xlu0 %v5255
        %v5257 = vpop.xlane.xlu0 %5256
        %v5258 = vadd.f32 %v5135, %v5137
        %5259 = vadd.xlane.f32.xlu0 %v5258
        %v5260 = vpop.xlane.xlu0 %5259
        %v5261 = vadd.f32 %v5139, %v5141
        %5262 = vadd.xlane.f32.xlu0 %v5261
        %v5263 = vpop.xlane.xlu0 %5262
        %v5264 = vadd.f32 %v5143, %v5145
        %5265 = vadd.xlane.f32.xlu0 %v5264
        %v5266 = vpop.xlane.xlu0 %5265
        %v5267 = vadd.f32 %v5147, %v5149
        %5268 = vadd.xlane.f32.xlu0 %v5267
        %v5269 = vpop.xlane.xlu0 %5268
        %v5270 = vadd.f32 %v5151, %v5153
        %5271 = vadd.xlane.f32.xlu0 %v5270
        %v5272 = vpop.xlane.xlu0 %5271
        %v5273 = vadd.f32 %v5155, %v5157
        %5274 = vadd.xlane.f32.xlu0 %v5273
        %v5275 = vpop.xlane.xlu0 %5274
        %v5276 = vadd.f32 %v5159, %v5161
        %5277 = vadd.xlane.f32.xlu0 %v5276
        %v5278 = vpop.xlane.xlu0 %5277
        %v5279 = vadd.f32 %v5163, %v5165
        %5280 = vadd.xlane.f32.xlu0 %v5279
        %v5281 = vpop.xlane.xlu0 %5280
        %v5282 = vadd.f32 %v5167, %v5169
        %5283 = vadd.xlane.f32.xlu0 %v5282
        %v5284 = vpop.xlane.xlu0 %5283
        %v5285 = vadd.f32 %v5171, %v5173
        %5286 = vadd.xlane.f32.xlu0 %v5285
        %v5287 = vpop.xlane.xlu0 %5286
        %v5288 = vadd.f32 %v5175, %v5177
        %5289 = vadd.xlane.f32.xlu0 %v5288
        %v5290 = vpop.xlane.xlu0 %5289
        %v5291 = vadd.f32 %v5179, %v5181
        %5292 = vadd.xlane.f32.xlu0 %v5291
        %v5293 = vpop.xlane.xlu0 %5292
        %v5294 = vadd.f32 %v5183, %v5185
        %5295 = vadd.xlane.f32.xlu0 %v5294
        %v5296 = vpop.xlane.xlu0 %5295
        %v5297 = vadd.f32 %v5187, %v5189
        %5298 = vadd.xlane.f32.xlu0 %v5297
        %v5299 = vpop.xlane.xlu0 %5298
        %v5300 = vadd.f32 %v5191, %v5193
        %5301 = vadd.xlane.f32.xlu0 %v5300
        %v5302 = vpop.xlane.xlu0 %5301
        %v5303 = vadd.f32 %v5195, %v5197
        %5304 = vadd.xlane.f32.xlu0 %v5303
        %v5305 = vpop.xlane.xlu0 %5304
        %v5306 = vadd.f32 %v5199, %v5201
        %5307 = vadd.xlane.f32.xlu0 %v5306
        %v5308 = vpop.xlane.xlu0 %5307
        %v5309 = vadd.f32 %v5203, %v5205
        %5310 = vadd.xlane.f32.xlu0 %v5309
        %v5311 = vpop.xlane.xlu0 %5310
        %v5312 = vadd.f32 %v5207, %v5209
        %5313 = vadd.xlane.f32.xlu0 %v5312
        %v5314 = vpop.xlane.xlu0 %5313
        %v5315 = vadd.f32 %v5211, %v5213
        %5316 = vadd.xlane.f32.xlu0 %v5315
        %v5317 = vpop.xlane.xlu0 %5316
        %v5318 = vadd.f32 %v5215, %v5217
        %5319 = vadd.xlane.f32.xlu0 %v5318
        %v5320 = vpop.xlane.xlu0 %5319
        %v5321 = vadd.f32 %v5219, %v5221
        %5322 = vadd.xlane.f32.xlu0 %v5321
        %v5323 = vpop.xlane.xlu0 %5322
        %v5324 = vadd.f32 %v5223, %v5225
        %5325 = vadd.xlane.f32.xlu0 %v5324
        %v5326 = vpop.xlane.xlu0 %5325
        %v5327 = vadd.f32 %v5227, %v5229
        %5328 = vadd.xlane.f32.xlu0 %v5327
        %v5329 = vpop.xlane.xlu0 %5328
        %v5330 = vadd.f32 %v5231, %v5233
        %5331 = vadd.xlane.f32.xlu0 %v5330
        %v5332 = vpop.xlane.xlu0 %5331
        %v5333 = vadd.f32 %v5235, %v5237
        %5334 = vadd.xlane.f32.xlu0 %v5333
        %v5335 = vpop.xlane.xlu0 %5334
        %v5336 = vadd.f32 %v5239, %v5241
        %5337 = vadd.xlane.f32.xlu0 %v5336
        %v5338 = vpop.xlane.xlu0 %5337
        %v5339 = vadd.f32 %v5243, %v5245
        %5340 = vadd.xlane.f32.xlu0 %v5339
        %v5341 = vpop.xlane.xlu0 %5340
        %v5342 = vpack.c.bf16 %v5123, %v5119
        %v5343 = vpack.c.bf16 %v5125, %v5121
        %v5344 = vpack.c.bf16 %v5131, %v5127
        %v5345 = vpack.c.bf16 %v5133, %v5129
        %v5346 = vpack.c.bf16 %v5139, %v5135
        %v5347 = vpack.c.bf16 %v5141, %v5137
        %v5348 = vpack.c.bf16 %v5147, %v5143
        %v5349 = vpack.c.bf16 %v5149, %v5145
        %v5350 = vpack.c.bf16 %v5155, %v5151
        %v5351 = vpack.c.bf16 %v5157, %v5153
        %v5352 = vpack.c.bf16 %v5163, %v5159
        %v5353 = vpack.c.bf16 %v5165, %v5161
        %v5354 = vpack.c.bf16 %v5171, %v5167
        %v5355 = vpack.c.bf16 %v5173, %v5169
        %v5356 = vpack.c.bf16 %v5179, %v5175
        %v5357 = vpack.c.bf16 %v5181, %v5177
        %v5358 = vpack.c.bf16 %v5187, %v5183
        %v5359 = vpack.c.bf16 %v5189, %v5185
        %v5360 = vpack.c.bf16 %v5195, %v5191
        %v5361 = vpack.c.bf16 %v5197, %v5193
        %v5362 = vpack.c.bf16 %v5203, %v5199
        %v5363 = vpack.c.bf16 %v5205, %v5201
        %v5364 = vpack.c.bf16 %v5211, %v5207
        %v5365 = vpack.c.bf16 %v5213, %v5209
        %v5366 = vpack.c.bf16 %v5219, %v5215
        %v5367 = vpack.c.bf16 %v5221, %v5217
        %v5368 = vpack.c.bf16 %v5227, %v5223
        %v5369 = vpack.c.bf16 %v5229, %v5225
        %v5370 = vpack.c.bf16 %v5235, %v5231
        %v5371 = vpack.c.bf16 %v5237, %v5233
        %v5372 = vpack.c.bf16 %v5243, %v5239
        %v5373 = vpack.c.bf16 %v5245, %v5241
        %5374 = vmatprep.subr.bf16.mxu0 0
        %5375 = vmatpush1.bf16.msra.mxu0 %v4552
        %5376 = vmatprep.subr.bf16.mxu0 0
        %5377 = vmatpush1.bf16.msra.mxu0 %v4553
        %5378 = vmatprep.subr.bf16.mxu0 0
        %5379 = vmatpush1.bf16.msra.mxu0 %v4554
        %5380 = vmatprep.subr.bf16.mxu0 0
        %5381 = vmatpush1.bf16.msra.mxu0 %v4555
        %5382 = vmatprep.subr.bf16.mxu0 0
        %5383 = vmatpush1.bf16.msra.mxu0 %v4556
        %5384 = vmatprep.subr.bf16.mxu0 0
        %5385 = vmatpush1.bf16.msra.mxu0 %v4557
        %5386 = vmatprep.subr.bf16.mxu0 0
        %5387 = vmatpush1.bf16.msra.mxu0 %v4558
        %5388 = vmatprep.subr.bf16.mxu0 0
        %5389 = vmatpush1.bf16.msra.mxu0 %v4559
        %5390 = vmatprep.subr.bf16.mxu0 0
        %5391 = vmatpush1.bf16.msra.mxu0 %v4560
        %5392 = vmatprep.subr.bf16.mxu0 0
        %5393 = vmatpush1.bf16.msra.mxu0 %v4561
        %5394 = vmatprep.subr.bf16.mxu0 0
        %5395 = vmatpush1.bf16.msra.mxu0 %v4562
        %5396 = vmatprep.subr.bf16.mxu0 0
        %5397 = vmatpush1.bf16.msra.mxu0 %v4563
        %5398 = vmatprep.subr.bf16.mxu0 0
        %5399 = vmatpush1.bf16.msra.mxu0 %v4564
        %5400 = vmatprep.subr.bf16.mxu0 0
        %5401 = vmatpush1.bf16.msra.mxu0 %v4565
        %5402 = vmatprep.subr.bf16.mxu0 0
        %5403 = vmatpush1.bf16.msra.mxu0 %v4566
        %5404 = vmatprep.subr.bf16.mxu0 0
        %5405 = vmatpush1.bf16.msra.mxu0 %v4567
        %5406 = vmatprep.mubr.bf16.mxu0 %v5343
        %5407 = vmatmul.mubr.bf16.gmra.mrb[0].mxu0 %v5342
        %v5408 = vpop.f32.mrb[0].mxu0
        %v5409 = vadd.f32 0.0, %v5408
        %v5410 = vpop.f32.mrb[0].mxu0
        %v5411 = vpop.f32.mrb[0].mxu0
        %v5412 = vadd.f32 0.0, %v5411
        %v5413 = vpop.f32.mrb[0].mxu0
        %5414 = vmatprep.mubr.bf16.mxu0 %v5345
        %5415 = vmatmul.mubr.bf16.gmra.mrb[0].mxu0 %v5344
        %v5416 = vpop.f32.mrb[0].mxu0
        %v5417 = vadd.f32 0.0, %v5416
        %v5418 = vpop.f32.mrb[0].mxu0
        %v5419 = vpop.f32.mrb[0].mxu0
        %v5420 = vadd.f32 0.0, %v5419
        %v5421 = vpop.f32.mrb[0].mxu0
        %5422 = vmatprep.mubr.bf16.mxu0 %v5347
        %5423 = vmatmul.mubr.bf16.gmra.mrb[0].mxu0 %v5346
        %v5424 = vpop.f32.mrb[0].mxu0
        %v5425 = vadd.f32 0.0, %v5424
        %v5426 = vpop.f32.mrb[0].mxu0
        %v5427 = vpop.f32.mrb[0].mxu0
        %v5428 = vadd.f32 0.0, %v5427
        %v5429 = vpop.f32.mrb[0].mxu0
        %5430 = vmatprep.mubr.bf16.mxu0 %v5349
        %5431 = vmatmul.mubr.bf16.gmra.mrb[0].mxu0 %v5348
        %v5432 = vpop.f32.mrb[0].mxu0
        %v5433 = vadd.f32 0.0, %v5432
        %v5434 = vpop.f32.mrb[0].mxu0
        %v5435 = vpop.f32.mrb[0].mxu0
        %v5436 = vadd.f32 0.0, %v5435
        %v5437 = vpop.f32.mrb[0].mxu0
        %5438 = vmatprep.mubr.bf16.mxu0 %v5351
        %5439 = vmatmul.mubr.bf16.gmra.mrb[0].mxu0 %v5350
        %v5440 = vpop.f32.mrb[0].mxu0
        %v5441 = vadd.f32 0.0, %v5440
        %v5442 = vpop.f32.mrb[0].mxu0
        %v5443 = vpop.f32.mrb[0].mxu0
        %v5444 = vadd.f32 0.0, %v5443
        %v5445 = vpop.f32.mrb[0].mxu0
        %5446 = vmatprep.mubr.bf16.mxu0 %v5353
        %5447 = vmatmul.mubr.bf16.gmra.mrb[0].mxu0 %v5352
        %v5448 = vpop.f32.mrb[0].mxu0
        %v5449 = vadd.f32 0.0, %v5448
        %v5450 = vpop.f32.mrb[0].mxu0
        %v5451 = vpop.f32.mrb[0].mxu0
        %v5452 = vadd.f32 0.0, %v5451
        %v5453 = vpop.f32.mrb[0].mxu0
        %5454 = vmatprep.mubr.bf16.mxu0 %v5355
        %5455 = vmatmul.mubr.bf16.gmra.mrb[0].mxu0 %v5354
        %v5456 = vpop.f32.mrb[0].mxu0
        %v5457 = vadd.f32 0.0, %v5456
        %v5458 = vpop.f32.mrb[0].mxu0
        %v5459 = vpop.f32.mrb[0].mxu0
        %v5460 = vadd.f32 0.0, %v5459
        %v5461 = vpop.f32.mrb[0].mxu0
        %5462 = vmatprep.mubr.bf16.mxu0 %v5357
        %5463 = vmatmul.mubr.bf16.gmra.mrb[0].mxu0 %v5356
        %v5464 = vpop.f32.mrb[0].mxu0
        %v5465 = vadd.f32 0.0, %v5464
        %v5466 = vpop.f32.mrb[0].mxu0
        %v5467 = vpop.f32.mrb[0].mxu0
        %v5468 = vadd.f32 0.0, %v5467
        %v5469 = vpop.f32.mrb[0].mxu0
        %5470 = vmatprep.mubr.bf16.mxu0 %v5359
        %5471 = vmatmul.mubr.bf16.gmra.mrb[0].mxu0 %v5358
        %v5472 = vpop.f32.mrb[0].mxu0
        %v5473 = vadd.f32 0.0, %v5472
        %v5474 = vpop.f32.mrb[0].mxu0
        %v5475 = vpop.f32.mrb[0].mxu0
        %v5476 = vadd.f32 0.0, %v5475
        %v5477 = vpop.f32.mrb[0].mxu0
        %5478 = vmatprep.mubr.bf16.mxu0 %v5361
        %5479 = vmatmul.mubr.bf16.gmra.mrb[0].mxu0 %v5360
        %v5480 = vpop.f32.mrb[0].mxu0
        %v5481 = vadd.f32 0.0, %v5480
        %v5482 = vpop.f32.mrb[0].mxu0
        %v5483 = vpop.f32.mrb[0].mxu0
        %v5484 = vadd.f32 0.0, %v5483
        %v5485 = vpop.f32.mrb[0].mxu0
        %5486 = vmatprep.mubr.bf16.mxu0 %v5363
        %5487 = vmatmul.mubr.bf16.gmra.mrb[0].mxu0 %v5362
        %v5488 = vpop.f32.mrb[0].mxu0
        %v5489 = vadd.f32 0.0, %v5488
        %v5490 = vpop.f32.mrb[0].mxu0
        %v5491 = vpop.f32.mrb[0].mxu0
        %v5492 = vadd.f32 0.0, %v5491
        %v5493 = vpop.f32.mrb[0].mxu0
        %5494 = vmatprep.mubr.bf16.mxu0 %v5365
        %5495 = vmatmul.mubr.bf16.gmra.mrb[0].mxu0 %v5364
        %v5496 = vpop.f32.mrb[0].mxu0
        %v5497 = vadd.f32 0.0, %v5496
        %v5498 = vpop.f32.mrb[0].mxu0
        %v5499 = vpop.f32.mrb[0].mxu0
        %v5500 = vadd.f32 0.0, %v5499
        %v5501 = vpop.f32.mrb[0].mxu0
        %5502 = vmatprep.mubr.bf16.mxu0 %v5367
        %5503 = vmatmul.mubr.bf16.gmra.mrb[0].mxu0 %v5366
        %v5504 = vpop.f32.mrb[0].mxu0
        %v5505 = vadd.f32 0.0, %v5504
        %v5506 = vpop.f32.mrb[0].mxu0
        %v5507 = vpop.f32.mrb[0].mxu0
        %v5508 = vadd.f32 0.0, %v5507
        %v5509 = vpop.f32.mrb[0].mxu0
        %5510 = vmatprep.mubr.bf16.mxu0 %v5369
        %5511 = vmatmul.mubr.bf16.gmra.mrb[0].mxu0 %v5368
        %v5512 = vpop.f32.mrb[0].mxu0
        %v5513 = vadd.f32 0.0, %v5512
        %v5514 = vpop.f32.mrb[0].mxu0
        %v5515 = vpop.f32.mrb[0].mxu0
        %v5516 = vadd.f32 0.0, %v5515
        %v5517 = vpop.f32.mrb[0].mxu0
        %5518 = vmatprep.mubr.bf16.mxu0 %v5371
        %5519 = vmatmul.mubr.bf16.gmra.mrb[0].mxu0 %v5370
        %v5520 = vpop.f32.mrb[0].mxu0
        %v5521 = vadd.f32 0.0, %v5520
        %v5522 = vpop.f32.mrb[0].mxu0
        %v5523 = vpop.f32.mrb[0].mxu0
        %v5524 = vadd.f32 0.0, %v5523
        %v5525 = vpop.f32.mrb[0].mxu0
        %5526 = vmatprep.mubr.bf16.mxu0 %v5373
        %5527 = vmatmul.mubr.bf16.gmra.mrb[0].mxu0 %v5372
        %v5528 = vpop.f32.mrb[0].mxu0
        %v5529 = vadd.f32 0.0, %v5528
        %v5530 = vpop.f32.mrb[0].mxu0
        %v5531 = vpop.f32.mrb[0].mxu0
        %v5532 = vadd.f32 0.0, %v5531
        %v5533 = vpop.f32.mrb[0].mxu0
        %5534 = vdwg.mxu0
        // While loop
        $region80: #{tpu_custom_call.1} parent=47 // loop_pre_header
          _
        $region81: #{tpu_custom_call.1} parent=47 // loop_header
          %s5536 = sphi 0, %s5538
          %p5537 = scmp.ge.s32.totalorder %s5536, %s34
          %v5541 = vphi %v4960, %v6014
          %v5542 = vphi %v4963, %v6015
          %v5543 = vphi %v4966, %v6016
          %v5544 = vphi %v4969, %v6017
          %v5545 = vphi %v4972, %v6018
          %v5546 = vphi %v4975, %v6019
          %v5547 = vphi %v4978, %v6020
          %v5548 = vphi %v4981, %v6021
          %v5549 = vphi %v4984, %v6022
          %v5550 = vphi %v4987, %v6023
          %v5551 = vphi %v4990, %v6024
          %v5552 = vphi %v4993, %v6025
          %v5553 = vphi %v4996, %v6026
          %v5554 = vphi %v4999, %v6027
          %v5555 = vphi %v5002, %v6028
          %v5556 = vphi %v5005, %v6029
          %v5557 = vphi %v5008, %v6030
          %v5558 = vphi %v5011, %v6031
          %v5559 = vphi %v5014, %v6032
          %v5560 = vphi %v5017, %v6033
          %v5561 = vphi %v5020, %v6034
          %v5562 = vphi %v5023, %v6035
          %v5563 = vphi %v5026, %v6036
          %v5564 = vphi %v5029, %v6037
          %v5565 = vphi %v5032, %v6038
          %v5566 = vphi %v5035, %v6039
          %v5567 = vphi %v5038, %v6040
          %v5568 = vphi %v5041, %v6041
          %v5569 = vphi %v5044, %v6042
          %v5570 = vphi %v5047, %v6043
          %v5571 = vphi %v5050, %v6044
          %v5572 = vphi %v5053, %v6045
          %v5573 = vphi %v5248, %v6462
          %v5574 = vphi %v5251, %v6463
          %v5575 = vphi %v5254, %v6464
          %v5576 = vphi %v5257, %v6465
          %v5577 = vphi %v5260, %v6466
          %v5578 = vphi %v5263, %v6467
          %v5579 = vphi %v5266, %v6468
          %v5580 = vphi %v5269, %v6469
          %v5581 = vphi %v5272, %v6470
          %v5582 = vphi %v5275, %v6471
          %v5583 = vphi %v5278, %v6472
          %v5584 = vphi %v5281, %v6473
          %v5585 = vphi %v5284, %v6474
          %v5586 = vphi %v5287, %v6475
          %v5587 = vphi %v5290, %v6476
          %v5588 = vphi %v5293, %v6477
          %v5589 = vphi %v5296, %v6478
          %v5590 = vphi %v5299, %v6479
          %v5591 = vphi %v5302, %v6480
          %v5592 = vphi %v5305, %v6481
          %v5593 = vphi %v5308, %v6482
          %v5594 = vphi %v5311, %v6483
          %v5595 = vphi %v5314, %v6484
          %v5596 = vphi %v5317, %v6485
          %v5597 = vphi %v5320, %v6486
          %v5598 = vphi %v5323, %v6487
          %v5599 = vphi %v5326, %v6488
          %v5600 = vphi %v5329, %v6489
          %v5601 = vphi %v5332, %v6490
          %v5602 = vphi %v5335, %v6491
          %v5603 = vphi %v5338, %v6492
          %v5604 = vphi %v5341, %v6493
          %v5605 = vphi %v5409, %v6719
          %v5606 = vphi %v5412, %v6720
          %v5607 = vphi %v5417, %v6721
          %v5608 = vphi %v5420, %v6722
          %v5609 = vphi %v5425, %v6723
          %v5610 = vphi %v5428, %v6724
          %v5611 = vphi %v5433, %v6725
          %v5612 = vphi %v5436, %v6726
          %v5613 = vphi %v5441, %v6727
          %v5614 = vphi %v5444, %v6728
          %v5615 = vphi %v5449, %v6729
          %v5616 = vphi %v5452, %v6730
          %v5617 = vphi %v5457, %v6731
          %v5618 = vphi %v5460, %v6732
          %v5619 = vphi %v5465, %v6733
          %v5620 = vphi %v5468, %v6734
          %v5621 = vphi %v5473, %v6735
          %v5622 = vphi %v5476, %v6736
          %v5623 = vphi %v5481, %v6737
          %v5624 = vphi %v5484, %v6738
          %v5625 = vphi %v5489, %v6739
          %v5626 = vphi %v5492, %v6740
          %v5627 = vphi %v5497, %v6741
          %v5628 = vphi %v5500, %v6742
          %v5629 = vphi %v5505, %v6743
          %v5630 = vphi %v5508, %v6744
          %v5631 = vphi %v5513, %v6745
          %v5632 = vphi %v5516, %v6746
          %v5633 = vphi %v5521, %v6747
          %v5634 = vphi %v5524, %v6748
          %v5635 = vphi %v5529, %v6749
          %v5636 = vphi %v5532, %v6750
        $region82: #{tpu_custom_call.1} parent=47 // loop_header_branch
          %5540 = sbr.rel (%p5537) target = $region86
        $region83: #{tpu_custom_call.1} parent=47 // loop_body
          %s5637 = smul.u32 %s5536, 256
          %s5638 = sshra.s32 %s5637, 4
          %s5639 = sand.u32 %s5637, 15
          %s5640 = sadd.s32 %s5638, 32
          %s5641 = smul.addr %s5640, 8
          %s5642 = scalar_lea.vmem [#allocation2], %s5641
          %v5643 = vld [vmem:[%s5642] sm:$0xff]
          %v5644 = vld [vmem:[%s5642 + $0x8] sm:$0xff]
          %v5645 = vld [vmem:[%s5642 + $0x10] sm:$0xff]
          %v5646 = vld [vmem:[%s5642 + $0x18] sm:$0xff]
          %v5647 = vld [vmem:[%s5642 + $0x20] sm:$0xff]
          %v5648 = vld [vmem:[%s5642 + $0x28] sm:$0xff]
          %v5649 = vld [vmem:[%s5642 + $0x30] sm:$0xff]
          %v5650 = vld [vmem:[%s5642 + $0x38] sm:$0xff]
          %v5651 = vld [vmem:[%s5642 + $0x40] sm:$0xff]
          %v5652 = vld [vmem:[%s5642 + $0x48] sm:$0xff]
          %v5653 = vld [vmem:[%s5642 + $0x50] sm:$0xff]
          %v5654 = vld [vmem:[%s5642 + $0x58] sm:$0xff]
          %v5655 = vld [vmem:[%s5642 + $0x60] sm:$0xff]
          %v5656 = vld [vmem:[%s5642 + $0x68] sm:$0xff]
          %v5657 = vld [vmem:[%s5642 + $0x70] sm:$0xff]
          %v5658 = vld [vmem:[%s5642 + $0x78] sm:$0xff]
          %s5659 = smul.addr %s5640, 8
          %s5660 = scalar_lea.vmem [#allocation3], %s5659
          %v5661 = vld [vmem:[%s5660] sm:$0xff]
          %v5662 = vld [vmem:[%s5660 + $0x8] sm:$0xff]
          %v5663 = vld [vmem:[%s5660 + $0x10] sm:$0xff]
          %v5664 = vld [vmem:[%s5660 + $0x18] sm:$0xff]
          %v5665 = vld [vmem:[%s5660 + $0x20] sm:$0xff]
          %v5666 = vld [vmem:[%s5660 + $0x28] sm:$0xff]
          %v5667 = vld [vmem:[%s5660 + $0x30] sm:$0xff]
          %v5668 = vld [vmem:[%s5660 + $0x38] sm:$0xff]
          %v5669 = vld [vmem:[%s5660 + $0x40] sm:$0xff]
          %v5670 = vld [vmem:[%s5660 + $0x48] sm:$0xff]
          %v5671 = vld [vmem:[%s5660 + $0x50] sm:$0xff]
          %v5672 = vld [vmem:[%s5660 + $0x58] sm:$0xff]
          %v5673 = vld [vmem:[%s5660 + $0x60] sm:$0xff]
          %v5674 = vld [vmem:[%s5660 + $0x68] sm:$0xff]
          %v5675 = vld [vmem:[%s5660 + $0x70] sm:$0xff]
          %v5676 = vld [vmem:[%s5660 + $0x78] sm:$0xff]
          %v5678 = vsel %vm1477, %v5643, 0
          %v5681 = vsel %vm1477, %v5644, 0
          %v5684 = vsel %vm1477, %v5645, 0
          %v5687 = vsel %vm1477, %v5646, 0
          %v5690 = vsel %vm1477, %v5647, 0
          %v5693 = vsel %vm1477, %v5648, 0
          %v5696 = vsel %vm1477, %v5649, 0
          %v5699 = vsel %vm1477, %v5650, 0
          %v5702 = vsel %vm1477, %v5651, 0
          %v5705 = vsel %vm1477, %v5652, 0
          %v5708 = vsel %vm1477, %v5653, 0
          %v5711 = vsel %vm1477, %v5654, 0
          %v5714 = vsel %vm1477, %v5655, 0
          %v5717 = vsel %vm1477, %v5656, 0
          %v5720 = vsel %vm1477, %v5657, 0
          %v5723 = vsel %vm1477, %v5658, 0
          %5725 = vmatprep.subr.bf16.mxu0 0
          %5726 = vmatpush1.bf16.xpose.msra.mxu0 %v5678
          %5727 = vmatprep.subr.bf16.mxu0 0
          %5728 = vmatpush1.bf16.xpose.msra.mxu0 %v5681
          %5729 = vmatprep.subr.bf16.mxu0 0
          %5730 = vmatpush1.bf16.xpose.msra.mxu0 %v5684
          %5731 = vmatprep.subr.bf16.mxu0 0
          %5732 = vmatpush1.bf16.xpose.msra.mxu0 %v5687
          %5733 = vmatprep.subr.bf16.mxu0 0
          %5734 = vmatpush1.bf16.xpose.msra.mxu0 %v5690
          %5735 = vmatprep.subr.bf16.mxu0 0
          %5736 = vmatpush1.bf16.xpose.msra.mxu0 %v5693
          %5737 = vmatprep.subr.bf16.mxu0 0
          %5738 = vmatpush1.bf16.xpose.msra.mxu0 %v5696
          %5739 = vmatprep.subr.bf16.mxu0 0
          %5740 = vmatpush1.bf16.xpose.msra.mxu0 %v5699
          %5741 = vmatprep.subr.bf16.mxu0 0
          %5742 = vmatpush1.bf16.xpose.msra.mxu0 %v5702
          %5743 = vmatprep.subr.bf16.mxu0 0
          %5744 = vmatpush1.bf16.xpose.msra.mxu0 %v5705
          %5745 = vmatprep.subr.bf16.mxu0 0
          %5746 = vmatpush1.bf16.xpose.msra.mxu0 %v5708
          %5747 = vmatprep.subr.bf16.mxu0 0
          %5748 = vmatpush1.bf16.xpose.msra.mxu0 %v5711
          %5749 = vmatprep.subr.bf16.mxu0 0
          %5750 = vmatpush1.bf16.xpose.msra.mxu0 %v5714
          %5751 = vmatprep.subr.bf16.mxu0 0
          %5752 = vmatpush1.bf16.xpose.msra.mxu0 %v5717
          %5753 = vmatprep.subr.bf16.mxu0 0
          %5754 = vmatpush1.bf16.xpose.msra.mxu0 %v5720
          %5755 = vmatprep.subr.bf16.mxu0 0
          %5756 = vmatpush1.bf16.xpose.msra.mxu0 %v5723
          %5757 = vmatprep.mubr.bf16.mxu0 0
          %5758 = vmatmul.mubr.bf16.gmra.mrb[0].mxu0 %v4606
          %v5759 = vpop.f32.mrb[0].mxu0
          %v5760 = vadd.f32 0.0, %v5759
          %v5761 = vpop.f32.mrb[0].mxu0
          %v5762 = vadd.f32 0.0, %v5761
          %v5763 = vpop.f32.mrb[0].mxu0
          %v5764 = vadd.f32 0.0, %v5763
          %v5765 = vpop.f32.mrb[0].mxu0
          %v5766 = vadd.f32 0.0, %v5765
          %5767 = vmatprep.mubr.bf16.mxu0 0
          %5768 = vmatmul.mubr.bf16.gmra.mrb[0].mxu0 %v4609
          %v5769 = vpop.f32.mrb[0].mxu0
          %v5770 = vadd.f32 0.0, %v5769
          %v5771 = vpop.f32.mrb[0].mxu0
          %v5772 = vadd.f32 0.0, %v5771
          %v5773 = vpop.f32.mrb[0].mxu0
          %v5774 = vadd.f32 0.0, %v5773
          %v5775 = vpop.f32.mrb[0].mxu0
          %v5776 = vadd.f32 0.0, %v5775
          %5777 = vmatprep.mubr.bf16.mxu0 0
          %5778 = vmatmul.mubr.bf16.gmra.mrb[0].mxu0 %v4612
          %v5779 = vpop.f32.mrb[0].mxu0
          %v5780 = vadd.f32 0.0, %v5779
          %v5781 = vpop.f32.mrb[0].mxu0
          %v5782 = vadd.f32 0.0, %v5781
          %v5783 = vpop.f32.mrb[0].mxu0
          %v5784 = vadd.f32 0.0, %v5783
          %v5785 = vpop.f32.mrb[0].mxu0
          %v5786 = vadd.f32 0.0, %v5785
          %5787 = vmatprep.mubr.bf16.mxu0 0
          %5788 = vmatmul.mubr.bf16.gmra.mrb[0].mxu0 %v4615
          %v5789 = vpop.f32.mrb[0].mxu0
          %v5790 = vadd.f32 0.0, %v5789
          %v5791 = vpop.f32.mrb[0].mxu0
          %v5792 = vadd.f32 0.0, %v5791
          %v5793 = vpop.f32.mrb[0].mxu0
          %v5794 = vadd.f32 0.0, %v5793
          %v5795 = vpop.f32.mrb[0].mxu0
          %v5796 = vadd.f32 0.0, %v5795
          %5797 = vmatprep.mubr.bf16.mxu0 0
          %5798 = vmatmul.mubr.bf16.gmra.mrb[0].mxu0 %v4618
          %v5799 = vpop.f32.mrb[0].mxu0
          %v5800 = vadd.f32 0.0, %v5799
          %v5801 = vpop.f32.mrb[0].mxu0
          %v5802 = vadd.f32 0.0, %v5801
          %v5803 = vpop.f32.mrb[0].mxu0
          %v5804 = vadd.f32 0.0, %v5803
          %v5805 = vpop.f32.mrb[0].mxu0
          %v5806 = vadd.f32 0.0, %v5805
          %5807 = vmatprep.mubr.bf16.mxu0 0
          %5808 = vmatmul.mubr.bf16.gmra.mrb[0].mxu0 %v4621
          %v5809 = vpop.f32.mrb[0].mxu0
          %v5810 = vadd.f32 0.0, %v5809
          %v5811 = vpop.f32.mrb[0].mxu0
          %v5812 = vadd.f32 0.0, %v5811
          %v5813 = vpop.f32.mrb[0].mxu0
          %v5814 = vadd.f32 0.0, %v5813
          %v5815 = vpop.f32.mrb[0].mxu0
          %v5816 = vadd.f32 0.0, %v5815
          %5817 = vmatprep.mubr.bf16.mxu0 0
          %5818 = vmatmul.mubr.bf16.gmra.mrb[0].mxu0 %v4624
          %v5819 = vpop.f32.mrb[0].mxu0
          %v5820 = vadd.f32 0.0, %v5819
          %v5821 = vpop.f32.mrb[0].mxu0
          %v5822 = vadd.f32 0.0, %v5821
          %v5823 = vpop.f32.mrb[0].mxu0
          %v5824 = vadd.f32 0.0, %v5823
          %v5825 = vpop.f32.mrb[0].mxu0
          %v5826 = vadd.f32 0.0, %v5825
          %5827 = vmatprep.mubr.bf16.mxu0 0
          %5828 = vmatmul.mubr.bf16.gmra.mrb[0].mxu0 %v4627
          %v5829 = vpop.f32.mrb[0].mxu0
          %v5830 = vadd.f32 0.0, %v5829
          %v5831 = vpop.f32.mrb[0].mxu0
          %v5832 = vadd.f32 0.0, %v5831
          %v5833 = vpop.f32.mrb[0].mxu0
          %v5834 = vadd.f32 0.0, %v5833
          %v5835 = vpop.f32.mrb[0].mxu0
          %v5836 = vadd.f32 0.0, %v5835
          %5837 = vmatprep.mubr.bf16.mxu0 0
          %5838 = vmatmul.mubr.bf16.gmra.mrb[0].mxu0 %v4630
          %v5839 = vpop.f32.mrb[0].mxu0
          %v5840 = vadd.f32 0.0, %v5839
          %v5841 = vpop.f32.mrb[0].mxu0
          %v5842 = vadd.f32 0.0, %v5841
          %v5843 = vpop.f32.mrb[0].mxu0
          %v5844 = vadd.f32 0.0, %v5843
          %v5845 = vpop.f32.mrb[0].mxu0
          %v5846 = vadd.f32 0.0, %v5845
          %5847 = vmatprep.mubr.bf16.mxu0 0
          %5848 = vmatmul.mubr.bf16.gmra.mrb[0].mxu0 %v4633
          %v5849 = vpop.f32.mrb[0].mxu0
          %v5850 = vadd.f32 0.0, %v5849
          %v5851 = vpop.f32.mrb[0].mxu0
          %v5852 = vadd.f32 0.0, %v5851
          %v5853 = vpop.f32.mrb[0].mxu0
          %v5854 = vadd.f32 0.0, %v5853
          %v5855 = vpop.f32.mrb[0].mxu0
          %v5856 = vadd.f32 0.0, %v5855
          %5857 = vmatprep.mubr.bf16.mxu0 0
          %5858 = vmatmul.mubr.bf16.gmra.mrb[0].mxu0 %v4636
          %v5859 = vpop.f32.mrb[0].mxu0
          %v5860 = vadd.f32 0.0, %v5859
          %v5861 = vpop.f32.mrb[0].mxu0
          %v5862 = vadd.f32 0.0, %v5861
          %v5863 = vpop.f32.mrb[0].mxu0
          %v5864 = vadd.f32 0.0, %v5863
          %v5865 = vpop.f32.mrb[0].mxu0
          %v5866 = vadd.f32 0.0, %v5865
          %5867 = vmatprep.mubr.bf16.mxu0 0
          %5868 = vmatmul.mubr.bf16.gmra.mrb[0].mxu0 %v4639
          %v5869 = vpop.f32.mrb[0].mxu0
          %v5870 = vadd.f32 0.0, %v5869
          %v5871 = vpop.f32.mrb[0].mxu0
          %v5872 = vadd.f32 0.0, %v5871
          %v5873 = vpop.f32.mrb[0].mxu0
          %v5874 = vadd.f32 0.0, %v5873
          %v5875 = vpop.f32.mrb[0].mxu0
          %v5876 = vadd.f32 0.0, %v5875
          %5877 = vmatprep.mubr.bf16.mxu0 0
          %5878 = vmatmul.mubr.bf16.gmra.mrb[0].mxu0 %v4642
          %v5879 = vpop.f32.mrb[0].mxu0
          %v5880 = vadd.f32 0.0, %v5879
          %v5881 = vpop.f32.mrb[0].mxu0
          %v5882 = vadd.f32 0.0, %v5881
          %v5883 = vpop.f32.mrb[0].mxu0
          %v5884 = vadd.f32 0.0, %v5883
          %v5885 = vpop.f32.mrb[0].mxu0
          %v5886 = vadd.f32 0.0, %v5885
          %5887 = vmatprep.mubr.bf16.mxu0 0
          %5888 = vmatmul.mubr.bf16.gmra.mrb[0].mxu0 %v4645
          %v5889 = vpop.f32.mrb[0].mxu0
          %v5890 = vadd.f32 0.0, %v5889
          %v5891 = vpop.f32.mrb[0].mxu0
          %v5892 = vadd.f32 0.0, %v5891
          %v5893 = vpop.f32.mrb[0].mxu0
          %v5894 = vadd.f32 0.0, %v5893
          %v5895 = vpop.f32.mrb[0].mxu0
          %v5896 = vadd.f32 0.0, %v5895
          %5897 = vmatprep.mubr.bf16.mxu0 0
          %5898 = vmatmul.mubr.bf16.gmra.mrb[0].mxu0 %v4648
          %v5899 = vpop.f32.mrb[0].mxu0
          %v5900 = vadd.f32 0.0, %v5899
          %v5901 = vpop.f32.mrb[0].mxu0
          %v5902 = vadd.f32 0.0, %v5901
          %v5903 = vpop.f32.mrb[0].mxu0
          %v5904 = vadd.f32 0.0, %v5903
          %v5905 = vpop.f32.mrb[0].mxu0
          %v5906 = vadd.f32 0.0, %v5905
          %5907 = vmatprep.mubr.bf16.mxu0 0
          %5908 = vmatmul.mubr.bf16.gmra.mrb[0].mxu0 %v4651
          %v5909 = vpop.f32.mrb[0].mxu0
          %v5910 = vadd.f32 0.0, %v5909
          %v5911 = vpop.f32.mrb[0].mxu0
          %v5912 = vadd.f32 0.0, %v5911
          %v5913 = vpop.f32.mrb[0].mxu0
          %v5914 = vadd.f32 0.0, %v5913
          %v5915 = vpop.f32.mrb[0].mxu0
          %v5916 = vadd.f32 0.0, %v5915
          %5917 = vdwg.mxu0
          %v5918 = vmax.f32 %v5760, %v5762
          %5919 = vmax.xlane.f32.xlu0 %v5918
          %v5920 = vpop.xlane.xlu0 %5919
          %v5921 = vmax.f32 %v5764, %v5766
          %5922 = vmax.xlane.f32.xlu0 %v5921
          %v5923 = vpop.xlane.xlu0 %5922
          %v5924 = vmax.f32 %v5770, %v5772
          %5925 = vmax.xlane.f32.xlu0 %v5924
          %v5926 = vpop.xlane.xlu0 %5925
          %v5927 = vmax.f32 %v5774, %v5776
          %5928 = vmax.xlane.f32.xlu0 %v5927
          %v5929 = vpop.xlane.xlu0 %5928
          %v5930 = vmax.f32 %v5780, %v5782
          %5931 = vmax.xlane.f32.xlu0 %v5930
          %v5932 = vpop.xlane.xlu0 %5931
          %v5933 = vmax.f32 %v5784, %v5786
          %5934 = vmax.xlane.f32.xlu0 %v5933
          %v5935 = vpop.xlane.xlu0 %5934
          %v5936 = vmax.f32 %v5790, %v5792
          %5937 = vmax.xlane.f32.xlu0 %v5936
          %v5938 = vpop.xlane.xlu0 %5937
          %v5939 = vmax.f32 %v5794, %v5796
          %5940 = vmax.xlane.f32.xlu0 %v5939
          %v5941 = vpop.xlane.xlu0 %5940
          %v5942 = vmax.f32 %v5800, %v5802
          %5943 = vmax.xlane.f32.xlu0 %v5942
          %v5944 = vpop.xlane.xlu0 %5943
          %v5945 = vmax.f32 %v5804, %v5806
          %5946 = vmax.xlane.f32.xlu0 %v5945
          %v5947 = vpop.xlane.xlu0 %5946
          %v5948 = vmax.f32 %v5810, %v5812
          %5949 = vmax.xlane.f32.xlu0 %v5948
          %v5950 = vpop.xlane.xlu0 %5949
          %v5951 = vmax.f32 %v5814, %v5816
          %5952 = vmax.xlane.f32.xlu0 %v5951
          %v5953 = vpop.xlane.xlu0 %5952
          %v5954 = vmax.f32 %v5820, %v5822
          %5955 = vmax.xlane.f32.xlu0 %v5954
          %v5956 = vpop.xlane.xlu0 %5955
          %v5957 = vmax.f32 %v5824, %v5826
          %5958 = vmax.xlane.f32.xlu0 %v5957
          %v5959 = vpop.xlane.xlu0 %5958
          %v5960 = vmax.f32 %v5830, %v5832
          %5961 = vmax.xlane.f32.xlu0 %v5960
          %v5962 = vpop.xlane.xlu0 %5961
          %v5963 = vmax.f32 %v5834, %v5836
          %5964 = vmax.xlane.f32.xlu0 %v5963
          %v5965 = vpop.xlane.xlu0 %5964
          %v5966 = vmax.f32 %v5840, %v5842
          %5967 = vmax.xlane.f32.xlu0 %v5966
          %v5968 = vpop.xlane.xlu0 %5967
          %v5969 = vmax.f32 %v5844, %v5846
          %5970 = vmax.xlane.f32.xlu0 %v5969
          %v5971 = vpop.xlane.xlu0 %5970
          %v5972 = vmax.f32 %v5850, %v5852
          %5973 = vmax.xlane.f32.xlu0 %v5972
          %v5974 = vpop.xlane.xlu0 %5973
          %v5975 = vmax.f32 %v5854, %v5856
          %5976 = vmax.xlane.f32.xlu0 %v5975
          %v5977 = vpop.xlane.xlu0 %5976
          %v5978 = vmax.f32 %v5860, %v5862
          %5979 = vmax.xlane.f32.xlu0 %v5978
          %v5980 = vpop.xlane.xlu0 %5979
          %v5981 = vmax.f32 %v5864, %v5866
          %5982 = vmax.xlane.f32.xlu0 %v5981
          %v5983 = vpop.xlane.xlu0 %5982
          %v5984 = vmax.f32 %v5870, %v5872
          %5985 = vmax.xlane.f32.xlu0 %v5984
          %v5986 = vpop.xlane.xlu0 %5985
          %v5987 = vmax.f32 %v5874, %v5876
          %5988 = vmax.xlane.f32.xlu0 %v5987
          %v5989 = vpop.xlane.xlu0 %5988
          %v5990 = vmax.f32 %v5880, %v5882
          %5991 = vmax.xlane.f32.xlu0 %v5990
          %v5992 = vpop.xlane.xlu0 %5991
          %v5993 = vmax.f32 %v5884, %v5886
          %5994 = vmax.xlane.f32.xlu0 %v5993
          %v5995 = vpop.xlane.xlu0 %5994
          %v5996 = vmax.f32 %v5890, %v5892
          %5997 = vmax.xlane.f32.xlu0 %v5996
          %v5998 = vpop.xlane.xlu0 %5997
          %v5999 = vmax.f32 %v5894, %v5896
          %6000 = vmax.xlane.f32.xlu0 %v5999
          %v6001 = vpop.xlane.xlu0 %6000
          %v6002 = vmax.f32 %v5900, %v5902
          %6003 = vmax.xlane.f32.xlu0 %v6002
          %v6004 = vpop.xlane.xlu0 %6003
          %v6005 = vmax.f32 %v5904, %v5906
          %6006 = vmax.xlane.f32.xlu0 %v6005
          %v6007 = vpop.xlane.xlu0 %6006
          %v6008 = vmax.f32 %v5910, %v5912
          %6009 = vmax.xlane.f32.xlu0 %v6008
          %v6010 = vpop.xlane.xlu0 %6009
          %v6011 = vmax.f32 %v5914, %v5916
          %6012 = vmax.xlane.f32.xlu0 %v6011
          %v6013 = vpop.xlane.xlu0 %6012
          %v6014 = vmax.f32 %v5541, %v5920
          %v6015 = vmax.f32 %v5542, %v5923
          %v6016 = vmax.f32 %v5543, %v5926
          %v6017 = vmax.f32 %v5544, %v5929
          %v6018 = vmax.f32 %v5545, %v5932
          %v6019 = vmax.f32 %v5546, %v5935
          %v6020 = vmax.f32 %v5547, %v5938
          %v6021 = vmax.f32 %v5548, %v5941
          %v6022 = vmax.f32 %v5549, %v5944
          %v6023 = vmax.f32 %v5550, %v5947
          %v6024 = vmax.f32 %v5551, %v5950
          %v6025 = vmax.f32 %v5552, %v5953
          %v6026 = vmax.f32 %v5553, %v5956
          %v6027 = vmax.f32 %v5554, %v5959
          %v6028 = vmax.f32 %v5555, %v5962
          %v6029 = vmax.f32 %v5556, %v5965
          %v6030 = vmax.f32 %v5557, %v5968
          %v6031 = vmax.f32 %v5558, %v5971
          %v6032 = vmax.f32 %v5559, %v5974
          %v6033 = vmax.f32 %v5560, %v5977
          %v6034 = vmax.f32 %v5561, %v5980
          %v6035 = vmax.f32 %v5562, %v5983
          %v6036 = vmax.f32 %v5563, %v5986
          %v6037 = vmax.f32 %v5564, %v5989
          %v6038 = vmax.f32 %v5565, %v5992
          %v6039 = vmax.f32 %v5566, %v5995
          %v6040 = vmax.f32 %v5567, %v5998
          %v6041 = vmax.f32 %v5568, %v6001
          %v6042 = vmax.f32 %v5569, %v6004
          %v6043 = vmax.f32 %v5570, %v6007
          %v6044 = vmax.f32 %v5571, %v6010
          %v6045 = vmax.f32 %v5572, %v6013
          %v6046 = vsub.f32 %v5541, %v6014
          %v6047 = vsub.f32 %v5542, %v6015
          %v6048 = vsub.f32 %v5543, %v6016
          %v6049 = vsub.f32 %v5544, %v6017
          %v6050 = vsub.f32 %v5545, %v6018
          %v6051 = vsub.f32 %v5546, %v6019
          %v6052 = vsub.f32 %v5547, %v6020
          %v6053 = vsub.f32 %v5548, %v6021
          %v6054 = vsub.f32 %v5549, %v6022
          %v6055 = vsub.f32 %v5550, %v6023
          %v6056 = vsub.f32 %v5551, %v6024
          %v6057 = vsub.f32 %v5552, %v6025
          %v6058 = vsub.f32 %v5553, %v6026
          %v6059 = vsub.f32 %v5554, %v6027
          %v6060 = vsub.f32 %v5555, %v6028
          %v6061 = vsub.f32 %v5556, %v6029
          %v6062 = vsub.f32 %v5557, %v6030
          %v6063 = vsub.f32 %v5558, %v6031
          %v6064 = vsub.f32 %v5559, %v6032
          %v6065 = vsub.f32 %v5560, %v6033
          %v6066 = vsub.f32 %v5561, %v6034
          %v6067 = vsub.f32 %v5562, %v6035
          %v6068 = vsub.f32 %v5563, %v6036
          %v6069 = vsub.f32 %v5564, %v6037
          %v6070 = vsub.f32 %v5565, %v6038
          %v6071 = vsub.f32 %v5566, %v6039
          %v6072 = vsub.f32 %v5567, %v6040
          %v6073 = vsub.f32 %v5568, %v6041
          %v6074 = vsub.f32 %v5569, %v6042
          %v6075 = vsub.f32 %v5570, %v6043
          %v6076 = vsub.f32 %v5571, %v6044
          %v6077 = vsub.f32 %v5572, %v6045
          %v6078 = vmul.f32 %v6046, 1.442695
          %v6079 = vpow.pop %v6078
          %v6080 = vmul.f32 %v6047, 1.442695
          %v6081 = vpow.pop %v6080
          %v6082 = vmul.f32 %v6048, 1.442695
          %v6083 = vpow.pop %v6082
          %v6084 = vmul.f32 %v6049, 1.442695
          %v6085 = vpow.pop %v6084
          %v6086 = vmul.f32 %v6050, 1.442695
          %v6087 = vpow.pop %v6086
          %v6088 = vmul.f32 %v6051, 1.442695
          %v6089 = vpow.pop %v6088
          %v6090 = vmul.f32 %v6052, 1.442695
          %v6091 = vpow.pop %v6090
          %v6092 = vmul.f32 %v6053, 1.442695
          %v6093 = vpow.pop %v6092
          %v6094 = vmul.f32 %v6054, 1.442695
          %v6095 = vpow.pop %v6094
          %v6096 = vmul.f32 %v6055, 1.442695
          %v6097 = vpow.pop %v6096
          %v6098 = vmul.f32 %v6056, 1.442695
          %v6099 = vpow.pop %v6098
          %v6100 = vmul.f32 %v6057, 1.442695
          %v6101 = vpow.pop %v6100
          %v6102 = vmul.f32 %v6058, 1.442695
          %v6103 = vpow.pop %v6102
          %v6104 = vmul.f32 %v6059, 1.442695
          %v6105 = vpow.pop %v6104
          %v6106 = vmul.f32 %v6060, 1.442695
          %v6107 = vpow.pop %v6106
          %v6108 = vmul.f32 %v6061, 1.442695
          %v6109 = vpow.pop %v6108
          %v6110 = vmul.f32 %v6062, 1.442695
          %v6111 = vpow.pop %v6110
          %v6112 = vmul.f32 %v6063, 1.442695
          %v6113 = vpow.pop %v6112
          %v6114 = vmul.f32 %v6064, 1.442695
          %v6115 = vpow.pop %v6114
          %v6116 = vmul.f32 %v6065, 1.442695
          %v6117 = vpow.pop %v6116
          %v6118 = vmul.f32 %v6066, 1.442695
          %v6119 = vpow.pop %v6118
          %v6120 = vmul.f32 %v6067, 1.442695
          %v6121 = vpow.pop %v6120
          %v6122 = vmul.f32 %v6068, 1.442695
          %v6123 = vpow.pop %v6122
          %v6124 = vmul.f32 %v6069, 1.442695
          %v6125 = vpow.pop %v6124
          %v6126 = vmul.f32 %v6070, 1.442695
          %v6127 = vpow.pop %v6126
          %v6128 = vmul.f32 %v6071, 1.442695
          %v6129 = vpow.pop %v6128
          %v6130 = vmul.f32 %v6072, 1.442695
          %v6131 = vpow.pop %v6130
          %v6132 = vmul.f32 %v6073, 1.442695
          %v6133 = vpow.pop %v6132
          %v6134 = vmul.f32 %v6074, 1.442695
          %v6135 = vpow.pop %v6134
          %v6136 = vmul.f32 %v6075, 1.442695
          %v6137 = vpow.pop %v6136
          %v6138 = vmul.f32 %v6076, 1.442695
          %v6139 = vpow.pop %v6138
          %v6140 = vmul.f32 %v6077, 1.442695
          %v6141 = vpow.pop %v6140
          %v6142 = vsub.f32 %v5760, %v6014
          %v6143 = vsub.f32 %v5762, %v6014
          %v6144 = vsub.f32 %v5764, %v6015
          %v6145 = vsub.f32 %v5766, %v6015
          %v6146 = vsub.f32 %v5770, %v6016
          %v6147 = vsub.f32 %v5772, %v6016
          %v6148 = vsub.f32 %v5774, %v6017
          %v6149 = vsub.f32 %v5776, %v6017
          %v6150 = vsub.f32 %v5780, %v6018
          %v6151 = vsub.f32 %v5782, %v6018
          %v6152 = vsub.f32 %v5784, %v6019
          %v6153 = vsub.f32 %v5786, %v6019
          %v6154 = vsub.f32 %v5790, %v6020
          %v6155 = vsub.f32 %v5792, %v6020
          %v6156 = vsub.f32 %v5794, %v6021
          %v6157 = vsub.f32 %v5796, %v6021
          %v6158 = vsub.f32 %v5800, %v6022
          %v6159 = vsub.f32 %v5802, %v6022
          %v6160 = vsub.f32 %v5804, %v6023
          %v6161 = vsub.f32 %v5806, %v6023
          %v6162 = vsub.f32 %v5810, %v6024
          %v6163 = vsub.f32 %v5812, %v6024
          %v6164 = vsub.f32 %v5814, %v6025
          %v6165 = vsub.f32 %v5816, %v6025
          %v6166 = vsub.f32 %v5820, %v6026
          %v6167 = vsub.f32 %v5822, %v6026
          %v6168 = vsub.f32 %v5824, %v6027
          %v6169 = vsub.f32 %v5826, %v6027
          %v6170 = vsub.f32 %v5830, %v6028
          %v6171 = vsub.f32 %v5832, %v6028
          %v6172 = vsub.f32 %v5834, %v6029
          %v6173 = vsub.f32 %v5836, %v6029
          %v6174 = vsub.f32 %v5840, %v6030
          %v6175 = vsub.f32 %v5842, %v6030
          %v6176 = vsub.f32 %v5844, %v6031
          %v6177 = vsub.f32 %v5846, %v6031
          %v6178 = vsub.f32 %v5850, %v6032
          %v6179 = vsub.f32 %v5852, %v6032
          %v6180 = vsub.f32 %v5854, %v6033
          %v6181 = vsub.f32 %v5856, %v6033
          %v6182 = vsub.f32 %v5860, %v6034
          %v6183 = vsub.f32 %v5862, %v6034
          %v6184 = vsub.f32 %v5864, %v6035
          %v6185 = vsub.f32 %v5866, %v6035
          %v6186 = vsub.f32 %v5870, %v6036
          %v6187 = vsub.f32 %v5872, %v6036
          %v6188 = vsub.f32 %v5874, %v6037
          %v6189 = vsub.f32 %v5876, %v6037
          %v6190 = vsub.f32 %v5880, %v6038
          %v6191 = vsub.f32 %v5882, %v6038
          %v6192 = vsub.f32 %v5884, %v6039
          %v6193 = vsub.f32 %v5886, %v6039
          %v6194 = vsub.f32 %v5890, %v6040
          %v6195 = vsub.f32 %v5892, %v6040
          %v6196 = vsub.f32 %v5894, %v6041
          %v6197 = vsub.f32 %v5896, %v6041
          %v6198 = vsub.f32 %v5900, %v6042
          %v6199 = vsub.f32 %v5902, %v6042
          %v6200 = vsub.f32 %v5904, %v6043
          %v6201 = vsub.f32 %v5906, %v6043
          %v6202 = vsub.f32 %v5910, %v6044
          %v6203 = vsub.f32 %v5912, %v6044
          %v6204 = vsub.f32 %v5914, %v6045
          %v6205 = vsub.f32 %v5916, %v6045
          %v6206 = vmul.f32 %v6142, 1.442695
          %v6207 = vpow.pop %v6206
          %v6208 = vmul.f32 %v6143, 1.442695
          %v6209 = vpow.pop %v6208
          %v6210 = vmul.f32 %v6144, 1.442695
          %v6211 = vpow.pop %v6210
          %v6212 = vmul.f32 %v6145, 1.442695
          %v6213 = vpow.pop %v6212
          %v6214 = vmul.f32 %v6146, 1.442695
          %v6215 = vpow.pop %v6214
          %v6216 = vmul.f32 %v6147, 1.442695
          %v6217 = vpow.pop %v6216
          %v6218 = vmul.f32 %v6148, 1.442695
          %v6219 = vpow.pop %v6218
          %v6220 = vmul.f32 %v6149, 1.442695
          %v6221 = vpow.pop %v6220
          %v6222 = vmul.f32 %v6150, 1.442695
          %v6223 = vpow.pop %v6222
          %v6224 = vmul.f32 %v6151, 1.442695
          %v6225 = vpow.pop %v6224
          %v6226 = vmul.f32 %v6152, 1.442695
          %v6227 = vpow.pop %v6226
          %v6228 = vmul.f32 %v6153, 1.442695
          %v6229 = vpow.pop %v6228
          %v6230 = vmul.f32 %v6154, 1.442695
          %v6231 = vpow.pop %v6230
          %v6232 = vmul.f32 %v6155, 1.442695
          %v6233 = vpow.pop %v6232
          %v6234 = vmul.f32 %v6156, 1.442695
          %v6235 = vpow.pop %v6234
          %v6236 = vmul.f32 %v6157, 1.442695
          %v6237 = vpow.pop %v6236
          %v6238 = vmul.f32 %v6158, 1.442695
          %v6239 = vpow.pop %v6238
          %v6240 = vmul.f32 %v6159, 1.442695
          %v6241 = vpow.pop %v6240
          %v6242 = vmul.f32 %v6160, 1.442695
          %v6243 = vpow.pop %v6242
          %v6244 = vmul.f32 %v6161, 1.442695
          %v6245 = vpow.pop %v6244
          %v6246 = vmul.f32 %v6162, 1.442695
          %v6247 = vpow.pop %v6246
          %v6248 = vmul.f32 %v6163, 1.442695
          %v6249 = vpow.pop %v6248
          %v6250 = vmul.f32 %v6164, 1.442695
          %v6251 = vpow.pop %v6250
          %v6252 = vmul.f32 %v6165, 1.442695
          %v6253 = vpow.pop %v6252
          %v6254 = vmul.f32 %v6166, 1.442695
          %v6255 = vpow.pop %v6254
          %v6256 = vmul.f32 %v6167, 1.442695
          %v6257 = vpow.pop %v6256
          %v6258 = vmul.f32 %v6168, 1.442695
          %v6259 = vpow.pop %v6258
          %v6260 = vmul.f32 %v6169, 1.442695
          %v6261 = vpow.pop %v6260
          %v6262 = vmul.f32 %v6170, 1.442695
          %v6263 = vpow.pop %v6262
          %v6264 = vmul.f32 %v6171, 1.442695
          %v6265 = vpow.pop %v6264
          %v6266 = vmul.f32 %v6172, 1.442695
          %v6267 = vpow.pop %v6266
          %v6268 = vmul.f32 %v6173, 1.442695
          %v6269 = vpow.pop %v6268
          %v6270 = vmul.f32 %v6174, 1.442695
          %v6271 = vpow.pop %v6270
          %v6272 = vmul.f32 %v6175, 1.442695
          %v6273 = vpow.pop %v6272
          %v6274 = vmul.f32 %v6176, 1.442695
          %v6275 = vpow.pop %v6274
          %v6276 = vmul.f32 %v6177, 1.442695
          %v6277 = vpow.pop %v6276
          %v6278 = vmul.f32 %v6178, 1.442695
          %v6279 = vpow.pop %v6278
          %v6280 = vmul.f32 %v6179, 1.442695
          %v6281 = vpow.pop %v6280
          %v6282 = vmul.f32 %v6180, 1.442695
          %v6283 = vpow.pop %v6282
          %v6284 = vmul.f32 %v6181, 1.442695
          %v6285 = vpow.pop %v6284
          %v6286 = vmul.f32 %v6182, 1.442695
          %v6287 = vpow.pop %v6286
          %v6288 = vmul.f32 %v6183, 1.442695
          %v6289 = vpow.pop %v6288
          %v6290 = vmul.f32 %v6184, 1.442695
          %v6291 = vpow.pop %v6290
          %v6292 = vmul.f32 %v6185, 1.442695
          %v6293 = vpow.pop %v6292
          %v6294 = vmul.f32 %v6186, 1.442695
          %v6295 = vpow.pop %v6294
          %v6296 = vmul.f32 %v6187, 1.442695
          %v6297 = vpow.pop %v6296
          %v6298 = vmul.f32 %v6188, 1.442695
          %v6299 = vpow.pop %v6298
          %v6300 = vmul.f32 %v6189, 1.442695
          %v6301 = vpow.pop %v6300
          %v6302 = vmul.f32 %v6190, 1.442695
          %v6303 = vpow.pop %v6302
          %v6304 = vmul.f32 %v6191, 1.442695
          %v6305 = vpow.pop %v6304
          %v6306 = vmul.f32 %v6192, 1.442695
          %v6307 = vpow.pop %v6306
          %v6308 = vmul.f32 %v6193, 1.442695
          %v6309 = vpow.pop %v6308
          %v6310 = vmul.f32 %v6194, 1.442695
          %v6311 = vpow.pop %v6310
          %v6312 = vmul.f32 %v6195, 1.442695
          %v6313 = vpow.pop %v6312
          %v6314 = vmul.f32 %v6196, 1.442695
          %v6315 = vpow.pop %v6314
          %v6316 = vmul.f32 %v6197, 1.442695
          %v6317 = vpow.pop %v6316
          %v6318 = vmul.f32 %v6198, 1.442695
          %v6319 = vpow.pop %v6318
          %v6320 = vmul.f32 %v6199, 1.442695
          %v6321 = vpow.pop %v6320
          %v6322 = vmul.f32 %v6200, 1.442695
          %v6323 = vpow.pop %v6322
          %v6324 = vmul.f32 %v6201, 1.442695
          %v6325 = vpow.pop %v6324
          %v6326 = vmul.f32 %v6202, 1.442695
          %v6327 = vpow.pop %v6326
          %v6328 = vmul.f32 %v6203, 1.442695
          %v6329 = vpow.pop %v6328
          %v6330 = vmul.f32 %v6204, 1.442695
          %v6331 = vpow.pop %v6330
          %v6332 = vmul.f32 %v6205, 1.442695
          %v6333 = vpow.pop %v6332
          %v6334 = vmul.f32 %v6079, %v5573
          %v6335 = vmul.f32 %v6081, %v5574
          %v6336 = vmul.f32 %v6083, %v5575
          %v6337 = vmul.f32 %v6085, %v5576
          %v6338 = vmul.f32 %v6087, %v5577
          %v6339 = vmul.f32 %v6089, %v5578
          %v6340 = vmul.f32 %v6091, %v5579
          %v6341 = vmul.f32 %v6093, %v5580
          %v6342 = vmul.f32 %v6095, %v5581
          %v6343 = vmul.f32 %v6097, %v5582
          %v6344 = vmul.f32 %v6099, %v5583
          %v6345 = vmul.f32 %v6101, %v5584
          %v6346 = vmul.f32 %v6103, %v5585
          %v6347 = vmul.f32 %v6105, %v5586
          %v6348 = vmul.f32 %v6107, %v5587
          %v6349 = vmul.f32 %v6109, %v5588
          %v6350 = vmul.f32 %v6111, %v5589
          %v6351 = vmul.f32 %v6113, %v5590
          %v6352 = vmul.f32 %v6115, %v5591
          %v6353 = vmul.f32 %v6117, %v5592
          %v6354 = vmul.f32 %v6119, %v5593
          %v6355 = vmul.f32 %v6121, %v5594
          %v6356 = vmul.f32 %v6123, %v5595
          %v6357 = vmul.f32 %v6125, %v5596
          %v6358 = vmul.f32 %v6127, %v5597
          %v6359 = vmul.f32 %v6129, %v5598
          %v6360 = vmul.f32 %v6131, %v5599
          %v6361 = vmul.f32 %v6133, %v5600
          %v6362 = vmul.f32 %v6135, %v5601
          %v6363 = vmul.f32 %v6137, %v5602
          %v6364 = vmul.f32 %v6139, %v5603
          %v6365 = vmul.f32 %v6141, %v5604
          %v6366 = vadd.f32 %v6207, %v6209
          %6367 = vadd.xlane.f32.xlu0 %v6366
          %v6368 = vpop.xlane.xlu0 %6367
          %v6369 = vadd.f32 %v6211, %v6213
          %6370 = vadd.xlane.f32.xlu0 %v6369
          %v6371 = vpop.xlane.xlu0 %6370
          %v6372 = vadd.f32 %v6215, %v6217
          %6373 = vadd.xlane.f32.xlu0 %v6372
          %v6374 = vpop.xlane.xlu0 %6373
          %v6375 = vadd.f32 %v6219, %v6221
          %6376 = vadd.xlane.f32.xlu0 %v6375
          %v6377 = vpop.xlane.xlu0 %6376
          %v6378 = vadd.f32 %v6223, %v6225
          %6379 = vadd.xlane.f32.xlu0 %v6378
          %v6380 = vpop.xlane.xlu0 %6379
          %v6381 = vadd.f32 %v6227, %v6229
          %6382 = vadd.xlane.f32.xlu0 %v6381
          %v6383 = vpop.xlane.xlu0 %6382
          %v6384 = vadd.f32 %v6231, %v6233
          %6385 = vadd.xlane.f32.xlu0 %v6384
          %v6386 = vpop.xlane.xlu0 %6385
          %v6387 = vadd.f32 %v6235, %v6237
          %6388 = vadd.xlane.f32.xlu0 %v6387
          %v6389 = vpop.xlane.xlu0 %6388
          %v6390 = vadd.f32 %v6239, %v6241
          %6391 = vadd.xlane.f32.xlu0 %v6390
          %v6392 = vpop.xlane.xlu0 %6391
          %v6393 = vadd.f32 %v6243, %v6245
          %6394 = vadd.xlane.f32.xlu0 %v6393
          %v6395 = vpop.xlane.xlu0 %6394
          %v6396 = vadd.f32 %v6247, %v6249
          %6397 = vadd.xlane.f32.xlu0 %v6396
          %v6398 = vpop.xlane.xlu0 %6397
          %v6399 = vadd.f32 %v6251, %v6253
          %6400 = vadd.xlane.f32.xlu0 %v6399
          %v6401 = vpop.xlane.xlu0 %6400
          %v6402 = vadd.f32 %v6255, %v6257
          %6403 = vadd.xlane.f32.xlu0 %v6402
          %v6404 = vpop.xlane.xlu0 %6403
          %v6405 = vadd.f32 %v6259, %v6261
          %6406 = vadd.xlane.f32.xlu0 %v6405
          %v6407 = vpop.xlane.xlu0 %6406
          %v6408 = vadd.f32 %v6263, %v6265
          %6409 = vadd.xlane.f32.xlu0 %v6408
          %v6410 = vpop.xlane.xlu0 %6409
          %v6411 = vadd.f32 %v6267, %v6269
          %6412 = vadd.xlane.f32.xlu0 %v6411
          %v6413 = vpop.xlane.xlu0 %6412
          %v6414 = vadd.f32 %v6271, %v6273
          %6415 = vadd.xlane.f32.xlu0 %v6414
          %v6416 = vpop.xlane.xlu0 %6415
          %v6417 = vadd.f32 %v6275, %v6277
          %6418 = vadd.xlane.f32.xlu0 %v6417
          %v6419 = vpop.xlane.xlu0 %6418
          %v6420 = vadd.f32 %v6279, %v6281
          %6421 = vadd.xlane.f32.xlu0 %v6420
          %v6422 = vpop.xlane.xlu0 %6421
          %v6423 = vadd.f32 %v6283, %v6285
          %6424 = vadd.xlane.f32.xlu0 %v6423
          %v6425 = vpop.xlane.xlu0 %6424
          %v6426 = vadd.f32 %v6287, %v6289
          %6427 = vadd.xlane.f32.xlu0 %v6426
          %v6428 = vpop.xlane.xlu0 %6427
          %v6429 = vadd.f32 %v6291, %v6293
          %6430 = vadd.xlane.f32.xlu0 %v6429
          %v6431 = vpop.xlane.xlu0 %6430
          %v6432 = vadd.f32 %v6295, %v6297
          %6433 = vadd.xlane.f32.xlu0 %v6432
          %v6434 = vpop.xlane.xlu0 %6433
          %v6435 = vadd.f32 %v6299, %v6301
          %6436 = vadd.xlane.f32.xlu0 %v6435
          %v6437 = vpop.xlane.xlu0 %6436
          %v6438 = vadd.f32 %v6303, %v6305
          %6439 = vadd.xlane.f32.xlu0 %v6438
          %v6440 = vpop.xlane.xlu0 %6439
          %v6441 = vadd.f32 %v6307, %v6309
          %6442 = vadd.xlane.f32.xlu0 %v6441
          %v6443 = vpop.xlane.xlu0 %6442
          %v6444 = vadd.f32 %v6311, %v6313
          %6445 = vadd.xlane.f32.xlu0 %v6444
          %v6446 = vpop.xlane.xlu0 %6445
          %v6447 = vadd.f32 %v6315, %v6317
          %6448 = vadd.xlane.f32.xlu0 %v6447
          %v6449 = vpop.xlane.xlu0 %6448
          %v6450 = vadd.f32 %v6319, %v6321
          %6451 = vadd.xlane.f32.xlu0 %v6450
          %v6452 = vpop.xlane.xlu0 %6451
          %v6453 = vadd.f32 %v6323, %v6325
          %6454 = vadd.xlane.f32.xlu0 %v6453
          %v6455 = vpop.xlane.xlu0 %6454
          %v6456 = vadd.f32 %v6327, %v6329
          %6457 = vadd.xlane.f32.xlu0 %v6456
          %v6458 = vpop.xlane.xlu0 %6457
          %v6459 = vadd.f32 %v6331, %v6333
          %6460 = vadd.xlane.f32.xlu0 %v6459
          %v6461 = vpop.xlane.xlu0 %6460
          %v6462 = vadd.f32 %v6334, %v6368
          %v6463 = vadd.f32 %v6335, %v6371
          %v6464 = vadd.f32 %v6336, %v6374
          %v6465 = vadd.f32 %v6337, %v6377
          %v6466 = vadd.f32 %v6338, %v6380
          %v6467 = vadd.f32 %v6339, %v6383
          %v6468 = vadd.f32 %v6340, %v6386
          %v6469 = vadd.f32 %v6341, %v6389
          %v6470 = vadd.f32 %v6342, %v6392
          %v6471 = vadd.f32 %v6343, %v6395
          %v6472 = vadd.f32 %v6344, %v6398
          %v6473 = vadd.f32 %v6345, %v6401
          %v6474 = vadd.f32 %v6346, %v6404
          %v6475 = vadd.f32 %v6347, %v6407
          %v6476 = vadd.f32 %v6348, %v6410
          %v6477 = vadd.f32 %v6349, %v6413
          %v6478 = vadd.f32 %v6350, %v6416
          %v6479 = vadd.f32 %v6351, %v6419
          %v6480 = vadd.f32 %v6352, %v6422
          %v6481 = vadd.f32 %v6353, %v6425
          %v6482 = vadd.f32 %v6354, %v6428
          %v6483 = vadd.f32 %v6355, %v6431
          %v6484 = vadd.f32 %v6356, %v6434
          %v6485 = vadd.f32 %v6357, %v6437
          %v6486 = vadd.f32 %v6358, %v6440
          %v6487 = vadd.f32 %v6359, %v6443
          %v6488 = vadd.f32 %v6360, %v6446
          %v6489 = vadd.f32 %v6361, %v6449
          %v6490 = vadd.f32 %v6362, %v6452
          %v6491 = vadd.f32 %v6363, %v6455
          %v6492 = vadd.f32 %v6364, %v6458
          %v6493 = vadd.f32 %v6365, %v6461
          %v6494 = vmul.f32 %v6079, %v5605
          %v6495 = vmul.f32 %v6081, %v5606
          %v6496 = vmul.f32 %v6083, %v5607
          %v6497 = vmul.f32 %v6085, %v5608
          %v6498 = vmul.f32 %v6087, %v5609
          %v6499 = vmul.f32 %v6089, %v5610
          %v6500 = vmul.f32 %v6091, %v5611
          %v6501 = vmul.f32 %v6093, %v5612
          %v6502 = vmul.f32 %v6095, %v5613
          %v6503 = vmul.f32 %v6097, %v5614
          %v6504 = vmul.f32 %v6099, %v5615
          %v6505 = vmul.f32 %v6101, %v5616
          %v6506 = vmul.f32 %v6103, %v5617
          %v6507 = vmul.f32 %v6105, %v5618
          %v6508 = vmul.f32 %v6107, %v5619
          %v6509 = vmul.f32 %v6109, %v5620
          %v6510 = vmul.f32 %v6111, %v5621
          %v6511 = vmul.f32 %v6113, %v5622
          %v6512 = vmul.f32 %v6115, %v5623
          %v6513 = vmul.f32 %v6117, %v5624
          %v6514 = vmul.f32 %v6119, %v5625
          %v6515 = vmul.f32 %v6121, %v5626
          %v6516 = vmul.f32 %v6123, %v5627
          %v6517 = vmul.f32 %v6125, %v5628
          %v6518 = vmul.f32 %v6127, %v5629
          %v6519 = vmul.f32 %v6129, %v5630
          %v6520 = vmul.f32 %v6131, %v5631
          %v6521 = vmul.f32 %v6133, %v5632
          %v6522 = vmul.f32 %v6135, %v5633
          %v6523 = vmul.f32 %v6137, %v5634
          %v6524 = vmul.f32 %v6139, %v5635
          %v6525 = vmul.f32 %v6141, %v5636
          %v6526 = vpack.c.bf16 %v6211, %v6207
          %v6527 = vpack.c.bf16 %v6213, %v6209
          %v6528 = vpack.c.bf16 %v6219, %v6215
          %v6529 = vpack.c.bf16 %v6221, %v6217
          %v6530 = vpack.c.bf16 %v6227, %v6223
          %v6531 = vpack.c.bf16 %v6229, %v6225
          %v6532 = vpack.c.bf16 %v6235, %v6231
          %v6533 = vpack.c.bf16 %v6237, %v6233
          %v6534 = vpack.c.bf16 %v6243, %v6239
          %v6535 = vpack.c.bf16 %v6245, %v6241
          %v6536 = vpack.c.bf16 %v6251, %v6247
          %v6537 = vpack.c.bf16 %v6253, %v6249
          %v6538 = vpack.c.bf16 %v6259, %v6255
          %v6539 = vpack.c.bf16 %v6261, %v6257
          %v6540 = vpack.c.bf16 %v6267, %v6263
          %v6541 = vpack.c.bf16 %v6269, %v6265
          %v6542 = vpack.c.bf16 %v6275, %v6271
          %v6543 = vpack.c.bf16 %v6277, %v6273
          %v6544 = vpack.c.bf16 %v6283, %v6279
          %v6545 = vpack.c.bf16 %v6285, %v6281
          %v6546 = vpack.c.bf16 %v6291, %v6287
          %v6547 = vpack.c.bf16 %v6293, %v6289
          %v6548 = vpack.c.bf16 %v6299, %v6295
          %v6549 = vpack.c.bf16 %v6301, %v6297
          %v6550 = vpack.c.bf16 %v6307, %v6303
          %v6551 = vpack.c.bf16 %v6309, %v6305
          %v6552 = vpack.c.bf16 %v6315, %v6311
          %v6553 = vpack.c.bf16 %v6317, %v6313
          %v6554 = vpack.c.bf16 %v6323, %v6319
          %v6555 = vpack.c.bf16 %v6325, %v6321
          %v6556 = vpack.c.bf16 %v6331, %v6327
          %v6557 = vpack.c.bf16 %v6333, %v6329
          %6558 = vmatprep.subr.bf16.mxu0 0
          %6559 = vmatpush1.bf16.msra.mxu0 %v5661
          %6560 = vmatprep.subr.bf16.mxu0 0
          %6561 = vmatpush1.bf16.msra.mxu0 %v5662
          %6562 = vmatprep.subr.bf16.mxu0 0
          %6563 = vmatpush1.bf16.msra.mxu0 %v5663
          %6564 = vmatprep.subr.bf16.mxu0 0
          %6565 = vmatpush1.bf16.msra.mxu0 %v5664
          %6566 = vmatprep.subr.bf16.mxu0 0
          %6567 = vmatpush1.bf16.msra.mxu0 %v5665
          %6568 = vmatprep.subr.bf16.mxu0 0
          %6569 = vmatpush1.bf16.msra.mxu0 %v5666
          %6570 = vmatprep.subr.bf16.mxu0 0
          %6571 = vmatpush1.bf16.msra.mxu0 %v5667
          %6572 = vmatprep.subr.bf16.mxu0 0
          %6573 = vmatpush1.bf16.msra.mxu0 %v5668
          %6574 = vmatprep.subr.bf16.mxu0 0
          %6575 = vmatpush1.bf16.msra.mxu0 %v5669
          %6576 = vmatprep.subr.bf16.mxu0 0
          %6577 = vmatpush1.bf16.msra.mxu0 %v5670
          %6578 = vmatprep.subr.bf16.mxu0 0
          %6579 = vmatpush1.bf16.msra.mxu0 %v5671
          %6580 = vmatprep.subr.bf16.mxu0 0
          %6581 = vmatpush1.bf16.msra.mxu0 %v5672
          %6582 = vmatprep.subr.bf16.mxu0 0
          %6583 = vmatpush1.bf16.msra.mxu0 %v5673
          %6584 = vmatprep.subr.bf16.mxu0 0
          %6585 = vmatpush1.bf16.msra.mxu0 %v5674
          %6586 = vmatprep.subr.bf16.mxu0 0
          %6587 = vmatpush1.bf16.msra.mxu0 %v5675
          %6588 = vmatprep.subr.bf16.mxu0 0
          %6589 = vmatpush1.bf16.msra.mxu0 %v5676
          %6590 = vmatprep.mubr.bf16.mxu0 %v6527
          %6591 = vmatmul.mubr.bf16.gmra.mrb[0].mxu0 %v6526
          %v6592 = vpop.f32.mrb[0].mxu0
          %v6593 = vadd.f32 0.0, %v6592
          %v6594 = vpop.f32.mrb[0].mxu0
          %v6595 = vpop.f32.mrb[0].mxu0
          %v6596 = vadd.f32 0.0, %v6595
          %v6597 = vpop.f32.mrb[0].mxu0
          %6598 = vmatprep.mubr.bf16.mxu0 %v6529
          %6599 = vmatmul.mubr.bf16.gmra.mrb[0].mxu0 %v6528
          %v6600 = vpop.f32.mrb[0].mxu0
          %v6601 = vadd.f32 0.0, %v6600
          %v6602 = vpop.f32.mrb[0].mxu0
          %v6603 = vpop.f32.mrb[0].mxu0
          %v6604 = vadd.f32 0.0, %v6603
          %v6605 = vpop.f32.mrb[0].mxu0
          %6606 = vmatprep.mubr.bf16.mxu0 %v6531
          %6607 = vmatmul.mubr.bf16.gmra.mrb[0].mxu0 %v6530
          %v6608 = vpop.f32.mrb[0].mxu0
          %v6609 = vadd.f32 0.0, %v6608
          %v6610 = vpop.f32.mrb[0].mxu0
          %v6611 = vpop.f32.mrb[0].mxu0
          %v6612 = vadd.f32 0.0, %v6611
          %v6613 = vpop.f32.mrb[0].mxu0
          %6614 = vmatprep.mubr.bf16.mxu0 %v6533
          %6615 = vmatmul.mubr.bf16.gmra.mrb[0].mxu0 %v6532
          %v6616 = vpop.f32.mrb[0].mxu0
          %v6617 = vadd.f32 0.0, %v6616
          %v6618 = vpop.f32.mrb[0].mxu0
          %v6619 = vpop.f32.mrb[0].mxu0
          %v6620 = vadd.f32 0.0, %v6619
          %v6621 = vpop.f32.mrb[0].mxu0
          %6622 = vmatprep.mubr.bf16.mxu0 %v6535
          %6623 = vmatmul.mubr.bf16.gmra.mrb[0].mxu0 %v6534
          %v6624 = vpop.f32.mrb[0].mxu0
          %v6625 = vadd.f32 0.0, %v6624
          %v6626 = vpop.f32.mrb[0].mxu0
          %v6627 = vpop.f32.mrb[0].mxu0
          %v6628 = vadd.f32 0.0, %v6627
          %v6629 = vpop.f32.mrb[0].mxu0
          %6630 = vmatprep.mubr.bf16.mxu0 %v6537
          %6631 = vmatmul.mubr.bf16.gmra.mrb[0].mxu0 %v6536
          %v6632 = vpop.f32.mrb[0].mxu0
          %v6633 = vadd.f32 0.0, %v6632
          %v6634 = vpop.f32.mrb[0].mxu0
          %v6635 = vpop.f32.mrb[0].mxu0
          %v6636 = vadd.f32 0.0, %v6635
          %v6637 = vpop.f32.mrb[0].mxu0
          %6638 = vmatprep.mubr.bf16.mxu0 %v6539
          %6639 = vmatmul.mubr.bf16.gmra.mrb[0].mxu0 %v6538
          %v6640 = vpop.f32.mrb[0].mxu0
          %v6641 = vadd.f32 0.0, %v6640
          %v6642 = vpop.f32.mrb[0].mxu0
          %v6643 = vpop.f32.mrb[0].mxu0
          %v6644 = vadd.f32 0.0, %v6643
          %v6645 = vpop.f32.mrb[0].mxu0
          %6646 = vmatprep.mubr.bf16.mxu0 %v6541
          %6647 = vmatmul.mubr.bf16.gmra.mrb[0].mxu0 %v6540
          %v6648 = vpop.f32.mrb[0].mxu0
          %v6649 = vadd.f32 0.0, %v6648
          %v6650 = vpop.f32.mrb[0].mxu0
          %v6651 = vpop.f32.mrb[0].mxu0
          %v6652 = vadd.f32 0.0, %v6651
          %v6653 = vpop.f32.mrb[0].mxu0
          %6654 = vmatprep.mubr.bf16.mxu0 %v6543
          %6655 = vmatmul.mubr.bf16.gmra.mrb[0].mxu0 %v6542
          %v6656 = vpop.f32.mrb[0].mxu0
          %v6657 = vadd.f32 0.0, %v6656
          %v6658 = vpop.f32.mrb[0].mxu0
          %v6659 = vpop.f32.mrb[0].mxu0
          %v6660 = vadd.f32 0.0, %v6659
          %v6661 = vpop.f32.mrb[0].mxu0
          %6662 = vmatprep.mubr.bf16.mxu0 %v6545
          %6663 = vmatmul.mubr.bf16.gmra.mrb[0].mxu0 %v6544
          %v6664 = vpop.f32.mrb[0].mxu0
          %v6665 = vadd.f32 0.0, %v6664
          %v6666 = vpop.f32.mrb[0].mxu0
          %v6667 = vpop.f32.mrb[0].mxu0
          %v6668 = vadd.f32 0.0, %v6667
          %v6669 = vpop.f32.mrb[0].mxu0
          %6670 = vmatprep.mubr.bf16.mxu0 %v6547
          %6671 = vmatmul.mubr.bf16.gmra.mrb[0].mxu0 %v6546
          %v6672 = vpop.f32.mrb[0].mxu0
          %v6673 = vadd.f32 0.0, %v6672
          %v6674 = vpop.f32.mrb[0].mxu0
          %v6675 = vpop.f32.mrb[0].mxu0
          %v6676 = vadd.f32 0.0, %v6675
          %v6677 = vpop.f32.mrb[0].mxu0
          %6678 = vmatprep.mubr.bf16.mxu0 %v6549
          %6679 = vmatmul.mubr.bf16.gmra.mrb[0].mxu0 %v6548
          %v6680 = vpop.f32.mrb[0].mxu0
          %v6681 = vadd.f32 0.0, %v6680
          %v6682 = vpop.f32.mrb[0].mxu0
          %v6683 = vpop.f32.mrb[0].mxu0
          %v6684 = vadd.f32 0.0, %v6683
          %v6685 = vpop.f32.mrb[0].mxu0
          %6686 = vmatprep.mubr.bf16.mxu0 %v6551
          %6687 = vmatmul.mubr.bf16.gmra.mrb[0].mxu0 %v6550
          %v6688 = vpop.f32.mrb[0].mxu0
          %v6689 = vadd.f32 0.0, %v6688
          %v6690 = vpop.f32.mrb[0].mxu0
          %v6691 = vpop.f32.mrb[0].mxu0
          %v6692 = vadd.f32 0.0, %v6691
          %v6693 = vpop.f32.mrb[0].mxu0
          %6694 = vmatprep.mubr.bf16.mxu0 %v6553
          %6695 = vmatmul.mubr.bf16.gmra.mrb[0].mxu0 %v6552
          %v6696 = vpop.f32.mrb[0].mxu0
          %v6697 = vadd.f32 0.0, %v6696
          %v6698 = vpop.f32.mrb[0].mxu0
          %v6699 = vpop.f32.mrb[0].mxu0
          %v6700 = vadd.f32 0.0, %v6699
          %v6701 = vpop.f32.mrb[0].mxu0
          %6702 = vmatprep.mubr.bf16.mxu0 %v6555
          %6703 = vmatmul.mubr.bf16.gmra.mrb[0].mxu0 %v6554
          %v6704 = vpop.f32.mrb[0].mxu0
          %v6705 = vadd.f32 0.0, %v6704
          %v6706 = vpop.f32.mrb[0].mxu0
          %v6707 = vpop.f32.mrb[0].mxu0
          %v6708 = vadd.f32 0.0, %v6707
          %v6709 = vpop.f32.mrb[0].mxu0
          %6710 = vmatprep.mubr.bf16.mxu0 %v6557
          %6711 = vmatmul.mubr.bf16.gmra.mrb[0].mxu0 %v6556
          %v6712 = vpop.f32.mrb[0].mxu0
          %v6713 = vadd.f32 0.0, %v6712
          %v6714 = vpop.f32.mrb[0].mxu0
          %v6715 = vpop.f32.mrb[0].mxu0
          %v6716 = vadd.f32 0.0, %v6715
          %v6717 = vpop.f32.mrb[0].mxu0
          %6718 = vdwg.mxu0
          %v6719 = vadd.f32 %v6494, %v6593
          %v6720 = vadd.f32 %v6495, %v6596
          %v6721 = vadd.f32 %v6496, %v6601
          %v6722 = vadd.f32 %v6497, %v6604
          %v6723 = vadd.f32 %v6498, %v6609
          %v6724 = vadd.f32 %v6499, %v6612
          %v6725 = vadd.f32 %v6500, %v6617
          %v6726 = vadd.f32 %v6501, %v6620
          %v6727 = vadd.f32 %v6502, %v6625
          %v6728 = vadd.f32 %v6503, %v6628
          %v6729 = vadd.f32 %v6504, %v6633
          %v6730 = vadd.f32 %v6505, %v6636
          %v6731 = vadd.f32 %v6506, %v6641
          %v6732 = vadd.f32 %v6507, %v6644
          %v6733 = vadd.f32 %v6508, %v6649
          %v6734 = vadd.f32 %v6509, %v6652
          %v6735 = vadd.f32 %v6510, %v6657
          %v6736 = vadd.f32 %v6511, %v6660
          %v6737 = vadd.f32 %v6512, %v6665
          %v6738 = vadd.f32 %v6513, %v6668
          %v6739 = vadd.f32 %v6514, %v6673
          %v6740 = vadd.f32 %v6515, %v6676
          %v6741 = vadd.f32 %v6516, %v6681
          %v6742 = vadd.f32 %v6517, %v6684
          %v6743 = vadd.f32 %v6518, %v6689
          %v6744 = vadd.f32 %v6519, %v6692
          %v6745 = vadd.f32 %v6520, %v6697
          %v6746 = vadd.f32 %v6521, %v6700
          %v6747 = vadd.f32 %v6522, %v6705
          %v6748 = vadd.f32 %v6523, %v6708
          %v6749 = vadd.f32 %v6524, %v6713
          %v6750 = vadd.f32 %v6525, %v6716
        $region84: #{tpu_custom_call.1} parent=47 // loop_footer
          %s5538 = sadd.s32 %s5536, 1
        $region85: #{tpu_custom_call.1} parent=47 // loop_footer_branch
          %5535 = sbr.rel target = $region81
        $region86: #{tpu_custom_call.1} parent=47 // loop_exit
          _
        %v6751 = vrcp.pop %v5573
        %v6752 = vrcp.pop %v5574
        %v6753 = vrcp.pop %v5575
        %v6754 = vrcp.pop %v5576
        %v6755 = vrcp.pop %v5577
        %v6756 = vrcp.pop %v5578
        %v6757 = vrcp.pop %v5579
        %v6758 = vrcp.pop %v5580
        %v6759 = vrcp.pop %v5581
        %v6760 = vrcp.pop %v5582
        %v6761 = vrcp.pop %v5583
        %v6762 = vrcp.pop %v5584
        %v6763 = vrcp.pop %v5585
        %v6764 = vrcp.pop %v5586
        %v6765 = vrcp.pop %v5587
        %v6766 = vrcp.pop %v5588
        %v6767 = vrcp.pop %v5589
        %v6768 = vrcp.pop %v5590
        %v6769 = vrcp.pop %v5591
        %v6770 = vrcp.pop %v5592
        %v6771 = vrcp.pop %v5593
        %v6772 = vrcp.pop %v5594
        %v6773 = vrcp.pop %v5595
        %v6774 = vrcp.pop %v5596
        %v6775 = vrcp.pop %v5597
        %v6776 = vrcp.pop %v5598
        %v6777 = vrcp.pop %v5599
        %v6778 = vrcp.pop %v5600
        %v6779 = vrcp.pop %v5601
        %v6780 = vrcp.pop %v5602
        %v6781 = vrcp.pop %v5603
        %v6782 = vrcp.pop %v5604
        %v6783 = vmul.f32 %v5605, %v6751
        %v6784 = vmul.f32 %v5606, %v6752
        %v6785 = vmul.f32 %v5607, %v6753
        %v6786 = vmul.f32 %v5608, %v6754
        %v6787 = vmul.f32 %v5609, %v6755
        %v6788 = vmul.f32 %v5610, %v6756
        %v6789 = vmul.f32 %v5611, %v6757
        %v6790 = vmul.f32 %v5612, %v6758
        %v6791 = vmul.f32 %v5613, %v6759
        %v6792 = vmul.f32 %v5614, %v6760
        %v6793 = vmul.f32 %v5615, %v6761
        %v6794 = vmul.f32 %v5616, %v6762
        %v6795 = vmul.f32 %v5617, %v6763
        %v6796 = vmul.f32 %v5618, %v6764
        %v6797 = vmul.f32 %v5619, %v6765
        %v6798 = vmul.f32 %v5620, %v6766
        %v6799 = vmul.f32 %v5621, %v6767
        %v6800 = vmul.f32 %v5622, %v6768
        %v6801 = vmul.f32 %v5623, %v6769
        %v6802 = vmul.f32 %v5624, %v6770
        %v6803 = vmul.f32 %v5625, %v6771
        %v6804 = vmul.f32 %v5626, %v6772
        %v6805 = vmul.f32 %v5627, %v6773
        %v6806 = vmul.f32 %v5628, %v6774
        %v6807 = vmul.f32 %v5629, %v6775
        %v6808 = vmul.f32 %v5630, %v6776
        %v6809 = vmul.f32 %v5631, %v6777
        %v6810 = vmul.f32 %v5632, %v6778
        %v6811 = vmul.f32 %v5633, %v6779
        %v6812 = vmul.f32 %v5634, %v6780
        %v6813 = vmul.f32 %v5635, %v6781
        %v6814 = vmul.f32 %v5636, %v6782
        %v6815 = vpack.c.bf16 %v6784, %v6783
        %v6816 = vpack.c.bf16 %v6786, %v6785
        %v6817 = vpack.c.bf16 %v6788, %v6787
        %v6818 = vpack.c.bf16 %v6790, %v6789
        %v6819 = vpack.c.bf16 %v6792, %v6791
        %v6820 = vpack.c.bf16 %v6794, %v6793
        %v6821 = vpack.c.bf16 %v6796, %v6795
        %v6822 = vpack.c.bf16 %v6798, %v6797
        %v6823 = vpack.c.bf16 %v6800, %v6799
        %v6824 = vpack.c.bf16 %v6802, %v6801
        %v6825 = vpack.c.bf16 %v6804, %v6803
        %v6826 = vpack.c.bf16 %v6806, %v6805
        %v6827 = vpack.c.bf16 %v6808, %v6807
        %v6828 = vpack.c.bf16 %v6810, %v6809
        %v6829 = vpack.c.bf16 %v6812, %v6811
        %v6830 = vpack.c.bf16 %v6814, %v6813
        %s6831 = scalar_lea.vmem [#allocation13], 8
        %v6832 = vld [vmem:[%s6831] sm:$0xf]
        %v6833 = vld [vmem:[%s6831 + $0x4] sm:$0xf]
        %v6836 = vunpack.c.l.b16 %v6832
        %v6837 = vunpack.c.l.b16 %v6833
        %v6838 = vpack.c.b16 %v6837, %v6836
        %v6841 = vsel %vm1477, %v6815, 0
        %v6844 = vsel %vm1477, %v6816, 0
        %v6847 = vsel %vm1477, %v6817, 0
        %v6850 = vsel %vm1477, %v6818, 0
        %v6853 = vsel %vm1477, %v6819, 0
        %v6856 = vsel %vm1477, %v6820, 0
        %v6859 = vsel %vm1477, %v6821, 0
        %v6862 = vsel %vm1477, %v6822, 0
        %v6865 = vsel %vm1477, %v6823, 0
        %v6868 = vsel %vm1477, %v6824, 0
        %v6871 = vsel %vm1477, %v6825, 0
        %v6874 = vsel %vm1477, %v6826, 0
        %v6877 = vsel %vm1477, %v6827, 0
        %v6880 = vsel %vm1477, %v6828, 0
        %v6883 = vsel %vm1477, %v6829, 0
        %v6886 = vsel %vm1477, %v6830, 0
        %6888 = vmatprep.subr.bf16.mxu0 0
        %6889 = vmatpush1.bf16.msra.mxu0 %v6838
        %6890 = vmatprep.subr.bf16.mxu0 0
        %6891 = vmatpush1.bf16.msra.mxu0 0
        %6892 = vmatprep.subr.bf16.mxu0 0
        %6893 = vmatpush1.bf16.msra.mxu0 0
        %6894 = vmatprep.subr.bf16.mxu0 0
        %6895 = vmatpush1.bf16.msra.mxu0 0
        %6896 = vmatprep.subr.bf16.mxu0 0
        %6897 = vmatpush1.bf16.msra.mxu0 0
        %6898 = vmatprep.subr.bf16.mxu0 0
        %6899 = vmatpush1.bf16.msra.mxu0 0
        %6900 = vmatprep.subr.bf16.mxu0 0
        %6901 = vmatpush1.bf16.msra.mxu0 0
        %6902 = vmatprep.subr.bf16.mxu0 0
        %6903 = vmatpush1.bf16.msra.mxu0 0
        %6904 = vmatprep.subr.bf16.mxu0 0
        %6905 = vmatpush1.bf16.msra.mxu0 0
        %6906 = vmatprep.subr.bf16.mxu0 0
        %6907 = vmatpush1.bf16.msra.mxu0 0
        %6908 = vmatprep.subr.bf16.mxu0 0
        %6909 = vmatpush1.bf16.msra.mxu0 0
        %6910 = vmatprep.subr.bf16.mxu0 0
        %6911 = vmatpush1.bf16.msra.mxu0 0
        %6912 = vmatprep.subr.bf16.mxu0 0
        %6913 = vmatpush1.bf16.msra.mxu0 0
        %6914 = vmatprep.subr.bf16.mxu0 0
        %6915 = vmatpush1.bf16.msra.mxu0 0
        %6916 = vmatprep.subr.bf16.mxu0 0
        %6917 = vmatpush1.bf16.msra.mxu0 0
        %6918 = vmatprep.subr.bf16.mxu0 0
        %6919 = vmatpush1.bf16.msra.mxu0 0
        %6920 = vmatprep.mubr.bf16.mxu0 0
        %6921 = vmatmul.mubr.bf16.gmra.mrb[0].mxu0 %v6841
        %v6922 = vpop.f32.mrb[0].mxu0
        %v6923 = vadd.f32 0.0, %v6922
        %v6924 = vpop.f32.mrb[0].mxu0
        %v6925 = vpop.f32.mrb[0].mxu0
        %v6926 = vadd.f32 0.0, %v6925
        %v6927 = vpop.f32.mrb[0].mxu0
        %6928 = vmatprep.mubr.bf16.mxu0 0
        %6929 = vmatmul.mubr.bf16.gmra.mrb[0].mxu0 %v6844
        %v6930 = vpop.f32.mrb[0].mxu0
        %v6931 = vadd.f32 0.0, %v6930
        %v6932 = vpop.f32.mrb[0].mxu0
        %v6933 = vpop.f32.mrb[0].mxu0
        %v6934 = vadd.f32 0.0, %v6933
        %v6935 = vpop.f32.mrb[0].mxu0
        %6936 = vmatprep.mubr.bf16.mxu0 0
        %6937 = vmatmul.mubr.bf16.gmra.mrb[0].mxu0 %v6847
        %v6938 = vpop.f32.mrb[0].mxu0
        %v6939 = vadd.f32 0.0, %v6938
        %v6940 = vpop.f32.mrb[0].mxu0
        %v6941 = vpop.f32.mrb[0].mxu0
        %v6942 = vadd.f32 0.0, %v6941
        %v6943 = vpop.f32.mrb[0].mxu0
        %6944 = vmatprep.mubr.bf16.mxu0 0
        %6945 = vmatmul.mubr.bf16.gmra.mrb[0].mxu0 %v6850
        %v6946 = vpop.f32.mrb[0].mxu0
        %v6947 = vadd.f32 0.0, %v6946
        %v6948 = vpop.f32.mrb[0].mxu0
        %v6949 = vpop.f32.mrb[0].mxu0
        %v6950 = vadd.f32 0.0, %v6949
        %v6951 = vpop.f32.mrb[0].mxu0
        %6952 = vmatprep.mubr.bf16.mxu0 0
        %6953 = vmatmul.mubr.bf16.gmra.mrb[0].mxu0 %v6853
        %v6954 = vpop.f32.mrb[0].mxu0
        %v6955 = vadd.f32 0.0, %v6954
        %v6956 = vpop.f32.mrb[0].mxu0
        %v6957 = vpop.f32.mrb[0].mxu0
        %v6958 = vadd.f32 0.0, %v6957
        %v6959 = vpop.f32.mrb[0].mxu0
        %6960 = vmatprep.mubr.bf16.mxu0 0
        %6961 = vmatmul.mubr.bf16.gmra.mrb[0].mxu0 %v6856
        %v6962 = vpop.f32.mrb[0].mxu0
        %v6963 = vadd.f32 0.0, %v6962
        %v6964 = vpop.f32.mrb[0].mxu0
        %v6965 = vpop.f32.mrb[0].mxu0
        %v6966 = vadd.f32 0.0, %v6965
        %v6967 = vpop.f32.mrb[0].mxu0
        %6968 = vmatprep.mubr.bf16.mxu0 0
        %6969 = vmatmul.mubr.bf16.gmra.mrb[0].mxu0 %v6859
        %v6970 = vpop.f32.mrb[0].mxu0
        %v6971 = vadd.f32 0.0, %v6970
        %v6972 = vpop.f32.mrb[0].mxu0
        %v6973 = vpop.f32.mrb[0].mxu0
        %v6974 = vadd.f32 0.0, %v6973
        %v6975 = vpop.f32.mrb[0].mxu0
        %6976 = vmatprep.mubr.bf16.mxu0 0
        %6977 = vmatmul.mubr.bf16.gmra.mrb[0].mxu0 %v6862
        %v6978 = vpop.f32.mrb[0].mxu0
        %v6979 = vadd.f32 0.0, %v6978
        %v6980 = vpop.f32.mrb[0].mxu0
        %v6981 = vpop.f32.mrb[0].mxu0
        %v6982 = vadd.f32 0.0, %v6981
        %v6983 = vpop.f32.mrb[0].mxu0
        %6984 = vmatprep.mubr.bf16.mxu0 0
        %6985 = vmatmul.mubr.bf16.gmra.mrb[0].mxu0 %v6865
        %v6986 = vpop.f32.mrb[0].mxu0
        %v6987 = vadd.f32 0.0, %v6986
        %v6988 = vpop.f32.mrb[0].mxu0
        %v6989 = vpop.f32.mrb[0].mxu0
        %v6990 = vadd.f32 0.0, %v6989
        %v6991 = vpop.f32.mrb[0].mxu0
        %6992 = vmatprep.mubr.bf16.mxu0 0
        %6993 = vmatmul.mubr.bf16.gmra.mrb[0].mxu0 %v6868
        %v6994 = vpop.f32.mrb[0].mxu0
        %v6995 = vadd.f32 0.0, %v6994
        %v6996 = vpop.f32.mrb[0].mxu0
        %v6997 = vpop.f32.mrb[0].mxu0
        %v6998 = vadd.f32 0.0, %v6997
        %v6999 = vpop.f32.mrb[0].mxu0
        %7000 = vmatprep.mubr.bf16.mxu0 0
        %7001 = vmatmul.mubr.bf16.gmra.mrb[0].mxu0 %v6871
        %v7002 = vpop.f32.mrb[0].mxu0
        %v7003 = vadd.f32 0.0, %v7002
        %v7004 = vpop.f32.mrb[0].mxu0
        %v7005 = vpop.f32.mrb[0].mxu0
        %v7006 = vadd.f32 0.0, %v7005
        %v7007 = vpop.f32.mrb[0].mxu0
        %7008 = vmatprep.mubr.bf16.mxu0 0
        %7009 = vmatmul.mubr.bf16.gmra.mrb[0].mxu0 %v6874
        %v7010 = vpop.f32.mrb[0].mxu0
        %v7011 = vadd.f32 0.0, %v7010
        %v7012 = vpop.f32.mrb[0].mxu0
        %v7013 = vpop.f32.mrb[0].mxu0
        %v7014 = vadd.f32 0.0, %v7013
        %v7015 = vpop.f32.mrb[0].mxu0
        %7016 = vmatprep.mubr.bf16.mxu0 0
        %7017 = vmatmul.mubr.bf16.gmra.mrb[0].mxu0 %v6877
        %v7018 = vpop.f32.mrb[0].mxu0
        %v7019 = vadd.f32 0.0, %v7018
        %v7020 = vpop.f32.mrb[0].mxu0
        %v7021 = vpop.f32.mrb[0].mxu0
        %v7022 = vadd.f32 0.0, %v7021
        %v7023 = vpop.f32.mrb[0].mxu0
        %7024 = vmatprep.mubr.bf16.mxu0 0
        %7025 = vmatmul.mubr.bf16.gmra.mrb[0].mxu0 %v6880
        %v7026 = vpop.f32.mrb[0].mxu0
        %v7027 = vadd.f32 0.0, %v7026
        %v7028 = vpop.f32.mrb[0].mxu0
        %v7029 = vpop.f32.mrb[0].mxu0
        %v7030 = vadd.f32 0.0, %v7029
        %v7031 = vpop.f32.mrb[0].mxu0
        %7032 = vmatprep.mubr.bf16.mxu0 0
        %7033 = vmatmul.mubr.bf16.gmra.mrb[0].mxu0 %v6883
        %v7034 = vpop.f32.mrb[0].mxu0
        %v7035 = vadd.f32 0.0, %v7034
        %v7036 = vpop.f32.mrb[0].mxu0
        %v7037 = vpop.f32.mrb[0].mxu0
        %v7038 = vadd.f32 0.0, %v7037
        %v7039 = vpop.f32.mrb[0].mxu0
        %7040 = vmatprep.mubr.bf16.mxu0 0
        %7041 = vmatmul.mubr.bf16.gmra.mrb[0].mxu0 %v6886
        %v7042 = vpop.f32.mrb[0].mxu0
        %v7043 = vadd.f32 0.0, %v7042
        %v7044 = vpop.f32.mrb[0].mxu0
        %v7045 = vpop.f32.mrb[0].mxu0
        %v7046 = vadd.f32 0.0, %v7045
        %v7047 = vpop.f32.mrb[0].mxu0
        %7048 = vdwg.mxu0
        %v7049 = vadd.f32 %v3954, %v6923
        %v7050 = vadd.f32 %v3955, %v6926
        %v7051 = vadd.f32 %v3956, %v6931
        %v7052 = vadd.f32 %v3957, %v6934
        %v7053 = vadd.f32 %v3958, %v6939
        %v7054 = vadd.f32 %v3959, %v6942
        %v7055 = vadd.f32 %v3960, %v6947
        %v7056 = vadd.f32 %v3961, %v6950
        %v7057 = vadd.f32 %v3962, %v6955
        %v7058 = vadd.f32 %v3963, %v6958
        %v7059 = vadd.f32 %v3964, %v6963
        %v7060 = vadd.f32 %v3965, %v6966
        %v7061 = vadd.f32 %v3966, %v6971
        %v7062 = vadd.f32 %v3967, %v6974
        %v7063 = vadd.f32 %v3968, %v6979
        %v7064 = vadd.f32 %v3969, %v6982
        %v7065 = vadd.f32 %v3970, %v6987
        %v7066 = vadd.f32 %v3971, %v6990
        %v7067 = vadd.f32 %v3972, %v6995
        %v7068 = vadd.f32 %v3973, %v6998
        %v7069 = vadd.f32 %v3974, %v7003
        %v7070 = vadd.f32 %v3975, %v7006
        %v7071 = vadd.f32 %v3976, %v7011
        %v7072 = vadd.f32 %v3977, %v7014
        %v7073 = vadd.f32 %v3978, %v7019
        %v7074 = vadd.f32 %v3979, %v7022
        %v7075 = vadd.f32 %v3980, %v7027
        %v7076 = vadd.f32 %v3981, %v7030
        %v7077 = vadd.f32 %v3982, %v7035
        %v7078 = vadd.f32 %v3983, %v7038
        %v7079 = vadd.f32 %v3984, %v7043
        %v7080 = vadd.f32 %v3985, %v7046
        %7081 = vst.msk [vmem:[%s387] sm:$0xff] %vm457, %v7049
        %7082 = vst.msk [vmem:[%s387 + $0x8] sm:$0xff] %vm457, %v7050
        %7083 = vst.msk [vmem:[%s387 + $0x10] sm:$0xff] %vm457, %v7051
        %7084 = vst.msk [vmem:[%s387 + $0x18] sm:$0xff] %vm457, %v7052
        %7085 = vst.msk [vmem:[%s387 + $0x20] sm:$0xff] %vm457, %v7053
        %7086 = vst.msk [vmem:[%s387 + $0x28] sm:$0xff] %vm457, %v7054
        %7087 = vst.msk [vmem:[%s387 + $0x30] sm:$0xff] %vm457, %v7055
        %7088 = vst.msk [vmem:[%s387 + $0x38] sm:$0xff] %vm457, %v7056
        %7089 = vst.msk [vmem:[%s387 + $0x40] sm:$0xff] %vm457, %v7057
        %7090 = vst.msk [vmem:[%s387 + $0x48] sm:$0xff] %vm457, %v7058
        %7091 = vst.msk [vmem:[%s387 + $0x50] sm:$0xff] %vm457, %v7059
        %7092 = vst.msk [vmem:[%s387 + $0x58] sm:$0xff] %vm457, %v7060
        %7093 = vst.msk [vmem:[%s387 + $0x60] sm:$0xff] %vm457, %v7061
        %7094 = vst.msk [vmem:[%s387 + $0x68] sm:$0xff] %vm457, %v7062
        %7095 = vst.msk [vmem:[%s387 + $0x70] sm:$0xff] %vm457, %v7063
        %7096 = vst.msk [vmem:[%s387 + $0x78] sm:$0xff] %vm457, %v7064
        %7097 = vst.msk [vmem:[%s387 + $0x80] sm:$0xff] %vm457, %v7065
        %7098 = vst.msk [vmem:[%s387 + $0x88] sm:$0xff] %vm457, %v7066
        %7099 = vst.msk [vmem:[%s387 + $0x90] sm:$0xff] %vm457, %v7067
        %7100 = vst.msk [vmem:[%s387 + $0x98] sm:$0xff] %vm457, %v7068
        %7101 = vst.msk [vmem:[%s387 + $0xa0] sm:$0xff] %vm457, %v7069
        %7102 = vst.msk [vmem:[%s387 + $0xa8] sm:$0xff] %vm457, %v7070
        %7103 = vst.msk [vmem:[%s387 + $0xb0] sm:$0xff] %vm457, %v7071
        %7104 = vst.msk [vmem:[%s387 + $0xb8] sm:$0xff] %vm457, %v7072
        %7105 = vst.msk [vmem:[%s387 + $0xc0] sm:$0xff] %vm457, %v7073
        %7106 = vst.msk [vmem:[%s387 + $0xc8] sm:$0xff] %vm457, %v7074
        %7107 = vst.msk [vmem:[%s387 + $0xd0] sm:$0xff] %vm457, %v7075
        %7108 = vst.msk [vmem:[%s387 + $0xd8] sm:$0xff] %vm457, %v7076
        %7109 = vst.msk [vmem:[%s387 + $0xe0] sm:$0xff] %vm457, %v7077
        %7110 = vst.msk [vmem:[%s387 + $0xe8] sm:$0xff] %vm457, %v7078
        %7111 = vst.msk [vmem:[%s387 + $0xf0] sm:$0xff] %vm457, %v7079
        %7112 = vst.msk [vmem:[%s387 + $0xf8] sm:$0xff] %vm457, %v7080
        %s7113 = sand.u32 %s205, 1
        %s7114 = scalar_lea.sflag [#allocation7], %s7113
        %s7115 = sand.u32 %s205, 1
        %s7116 = smul.addr %s7115, 256
        %s7117 = scalar_lea.vmem [#allocation16], %s7116
        // Predicated region
        $region87: #{tpu_custom_call.1} parent=47 // pred_check
          %p7118 = pneg %p215
        $region88: #{tpu_custom_call.1} parent=47 // pred_check_branch
          %7120 = sbr.rel (%p7118) target = $region90
        $region89: #{tpu_custom_call.1} parent=47 // pred_region
          %s7121 = smul.u32 32, %s34
          %s7123 = ssub.s32 4096, 4096
          %7124 = vsyncadd %s7114, %s7123
          %s7125 = smul.addr %s33, 64
          %s7126 = sadd.s32 %s7121, %s7125
          %s7127 = smul.addr %s7126, 128
          %s7128 = scalar_lea.hbm %s7, %s7127
          %s7129 = sshll.u32 %s7117, 4
          %s7130 = int_to_ptr.vmem [resolvable:$true] %s7129
          %7135 = dma.vmem_to_hbm [thread:$0]  %s7130, 4096, %s7128, %s7114, 128, 128, 8
        $region90: #{tpu_custom_call.1} parent=47 // pred_fallthru
          _
      $region48: #{tpu_custom_call.1} parent=5 // pred_fallthru
        _
      %p7136 = scmp.le.s32.totalorder 2, %s24
      // Predicated region
      $region91: #{tpu_custom_call.1} parent=5 // pred_check
        %p7137 = pneg %p7136
      $region92: #{tpu_custom_call.1} parent=5 // pred_check_branch
        %7139 = sbr.rel (%p7137) target = $region94
      $region93: #{tpu_custom_call.1} parent=5 // pred_region
        %s7140 = ssub.s32 %s24, 2
        // Predicated region
        $region95: #{tpu_custom_call.1} parent=93 // pred_check
          %p7141 = pneg %p221
        $region96: #{tpu_custom_call.1} parent=93 // pred_check_branch
          %7143 = sbr.rel (%p7141) target = $region98
        $region97: #{tpu_custom_call.1} parent=93 // pred_region
          %s7144 = sand.u32 %s206, 1
          %s7145 = scalar_lea.sflag [#allocation7], %s7144
          %s7146 = sand.u32 %s206, 1
          %s7147 = smul.addr %s7146, 256
          %s7148 = scalar_lea.vmem [#allocation16], %s7147
          %7149 = dma.done %s7145, 4096
        $region98: #{tpu_custom_call.1} parent=93 // pred_fallthru
          _
      $region94: #{tpu_custom_call.1} parent=5 // pred_fallthru
        _
    $region6: #{tpu_custom_call.1} parent=1 // loop_footer
      %s28 = sadd.s32 1, %s24
    $region7: #{tpu_custom_call.1} parent=1 // loop_footer_branch
      %23 = sbr.rel target = $region3
    $region8: #{tpu_custom_call.1} parent=1 // loop_exit
      _
    %7150 = vsyncpa [#allocation6], 1
    %s7151 = scalar_lea.sflag [#allocation6], 1
    %7152 = vsyncpa %s7151, 1
    %7153 = vsyncpa [#allocation9], 1
    %7154 = vsyncpa [#allocation12], 1
    %7155 = vsyncpa [#allocation15], 1
    %7156 = vsyncpa [#allocation7], 1
    %s7157 = scalar_lea.sflag [#allocation7], 1
    %7158 = vsyncpa %s7157, 1

</llo_original>
